<compile_context>
chip_gen: v7x
topology: tpu7x:2x2x1
jax: 0.10.0
libtpu: 0.0.40
codegen_flags: <defaults>
</compile_context>

<pallas_src>
import functools

import numpy as np

import jax
import jax.numpy as jnp
from jax.experimental import pallas as pl
from jax.experimental.pallas import tpu as pltpu


# ------------------------------- Pallas kernel -------------------------------

def mynet_kernel(patches_ref, w1_ref, b1_ref,
                 g2_ref, w2_ref, b2_ref,
                 g3_ref, w3_ref, b3_ref,
                 wf1_ref, bf1_ref, wf2_ref, bf2_ref,
                 out_ref, x4flat_ref):
    """Whole MyNet forward for one block of B_blk batch elements."""
    f32, bf16 = jnp.float32, jnp.bfloat16
    b_blk = out_ref.shape[1]

    # ---- conv1 + pool1 + relu.  Channels (and batch) on sublanes, the
    #      4*256 = 1024 (pool offset, position) pairs on lanes -> lane-dense N.
    y1 = jnp.dot(w1_ref[...], patches_ref[0], preferred_element_type=f32)   # (B*16, 1024)
    n1 = 256
    m1 = jnp.maximum(jnp.maximum(y1[:, 0:n1], y1[:, n1:2 * n1]),
                     jnp.maximum(y1[:, 2 * n1:3 * n1], y1[:, 3 * n1:4 * n1]))
    x2 = jnp.maximum(m1 + b1_ref[...], 0.0).astype(bf16)                    # (B*16, 256)

    # ---- conv2 + pool2 + relu: 9 taps; the 0/1 gather matrix (applied on the
    #      lane/position axis, N=256) selects the padded/strided input column,
    #      then the block-diagonal tap weight mixes channels per element.
    acc2 = jnp.zeros((b_blk * 32, 256), f32)
    for t in range(9):
        u = jnp.dot(x2, g2_ref[t], preferred_element_type=f32).astype(bf16)  # (B*16, 256)
        acc2 = acc2 + jnp.dot(w2_ref[t], u, preferred_element_type=f32)      # (B*32, 256)
    n2 = 64
    m2 = jnp.maximum(jnp.maximum(acc2[:, 0:n2], acc2[:, n2:2 * n2]),
                     jnp.maximum(acc2[:, 2 * n2:3 * n2], acc2[:, 3 * n2:4 * n2]))
    x3 = jnp.maximum(m2 + b2_ref[...], 0.0).astype(bf16)                     # (B*32, 64)

    # ---- conv3 + pool3 + relu
    acc3 = jnp.zeros((b_blk * 64, 64), f32)
    for t in range(9):
        u = jnp.dot(x3, g3_ref[t], preferred_element_type=f32).astype(bf16)  # (B*32, 64)
        acc3 = acc3 + jnp.dot(w3_ref[t], u, preferred_element_type=f32)      # (B*64, 64)
    n3 = 16
    m3 = jnp.maximum(jnp.maximum(acc3[:, 0:n3], acc3[:, n3:2 * n3]),
                     jnp.maximum(acc3[:, 2 * n3:3 * n3], acc3[:, 3 * n3:4 * n3]))
    # (16 spatial positions, B*64 channels) after one small 2-D transpose.
    x4 = jnp.maximum(jnp.transpose(m3) + b3_ref[...], 0.0)                   # (16, B*64) f32

    # ---- flatten to (B_blk, 1024).  Feature order r = j*64 + c is folded into
    #      the host-side fc1 weight permutation, so these are plain contiguous
    #      64-lane row stores (no in-kernel reshape across sublanes/lanes).
    for j in range(16):
        for e in range(b_blk):
            x4flat_ref[e, j * 64:(j + 1) * 64] = x4[j, e * 64:(e + 1) * 64]

    # ---- fc1 + relu: single (B_blk, 1024) @ (1024, 512) matmul; then fc2.
    h = jnp.dot(x4flat_ref[...].astype(bf16), wf1_ref[...],
                preferred_element_type=f32)                                   # (B, 512)
    h = jnp.maximum(h + bf1_ref[...], 0.0).astype(bf16)
    # TODO(synk): nn.Dropout(0.2) is identity in eval mode; training-mode RNG mask not implemented.
    out_ref[0] = jnp.dot(h, wf2_ref[...], preferred_element_type=f32) + bf2_ref[...]


# --------------------------- host-side preparation ---------------------------

def _pool_gather_mats(h_in, w_in):
    """0/1 gather matrices for 3x3 conv (pad=1) fused with 2x2/2 maxpool.

    Returns (9, 4*h_out*w_out, h_in*w_in):
      g[t, p*n_out + oh*w_out + ow, ih*w_in + iw] = 1
    with t = ky*3+kx, p = a*2+b (pool offset), ih = 2*oh+a+ky-1, iw = 2*ow+b+kx-1.
    Out-of-bounds taps (zero padding) stay all-zero rows.
    """
    h_out, w_out = h_in // 2, w_in // 2
    n_in, n_out = h_in * w_in, h_out * w_out
    g = np.zeros((9, 4 * n_out, n_in), dtype=np.float32)
    for t in range(9):
        ky, kx = t // 3, t % 3
        for p in range(4):
            a, b = p // 2, p % 2
            for oh in range(h_out):
                ih = 2 * oh + a + ky - 1
                if not (0 <= ih < h_in):
                    continue
                for ow in range(w_out):
                    iw = 2 * ow + b + kx - 1
                    if 0 <= iw < w_in:
                        g[t, p * n_out + oh * w_out + ow, ih * w_in + iw] = 1.0
    return g


def init_params(key, num_classes=10):
    """Same (PyTorch-layout) parameters as the reference module."""
    ks = jax.random.split(key, 10)
    s = 0.05
    return {
        "conv1_w": s * jax.random.normal(ks[0], (16, 3, 3, 3), jnp.float32),
        "conv1_b": s * jax.random.normal(ks[1], (16,), jnp.float32),
        "conv2_w": s * jax.random.normal(ks[2], (32, 16, 3, 3), jnp.float32),
        "conv2_b": s * jax.random.normal(ks[3], (32,), jnp.float32),
        "conv3_w": s * jax.random.normal(ks[4], (64, 32, 3, 3), jnp.float32),
        "conv3_b": s * jax.random.normal(ks[5], (64,), jnp.float32),
        "fc1_w": s * jax.random.normal(ks[6], (500, 64 * 4 * 4), jnp.float32),
        "fc1_b": s * jax.random.normal(ks[7], (500,), jnp.float32),
        "fc2_w": s * jax.random.normal(ks[8], (num_classes, 500), jnp.float32),
        "fc2_b": s * jax.random.normal(ks[9], (num_classes,), jnp.float32),
    }


def prepare_params(params, b_blk=1):
    """One-time layout prep (eager, outside jit) for a given batch block size."""
    bf16, f32 = jnp.bfloat16, jnp.float32

    def bdiag(w):  # (a, b) -> (b_blk*a, b_blk*b) block-diagonal replication
        return jnp.kron(jnp.eye(b_blk, dtype=w.dtype), w)

    def conv_taps(w):  # (Co, Ci, 3, 3) -> (9, Co, Ci), t = ky*3 + kx
        co, ci = w.shape[0], w.shape[1]
        return jnp.transpose(w, (2, 3, 0, 1)).reshape(9, co, ci)

    # conv1 as a (16, 27) matrix; feature order f = (ky*3 + kx)*3 + ci matches
    # the wrapper's im2col ordering.
    w1 = jnp.transpose(params["conv1_w"], (0, 2, 3, 1)).reshape(16, 27)
    w2t = conv_taps(params["conv2_w"])   # (9, 32, 16)
    w3t = conv_taps(params["conv3_w"])   # (9, 64, 32)

    h1 = params["fc1_b"].shape[0]        # 500
    nc = params["fc2_b"].shape[0]        # 10
    h1p, ncp = 512, 128                  # lane-dense padded sizes

    # fc1: flatten order used in-kernel is r = j*64 + c (j = h*4+w spatial,
    # c = channel); PyTorch flatten is f = c*16 + j, so permute the weight.
    wf1 = params["fc1_w"].reshape(h1, 64, 16)                  # (o, c, j)
    wf1 = jnp.transpose(wf1, (2, 1, 0)).reshape(16 * 64, h1)   # row r = j*64 + c
    wf1 = jnp.pad(wf1, ((0, 0), (0, h1p - h1))).astype(bf16)   # (1024, 512)
    bf1 = jnp.pad(params["fc1_b"], (0, h1p - h1)).reshape(1, h1p).astype(f32)
    wf2 = jnp.pad(params["fc2_w"].T, ((0, h1p - h1), (0, ncp - nc))).astype(bf16)  # (512, 128)
    bf2 = jnp.pad(params["fc2_b"], (0, ncp - nc)).reshape(1, ncp).astype(f32)

    return {
        "w1blk": bdiag(w1).astype(bf16),                                        # (B*16, B*27)
        "b1col": jnp.tile(params["conv1_b"], b_blk).reshape(-1, 1).astype(f32),  # (B*16, 1)
        "g2t": jnp.asarray(_pool_gather_mats(16, 16).transpose(0, 2, 1), bf16),  # (9, 256, 256)
        "w2blk": jnp.stack([bdiag(w2t[t]) for t in range(9)]).astype(bf16),      # (9, B*32, B*16)
        "b2col": jnp.tile(params["conv2_b"], b_blk).reshape(-1, 1).astype(f32),  # (B*32, 1)
        "g3t": jnp.asarray(_pool_gather_mats(8, 8).transpose(0, 2, 1), bf16),    # (9, 64, 64)
        "w3blk": jnp.stack([bdiag(w3t[t]) for t in range(9)]).astype(bf16),      # (9, B*64, B*32)
        "b3row": jnp.tile(params["conv3_b"], b_blk).reshape(1, -1).astype(f32),  # (1, B*64)
        "wf1": wf1, "bf1": bf1, "wf2": wf2, "bf2": bf2,
    }


# --------------------------------- forward -----------------------------------

def _layer1_patches(x_nhwc):
    """(B,32,32,3) f32 -> (B, 4*256, 27) bf16 im2col patches, rows ordered
    (pool offset p, oh*16+ow), features ordered (ky, kx, cin)."""
    B, H, W, C = x_nhwc.shape
    Ho, Wo = H // 2, W // 2
    xp = jnp.pad(x_nhwc, ((0, 0), (1, 1), (1, 1), (0, 0)))
    groups = []
    for a in range(2):
        for b in range(2):
            taps = [xp[:, a + ky: a + ky + 2 * Ho: 2, b + kx: b + kx + 2 * Wo: 2, :]
                    for ky in range(3) for kx in range(3)]
            groups.append(jnp.concatenate(taps, axis=-1).reshape(B, Ho * Wo, 9 * C))
    return jnp.concatenate(groups, axis=1).astype(jnp.bfloat16)   # (B, 1024, 27)


@functools.partial(jax.jit, static_argnames=("num_classes",))
def mynet_forward(x_nchw, prep, num_classes=10):
    b_blk = prep["w1blk"].shape[0] // 16          # batch elements per grid step
    B = x_nchw.shape[0]
    G = -(-B // b_blk)                            # grid steps

    x = jnp.transpose(x_nchw, (0, 2, 3, 1)).astype(jnp.float32)   # NCHW -> NHWC
    patches = _layer1_patches(x)                                  # (B, 1024, 27) bf16
    if G * b_blk != B:
        patches = jnp.pad(patches, ((0, G * b_blk - B), (0, 0), (0, 0)))
    # (G, B_blk*27, 1024): per grid block, rows = (element, tap-feature),
    # lanes = (pool offset, output position).
    patches_t = jnp.transpose(patches, (0, 2, 1)).reshape(G, b_blk * 27, 1024)

    out = pl.pallas_call(
        mynet_kernel,
        out_shape=jax.ShapeDtypeStruct((G, b_blk, 128), jnp.float32),
        grid=(G,),
        in_specs=[
            pl.BlockSpec((1, b_blk * 27, 1024), lambda i: (i, 0, 0)),      # layer-1 patches
            pl.BlockSpec((b_blk * 16, b_blk * 27), lambda i: (0, 0)),      # w1 (block-diag)
            pl.BlockSpec((b_blk * 16, 1), lambda i: (0, 0)),               # b1 (column)
            pl.BlockSpec((9, 256, 256), lambda i: (0, 0, 0)),              # g2^T
            pl.BlockSpec((9, b_blk * 32, b_blk * 16), lambda i: (0, 0, 0)),  # w2 taps
            pl.BlockSpec((b_blk * 32, 1), lambda i: (0, 0)),               # b2 (column)
            pl.BlockSpec((9, 64, 64), lambda i: (0, 0, 0)),                # g3^T
            pl.BlockSpec((9, b_blk * 64, b_blk * 32), lambda i: (0, 0, 0)),  # w3 taps
            pl.BlockSpec((1, b_blk * 64), lambda i: (0, 0)),               # b3 (row)
            pl.BlockSpec((1024, 512), lambda i: (0, 0)),                   # fc1 (permuted, padded)
            pl.BlockSpec((1, 512), lambda i: (0, 0)),                      # fc1 bias (padded)
            pl.BlockSpec((512, 128), lambda i: (0, 0)),                    # fc2 (padded)
            pl.BlockSpec((1, 128), lambda i: (0, 0)),                      # fc2 bias (padded)
        ],
        out_specs=pl.BlockSpec((1, b_blk, 128), lambda i: (i, 0, 0)),
        scratch_shapes=[pltpu.VMEM((b_blk, 1024), jnp.float32)],           # flattened x4
        compiler_params=pltpu.CompilerParams(dimension_semantics=("parallel",)),
    )(patches_t, prep["w1blk"], prep["b1col"],
      prep["g2t"], prep["w2blk"], prep["b2col"],
      prep["g3t"], prep["w3blk"], prep["b3row"],
      prep["wf1"], prep["bf1"], prep["wf2"], prep["bf2"])

    return out.reshape(G * b_blk, 128)[:B, :num_classes]


if __name__ == "__main__":
    key = jax.random.PRNGKey(0)
    k_x, k_p = jax.random.split(key)
    x = jax.random.normal(k_x, (2, 3, 32, 32), jnp.float32)   # NCHW, like PyTorch
    params = init_params(k_p, num_classes=10)

    # Batch-block policy: keep >=2 grid steps when B>=2 (both v7x TensorCores
    # get work), up to 8 elements per step for larger batches.
    B = x.shape[0]
    b_blk = min(8, max(1, -(-B // 2)))
    prep = prepare_params(params, b_blk=b_blk)                # one-time layout prep

    out = mynet_forward(x, prep, num_classes=10)
    out = jax.block_until_ready(out)
    assert out.shape == (2, 10) and out.dtype == jnp.float32
    print("KERNEL_OK")
</pallas_src>

<mosaic_0001>
module attributes {stable_mosaic.version = 11 : i64} {
  func.func @mynet_kernel(%arg0: i32, %arg1: memref<1x27x1024xbf16, #tpu.memory_space<vmem>>, %arg2: memref<16x27xbf16, #tpu.memory_space<vmem>>, %arg3: memref<16x1xf32, #tpu.memory_space<vmem>>, %arg4: memref<9x256x256xbf16, #tpu.memory_space<vmem>>, %arg5: memref<9x32x16xbf16, #tpu.memory_space<vmem>>, %arg6: memref<32x1xf32, #tpu.memory_space<vmem>>, %arg7: memref<9x64x64xbf16, #tpu.memory_space<vmem>>, %arg8: memref<9x64x32xbf16, #tpu.memory_space<vmem>>, %arg9: memref<1x64xf32, #tpu.memory_space<vmem>>, %arg10: memref<1024x512xbf16, #tpu.memory_space<vmem>>, %arg11: memref<1x512xf32, #tpu.memory_space<vmem>>, %arg12: memref<512x128xbf16, #tpu.memory_space<vmem>>, %arg13: memref<1x128xf32, #tpu.memory_space<vmem>>, %arg14: memref<1x1x128xf32, #tpu.memory_space<vmem>>, %arg15: memref<1x1024xf32, #tpu.memory_space<vmem>>) attributes {dimension_semantics = [#tpu.dimension_semantics<parallel>], iteration_bounds = array<i64: 2>, scalar_prefetch = 0 : i64, scratch_operands = 1 : i64, tpu.core_type = #tpu.core_type<tc>, window_params = [{transform_indices = @transform_0, window_bounds = array<i64: 1, 27, 1024>}, {pipeline_mode = #tpu.pipeline_mode<synchronous>, transform_indices = @transform_1, window_bounds = array<i64: 16, 27>}, {pipeline_mode = #tpu.pipeline_mode<synchronous>, transform_indices = @transform_2, window_bounds = array<i64: 16, 1>}, {pipeline_mode = #tpu.pipeline_mode<synchronous>, transform_indices = @transform_3, window_bounds = array<i64: 9, 256, 256>}, {pipeline_mode = #tpu.pipeline_mode<synchronous>, transform_indices = @transform_4, window_bounds = array<i64: 9, 32, 16>}, {pipeline_mode = #tpu.pipeline_mode<synchronous>, transform_indices = @transform_5, window_bounds = array<i64: 32, 1>}, {pipeline_mode = #tpu.pipeline_mode<synchronous>, transform_indices = @transform_6, window_bounds = array<i64: 9, 64, 64>}, {pipeline_mode = #tpu.pipeline_mode<synchronous>, transform_indices = @transform_7, window_bounds = array<i64: 9, 64, 32>}, {pipeline_mode = #tpu.pipeline_mode<synchronous>, transform_indices = @transform_8, window_bounds = array<i64: 1, 64>}, {pipeline_mode = #tpu.pipeline_mode<synchronous>, transform_indices = @transform_9, window_bounds = array<i64: 1024, 512>}, {pipeline_mode = #tpu.pipeline_mode<synchronous>, transform_indices = @transform_10, window_bounds = array<i64: 1, 512>}, {pipeline_mode = #tpu.pipeline_mode<synchronous>, transform_indices = @transform_11, window_bounds = array<i64: 512, 128>}, {pipeline_mode = #tpu.pipeline_mode<synchronous>, transform_indices = @transform_12, window_bounds = array<i64: 1, 128>}, {transform_indices = @transform_13, window_bounds = array<i64: 1, 1, 128>}]} {
    %c0 = arith.constant 0 : index
    %c0_0 = arith.constant 0 : index
    %0 = vector.load %arg2[%c0, %c0_0] : memref<16x27xbf16, #tpu.memory_space<vmem>>, vector<16x27xbf16>
    %c0_1 = arith.constant 0 : index
    %c0_2 = arith.constant 0 : index
    %c0_3 = arith.constant 0 : index
    %1 = vector.load %arg1[%c0_1, %c0_2, %c0_3] : memref<1x27x1024xbf16, #tpu.memory_space<vmem>>, vector<1x27x1024xbf16>
    %2 = vector.shape_cast %1 : vector<1x27x1024xbf16> to vector<27x1024xbf16>
    %cst = arith.constant dense<0.000000e+00> : vector<16x1024xf32>
    %3 = tpu.matmul %0, %2, %cst {dimension_numbers = #tpu.dot_dimension_numbers<[1], [0], [0], [1], [0, 0, 1, 1], [], []>} : vector<16x27xbf16>, vector<27x1024xbf16>, vector<16x1024xf32> -> vector<16x1024xf32>
    %4 = vector.extract_strided_slice %3 {offsets = [0, 0], sizes = [16, 256], strides = [1, 1]} : vector<16x1024xf32> to vector<16x256xf32>
    %5 = vector.extract_strided_slice %3 {offsets = [0, 256], sizes = [16, 256], strides = [1, 1]} : vector<16x1024xf32> to vector<16x256xf32>
    %6 = arith.maximumf %4, %5 : vector<16x256xf32>
    %7 = vector.extract_strided_slice %3 {offsets = [0, 512], sizes = [16, 256], strides = [1, 1]} : vector<16x1024xf32> to vector<16x256xf32>
    %8 = vector.extract_strided_slice %3 {offsets = [0, 768], sizes = [16, 256], strides = [1, 1]} : vector<16x1024xf32> to vector<16x256xf32>
    %9 = arith.maximumf %7, %8 : vector<16x256xf32>
    %10 = arith.maximumf %6, %9 : vector<16x256xf32>
    %c0_4 = arith.constant 0 : index
    %c0_5 = arith.constant 0 : index
    %11 = vector.load %arg3[%c0_4, %c0_5] : memref<16x1xf32, #tpu.memory_space<vmem>>, vector<16x1xf32>
    %12 = vector.broadcast %11 : vector<16x1xf32> to vector<16x256xf32>
    %13 = arith.addf %10, %12 : vector<16x256xf32>
    %cst_6 = arith.constant 0.000000e+00 : f32
    %14 = vector.broadcast %cst_6 : f32 to vector<16x256xf32>
    %15 = arith.maximumf %13, %14 : vector<16x256xf32>
    %16 = arith.truncf %15 : vector<16x256xf32> to vector<16x256xbf16>
    %cst_7 = arith.constant 0.000000e+00 : f32
    %17 = vector.broadcast %cst_7 : f32 to vector<32x256xf32>
    %c0_8 = arith.constant 0 : index
    %c0_9 = arith.constant 0 : index
    %c0_10 = arith.constant 0 : index
    %18 = vector.load %arg4[%c0_8, %c0_9, %c0_10] : memref<9x256x256xbf16, #tpu.memory_space<vmem>>, vector<1x256x256xbf16>
    %19 = vector.shape_cast %18 : vector<1x256x256xbf16> to vector<256x256xbf16>
    %cst_11 = arith.constant dense<0.000000e+00> : vector<16x256xf32>
    %20 = tpu.matmul %16, %19, %cst_11 {dimension_numbers = #tpu.dot_dimension_numbers<[1], [0], [0], [1], [0, 0, 1, 1], [], []>} : vector<16x256xbf16>, vector<256x256xbf16>, vector<16x256xf32> -> vector<16x256xf32>
    %21 = arith.truncf %20 : vector<16x256xf32> to vector<16x256xbf16>
    %c0_12 = arith.constant 0 : index
    %c0_13 = arith.constant 0 : index
    %c0_14 = arith.constant 0 : index
    %22 = vector.load %arg5[%c0_12, %c0_13, %c0_14] : memref<9x32x16xbf16, #tpu.memory_space<vmem>>, vector<1x32x16xbf16>
    %23 = vector.shape_cast %22 : vector<1x32x16xbf16> to vector<32x16xbf16>
    %cst_15 = arith.constant dense<0.000000e+00> : vector<32x256xf32>
    %24 = tpu.matmul %23, %21, %cst_15 {dimension_numbers = #tpu.dot_dimension_numbers<[1], [0], [0], [1], [0, 0, 1, 1], [], []>} : vector<32x16xbf16>, vector<16x256xbf16>, vector<32x256xf32> -> vector<32x256xf32>
    %25 = arith.addf %17, %24 : vector<32x256xf32>
    %c1 = arith.constant 1 : index
    %c0_16 = arith.constant 0 : index
    %c0_17 = arith.constant 0 : index
    %26 = vector.load %arg4[%c1, %c0_16, %c0_17] : memref<9x256x256xbf16, #tpu.memory_space<vmem>>, vector<1x256x256xbf16>
    %27 = vector.shape_cast %26 : vector<1x256x256xbf16> to vector<256x256xbf16>
    %cst_18 = arith.constant dense<0.000000e+00> : vector<16x256xf32>
    %28 = tpu.matmul %16, %27, %cst_18 {dimension_numbers = #tpu.dot_dimension_numbers<[1], [0], [0], [1], [0, 0, 1, 1], [], []>} : vector<16x256xbf16>, vector<256x256xbf16>, vector<16x256xf32> -> vector<16x256xf32>
    %29 = arith.truncf %28 : vector<16x256xf32> to vector<16x256xbf16>
    %c1_19 = arith.constant 1 : index
    %c0_20 = arith.constant 0 : index
    %c0_21 = arith.constant 0 : index
    %30 = vector.load %arg5[%c1_19, %c0_20, %c0_21] : memref<9x32x16xbf16, #tpu.memory_space<vmem>>, vector<1x32x16xbf16>
    %31 = vector.shape_cast %30 : vector<1x32x16xbf16> to vector<32x16xbf16>
    %cst_22 = arith.constant dense<0.000000e+00> : vector<32x256xf32>
    %32 = tpu.matmul %31, %29, %cst_22 {dimension_numbers = #tpu.dot_dimension_numbers<[1], [0], [0], [1], [0, 0, 1, 1], [], []>} : vector<32x16xbf16>, vector<16x256xbf16>, vector<32x256xf32> -> vector<32x256xf32>
    %33 = arith.addf %25, %32 : vector<32x256xf32>
    %c2 = arith.constant 2 : index
    %c0_23 = arith.constant 0 : index
    %c0_24 = arith.constant 0 : index
    %34 = vector.load %arg4[%c2, %c0_23, %c0_24] : memref<9x256x256xbf16, #tpu.memory_space<vmem>>, vector<1x256x256xbf16>
    %35 = vector.shape_cast %34 : vector<1x256x256xbf16> to vector<256x256xbf16>
    %cst_25 = arith.constant dense<0.000000e+00> : vector<16x256xf32>
    %36 = tpu.matmul %16, %35, %cst_25 {dimension_numbers = #tpu.dot_dimension_numbers<[1], [0], [0], [1], [0, 0, 1, 1], [], []>} : vector<16x256xbf16>, vector<256x256xbf16>, vector<16x256xf32> -> vector<16x256xf32>
    %37 = arith.truncf %36 : vector<16x256xf32> to vector<16x256xbf16>
    %c2_26 = arith.constant 2 : index
    %c0_27 = arith.constant 0 : index
    %c0_28 = arith.constant 0 : index
    %38 = vector.load %arg5[%c2_26, %c0_27, %c0_28] : memref<9x32x16xbf16, #tpu.memory_space<vmem>>, vector<1x32x16xbf16>
    %39 = vector.shape_cast %38 : vector<1x32x16xbf16> to vector<32x16xbf16>
    %cst_29 = arith.constant dense<0.000000e+00> : vector<32x256xf32>
    %40 = tpu.matmul %39, %37, %cst_29 {dimension_numbers = #tpu.dot_dimension_numbers<[1], [0], [0], [1], [0, 0, 1, 1], [], []>} : vector<32x16xbf16>, vector<16x256xbf16>, vector<32x256xf32> -> vector<32x256xf32>
    %41 = arith.addf %33, %40 : vector<32x256xf32>
    %c3 = arith.constant 3 : index
    %c0_30 = arith.constant 0 : index
    %c0_31 = arith.constant 0 : index
    %42 = vector.load %arg4[%c3, %c0_30, %c0_31] : memref<9x256x256xbf16, #tpu.memory_space<vmem>>, vector<1x256x256xbf16>
    %43 = vector.shape_cast %42 : vector<1x256x256xbf16> to vector<256x256xbf16>
    %cst_32 = arith.constant dense<0.000000e+00> : vector<16x256xf32>
    %44 = tpu.matmul %16, %43, %cst_32 {dimension_numbers = #tpu.dot_dimension_numbers<[1], [0], [0], [1], [0, 0, 1, 1], [], []>} : vector<16x256xbf16>, vector<256x256xbf16>, vector<16x256xf32> -> vector<16x256xf32>
    %45 = arith.truncf %44 : vector<16x256xf32> to vector<16x256xbf16>
    %c3_33 = arith.constant 3 : index
    %c0_34 = arith.constant 0 : index
    %c0_35 = arith.constant 0 : index
    %46 = vector.load %arg5[%c3_33, %c0_34, %c0_35] : memref<9x32x16xbf16, #tpu.memory_space<vmem>>, vector<1x32x16xbf16>
    %47 = vector.shape_cast %46 : vector<1x32x16xbf16> to vector<32x16xbf16>
    %cst_36 = arith.constant dense<0.000000e+00> : vector<32x256xf32>
    %48 = tpu.matmul %47, %45, %cst_36 {dimension_numbers = #tpu.dot_dimension_numbers<[1], [0], [0], [1], [0, 0, 1, 1], [], []>} : vector<32x16xbf16>, vector<16x256xbf16>, vector<32x256xf32> -> vector<32x256xf32>
    %49 = arith.addf %41, %48 : vector<32x256xf32>
    %c4 = arith.constant 4 : index
    %c0_37 = arith.constant 0 : index
    %c0_38 = arith.constant 0 : index
    %50 = vector.load %arg4[%c4, %c0_37, %c0_38] : memref<9x256x256xbf16, #tpu.memory_space<vmem>>, vector<1x256x256xbf16>
    %51 = vector.shape_cast %50 : vector<1x256x256xbf16> to vector<256x256xbf16>
    %cst_39 = arith.constant dense<0.000000e+00> : vector<16x256xf32>
    %52 = tpu.matmul %16, %51, %cst_39 {dimension_numbers = #tpu.dot_dimension_numbers<[1], [0], [0], [1], [0, 0, 1, 1], [], []>} : vector<16x256xbf16>, vector<256x256xbf16>, vector<16x256xf32> -> vector<16x256xf32>
    %53 = arith.truncf %52 : vector<16x256xf32> to vector<16x256xbf16>
    %c4_40 = arith.constant 4 : index
    %c0_41 = arith.constant 0 : index
    %c0_42 = arith.constant 0 : index
    %54 = vector.load %arg5[%c4_40, %c0_41, %c0_42] : memref<9x32x16xbf16, #tpu.memory_space<vmem>>, vector<1x32x16xbf16>
    %55 = vector.shape_cast %54 : vector<1x32x16xbf16> to vector<32x16xbf16>
    %cst_43 = arith.constant dense<0.000000e+00> : vector<32x256xf32>
    %56 = tpu.matmul %55, %53, %cst_43 {dimension_numbers = #tpu.dot_dimension_numbers<[1], [0], [0], [1], [0, 0, 1, 1], [], []>} : vector<32x16xbf16>, vector<16x256xbf16>, vector<32x256xf32> -> vector<32x256xf32>
    %57 = arith.addf %49, %56 : vector<32x256xf32>
    %c5 = arith.constant 5 : index
    %c0_44 = arith.constant 0 : index
    %c0_45 = arith.constant 0 : index
    %58 = vector.load %arg4[%c5, %c0_44, %c0_45] : memref<9x256x256xbf16, #tpu.memory_space<vmem>>, vector<1x256x256xbf16>
    %59 = vector.shape_cast %58 : vector<1x256x256xbf16> to vector<256x256xbf16>
    %cst_46 = arith.constant dense<0.000000e+00> : vector<16x256xf32>
    %60 = tpu.matmul %16, %59, %cst_46 {dimension_numbers = #tpu.dot_dimension_numbers<[1], [0], [0], [1], [0, 0, 1, 1], [], []>} : vector<16x256xbf16>, vector<256x256xbf16>, vector<16x256xf32> -> vector<16x256xf32>
    %61 = arith.truncf %60 : vector<16x256xf32> to vector<16x256xbf16>
    %c5_47 = arith.constant 5 : index
    %c0_48 = arith.constant 0 : index
    %c0_49 = arith.constant 0 : index
    %62 = vector.load %arg5[%c5_47, %c0_48, %c0_49] : memref<9x32x16xbf16, #tpu.memory_space<vmem>>, vector<1x32x16xbf16>
    %63 = vector.shape_cast %62 : vector<1x32x16xbf16> to vector<32x16xbf16>
    %cst_50 = arith.constant dense<0.000000e+00> : vector<32x256xf32>
    %64 = tpu.matmul %63, %61, %cst_50 {dimension_numbers = #tpu.dot_dimension_numbers<[1], [0], [0], [1], [0, 0, 1, 1], [], []>} : vector<32x16xbf16>, vector<16x256xbf16>, vector<32x256xf32> -> vector<32x256xf32>
    %65 = arith.addf %57, %64 : vector<32x256xf32>
    %c6 = arith.constant 6 : index
    %c0_51 = arith.constant 0 : index
    %c0_52 = arith.constant 0 : index
    %66 = vector.load %arg4[%c6, %c0_51, %c0_52] : memref<9x256x256xbf16, #tpu.memory_space<vmem>>, vector<1x256x256xbf16>
    %67 = vector.shape_cast %66 : vector<1x256x256xbf16> to vector<256x256xbf16>
    %cst_53 = arith.constant dense<0.000000e+00> : vector<16x256xf32>
    %68 = tpu.matmul %16, %67, %cst_53 {dimension_numbers = #tpu.dot_dimension_numbers<[1], [0], [0], [1], [0, 0, 1, 1], [], []>} : vector<16x256xbf16>, vector<256x256xbf16>, vector<16x256xf32> -> vector<16x256xf32>
    %69 = arith.truncf %68 : vector<16x256xf32> to vector<16x256xbf16>
    %c6_54 = arith.constant 6 : index
    %c0_55 = arith.constant 0 : index
    %c0_56 = arith.constant 0 : index
    %70 = vector.load %arg5[%c6_54, %c0_55, %c0_56] : memref<9x32x16xbf16, #tpu.memory_space<vmem>>, vector<1x32x16xbf16>
    %71 = vector.shape_cast %70 : vector<1x32x16xbf16> to vector<32x16xbf16>
    %cst_57 = arith.constant dense<0.000000e+00> : vector<32x256xf32>
    %72 = tpu.matmul %71, %69, %cst_57 {dimension_numbers = #tpu.dot_dimension_numbers<[1], [0], [0], [1], [0, 0, 1, 1], [], []>} : vector<32x16xbf16>, vector<16x256xbf16>, vector<32x256xf32> -> vector<32x256xf32>
    %73 = arith.addf %65, %72 : vector<32x256xf32>
    %c7 = arith.constant 7 : index
    %c0_58 = arith.constant 0 : index
    %c0_59 = arith.constant 0 : index
    %74 = vector.load %arg4[%c7, %c0_58, %c0_59] : memref<9x256x256xbf16, #tpu.memory_space<vmem>>, vector<1x256x256xbf16>
    %75 = vector.shape_cast %74 : vector<1x256x256xbf16> to vector<256x256xbf16>
    %cst_60 = arith.constant dense<0.000000e+00> : vector<16x256xf32>
    %76 = tpu.matmul %16, %75, %cst_60 {dimension_numbers = #tpu.dot_dimension_numbers<[1], [0], [0], [1], [0, 0, 1, 1], [], []>} : vector<16x256xbf16>, vector<256x256xbf16>, vector<16x256xf32> -> vector<16x256xf32>
    %77 = arith.truncf %76 : vector<16x256xf32> to vector<16x256xbf16>
    %c7_61 = arith.constant 7 : index
    %c0_62 = arith.constant 0 : index
    %c0_63 = arith.constant 0 : index
    %78 = vector.load %arg5[%c7_61, %c0_62, %c0_63] : memref<9x32x16xbf16, #tpu.memory_space<vmem>>, vector<1x32x16xbf16>
    %79 = vector.shape_cast %78 : vector<1x32x16xbf16> to vector<32x16xbf16>
    %cst_64 = arith.constant dense<0.000000e+00> : vector<32x256xf32>
    %80 = tpu.matmul %79, %77, %cst_64 {dimension_numbers = #tpu.dot_dimension_numbers<[1], [0], [0], [1], [0, 0, 1, 1], [], []>} : vector<32x16xbf16>, vector<16x256xbf16>, vector<32x256xf32> -> vector<32x256xf32>
    %81 = arith.addf %73, %80 : vector<32x256xf32>
    %c8 = arith.constant 8 : index
    %c0_65 = arith.constant 0 : index
    %c0_66 = arith.constant 0 : index
    %82 = vector.load %arg4[%c8, %c0_65, %c0_66] : memref<9x256x256xbf16, #tpu.memory_space<vmem>>, vector<1x256x256xbf16>
    %83 = vector.shape_cast %82 : vector<1x256x256xbf16> to vector<256x256xbf16>
    %cst_67 = arith.constant dense<0.000000e+00> : vector<16x256xf32>
    %84 = tpu.matmul %16, %83, %cst_67 {dimension_numbers = #tpu.dot_dimension_numbers<[1], [0], [0], [1], [0, 0, 1, 1], [], []>} : vector<16x256xbf16>, vector<256x256xbf16>, vector<16x256xf32> -> vector<16x256xf32>
    %85 = arith.truncf %84 : vector<16x256xf32> to vector<16x256xbf16>
    %c8_68 = arith.constant 8 : index
    %c0_69 = arith.constant 0 : index
    %c0_70 = arith.constant 0 : index
    %86 = vector.load %arg5[%c8_68, %c0_69, %c0_70] : memref<9x32x16xbf16, #tpu.memory_space<vmem>>, vector<1x32x16xbf16>
    %87 = vector.shape_cast %86 : vector<1x32x16xbf16> to vector<32x16xbf16>
    %cst_71 = arith.constant dense<0.000000e+00> : vector<32x256xf32>
    %88 = tpu.matmul %87, %85, %cst_71 {dimension_numbers = #tpu.dot_dimension_numbers<[1], [0], [0], [1], [0, 0, 1, 1], [], []>} : vector<32x16xbf16>, vector<16x256xbf16>, vector<32x256xf32> -> vector<32x256xf32>
    %89 = arith.addf %81, %88 : vector<32x256xf32>
    %90 = vector.extract_strided_slice %89 {offsets = [0, 0], sizes = [32, 64], strides = [1, 1]} : vector<32x256xf32> to vector<32x64xf32>
    %91 = vector.extract_strided_slice %89 {offsets = [0, 64], sizes = [32, 64], strides = [1, 1]} : vector<32x256xf32> to vector<32x64xf32>
    %92 = arith.maximumf %90, %91 : vector<32x64xf32>
    %93 = vector.extract_strided_slice %89 {offsets = [0, 128], sizes = [32, 64], strides = [1, 1]} : vector<32x256xf32> to vector<32x64xf32>
    %94 = vector.extract_strided_slice %89 {offsets = [0, 192], sizes = [32, 64], strides = [1, 1]} : vector<32x256xf32> to vector<32x64xf32>
    %95 = arith.maximumf %93, %94 : vector<32x64xf32>
    %96 = arith.maximumf %92, %95 : vector<32x64xf32>
    %c0_72 = arith.constant 0 : index
    %c0_73 = arith.constant 0 : index
    %97 = vector.load %arg6[%c0_72, %c0_73] : memref<32x1xf32, #tpu.memory_space<vmem>>, vector<32x1xf32>
    %98 = vector.broadcast %97 : vector<32x1xf32> to vector<32x64xf32>
    %99 = arith.addf %96, %98 : vector<32x64xf32>
    %cst_74 = arith.constant 0.000000e+00 : f32
    %100 = vector.broadcast %cst_74 : f32 to vector<32x64xf32>
    %101 = arith.maximumf %99, %100 : vector<32x64xf32>
    %102 = arith.truncf %101 : vector<32x64xf32> to vector<32x64xbf16>
    %cst_75 = arith.constant 0.000000e+00 : f32
    %103 = vector.broadcast %cst_75 : f32 to vector<64x64xf32>
    %c0_76 = arith.constant 0 : index
    %c0_77 = arith.constant 0 : index
    %c0_78 = arith.constant 0 : index
    %104 = vector.load %arg7[%c0_76, %c0_77, %c0_78] : memref<9x64x64xbf16, #tpu.memory_space<vmem>>, vector<1x64x64xbf16>
    %105 = vector.shape_cast %104 : vector<1x64x64xbf16> to vector<64x64xbf16>
    %cst_79 = arith.constant dense<0.000000e+00> : vector<32x64xf32>
    %106 = tpu.matmul %102, %105, %cst_79 {dimension_numbers = #tpu.dot_dimension_numbers<[1], [0], [0], [1], [0, 0, 1, 1], [], []>} : vector<32x64xbf16>, vector<64x64xbf16>, vector<32x64xf32> -> vector<32x64xf32>
    %107 = arith.truncf %106 : vector<32x64xf32> to vector<32x64xbf16>
    %c0_80 = arith.constant 0 : index
    %c0_81 = arith.constant 0 : index
    %c0_82 = arith.constant 0 : index
    %108 = vector.load %arg8[%c0_80, %c0_81, %c0_82] : memref<9x64x32xbf16, #tpu.memory_space<vmem>>, vector<1x64x32xbf16>
    %109 = vector.shape_cast %108 : vector<1x64x32xbf16> to vector<64x32xbf16>
    %cst_83 = arith.constant dense<0.000000e+00> : vector<64x64xf32>
    %110 = tpu.matmul %109, %107, %cst_83 {dimension_numbers = #tpu.dot_dimension_numbers<[1], [0], [0], [1], [0, 0, 1, 1], [], []>} : vector<64x32xbf16>, vector<32x64xbf16>, vector<64x64xf32> -> vector<64x64xf32>
    %111 = arith.addf %103, %110 : vector<64x64xf32>
    %c1_84 = arith.constant 1 : index
    %c0_85 = arith.constant 0 : index
    %c0_86 = arith.constant 0 : index
    %112 = vector.load %arg7[%c1_84, %c0_85, %c0_86] : memref<9x64x64xbf16, #tpu.memory_space<vmem>>, vector<1x64x64xbf16>
    %113 = vector.shape_cast %112 : vector<1x64x64xbf16> to vector<64x64xbf16>
    %cst_87 = arith.constant dense<0.000000e+00> : vector<32x64xf32>
    %114 = tpu.matmul %102, %113, %cst_87 {dimension_numbers = #tpu.dot_dimension_numbers<[1], [0], [0], [1], [0, 0, 1, 1], [], []>} : vector<32x64xbf16>, vector<64x64xbf16>, vector<32x64xf32> -> vector<32x64xf32>
    %115 = arith.truncf %114 : vector<32x64xf32> to vector<32x64xbf16>
    %c1_88 = arith.constant 1 : index
    %c0_89 = arith.constant 0 : index
    %c0_90 = arith.constant 0 : index
    %116 = vector.load %arg8[%c1_88, %c0_89, %c0_90] : memref<9x64x32xbf16, #tpu.memory_space<vmem>>, vector<1x64x32xbf16>
    %117 = vector.shape_cast %116 : vector<1x64x32xbf16> to vector<64x32xbf16>
    %cst_91 = arith.constant dense<0.000000e+00> : vector<64x64xf32>
    %118 = tpu.matmul %117, %115, %cst_91 {dimension_numbers = #tpu.dot_dimension_numbers<[1], [0], [0], [1], [0, 0, 1, 1], [], []>} : vector<64x32xbf16>, vector<32x64xbf16>, vector<64x64xf32> -> vector<64x64xf32>
    %119 = arith.addf %111, %118 : vector<64x64xf32>
    %c2_92 = arith.constant 2 : index
    %c0_93 = arith.constant 0 : index
    %c0_94 = arith.constant 0 : index
    %120 = vector.load %arg7[%c2_92, %c0_93, %c0_94] : memref<9x64x64xbf16, #tpu.memory_space<vmem>>, vector<1x64x64xbf16>
    %121 = vector.shape_cast %120 : vector<1x64x64xbf16> to vector<64x64xbf16>
    %cst_95 = arith.constant dense<0.000000e+00> : vector<32x64xf32>
    %122 = tpu.matmul %102, %121, %cst_95 {dimension_numbers = #tpu.dot_dimension_numbers<[1], [0], [0], [1], [0, 0, 1, 1], [], []>} : vector<32x64xbf16>, vector<64x64xbf16>, vector<32x64xf32> -> vector<32x64xf32>
    %123 = arith.truncf %122 : vector<32x64xf32> to vector<32x64xbf16>
    %c2_96 = arith.constant 2 : index
    %c0_97 = arith.constant 0 : index
    %c0_98 = arith.constant 0 : index
    %124 = vector.load %arg8[%c2_96, %c0_97, %c0_98] : memref<9x64x32xbf16, #tpu.memory_space<vmem>>, vector<1x64x32xbf16>
    %125 = vector.shape_cast %124 : vector<1x64x32xbf16> to vector<64x32xbf16>
    %cst_99 = arith.constant dense<0.000000e+00> : vector<64x64xf32>
    %126 = tpu.matmul %125, %123, %cst_99 {dimension_numbers = #tpu.dot_dimension_numbers<[1], [0], [0], [1], [0, 0, 1, 1], [], []>} : vector<64x32xbf16>, vector<32x64xbf16>, vector<64x64xf32> -> vector<64x64xf32>
    %127 = arith.addf %119, %126 : vector<64x64xf32>
    %c3_100 = arith.constant 3 : index
    %c0_101 = arith.constant 0 : index
    %c0_102 = arith.constant 0 : index
    %128 = vector.load %arg7[%c3_100, %c0_101, %c0_102] : memref<9x64x64xbf16, #tpu.memory_space<vmem>>, vector<1x64x64xbf16>
    %129 = vector.shape_cast %128 : vector<1x64x64xbf16> to vector<64x64xbf16>
    %cst_103 = arith.constant dense<0.000000e+00> : vector<32x64xf32>
    %130 = tpu.matmul %102, %129, %cst_103 {dimension_numbers = #tpu.dot_dimension_numbers<[1], [0], [0], [1], [0, 0, 1, 1], [], []>} : vector<32x64xbf16>, vector<64x64xbf16>, vector<32x64xf32> -> vector<32x64xf32>
    %131 = arith.truncf %130 : vector<32x64xf32> to vector<32x64xbf16>
    %c3_104 = arith.constant 3 : index
    %c0_105 = arith.constant 0 : index
    %c0_106 = arith.constant 0 : index
    %132 = vector.load %arg8[%c3_104, %c0_105, %c0_106] : memref<9x64x32xbf16, #tpu.memory_space<vmem>>, vector<1x64x32xbf16>
    %133 = vector.shape_cast %132 : vector<1x64x32xbf16> to vector<64x32xbf16>
    %cst_107 = arith.constant dense<0.000000e+00> : vector<64x64xf32>
    %134 = tpu.matmul %133, %131, %cst_107 {dimension_numbers = #tpu.dot_dimension_numbers<[1], [0], [0], [1], [0, 0, 1, 1], [], []>} : vector<64x32xbf16>, vector<32x64xbf16>, vector<64x64xf32> -> vector<64x64xf32>
    %135 = arith.addf %127, %134 : vector<64x64xf32>
    %c4_108 = arith.constant 4 : index
    %c0_109 = arith.constant 0 : index
    %c0_110 = arith.constant 0 : index
    %136 = vector.load %arg7[%c4_108, %c0_109, %c0_110] : memref<9x64x64xbf16, #tpu.memory_space<vmem>>, vector<1x64x64xbf16>
    %137 = vector.shape_cast %136 : vector<1x64x64xbf16> to vector<64x64xbf16>
    %cst_111 = arith.constant dense<0.000000e+00> : vector<32x64xf32>
    %138 = tpu.matmul %102, %137, %cst_111 {dimension_numbers = #tpu.dot_dimension_numbers<[1], [0], [0], [1], [0, 0, 1, 1], [], []>} : vector<32x64xbf16>, vector<64x64xbf16>, vector<32x64xf32> -> vector<32x64xf32>
    %139 = arith.truncf %138 : vector<32x64xf32> to vector<32x64xbf16>
    %c4_112 = arith.constant 4 : index
    %c0_113 = arith.constant 0 : index
    %c0_114 = arith.constant 0 : index
    %140 = vector.load %arg8[%c4_112, %c0_113, %c0_114] : memref<9x64x32xbf16, #tpu.memory_space<vmem>>, vector<1x64x32xbf16>
    %141 = vector.shape_cast %140 : vector<1x64x32xbf16> to vector<64x32xbf16>
    %cst_115 = arith.constant dense<0.000000e+00> : vector<64x64xf32>
    %142 = tpu.matmul %141, %139, %cst_115 {dimension_numbers = #tpu.dot_dimension_numbers<[1], [0], [0], [1], [0, 0, 1, 1], [], []>} : vector<64x32xbf16>, vector<32x64xbf16>, vector<64x64xf32> -> vector<64x64xf32>
    %143 = arith.addf %135, %142 : vector<64x64xf32>
    %c5_116 = arith.constant 5 : index
    %c0_117 = arith.constant 0 : index
    %c0_118 = arith.constant 0 : index
    %144 = vector.load %arg7[%c5_116, %c0_117, %c0_118] : memref<9x64x64xbf16, #tpu.memory_space<vmem>>, vector<1x64x64xbf16>
    %145 = vector.shape_cast %144 : vector<1x64x64xbf16> to vector<64x64xbf16>
    %cst_119 = arith.constant dense<0.000000e+00> : vector<32x64xf32>
    %146 = tpu.matmul %102, %145, %cst_119 {dimension_numbers = #tpu.dot_dimension_numbers<[1], [0], [0], [1], [0, 0, 1, 1], [], []>} : vector<32x64xbf16>, vector<64x64xbf16>, vector<32x64xf32> -> vector<32x64xf32>
    %147 = arith.truncf %146 : vector<32x64xf32> to vector<32x64xbf16>
    %c5_120 = arith.constant 5 : index
    %c0_121 = arith.constant 0 : index
    %c0_122 = arith.constant 0 : index
    %148 = vector.load %arg8[%c5_120, %c0_121, %c0_122] : memref<9x64x32xbf16, #tpu.memory_space<vmem>>, vector<1x64x32xbf16>
    %149 = vector.shape_cast %148 : vector<1x64x32xbf16> to vector<64x32xbf16>
    %cst_123 = arith.constant dense<0.000000e+00> : vector<64x64xf32>
    %150 = tpu.matmul %149, %147, %cst_123 {dimension_numbers = #tpu.dot_dimension_numbers<[1], [0], [0], [1], [0, 0, 1, 1], [], []>} : vector<64x32xbf16>, vector<32x64xbf16>, vector<64x64xf32> -> vector<64x64xf32>
    %151 = arith.addf %143, %150 : vector<64x64xf32>
    %c6_124 = arith.constant 6 : index
    %c0_125 = arith.constant 0 : index
    %c0_126 = arith.constant 0 : index
    %152 = vector.load %arg7[%c6_124, %c0_125, %c0_126] : memref<9x64x64xbf16, #tpu.memory_space<vmem>>, vector<1x64x64xbf16>
    %153 = vector.shape_cast %152 : vector<1x64x64xbf16> to vector<64x64xbf16>
    %cst_127 = arith.constant dense<0.000000e+00> : vector<32x64xf32>
    %154 = tpu.matmul %102, %153, %cst_127 {dimension_numbers = #tpu.dot_dimension_numbers<[1], [0], [0], [1], [0, 0, 1, 1], [], []>} : vector<32x64xbf16>, vector<64x64xbf16>, vector<32x64xf32> -> vector<32x64xf32>
    %155 = arith.truncf %154 : vector<32x64xf32> to vector<32x64xbf16>
    %c6_128 = arith.constant 6 : index
    %c0_129 = arith.constant 0 : index
    %c0_130 = arith.constant 0 : index
    %156 = vector.load %arg8[%c6_128, %c0_129, %c0_130] : memref<9x64x32xbf16, #tpu.memory_space<vmem>>, vector<1x64x32xbf16>
    %157 = vector.shape_cast %156 : vector<1x64x32xbf16> to vector<64x32xbf16>
    %cst_131 = arith.constant dense<0.000000e+00> : vector<64x64xf32>
    %158 = tpu.matmul %157, %155, %cst_131 {dimension_numbers = #tpu.dot_dimension_numbers<[1], [0], [0], [1], [0, 0, 1, 1], [], []>} : vector<64x32xbf16>, vector<32x64xbf16>, vector<64x64xf32> -> vector<64x64xf32>
    %159 = arith.addf %151, %158 : vector<64x64xf32>
    %c7_132 = arith.constant 7 : index
    %c0_133 = arith.constant 0 : index
    %c0_134 = arith.constant 0 : index
    %160 = vector.load %arg7[%c7_132, %c0_133, %c0_134] : memref<9x64x64xbf16, #tpu.memory_space<vmem>>, vector<1x64x64xbf16>
    %161 = vector.shape_cast %160 : vector<1x64x64xbf16> to vector<64x64xbf16>
    %cst_135 = arith.constant dense<0.000000e+00> : vector<32x64xf32>
    %162 = tpu.matmul %102, %161, %cst_135 {dimension_numbers = #tpu.dot_dimension_numbers<[1], [0], [0], [1], [0, 0, 1, 1], [], []>} : vector<32x64xbf16>, vector<64x64xbf16>, vector<32x64xf32> -> vector<32x64xf32>
    %163 = arith.truncf %162 : vector<32x64xf32> to vector<32x64xbf16>
    %c7_136 = arith.constant 7 : index
    %c0_137 = arith.constant 0 : index
    %c0_138 = arith.constant 0 : index
    %164 = vector.load %arg8[%c7_136, %c0_137, %c0_138] : memref<9x64x32xbf16, #tpu.memory_space<vmem>>, vector<1x64x32xbf16>
    %165 = vector.shape_cast %164 : vector<1x64x32xbf16> to vector<64x32xbf16>
    %cst_139 = arith.constant dense<0.000000e+00> : vector<64x64xf32>
    %166 = tpu.matmul %165, %163, %cst_139 {dimension_numbers = #tpu.dot_dimension_numbers<[1], [0], [0], [1], [0, 0, 1, 1], [], []>} : vector<64x32xbf16>, vector<32x64xbf16>, vector<64x64xf32> -> vector<64x64xf32>
    %167 = arith.addf %159, %166 : vector<64x64xf32>
    %c8_140 = arith.constant 8 : index
    %c0_141 = arith.constant 0 : index
    %c0_142 = arith.constant 0 : index
    %168 = vector.load %arg7[%c8_140, %c0_141, %c0_142] : memref<9x64x64xbf16, #tpu.memory_space<vmem>>, vector<1x64x64xbf16>
    %169 = vector.shape_cast %168 : vector<1x64x64xbf16> to vector<64x64xbf16>
    %cst_143 = arith.constant dense<0.000000e+00> : vector<32x64xf32>
    %170 = tpu.matmul %102, %169, %cst_143 {dimension_numbers = #tpu.dot_dimension_numbers<[1], [0], [0], [1], [0, 0, 1, 1], [], []>} : vector<32x64xbf16>, vector<64x64xbf16>, vector<32x64xf32> -> vector<32x64xf32>
    %171 = arith.truncf %170 : vector<32x64xf32> to vector<32x64xbf16>
    %c8_144 = arith.constant 8 : index
    %c0_145 = arith.constant 0 : index
    %c0_146 = arith.constant 0 : index
    %172 = vector.load %arg8[%c8_144, %c0_145, %c0_146] : memref<9x64x32xbf16, #tpu.memory_space<vmem>>, vector<1x64x32xbf16>
    %173 = vector.shape_cast %172 : vector<1x64x32xbf16> to vector<64x32xbf16>
    %cst_147 = arith.constant dense<0.000000e+00> : vector<64x64xf32>
    %174 = tpu.matmul %173, %171, %cst_147 {dimension_numbers = #tpu.dot_dimension_numbers<[1], [0], [0], [1], [0, 0, 1, 1], [], []>} : vector<64x32xbf16>, vector<32x64xbf16>, vector<64x64xf32> -> vector<64x64xf32>
    %175 = arith.addf %167, %174 : vector<64x64xf32>
    %176 = vector.extract_strided_slice %175 {offsets = [0, 0], sizes = [64, 16], strides = [1, 1]} : vector<64x64xf32> to vector<64x16xf32>
    %177 = vector.extract_strided_slice %175 {offsets = [0, 16], sizes = [64, 16], strides = [1, 1]} : vector<64x64xf32> to vector<64x16xf32>
    %178 = arith.maximumf %176, %177 : vector<64x16xf32>
    %179 = vector.extract_strided_slice %175 {offsets = [0, 32], sizes = [64, 16], strides = [1, 1]} : vector<64x64xf32> to vector<64x16xf32>
    %180 = vector.extract_strided_slice %175 {offsets = [0, 48], sizes = [64, 16], strides = [1, 1]} : vector<64x64xf32> to vector<64x16xf32>
    %181 = arith.maximumf %179, %180 : vector<64x16xf32>
    %182 = arith.maximumf %178, %181 : vector<64x16xf32>
    %183 = tpu.transpose %182, [1, 0] : vector<64x16xf32> -> vector<16x64xf32>
    %c0_148 = arith.constant 0 : index
    %c0_149 = arith.constant 0 : index
    %184 = vector.load %arg9[%c0_148, %c0_149] : memref<1x64xf32, #tpu.memory_space<vmem>>, vector<1x64xf32>
    %185 = vector.broadcast %184 : vector<1x64xf32> to vector<16x64xf32>
    %186 = arith.addf %183, %185 : vector<16x64xf32>
    %cst_150 = arith.constant 0.000000e+00 : f32
    %187 = vector.broadcast %cst_150 : f32 to vector<16x64xf32>
    %188 = arith.maximumf %186, %187 : vector<16x64xf32>
    %189 = vector.extract_strided_slice %188 {offsets = [0, 0], sizes = [1, 64], strides = [1, 1]} : vector<16x64xf32> to vector<1x64xf32>
    %190 = vector.shape_cast %189 : vector<1x64xf32> to vector<64xf32>
    %c0_151 = arith.constant 0 : index
    %c0_152 = arith.constant 0 : index
    %191 = vector.load %arg15[%c0_151, %c0_152] : memref<1x1024xf32, #tpu.memory_space<vmem>>, vector<1x64xf32>
    %192 = vector.shape_cast %191 : vector<1x64xf32> to vector<64xf32>
    %193 = vector.shape_cast %190 : vector<64xf32> to vector<1x64xf32>
    tpu.vector_store %arg15[%c0_151, %c0_152], %193 {strides = array<i32>} : memref<1x1024xf32, #tpu.memory_space<vmem>>, vector<1x64xf32>,
    %194 = vector.extract_strided_slice %188 {offsets = [1, 0], sizes = [1, 64], strides = [1, 1]} : vector<16x64xf32> to vector<1x64xf32>
    %195 = vector.shape_cast %194 : vector<1x64xf32> to vector<64xf32>
    %c0_153 = arith.constant 0 : index
    %c64 = arith.constant 64 : index
    %196 = vector.load %arg15[%c0_153, %c64] : memref<1x1024xf32, #tpu.memory_space<vmem>>, vector<1x64xf32>
    %197 = vector.shape_cast %196 : vector<1x64xf32> to vector<64xf32>
    %198 = vector.shape_cast %195 : vector<64xf32> to vector<1x64xf32>
    tpu.vector_store %arg15[%c0_153, %c64], %198 {strides = array<i32>} : memref<1x1024xf32, #tpu.memory_space<vmem>>, vector<1x64xf32>,
    %199 = vector.extract_strided_slice %188 {offsets = [2, 0], sizes = [1, 64], strides = [1, 1]} : vector<16x64xf32> to vector<1x64xf32>
    %200 = vector.shape_cast %199 : vector<1x64xf32> to vector<64xf32>
    %c0_154 = arith.constant 0 : index
    %c128 = arith.constant 128 : index
    %201 = vector.load %arg15[%c0_154, %c128] : memref<1x1024xf32, #tpu.memory_space<vmem>>, vector<1x64xf32>
    %202 = vector.shape_cast %201 : vector<1x64xf32> to vector<64xf32>
    %203 = vector.shape_cast %200 : vector<64xf32> to vector<1x64xf32>
    tpu.vector_store %arg15[%c0_154, %c128], %203 {strides = array<i32>} : memref<1x1024xf32, #tpu.memory_space<vmem>>, vector<1x64xf32>,
    %204 = vector.extract_strided_slice %188 {offsets = [3, 0], sizes = [1, 64], strides = [1, 1]} : vector<16x64xf32> to vector<1x64xf32>
    %205 = vector.shape_cast %204 : vector<1x64xf32> to vector<64xf32>
    %c0_155 = arith.constant 0 : index
    %c192 = arith.constant 192 : index
    %206 = vector.load %arg15[%c0_155, %c192] : memref<1x1024xf32, #tpu.memory_space<vmem>>, vector<1x64xf32>
    %207 = vector.shape_cast %206 : vector<1x64xf32> to vector<64xf32>
    %208 = vector.shape_cast %205 : vector<64xf32> to vector<1x64xf32>
    tpu.vector_store %arg15[%c0_155, %c192], %208 {strides = array<i32>} : memref<1x1024xf32, #tpu.memory_space<vmem>>, vector<1x64xf32>,
    %209 = vector.extract_strided_slice %188 {offsets = [4, 0], sizes = [1, 64], strides = [1, 1]} : vector<16x64xf32> to vector<1x64xf32>
    %210 = vector.shape_cast %209 : vector<1x64xf32> to vector<64xf32>
    %c0_156 = arith.constant 0 : index
    %c256 = arith.constant 256 : index
    %211 = vector.load %arg15[%c0_156, %c256] : memref<1x1024xf32, #tpu.memory_space<vmem>>, vector<1x64xf32>
    %212 = vector.shape_cast %211 : vector<1x64xf32> to vector<64xf32>
    %213 = vector.shape_cast %210 : vector<64xf32> to vector<1x64xf32>
    tpu.vector_store %arg15[%c0_156, %c256], %213 {strides = array<i32>} : memref<1x1024xf32, #tpu.memory_space<vmem>>, vector<1x64xf32>,
    %214 = vector.extract_strided_slice %188 {offsets = [5, 0], sizes = [1, 64], strides = [1, 1]} : vector<16x64xf32> to vector<1x64xf32>
    %215 = vector.shape_cast %214 : vector<1x64xf32> to vector<64xf32>
    %c0_157 = arith.constant 0 : index
    %c320 = arith.constant 320 : index
    %216 = vector.load %arg15[%c0_157, %c320] : memref<1x1024xf32, #tpu.memory_space<vmem>>, vector<1x64xf32>
    %217 = vector.shape_cast %216 : vector<1x64xf32> to vector<64xf32>
    %218 = vector.shape_cast %215 : vector<64xf32> to vector<1x64xf32>
    tpu.vector_store %arg15[%c0_157, %c320], %218 {strides = array<i32>} : memref<1x1024xf32, #tpu.memory_space<vmem>>, vector<1x64xf32>,
    %219 = vector.extract_strided_slice %188 {offsets = [6, 0], sizes = [1, 64], strides = [1, 1]} : vector<16x64xf32> to vector<1x64xf32>
    %220 = vector.shape_cast %219 : vector<1x64xf32> to vector<64xf32>
    %c0_158 = arith.constant 0 : index
    %c384 = arith.constant 384 : index
    %221 = vector.load %arg15[%c0_158, %c384] : memref<1x1024xf32, #tpu.memory_space<vmem>>, vector<1x64xf32>
    %222 = vector.shape_cast %221 : vector<1x64xf32> to vector<64xf32>
    %223 = vector.shape_cast %220 : vector<64xf32> to vector<1x64xf32>
    tpu.vector_store %arg15[%c0_158, %c384], %223 {strides = array<i32>} : memref<1x1024xf32, #tpu.memory_space<vmem>>, vector<1x64xf32>,
    %224 = vector.extract_strided_slice %188 {offsets = [7, 0], sizes = [1, 64], strides = [1, 1]} : vector<16x64xf32> to vector<1x64xf32>
    %225 = vector.shape_cast %224 : vector<1x64xf32> to vector<64xf32>
    %c0_159 = arith.constant 0 : index
    %c448 = arith.constant 448 : index
    %226 = vector.load %arg15[%c0_159, %c448] : memref<1x1024xf32, #tpu.memory_space<vmem>>, vector<1x64xf32>
    %227 = vector.shape_cast %226 : vector<1x64xf32> to vector<64xf32>
    %228 = vector.shape_cast %225 : vector<64xf32> to vector<1x64xf32>
    tpu.vector_store %arg15[%c0_159, %c448], %228 {strides = array<i32>} : memref<1x1024xf32, #tpu.memory_space<vmem>>, vector<1x64xf32>,
    %229 = vector.extract_strided_slice %188 {offsets = [8, 0], sizes = [1, 64], strides = [1, 1]} : vector<16x64xf32> to vector<1x64xf32>
    %230 = vector.shape_cast %229 : vector<1x64xf32> to vector<64xf32>
    %c0_160 = arith.constant 0 : index
    %c512 = arith.constant 512 : index
    %231 = vector.load %arg15[%c0_160, %c512] : memref<1x1024xf32, #tpu.memory_space<vmem>>, vector<1x64xf32>
    %232 = vector.shape_cast %231 : vector<1x64xf32> to vector<64xf32>
    %233 = vector.shape_cast %230 : vector<64xf32> to vector<1x64xf32>
    tpu.vector_store %arg15[%c0_160, %c512], %233 {strides = array<i32>} : memref<1x1024xf32, #tpu.memory_space<vmem>>, vector<1x64xf32>,
    %234 = vector.extract_strided_slice %188 {offsets = [9, 0], sizes = [1, 64], strides = [1, 1]} : vector<16x64xf32> to vector<1x64xf32>
    %235 = vector.shape_cast %234 : vector<1x64xf32> to vector<64xf32>
    %c0_161 = arith.constant 0 : index
    %c576 = arith.constant 576 : index
    %236 = vector.load %arg15[%c0_161, %c576] : memref<1x1024xf32, #tpu.memory_space<vmem>>, vector<1x64xf32>
    %237 = vector.shape_cast %236 : vector<1x64xf32> to vector<64xf32>
    %238 = vector.shape_cast %235 : vector<64xf32> to vector<1x64xf32>
    tpu.vector_store %arg15[%c0_161, %c576], %238 {strides = array<i32>} : memref<1x1024xf32, #tpu.memory_space<vmem>>, vector<1x64xf32>,
    %239 = vector.extract_strided_slice %188 {offsets = [10, 0], sizes = [1, 64], strides = [1, 1]} : vector<16x64xf32> to vector<1x64xf32>
    %240 = vector.shape_cast %239 : vector<1x64xf32> to vector<64xf32>
    %c0_162 = arith.constant 0 : index
    %c640 = arith.constant 640 : index
    %241 = vector.load %arg15[%c0_162, %c640] : memref<1x1024xf32, #tpu.memory_space<vmem>>, vector<1x64xf32>
    %242 = vector.shape_cast %241 : vector<1x64xf32> to vector<64xf32>
    %243 = vector.shape_cast %240 : vector<64xf32> to vector<1x64xf32>
    tpu.vector_store %arg15[%c0_162, %c640], %243 {strides = array<i32>} : memref<1x1024xf32, #tpu.memory_space<vmem>>, vector<1x64xf32>,
    %244 = vector.extract_strided_slice %188 {offsets = [11, 0], sizes = [1, 64], strides = [1, 1]} : vector<16x64xf32> to vector<1x64xf32>
    %245 = vector.shape_cast %244 : vector<1x64xf32> to vector<64xf32>
    %c0_163 = arith.constant 0 : index
    %c704 = arith.constant 704 : index
    %246 = vector.load %arg15[%c0_163, %c704] : memref<1x1024xf32, #tpu.memory_space<vmem>>, vector<1x64xf32>
    %247 = vector.shape_cast %246 : vector<1x64xf32> to vector<64xf32>
    %248 = vector.shape_cast %245 : vector<64xf32> to vector<1x64xf32>
    tpu.vector_store %arg15[%c0_163, %c704], %248 {strides = array<i32>} : memref<1x1024xf32, #tpu.memory_space<vmem>>, vector<1x64xf32>,
    %249 = vector.extract_strided_slice %188 {offsets = [12, 0], sizes = [1, 64], strides = [1, 1]} : vector<16x64xf32> to vector<1x64xf32>
    %250 = vector.shape_cast %249 : vector<1x64xf32> to vector<64xf32>
    %c0_164 = arith.constant 0 : index
    %c768 = arith.constant 768 : index
    %251 = vector.load %arg15[%c0_164, %c768] : memref<1x1024xf32, #tpu.memory_space<vmem>>, vector<1x64xf32>
    %252 = vector.shape_cast %251 : vector<1x64xf32> to vector<64xf32>
    %253 = vector.shape_cast %250 : vector<64xf32> to vector<1x64xf32>
    tpu.vector_store %arg15[%c0_164, %c768], %253 {strides = array<i32>} : memref<1x1024xf32, #tpu.memory_space<vmem>>, vector<1x64xf32>,
    %254 = vector.extract_strided_slice %188 {offsets = [13, 0], sizes = [1, 64], strides = [1, 1]} : vector<16x64xf32> to vector<1x64xf32>
    %255 = vector.shape_cast %254 : vector<1x64xf32> to vector<64xf32>
    %c0_165 = arith.constant 0 : index
    %c832 = arith.constant 832 : index
    %256 = vector.load %arg15[%c0_165, %c832] : memref<1x1024xf32, #tpu.memory_space<vmem>>, vector<1x64xf32>
    %257 = vector.shape_cast %256 : vector<1x64xf32> to vector<64xf32>
    %258 = vector.shape_cast %255 : vector<64xf32> to vector<1x64xf32>
    tpu.vector_store %arg15[%c0_165, %c832], %258 {strides = array<i32>} : memref<1x1024xf32, #tpu.memory_space<vmem>>, vector<1x64xf32>,
    %259 = vector.extract_strided_slice %188 {offsets = [14, 0], sizes = [1, 64], strides = [1, 1]} : vector<16x64xf32> to vector<1x64xf32>
    %260 = vector.shape_cast %259 : vector<1x64xf32> to vector<64xf32>
    %c0_166 = arith.constant 0 : index
    %c896 = arith.constant 896 : index
    %261 = vector.load %arg15[%c0_166, %c896] : memref<1x1024xf32, #tpu.memory_space<vmem>>, vector<1x64xf32>
    %262 = vector.shape_cast %261 : vector<1x64xf32> to vector<64xf32>
    %263 = vector.shape_cast %260 : vector<64xf32> to vector<1x64xf32>
    tpu.vector_store %arg15[%c0_166, %c896], %263 {strides = array<i32>} : memref<1x1024xf32, #tpu.memory_space<vmem>>, vector<1x64xf32>,
    %264 = vector.extract_strided_slice %188 {offsets = [15, 0], sizes = [1, 64], strides = [1, 1]} : vector<16x64xf32> to vector<1x64xf32>
    %265 = vector.shape_cast %264 : vector<1x64xf32> to vector<64xf32>
    %c0_167 = arith.constant 0 : index
    %c960 = arith.constant 960 : index
    %266 = vector.load %arg15[%c0_167, %c960] : memref<1x1024xf32, #tpu.memory_space<vmem>>, vector<1x64xf32>
    %267 = vector.shape_cast %266 : vector<1x64xf32> to vector<64xf32>
    %268 = vector.shape_cast %265 : vector<64xf32> to vector<1x64xf32>
    tpu.vector_store %arg15[%c0_167, %c960], %268 {strides = array<i32>} : memref<1x1024xf32, #tpu.memory_space<vmem>>, vector<1x64xf32>,
    %c0_168 = arith.constant 0 : index
    %c0_169 = arith.constant 0 : index
    %269 = vector.load %arg15[%c0_168, %c0_169] : memref<1x1024xf32, #tpu.memory_space<vmem>>, vector<1x1024xf32>
    %270 = arith.truncf %269 : vector<1x1024xf32> to vector<1x1024xbf16>
    %c0_170 = arith.constant 0 : index
    %c0_171 = arith.constant 0 : index
    %271 = vector.load %arg10[%c0_170, %c0_171] : memref<1024x512xbf16, #tpu.memory_space<vmem>>, vector<1024x512xbf16>
    %cst_172 = arith.constant dense<0.000000e+00> : vector<1x512xf32>
    %272 = tpu.matmul %270, %271, %cst_172 {dimension_numbers = #tpu.dot_dimension_numbers<[1], [0], [0], [1], [0, 0, 1, 1], [], []>} : vector<1x1024xbf16>, vector<1024x512xbf16>, vector<1x512xf32> -> vector<1x512xf32>
    %c0_173 = arith.constant 0 : index
    %c0_174 = arith.constant 0 : index
    %273 = vector.load %arg11[%c0_173, %c0_174] : memref<1x512xf32, #tpu.memory_space<vmem>>, vector<1x512xf32>
    %274 = arith.addf %272, %273 : vector<1x512xf32>
    %cst_175 = arith.constant 0.000000e+00 : f32
    %275 = vector.broadcast %cst_175 : f32 to vector<1x512xf32>
    %276 = arith.maximumf %274, %275 : vector<1x512xf32>
    %277 = arith.truncf %276 : vector<1x512xf32> to vector<1x512xbf16>
    %c0_176 = arith.constant 0 : index
    %c0_177 = arith.constant 0 : index
    %278 = vector.load %arg12[%c0_176, %c0_177] : memref<512x128xbf16, #tpu.memory_space<vmem>>, vector<512x128xbf16>
    %cst_178 = arith.constant dense<0.000000e+00> : vector<1x128xf32>
    %279 = tpu.matmul %277, %278, %cst_178 {dimension_numbers = #tpu.dot_dimension_numbers<[1], [0], [0], [1], [0, 0, 1, 1], [], []>} : vector<1x512xbf16>, vector<512x128xbf16>, vector<1x128xf32> -> vector<1x128xf32>
    %c0_179 = arith.constant 0 : index
    %c0_180 = arith.constant 0 : index
    %280 = vector.load %arg13[%c0_179, %c0_180] : memref<1x128xf32, #tpu.memory_space<vmem>>, vector<1x128xf32>
    %281 = arith.addf %279, %280 : vector<1x128xf32>
    %c0_181 = arith.constant 0 : index
    %c0_182 = arith.constant 0 : index
    %c0_183 = arith.constant 0 : index
    %282 = vector.load %arg14[%c0_181, %c0_182, %c0_183] : memref<1x1x128xf32, #tpu.memory_space<vmem>>, vector<1x1x128xf32>
    %283 = vector.shape_cast %282 : vector<1x1x128xf32> to vector<1x128xf32>
    %284 = vector.shape_cast %281 : vector<1x128xf32> to vector<1x1x128xf32>
    tpu.vector_store %arg14[%c0_181, %c0_182, %c0_183], %284 {strides = array<i32>} : memref<1x1x128xf32, #tpu.memory_space<vmem>>, vector<1x1x128xf32>,
    return
  }
  func.func @transform_0(%arg0: i32) -> (i32, i32, i32) {
    %c0_i32 = arith.constant 0 : i32
    %c0_i32_0 = arith.constant 0 : i32
    %c0_i32_1 = arith.constant 0 : i32
    return %arg0, %c0_i32, %c0_i32_0 : i32, i32, i32
  }
  func.func @transform_1(%arg0: i32) -> (i32, i32) {
    %c0_i32 = arith.constant 0 : i32
    %c0_i32_0 = arith.constant 0 : i32
    %c0_i32_1 = arith.constant 0 : i32
    return %c0_i32, %c0_i32_0 : i32, i32
  }
  func.func @transform_2(%arg0: i32) -> (i32, i32) {
    %c0_i32 = arith.constant 0 : i32
    %c0_i32_0 = arith.constant 0 : i32
    %c0_i32_1 = arith.constant 0 : i32
    return %c0_i32, %c0_i32_0 : i32, i32
  }
  func.func @transform_3(%arg0: i32) -> (i32, i32, i32) {
    %c0_i32 = arith.constant 0 : i32
    %c0_i32_0 = arith.constant 0 : i32
    %c0_i32_1 = arith.constant 0 : i32
    %c0_i32_2 = arith.constant 0 : i32
    return %c0_i32, %c0_i32_0, %c0_i32_1 : i32, i32, i32
  }
  func.func @transform_4(%arg0: i32) -> (i32, i32, i32) {
    %c0_i32 = arith.constant 0 : i32
    %c0_i32_0 = arith.constant 0 : i32
    %c0_i32_1 = arith.constant 0 : i32
    %c0_i32_2 = arith.constant 0 : i32
    return %c0_i32, %c0_i32_0, %c0_i32_1 : i32, i32, i32
  }
  func.func @transform_5(%arg0: i32) -> (i32, i32) {
    %c0_i32 = arith.constant 0 : i32
    %c0_i32_0 = arith.constant 0 : i32
    %c0_i32_1 = arith.constant 0 : i32
    return %c0_i32, %c0_i32_0 : i32, i32
  }
  func.func @transform_6(%arg0: i32) -> (i32, i32, i32) {
    %c0_i32 = arith.constant 0 : i32
    %c0_i32_0 = arith.constant 0 : i32
    %c0_i32_1 = arith.constant 0 : i32
    %c0_i32_2 = arith.constant 0 : i32
    return %c0_i32, %c0_i32_0, %c0_i32_1 : i32, i32, i32
  }
  func.func @transform_7(%arg0: i32) -> (i32, i32, i32) {
    %c0_i32 = arith.constant 0 : i32
    %c0_i32_0 = arith.constant 0 : i32
    %c0_i32_1 = arith.constant 0 : i32
    %c0_i32_2 = arith.constant 0 : i32
    return %c0_i32, %c0_i32_0, %c0_i32_1 : i32, i32, i32
  }
  func.func @transform_8(%arg0: i32) -> (i32, i32) {
    %c0_i32 = arith.constant 0 : i32
    %c0_i32_0 = arith.constant 0 : i32
    %c0_i32_1 = arith.constant 0 : i32
    return %c0_i32, %c0_i32_0 : i32, i32
  }
  func.func @transform_9(%arg0: i32) -> (i32, i32) {
    %c0_i32 = arith.constant 0 : i32
    %c0_i32_0 = arith.constant 0 : i32
    %c0_i32_1 = arith.constant 0 : i32
    return %c0_i32, %c0_i32_0 : i32, i32
  }
  func.func @transform_10(%arg0: i32) -> (i32, i32) {
    %c0_i32 = arith.constant 0 : i32
    %c0_i32_0 = arith.constant 0 : i32
    %c0_i32_1 = arith.constant 0 : i32
    return %c0_i32, %c0_i32_0 : i32, i32
  }
  func.func @transform_11(%arg0: i32) -> (i32, i32) {
    %c0_i32 = arith.constant 0 : i32
    %c0_i32_0 = arith.constant 0 : i32
    %c0_i32_1 = arith.constant 0 : i32
    return %c0_i32, %c0_i32_0 : i32, i32
  }
  func.func @transform_12(%arg0: i32) -> (i32, i32) {
    %c0_i32 = arith.constant 0 : i32
    %c0_i32_0 = arith.constant 0 : i32
    %c0_i32_1 = arith.constant 0 : i32
    return %c0_i32, %c0_i32_0 : i32, i32
  }
  func.func @transform_13(%arg0: i32) -> (i32, i32, i32) {
    %c0_i32 = arith.constant 0 : i32
    %c0_i32_0 = arith.constant 0 : i32
    %c0_i32_1 = arith.constant 0 : i32
    return %arg0, %c0_i32, %c0_i32_0 : i32, i32, i32
  }
}

</mosaic_0001>

<llo_original>
// kernel: mynet_forward.1
$region0: #{mynet_forward.1}
  #allocation0 [shape = 'u32[]', space=smem, size = 0x4, offset = 0x4, fixed_abs, tag = 'smem constant byte address 0x4 - core index']
  #allocation1 [shape = 'u32[144,128]{1,0:T(1,128)}', space=vmem, size = 0x12000, scoped, tag = 'internal scratch']
  #allocation2 [shape = 'f32[1,1024]{1,0:T(1,128)}', space=vmem, size = 0x1000, scoped, tag = 'scratch operand']
  %s0 = inlined_call_operand.vmem [shape: bf16[2,27,1024], index: 0, kind: input, shape index: {}]
  %s1 = inlined_call_operand.vmem [shape: bf16[16,27], index: 1, kind: input, shape index: {}]
  %s2 = inlined_call_operand.vmem [shape: f32[16,1], index: 2, kind: input, shape index: {}]
  %s3 = inlined_call_operand.vmem [shape: bf16[9,256,256], index: 3, kind: input, shape index: {}]
  %s4 = inlined_call_operand.vmem [shape: bf16[9,32,16], index: 4, kind: input, shape index: {}]
  %s5 = inlined_call_operand.vmem [shape: f32[32,1], index: 5, kind: input, shape index: {}]
  %s6 = inlined_call_operand.vmem [shape: bf16[9,64,64], index: 6, kind: input, shape index: {}]
  %s7 = inlined_call_operand.vmem [shape: bf16[9,64,32], index: 7, kind: input, shape index: {}]
  %s8 = inlined_call_operand.vmem [shape: f32[1,64], index: 8, kind: input, shape index: {}]
  %s9 = inlined_call_operand.vmem [shape: bf16[1024,512], index: 9, kind: input, shape index: {}]
  %s10 = inlined_call_operand.vmem [shape: f32[1,512], index: 10, kind: input, shape index: {}]
  %s11 = inlined_call_operand.vmem [shape: bf16[512,128], index: 11, kind: input, shape index: {}]
  %s12 = inlined_call_operand.vmem [shape: f32[1,128], index: 12, kind: input, shape index: {}]
  %s13 = inlined_call_operand.hbm [shape: f32[2,1,128], index: 13, kind: output, shape index: {}]
  %s14 = sld [smem:[#allocation0]]
  $region85: #{mynet_forward.1} parent=0
    _
  %s16 = ssub.s32 1, %s14
  %s17 = scalar_select 0, %s16, %s14
  $region1: #{mynet_forward.1} parent=0
    #allocation3 [shape = 'u8[1024]{0}', space=vmem, size = 0x400, scoped, tag = 'output window, operand 0']
    #allocation4 [shape = 's32[2]{0}', space=sflag, size = 0x8, scoped, tag = 'scoped memory for mynet_forward.1']
    %18 = vsyncpa [#allocation4], 0
    %s19 = scalar_lea.sflag [#allocation4], 1
    %20 = vsyncpa %s19, 0
    loop: start=0, step=1, limit=4
    $region2: #{mynet_forward.1} parent=1 // loop_pre_header
      _
    $region3: #{mynet_forward.1} parent=1 // loop_header
      %s22 = sphi 0, %s26
      %p23 = scmp.ge.s32.totalorder %s22, 4
      %s32 = sphi 0, %s34
      %s35 = sphi 0, %s32
      %s36 = sphi 0, %s35
      %s52 = sphi 0, %s36
      %s56 = sphi 0, %s56
      %s58 = sphi 0, %s56
      %s59 = sphi 0, %s58
      %s73 = sphi 0, %s59
      %s77 = sphi 0, %s77
      %s79 = sphi 0, %s77
      %s80 = sphi 0, %s79
      %s94 = sphi 0, %s80
      %s98 = sphi 0, %s98
      %s100 = sphi 0, %s98
      %s101 = sphi 0, %s100
      %s115 = sphi 0, %s101
      %s119 = sphi 0, %s119
      %s121 = sphi 0, %s119
      %s122 = sphi 0, %s121
      %s136 = sphi 0, %s122
      %s140 = sphi 0, %s140
      %s142 = sphi 0, %s140
      %s143 = sphi 0, %s142
      %s157 = sphi 0, %s143
      %s161 = sphi 0, %s161
      %s163 = sphi 0, %s161
      %s164 = sphi 0, %s163
      %s178 = sphi 0, %s164
      %s182 = sphi 0, %s182
      %s184 = sphi 0, %s182
      %s185 = sphi 0, %s184
      %s199 = sphi 0, %s185
      %s203 = sphi 0, %s203
      %s205 = sphi 0, %s203
      %s206 = sphi 0, %s205
      %s220 = sphi 0, %s206
      %s224 = sphi 0, %s224
      %s226 = sphi 0, %s224
      %s227 = sphi 0, %s226
      %s241 = sphi 0, %s227
      %s245 = sphi 0, %s245
      %s247 = sphi 0, %s245
      %s248 = sphi 0, %s247
      %s262 = sphi 0, %s248
      %s266 = sphi 0, %s266
      %s268 = sphi 0, %s266
      %s269 = sphi 0, %s268
      %s283 = sphi 0, %s269
      %s287 = sphi 0, %s287
      %s289 = sphi 0, %s287
      %s290 = sphi 0, %s289
      %s304 = sphi 0, %s290
      %s310 = sphi 0, %s312
      %s313 = sphi 0, %s310
      %s314 = sphi 0, %s313
      %s330 = sphi 0, %s314
    $region4: #{mynet_forward.1} parent=1 // loop_header_branch
      %25 = sbr.rel (%p23) target = $region8
    $region5: #{mynet_forward.1} parent=1 // loop_body
      %s27 = ssub.s32 %s22, 1
      %s28 = ssub.s32 %s22, 2
      %s29 = sadd.s32 %s22, 1
      %s30 = ssub.s32 %s22, %s29
      %p31 = scmp.eq.s32.totalorder %s30, 0
      %s33 = sadd.s32 %s32, 1
      %s34 = scalar_select %p31, %s32, %s33
      %p37 = pneg %p31
      %p38 = scmp.eq.s32.totalorder %s22, 1
      %p39 = por %p37, %p38
      %p40 = scmp.ne.s32.totalorder %s32, %s35
      %p41 = scmp.eq.s32.totalorder %s22, 0
      %p42 = por %p40, %p41
      %p43 = scmp.ne.s32.totalorder %s32, %s35
      %p44 = scmp.eq.s32.totalorder %s27, 1
      %p45 = por %p43, %p44
      %p46 = scmp.ne.s32.totalorder %s35, %s36
      %p47 = scmp.eq.s32.totalorder %s27, 0
      %p48 = por %p46, %p47
      %p49 = scmp.ne.s32.totalorder %s35, %s36
      %p50 = scmp.eq.s32.totalorder %s28, 1
      %p51 = por %p49, %p50
      %p53 = scmp.ne.s32.totalorder %s36, %s52
      %p54 = scmp.eq.s32.totalorder %s28, 0
      %p55 = por %p53, %p54
      %s57 = sadd.s32 %s56, 1
      %p60 = scmp.eq.s32.totalorder %s22, 1
      %p61 = scmp.ne.s32.totalorder %s56, %s58
      %p62 = scmp.eq.s32.totalorder %s22, 0
      %p63 = por %p61, %p62
      %p64 = scmp.ne.s32.totalorder %s56, %s58
      %p65 = scmp.eq.s32.totalorder %s27, 1
      %p66 = por %p64, %p65
      %p67 = scmp.ne.s32.totalorder %s58, %s59
      %p68 = scmp.eq.s32.totalorder %s27, 0
      %p69 = por %p67, %p68
      %p70 = scmp.ne.s32.totalorder %s58, %s59
      %p71 = scmp.eq.s32.totalorder %s28, 1
      %p72 = por %p70, %p71
      %p74 = scmp.ne.s32.totalorder %s59, %s73
      %p75 = scmp.eq.s32.totalorder %s28, 0
      %p76 = por %p74, %p75
      %s78 = sadd.s32 %s77, 1
      %p81 = scmp.eq.s32.totalorder %s22, 1
      %p82 = scmp.ne.s32.totalorder %s77, %s79
      %p83 = scmp.eq.s32.totalorder %s22, 0
      %p84 = por %p82, %p83
      %p85 = scmp.ne.s32.totalorder %s77, %s79
      %p86 = scmp.eq.s32.totalorder %s27, 1
      %p87 = por %p85, %p86
      %p88 = scmp.ne.s32.totalorder %s79, %s80
      %p89 = scmp.eq.s32.totalorder %s27, 0
      %p90 = por %p88, %p89
      %p91 = scmp.ne.s32.totalorder %s79, %s80
      %p92 = scmp.eq.s32.totalorder %s28, 1
      %p93 = por %p91, %p92
      %p95 = scmp.ne.s32.totalorder %s80, %s94
      %p96 = scmp.eq.s32.totalorder %s28, 0
      %p97 = por %p95, %p96
      %s99 = sadd.s32 %s98, 1
      %p102 = scmp.eq.s32.totalorder %s22, 1
      %p103 = scmp.ne.s32.totalorder %s98, %s100
      %p104 = scmp.eq.s32.totalorder %s22, 0
      %p105 = por %p103, %p104
      %p106 = scmp.ne.s32.totalorder %s98, %s100
      %p107 = scmp.eq.s32.totalorder %s27, 1
      %p108 = por %p106, %p107
      %p109 = scmp.ne.s32.totalorder %s100, %s101
      %p110 = scmp.eq.s32.totalorder %s27, 0
      %p111 = por %p109, %p110
      %p112 = scmp.ne.s32.totalorder %s100, %s101
      %p113 = scmp.eq.s32.totalorder %s28, 1
      %p114 = por %p112, %p113
      %p116 = scmp.ne.s32.totalorder %s101, %s115
      %p117 = scmp.eq.s32.totalorder %s28, 0
      %p118 = por %p116, %p117
      %s120 = sadd.s32 %s119, 1
      %p123 = scmp.eq.s32.totalorder %s22, 1
      %p124 = scmp.ne.s32.totalorder %s119, %s121
      %p125 = scmp.eq.s32.totalorder %s22, 0
      %p126 = por %p124, %p125
      %p127 = scmp.ne.s32.totalorder %s119, %s121
      %p128 = scmp.eq.s32.totalorder %s27, 1
      %p129 = por %p127, %p128
      %p130 = scmp.ne.s32.totalorder %s121, %s122
      %p131 = scmp.eq.s32.totalorder %s27, 0
      %p132 = por %p130, %p131
      %p133 = scmp.ne.s32.totalorder %s121, %s122
      %p134 = scmp.eq.s32.totalorder %s28, 1
      %p135 = por %p133, %p134
      %p137 = scmp.ne.s32.totalorder %s122, %s136
      %p138 = scmp.eq.s32.totalorder %s28, 0
      %p139 = por %p137, %p138
      %s141 = sadd.s32 %s140, 1
      %p144 = scmp.eq.s32.totalorder %s22, 1
      %p145 = scmp.ne.s32.totalorder %s140, %s142
      %p146 = scmp.eq.s32.totalorder %s22, 0
      %p147 = por %p145, %p146
      %p148 = scmp.ne.s32.totalorder %s140, %s142
      %p149 = scmp.eq.s32.totalorder %s27, 1
      %p150 = por %p148, %p149
      %p151 = scmp.ne.s32.totalorder %s142, %s143
      %p152 = scmp.eq.s32.totalorder %s27, 0
      %p153 = por %p151, %p152
      %p154 = scmp.ne.s32.totalorder %s142, %s143
      %p155 = scmp.eq.s32.totalorder %s28, 1
      %p156 = por %p154, %p155
      %p158 = scmp.ne.s32.totalorder %s143, %s157
      %p159 = scmp.eq.s32.totalorder %s28, 0
      %p160 = por %p158, %p159
      %s162 = sadd.s32 %s161, 1
      %p165 = scmp.eq.s32.totalorder %s22, 1
      %p166 = scmp.ne.s32.totalorder %s161, %s163
      %p167 = scmp.eq.s32.totalorder %s22, 0
      %p168 = por %p166, %p167
      %p169 = scmp.ne.s32.totalorder %s161, %s163
      %p170 = scmp.eq.s32.totalorder %s27, 1
      %p171 = por %p169, %p170
      %p172 = scmp.ne.s32.totalorder %s163, %s164
      %p173 = scmp.eq.s32.totalorder %s27, 0
      %p174 = por %p172, %p173
      %p175 = scmp.ne.s32.totalorder %s163, %s164
      %p176 = scmp.eq.s32.totalorder %s28, 1
      %p177 = por %p175, %p176
      %p179 = scmp.ne.s32.totalorder %s164, %s178
      %p180 = scmp.eq.s32.totalorder %s28, 0
      %p181 = por %p179, %p180
      %s183 = sadd.s32 %s182, 1
      %p186 = scmp.eq.s32.totalorder %s22, 1
      %p187 = scmp.ne.s32.totalorder %s182, %s184
      %p188 = scmp.eq.s32.totalorder %s22, 0
      %p189 = por %p187, %p188
      %p190 = scmp.ne.s32.totalorder %s182, %s184
      %p191 = scmp.eq.s32.totalorder %s27, 1
      %p192 = por %p190, %p191
      %p193 = scmp.ne.s32.totalorder %s184, %s185
      %p194 = scmp.eq.s32.totalorder %s27, 0
      %p195 = por %p193, %p194
      %p196 = scmp.ne.s32.totalorder %s184, %s185
      %p197 = scmp.eq.s32.totalorder %s28, 1
      %p198 = por %p196, %p197
      %p200 = scmp.ne.s32.totalorder %s185, %s199
      %p201 = scmp.eq.s32.totalorder %s28, 0
      %p202 = por %p200, %p201
      %s204 = sadd.s32 %s203, 1
      %p207 = scmp.eq.s32.totalorder %s22, 1
      %p208 = scmp.ne.s32.totalorder %s203, %s205
      %p209 = scmp.eq.s32.totalorder %s22, 0
      %p210 = por %p208, %p209
      %p211 = scmp.ne.s32.totalorder %s203, %s205
      %p212 = scmp.eq.s32.totalorder %s27, 1
      %p213 = por %p211, %p212
      %p214 = scmp.ne.s32.totalorder %s205, %s206
      %p215 = scmp.eq.s32.totalorder %s27, 0
      %p216 = por %p214, %p215
      %p217 = scmp.ne.s32.totalorder %s205, %s206
      %p218 = scmp.eq.s32.totalorder %s28, 1
      %p219 = por %p217, %p218
      %p221 = scmp.ne.s32.totalorder %s206, %s220
      %p222 = scmp.eq.s32.totalorder %s28, 0
      %p223 = por %p221, %p222
      %s225 = sadd.s32 %s224, 1
      %p228 = scmp.eq.s32.totalorder %s22, 1
      %p229 = scmp.ne.s32.totalorder %s224, %s226
      %p230 = scmp.eq.s32.totalorder %s22, 0
      %p231 = por %p229, %p230
      %p232 = scmp.ne.s32.totalorder %s224, %s226
      %p233 = scmp.eq.s32.totalorder %s27, 1
      %p234 = por %p232, %p233
      %p235 = scmp.ne.s32.totalorder %s226, %s227
      %p236 = scmp.eq.s32.totalorder %s27, 0
      %p237 = por %p235, %p236
      %p238 = scmp.ne.s32.totalorder %s226, %s227
      %p239 = scmp.eq.s32.totalorder %s28, 1
      %p240 = por %p238, %p239
      %p242 = scmp.ne.s32.totalorder %s227, %s241
      %p243 = scmp.eq.s32.totalorder %s28, 0
      %p244 = por %p242, %p243
      %s246 = sadd.s32 %s245, 1
      %p249 = scmp.eq.s32.totalorder %s22, 1
      %p250 = scmp.ne.s32.totalorder %s245, %s247
      %p251 = scmp.eq.s32.totalorder %s22, 0
      %p252 = por %p250, %p251
      %p253 = scmp.ne.s32.totalorder %s245, %s247
      %p254 = scmp.eq.s32.totalorder %s27, 1
      %p255 = por %p253, %p254
      %p256 = scmp.ne.s32.totalorder %s247, %s248
      %p257 = scmp.eq.s32.totalorder %s27, 0
      %p258 = por %p256, %p257
      %p259 = scmp.ne.s32.totalorder %s247, %s248
      %p260 = scmp.eq.s32.totalorder %s28, 1
      %p261 = por %p259, %p260
      %p263 = scmp.ne.s32.totalorder %s248, %s262
      %p264 = scmp.eq.s32.totalorder %s28, 0
      %p265 = por %p263, %p264
      %s267 = sadd.s32 %s266, 1
      %p270 = scmp.eq.s32.totalorder %s22, 1
      %p271 = scmp.ne.s32.totalorder %s266, %s268
      %p272 = scmp.eq.s32.totalorder %s22, 0
      %p273 = por %p271, %p272
      %p274 = scmp.ne.s32.totalorder %s266, %s268
      %p275 = scmp.eq.s32.totalorder %s27, 1
      %p276 = por %p274, %p275
      %p277 = scmp.ne.s32.totalorder %s268, %s269
      %p278 = scmp.eq.s32.totalorder %s27, 0
      %p279 = por %p277, %p278
      %p280 = scmp.ne.s32.totalorder %s268, %s269
      %p281 = scmp.eq.s32.totalorder %s28, 1
      %p282 = por %p280, %p281
      %p284 = scmp.ne.s32.totalorder %s269, %s283
      %p285 = scmp.eq.s32.totalorder %s28, 0
      %p286 = por %p284, %p285
      %s288 = sadd.s32 %s287, 1
      %p291 = scmp.eq.s32.totalorder %s22, 1
      %p292 = scmp.ne.s32.totalorder %s287, %s289
      %p293 = scmp.eq.s32.totalorder %s22, 0
      %p294 = por %p292, %p293
      %p295 = scmp.ne.s32.totalorder %s287, %s289
      %p296 = scmp.eq.s32.totalorder %s27, 1
      %p297 = por %p295, %p296
      %p298 = scmp.ne.s32.totalorder %s289, %s290
      %p299 = scmp.eq.s32.totalorder %s27, 0
      %p300 = por %p298, %p299
      %p301 = scmp.ne.s32.totalorder %s289, %s290
      %p302 = scmp.eq.s32.totalorder %s28, 1
      %p303 = por %p301, %p302
      %p305 = scmp.ne.s32.totalorder %s290, %s304
      %p306 = scmp.eq.s32.totalorder %s28, 0
      %p307 = por %p305, %p306
      %s308 = ssub.s32 %s22, %s29
      %p309 = scmp.eq.s32.totalorder %s308, 0
      %s311 = sadd.s32 %s310, 1
      %s312 = scalar_select %p309, %s310, %s311
      %p315 = pneg %p309
      %p316 = scmp.eq.s32.totalorder %s22, 1
      %p317 = por %p315, %p316
      %p318 = scmp.ne.s32.totalorder %s310, %s313
      %p319 = scmp.eq.s32.totalorder %s22, 0
      %p320 = por %p318, %p319
      %p321 = scmp.ne.s32.totalorder %s310, %s313
      %p322 = scmp.eq.s32.totalorder %s27, 1
      %p323 = por %p321, %p322
      %p324 = scmp.ne.s32.totalorder %s313, %s314
      %p325 = scmp.eq.s32.totalorder %s27, 0
      %p326 = por %p324, %p325
      %p327 = scmp.ne.s32.totalorder %s313, %s314
      %p328 = scmp.eq.s32.totalorder %s28, 1
      %p329 = por %p327, %p328
      %p331 = scmp.ne.s32.totalorder %s314, %s330
      %p332 = scmp.eq.s32.totalorder %s28, 0
      %p333 = por %p331, %p332
      %p334 = scmp.le.s32.totalorder 1, %s22
      %p335 = scmp.lt.s32.totalorder %s22, 3
      %p336 = pnand %p334, %p335
      %p337 = pneg %p336
      // Predicated region
      $region9: #{mynet_forward.1} parent=5 // pred_check
        _
      $region10: #{mynet_forward.1} parent=5 // pred_check_branch
        %339 = sbr.rel (%p336) target = $region12
      $region11: #{mynet_forward.1} parent=5 // pred_region
        %s340 = ssub.s32 %s22, 1
        // Predicated region
        $region13: #{mynet_forward.1} parent=11 // pred_check
          %p341 = pneg %p69
        $region14: #{mynet_forward.1} parent=11 // pred_check_branch
          %343 = sbr.rel (%p341) target = $region16
        $region15: #{mynet_forward.1} parent=11 // pred_region
          _
        $region16: #{mynet_forward.1} parent=11 // pred_fallthru
          _
        // Predicated region
        $region17: #{mynet_forward.1} parent=11 // pred_check
          %p344 = pneg %p90
        $region18: #{mynet_forward.1} parent=11 // pred_check_branch
          %346 = sbr.rel (%p344) target = $region20
        $region19: #{mynet_forward.1} parent=11 // pred_region
          _
        $region20: #{mynet_forward.1} parent=11 // pred_fallthru
          _
        // Predicated region
        $region21: #{mynet_forward.1} parent=11 // pred_check
          %p347 = pneg %p111
        $region22: #{mynet_forward.1} parent=11 // pred_check_branch
          %349 = sbr.rel (%p347) target = $region24
        $region23: #{mynet_forward.1} parent=11 // pred_region
          _
        $region24: #{mynet_forward.1} parent=11 // pred_fallthru
          _
        // Predicated region
        $region25: #{mynet_forward.1} parent=11 // pred_check
          %p350 = pneg %p132
        $region26: #{mynet_forward.1} parent=11 // pred_check_branch
          %352 = sbr.rel (%p350) target = $region28
        $region27: #{mynet_forward.1} parent=11 // pred_region
          _
        $region28: #{mynet_forward.1} parent=11 // pred_fallthru
          _
        // Predicated region
        $region29: #{mynet_forward.1} parent=11 // pred_check
          %p353 = pneg %p153
        $region30: #{mynet_forward.1} parent=11 // pred_check_branch
          %355 = sbr.rel (%p353) target = $region32
        $region31: #{mynet_forward.1} parent=11 // pred_region
          _
        $region32: #{mynet_forward.1} parent=11 // pred_fallthru
          _
        // Predicated region
        $region33: #{mynet_forward.1} parent=11 // pred_check
          %p356 = pneg %p174
        $region34: #{mynet_forward.1} parent=11 // pred_check_branch
          %358 = sbr.rel (%p356) target = $region36
        $region35: #{mynet_forward.1} parent=11 // pred_region
          _
        $region36: #{mynet_forward.1} parent=11 // pred_fallthru
          _
        // Predicated region
        $region37: #{mynet_forward.1} parent=11 // pred_check
          %p359 = pneg %p195
        $region38: #{mynet_forward.1} parent=11 // pred_check_branch
          %361 = sbr.rel (%p359) target = $region40
        $region39: #{mynet_forward.1} parent=11 // pred_region
          _
        $region40: #{mynet_forward.1} parent=11 // pred_fallthru
          _
        // Predicated region
        $region41: #{mynet_forward.1} parent=11 // pred_check
          %p362 = pneg %p216
        $region42: #{mynet_forward.1} parent=11 // pred_check_branch
          %364 = sbr.rel (%p362) target = $region44
        $region43: #{mynet_forward.1} parent=11 // pred_region
          _
        $region44: #{mynet_forward.1} parent=11 // pred_fallthru
          _
        // Predicated region
        $region45: #{mynet_forward.1} parent=11 // pred_check
          %p365 = pneg %p237
        $region46: #{mynet_forward.1} parent=11 // pred_check_branch
          %367 = sbr.rel (%p365) target = $region48
        $region47: #{mynet_forward.1} parent=11 // pred_region
          _
        $region48: #{mynet_forward.1} parent=11 // pred_fallthru
          _
        // Predicated region
        $region49: #{mynet_forward.1} parent=11 // pred_check
          %p368 = pneg %p258
        $region50: #{mynet_forward.1} parent=11 // pred_check_branch
          %370 = sbr.rel (%p368) target = $region52
        $region51: #{mynet_forward.1} parent=11 // pred_region
          _
        $region52: #{mynet_forward.1} parent=11 // pred_fallthru
          _
        // Predicated region
        $region53: #{mynet_forward.1} parent=11 // pred_check
          %p371 = pneg %p279
        $region54: #{mynet_forward.1} parent=11 // pred_check_branch
          %373 = sbr.rel (%p371) target = $region56
        $region55: #{mynet_forward.1} parent=11 // pred_region
          _
        $region56: #{mynet_forward.1} parent=11 // pred_fallthru
          _
        // Predicated region
        $region57: #{mynet_forward.1} parent=11 // pred_check
          %p374 = pneg %p300
        $region58: #{mynet_forward.1} parent=11 // pred_check_branch
          %376 = sbr.rel (%p374) target = $region60
        $region59: #{mynet_forward.1} parent=11 // pred_region
          _
        $region60: #{mynet_forward.1} parent=11 // pred_fallthru
          _
      $region12: #{mynet_forward.1} parent=5 // pred_fallthru
        _
      %p377 = scmp.lt.s32.totalorder %s22, 2
      // Predicated region
      $region61: #{mynet_forward.1} parent=5 // pred_check
        %p378 = pneg %p377
      $region62: #{mynet_forward.1} parent=5 // pred_check_branch
        %380 = sbr.rel (%p378) target = $region64
      $region63: #{mynet_forward.1} parent=5 // pred_region
        // Predicated region
        $region65: #{mynet_forward.1} parent=63 // pred_check
          %p381 = pneg %p42
        $region66: #{mynet_forward.1} parent=63 // pred_check_branch
          %383 = sbr.rel (%p381) target = $region68
        $region67: #{mynet_forward.1} parent=63 // pred_region
          %p384 = scmp.lt.s32.totalorder %s22, 1
          %s385 = scalar_select %p384, %s22, 1
          %s386 = smul.addr %s385, 32
          %s387 = smul.addr %s386, 4
          %s388 = scalar_lea.vmem %s0, %s387
        $region68: #{mynet_forward.1} parent=63 // pred_fallthru
          _
      $region64: #{mynet_forward.1} parent=5 // pred_fallthru
        _
      %p389 = scmp.le.s32.totalorder 1, %s22
      %p390 = scmp.lt.s32.totalorder %s22, 3
      %p391 = pnand %p389, %p390
      %p392 = pneg %p391
      // Predicated region
      $region69: #{mynet_forward.1} parent=5 // pred_check
        _
      $region70: #{mynet_forward.1} parent=5 // pred_check_branch
        %394 = sbr.rel (%p391) target = $region72
      $region71: #{mynet_forward.1} parent=5 // pred_region
        %s395 = ssub.s32 %s22, 1
        %p396 = scmp.lt.s32.totalorder %s27, 1
        %s397 = scalar_select %p396, %s27, 1
        %s398 = smul.addr %s397, 32
        %s399 = smul.addr %s398, 4
        %s400 = scalar_lea.vmem %s0, %s399
        %p401 = pneg %p48
        %p402 = pneg %p45
        %p403 = pneg %p69
        %p404 = pneg %p66
        %p405 = pneg %p90
        %p406 = pneg %p87
        %p407 = pneg %p111
        %p408 = pneg %p108
        %p409 = pneg %p132
        %p410 = pneg %p129
        %p411 = pneg %p153
        %p412 = pneg %p150
        %p413 = pneg %p174
        %p414 = pneg %p171
        %p415 = pneg %p195
        %p416 = pneg %p192
        %p417 = pneg %p216
        %p418 = pneg %p213
        %p419 = pneg %p237
        %p420 = pneg %p234
        %p421 = pneg %p258
        %p422 = pneg %p255
        %p423 = pneg %p279
        %p424 = pneg %p276
        %p425 = pneg %p300
        %p426 = pneg %p297
        %p427 = pneg %p326
        %p428 = pneg %p323
        %s429 = sand.u32 %s313, 1
        %s430 = scalar_lea.sflag [#allocation4], %s429
        %s431 = sand.u32 %s313, 1
        %s432 = scalar_lea.vmem [#allocation3], %s431
        %p433 = scmp.lt.s32.totalorder %s27, 1
        %s434 = scalar_select %p433, %s27, 1
        %s435 = smul.addr %s434, 32
        %s436 = smul.addr %s435, 4
        %s437 = scalar_lea.vmem %s0, %s436
        %v439 = vld [vmem:[%s1] sm:$0xf]
        %v440 = vld [vmem:[%s1 + $0x4] sm:$0xf]
        %v441 = vld [vmem:[%s437] sm:$0xff]
        %v442 = vld [vmem:[%s437 + $0x8] sm:$0xff]
        %v443 = vld [vmem:[%s437 + $0x10] sm:$0xff]
        %v444 = vld [vmem:[%s437 + $0x18] sm:$0xff]
        %v445 = vld [vmem:[%s437 + $0x20] sm:$0xff]
        %v446 = vld [vmem:[%s437 + $0x28] sm:$0xff]
        %v447 = vld [vmem:[%s437 + $0x30] sm:$0xff]
        %v448 = vld [vmem:[%s437 + $0x38] sm:$0xff]
        %v449 = vld [vmem:[%s437 + $0x40] sm:$0xff]
        %v450 = vld [vmem:[%s437 + $0x48] sm:$0xff]
        %v451 = vld [vmem:[%s437 + $0x50] sm:$0xff]
        %v452 = vld [vmem:[%s437 + $0x58] sm:$0xff]
        %v453 = vld [vmem:[%s437 + $0x60] sm:$0x33]
        %v454 = vld [vmem:[%s437 + $0x68] sm:$0x33]
        %v455 = vld [vmem:[%s437 + $0x70] sm:$0x33]
        %v456 = vld [vmem:[%s437 + $0x78] sm:$0x33]
        %v459 = vunpack.c.l.b16 %v439
        %v460 = vunpack.c.l.b16 %v440
        %v461 = vpack.c.b16 %v460, %v459
        %v478 = vunpack.c.l.b16 %v441
        %v479 = vunpack.c.h.b16 %v441
        %v480 = vunpack.c.l.b16 %v442
        %v481 = vunpack.c.h.b16 %v442
        %v482 = vunpack.c.l.b16 %v443
        %v483 = vunpack.c.h.b16 %v443
        %v484 = vunpack.c.l.b16 %v444
        %v485 = vunpack.c.h.b16 %v444
        %v486 = vunpack.c.l.b16 %v445
        %v487 = vunpack.c.h.b16 %v445
        %v488 = vunpack.c.l.b16 %v446
        %v489 = vunpack.c.h.b16 %v446
        %v490 = vunpack.c.l.b16 %v447
        %v491 = vunpack.c.h.b16 %v447
        %v492 = vunpack.c.l.b16 %v448
        %v493 = vunpack.c.h.b16 %v448
        %v494 = vunpack.c.l.b16 %v449
        %v495 = vunpack.c.h.b16 %v449
        %v496 = vunpack.c.l.b16 %v450
        %v497 = vunpack.c.h.b16 %v450
        %v498 = vunpack.c.l.b16 %v451
        %v499 = vunpack.c.h.b16 %v451
        %v500 = vunpack.c.l.b16 %v452
        %v501 = vunpack.c.h.b16 %v452
        %v502 = vunpack.c.l.b16 %v453
        %v503 = vunpack.c.h.b16 %v453
        %v504 = vunpack.c.l.b16 %v454
        %v505 = vunpack.c.h.b16 %v454
        %v506 = vunpack.c.l.b16 %v455
        %v507 = vunpack.c.h.b16 %v455
        %v508 = vunpack.c.l.b16 %v456
        %v509 = vunpack.c.h.b16 %v456
        %v510 = vpack.c.b16 %v486, %v478
        %v511 = vpack.c.b16 %v487, %v479
        %v512 = vpack.c.b16 %v488, %v480
        %v513 = vpack.c.b16 %v489, %v481
        %v514 = vpack.c.b16 %v490, %v482
        %v515 = vpack.c.b16 %v491, %v483
        %v516 = vpack.c.b16 %v492, %v484
        %v517 = vpack.c.b16 %v493, %v485
        %v518 = vpack.c.b16 %v502, %v494
        %v519 = vpack.c.b16 %v503, %v495
        %v520 = vpack.c.b16 %v504, %v496
        %v521 = vpack.c.b16 %v505, %v497
        %v522 = vpack.c.b16 %v506, %v498
        %v523 = vpack.c.b16 %v507, %v499
        %v524 = vpack.c.b16 %v508, %v500
        %v525 = vpack.c.b16 %v509, %v501
        %vm534 = vcmask 220160
        %v536 = vsel %vm534, %v461, 0
        %vm538 = vcmask 1044480
        %vm539 = vcmask 1045504
        %v540 = vsel %vm538, 4294967295, 65535
        %v541 = vsel %vm539, %v540, 0
        %v543 = vand.u32 %v518, %v541
        %v546 = vand.u32 %v519, %v541
        %v549 = vand.u32 %v520, %v541
        %v552 = vand.u32 %v521, %v541
        %v555 = vand.u32 %v522, %v541
        %v558 = vand.u32 %v523, %v541
        %v561 = vand.u32 %v524, %v541
        %v564 = vand.u32 %v525, %v541
        %566 = vmatprep.subr.bf16.mxu0 %v511
        %567 = vmatpush1.bf16.msra.mxu0 %v510
        %568 = vmatprep.subr.bf16.mxu0 %v546
        %569 = vmatpush1.bf16.msra.mxu0 %v543
        %570 = vmatprep.subr.bf16.mxu0 0
        %571 = vmatpush1.bf16.msra.mxu0 0
        %572 = vmatprep.subr.bf16.mxu0 0
        %573 = vmatpush1.bf16.msra.mxu0 0
        %574 = vmatprep.subr.bf16.mxu0 0
        %575 = vmatpush1.bf16.msra.mxu0 0
        %576 = vmatprep.subr.bf16.mxu0 0
        %577 = vmatpush1.bf16.msra.mxu0 0
        %578 = vmatprep.subr.bf16.mxu0 0
        %579 = vmatpush1.bf16.msra.mxu0 0
        %580 = vmatprep.subr.bf16.mxu0 0
        %581 = vmatpush1.bf16.msra.mxu0 0
        %582 = vmatprep.subr.bf16.mxu0 0
        %583 = vmatpush1.bf16.msra.mxu0 0
        %584 = vmatprep.subr.bf16.mxu0 0
        %585 = vmatpush1.bf16.msra.mxu0 0
        %586 = vmatprep.subr.bf16.mxu0 0
        %587 = vmatpush1.bf16.msra.mxu0 0
        %588 = vmatprep.subr.bf16.mxu0 0
        %589 = vmatpush1.bf16.msra.mxu0 0
        %590 = vmatprep.subr.bf16.mxu0 0
        %591 = vmatpush1.bf16.msra.mxu0 0
        %592 = vmatprep.subr.bf16.mxu0 0
        %593 = vmatpush1.bf16.msra.mxu0 0
        %594 = vmatprep.subr.bf16.mxu0 0
        %595 = vmatpush1.bf16.msra.mxu0 0
        %596 = vmatprep.subr.bf16.mxu0 0
        %597 = vmatpush1.bf16.msra.mxu0 0
        %598 = vmatprep.mubr.bf16.mxu0 0
        %599 = vmatmul.mubr.bf16.gmra.mrb[0].mxu0 %v536
        %v600 = vpop.f32.mrb[0].mxu0
        %v601 = vadd.f32 0.0, %v600
        %v602 = vpop.f32.mrb[0].mxu0
        %v603 = vadd.f32 0.0, %v602
        %v604 = vpop.f32.mrb[0].mxu0
        %v605 = vadd.f32 0.0, %v604
        %v606 = vpop.f32.mrb[0].mxu0
        %v607 = vadd.f32 0.0, %v606
        %608 = vdwg.mxu0
        %609 = vmatprep.subr.bf16.mxu0 %v513
        %610 = vmatpush1.bf16.msra.mxu0 %v512
        %611 = vmatprep.subr.bf16.mxu0 %v552
        %612 = vmatpush1.bf16.msra.mxu0 %v549
        %613 = vmatprep.subr.bf16.mxu0 0
        %614 = vmatpush1.bf16.msra.mxu0 0
        %615 = vmatprep.subr.bf16.mxu0 0
        %616 = vmatpush1.bf16.msra.mxu0 0
        %617 = vmatprep.subr.bf16.mxu0 0
        %618 = vmatpush1.bf16.msra.mxu0 0
        %619 = vmatprep.subr.bf16.mxu0 0
        %620 = vmatpush1.bf16.msra.mxu0 0
        %621 = vmatprep.subr.bf16.mxu0 0
        %622 = vmatpush1.bf16.msra.mxu0 0
        %623 = vmatprep.subr.bf16.mxu0 0
        %624 = vmatpush1.bf16.msra.mxu0 0
        %625 = vmatprep.subr.bf16.mxu0 0
        %626 = vmatpush1.bf16.msra.mxu0 0
        %627 = vmatprep.subr.bf16.mxu0 0
        %628 = vmatpush1.bf16.msra.mxu0 0
        %629 = vmatprep.subr.bf16.mxu0 0
        %630 = vmatpush1.bf16.msra.mxu0 0
        %631 = vmatprep.subr.bf16.mxu0 0
        %632 = vmatpush1.bf16.msra.mxu0 0
        %633 = vmatprep.subr.bf16.mxu0 0
        %634 = vmatpush1.bf16.msra.mxu0 0
        %635 = vmatprep.subr.bf16.mxu0 0
        %636 = vmatpush1.bf16.msra.mxu0 0
        %637 = vmatprep.subr.bf16.mxu0 0
        %638 = vmatpush1.bf16.msra.mxu0 0
        %639 = vmatprep.subr.bf16.mxu0 0
        %640 = vmatpush1.bf16.msra.mxu0 0
        %641 = vmatprep.mubr.bf16.mxu0 0
        %642 = vmatmul.mubr.bf16.gmra.mrb[0].mxu0 %v536
        %v643 = vpop.f32.mrb[0].mxu0
        %v644 = vadd.f32 0.0, %v643
        %v645 = vpop.f32.mrb[0].mxu0
        %v646 = vadd.f32 0.0, %v645
        %v647 = vpop.f32.mrb[0].mxu0
        %v648 = vadd.f32 0.0, %v647
        %v649 = vpop.f32.mrb[0].mxu0
        %v650 = vadd.f32 0.0, %v649
        %651 = vdwg.mxu0
        %652 = vmatprep.subr.bf16.mxu0 %v515
        %653 = vmatpush1.bf16.msra.mxu0 %v514
        %654 = vmatprep.subr.bf16.mxu0 %v558
        %655 = vmatpush1.bf16.msra.mxu0 %v555
        %656 = vmatprep.subr.bf16.mxu0 0
        %657 = vmatpush1.bf16.msra.mxu0 0
        %658 = vmatprep.subr.bf16.mxu0 0
        %659 = vmatpush1.bf16.msra.mxu0 0
        %660 = vmatprep.subr.bf16.mxu0 0
        %661 = vmatpush1.bf16.msra.mxu0 0
        %662 = vmatprep.subr.bf16.mxu0 0
        %663 = vmatpush1.bf16.msra.mxu0 0
        %664 = vmatprep.subr.bf16.mxu0 0
        %665 = vmatpush1.bf16.msra.mxu0 0
        %666 = vmatprep.subr.bf16.mxu0 0
        %667 = vmatpush1.bf16.msra.mxu0 0
        %668 = vmatprep.subr.bf16.mxu0 0
        %669 = vmatpush1.bf16.msra.mxu0 0
        %670 = vmatprep.subr.bf16.mxu0 0
        %671 = vmatpush1.bf16.msra.mxu0 0
        %672 = vmatprep.subr.bf16.mxu0 0
        %673 = vmatpush1.bf16.msra.mxu0 0
        %674 = vmatprep.subr.bf16.mxu0 0
        %675 = vmatpush1.bf16.msra.mxu0 0
        %676 = vmatprep.subr.bf16.mxu0 0
        %677 = vmatpush1.bf16.msra.mxu0 0
        %678 = vmatprep.subr.bf16.mxu0 0
        %679 = vmatpush1.bf16.msra.mxu0 0
        %680 = vmatprep.subr.bf16.mxu0 0
        %681 = vmatpush1.bf16.msra.mxu0 0
        %682 = vmatprep.subr.bf16.mxu0 0
        %683 = vmatpush1.bf16.msra.mxu0 0
        %684 = vmatprep.mubr.bf16.mxu0 0
        %685 = vmatmul.mubr.bf16.gmra.mrb[0].mxu0 %v536
        %v686 = vpop.f32.mrb[0].mxu0
        %v687 = vadd.f32 0.0, %v686
        %v688 = vpop.f32.mrb[0].mxu0
        %v689 = vadd.f32 0.0, %v688
        %v690 = vpop.f32.mrb[0].mxu0
        %v691 = vadd.f32 0.0, %v690
        %v692 = vpop.f32.mrb[0].mxu0
        %v693 = vadd.f32 0.0, %v692
        %694 = vdwg.mxu0
        %695 = vmatprep.subr.bf16.mxu0 %v517
        %696 = vmatpush1.bf16.msra.mxu0 %v516
        %697 = vmatprep.subr.bf16.mxu0 %v564
        %698 = vmatpush1.bf16.msra.mxu0 %v561
        %699 = vmatprep.subr.bf16.mxu0 0
        %700 = vmatpush1.bf16.msra.mxu0 0
        %701 = vmatprep.subr.bf16.mxu0 0
        %702 = vmatpush1.bf16.msra.mxu0 0
        %703 = vmatprep.subr.bf16.mxu0 0
        %704 = vmatpush1.bf16.msra.mxu0 0
        %705 = vmatprep.subr.bf16.mxu0 0
        %706 = vmatpush1.bf16.msra.mxu0 0
        %707 = vmatprep.subr.bf16.mxu0 0
        %708 = vmatpush1.bf16.msra.mxu0 0
        %709 = vmatprep.subr.bf16.mxu0 0
        %710 = vmatpush1.bf16.msra.mxu0 0
        %711 = vmatprep.subr.bf16.mxu0 0
        %712 = vmatpush1.bf16.msra.mxu0 0
        %713 = vmatprep.subr.bf16.mxu0 0
        %714 = vmatpush1.bf16.msra.mxu0 0
        %715 = vmatprep.subr.bf16.mxu0 0
        %716 = vmatpush1.bf16.msra.mxu0 0
        %717 = vmatprep.subr.bf16.mxu0 0
        %718 = vmatpush1.bf16.msra.mxu0 0
        %719 = vmatprep.subr.bf16.mxu0 0
        %720 = vmatpush1.bf16.msra.mxu0 0
        %721 = vmatprep.subr.bf16.mxu0 0
        %722 = vmatpush1.bf16.msra.mxu0 0
        %723 = vmatprep.subr.bf16.mxu0 0
        %724 = vmatpush1.bf16.msra.mxu0 0
        %725 = vmatprep.subr.bf16.mxu0 0
        %726 = vmatpush1.bf16.msra.mxu0 0
        %727 = vmatprep.mubr.bf16.mxu0 0
        %728 = vmatmul.mubr.bf16.gmra.mrb[0].mxu0 %v536
        %v729 = vpop.f32.mrb[0].mxu0
        %v730 = vadd.f32 0.0, %v729
        %v731 = vpop.f32.mrb[0].mxu0
        %v732 = vadd.f32 0.0, %v731
        %v733 = vpop.f32.mrb[0].mxu0
        %v734 = vadd.f32 0.0, %v733
        %v735 = vpop.f32.mrb[0].mxu0
        %v736 = vadd.f32 0.0, %v735
        %737 = vdwg.mxu0
        %v738 = vmax.f32 %v601, %v644
        %v739 = vmax.f32 %v603, %v646
        %v740 = vmax.f32 %v605, %v648
        %v741 = vmax.f32 %v607, %v650
        %v742 = vmax.f32 %v687, %v730
        %v743 = vmax.f32 %v689, %v732
        %v744 = vmax.f32 %v691, %v734
        %v745 = vmax.f32 %v693, %v736
        %v746 = vmax.f32 %v738, %v742
        %v747 = vmax.f32 %v739, %v743
        %v748 = vmax.f32 %v740, %v744
        %v749 = vmax.f32 %v741, %v745
        %v750 = vld [vmem:[%s2] sm:$0xff]
        %v751 = vld [vmem:[%s2 + $0x8] sm:$0xff]
        %753 = vset.pattern.permute.xlu0 0
        %754 = vperm.xlu0 %753, %v750
        %v755 = vpop.permute.xlu0 %754
        %758 = vset.pattern.permute.xlu0 0
        %759 = vperm.xlu0 %758, %v751
        %v760 = vpop.permute.xlu0 %759
        %v762 = vadd.f32 %v746, %v755
        %v763 = vadd.f32 %v747, %v755
        %v764 = vadd.f32 %v748, %v760
        %v765 = vadd.f32 %v749, %v760
        %v766 = vmax.f32 %v762, 0.0
        %v767 = vmax.f32 %v763, 0.0
        %v768 = vmax.f32 %v764, 0.0
        %v769 = vmax.f32 %v765, 0.0
        %v770 = vpack.c.bf16 %v768, %v766
        %v771 = vpack.c.bf16 %v769, %v767
        %v772 = vld [vmem:[%s3] sm:$0xff]
        %v773 = vld [vmem:[%s3 + $0x8] sm:$0xff]
        %v774 = vld [vmem:[%s3 + $0x10] sm:$0xff]
        %v775 = vld [vmem:[%s3 + $0x18] sm:$0xff]
        %v776 = vld [vmem:[%s3 + $0x20] sm:$0xff]
        %v777 = vld [vmem:[%s3 + $0x28] sm:$0xff]
        %v778 = vld [vmem:[%s3 + $0x30] sm:$0xff]
        %v779 = vld [vmem:[%s3 + $0x38] sm:$0xff]
        %v780 = vld [vmem:[%s3 + $0x40] sm:$0xff]
        %v781 = vld [vmem:[%s3 + $0x48] sm:$0xff]
        %v782 = vld [vmem:[%s3 + $0x50] sm:$0xff]
        %v783 = vld [vmem:[%s3 + $0x58] sm:$0xff]
        %v784 = vld [vmem:[%s3 + $0x60] sm:$0xff]
        %v785 = vld [vmem:[%s3 + $0x68] sm:$0xff]
        %v786 = vld [vmem:[%s3 + $0x70] sm:$0xff]
        %v787 = vld [vmem:[%s3 + $0x78] sm:$0xff]
        %v788 = vld [vmem:[%s3 + $0x80] sm:$0xff]
        %v789 = vld [vmem:[%s3 + $0x88] sm:$0xff]
        %v790 = vld [vmem:[%s3 + $0x90] sm:$0xff]
        %v791 = vld [vmem:[%s3 + $0x98] sm:$0xff]
        %v792 = vld [vmem:[%s3 + $0xa0] sm:$0xff]
        %v793 = vld [vmem:[%s3 + $0xa8] sm:$0xff]
        %v794 = vld [vmem:[%s3 + $0xb0] sm:$0xff]
        %v795 = vld [vmem:[%s3 + $0xb8] sm:$0xff]
        %v796 = vld [vmem:[%s3 + $0xc0] sm:$0xff]
        %v797 = vld [vmem:[%s3 + $0xc8] sm:$0xff]
        %v798 = vld [vmem:[%s3 + $0xd0] sm:$0xff]
        %v799 = vld [vmem:[%s3 + $0xd8] sm:$0xff]
        %v800 = vld [vmem:[%s3 + $0xe0] sm:$0xff]
        %v801 = vld [vmem:[%s3 + $0xe8] sm:$0xff]
        %v802 = vld [vmem:[%s3 + $0xf0] sm:$0xff]
        %v803 = vld [vmem:[%s3 + $0xf8] sm:$0xff]
        %v836 = vunpack.c.l.b16 %v772
        %v837 = vunpack.c.h.b16 %v772
        %v838 = vunpack.c.l.b16 %v773
        %v839 = vunpack.c.h.b16 %v773
        %v840 = vunpack.c.l.b16 %v774
        %v841 = vunpack.c.h.b16 %v774
        %v842 = vunpack.c.l.b16 %v775
        %v843 = vunpack.c.h.b16 %v775
        %v844 = vunpack.c.l.b16 %v776
        %v845 = vunpack.c.h.b16 %v776
        %v846 = vunpack.c.l.b16 %v777
        %v847 = vunpack.c.h.b16 %v777
        %v848 = vunpack.c.l.b16 %v778
        %v849 = vunpack.c.h.b16 %v778
        %v850 = vunpack.c.l.b16 %v779
        %v851 = vunpack.c.h.b16 %v779
        %v852 = vunpack.c.l.b16 %v780
        %v853 = vunpack.c.h.b16 %v780
        %v854 = vunpack.c.l.b16 %v781
        %v855 = vunpack.c.h.b16 %v781
        %v856 = vunpack.c.l.b16 %v782
        %v857 = vunpack.c.h.b16 %v782
        %v858 = vunpack.c.l.b16 %v783
        %v859 = vunpack.c.h.b16 %v783
        %v860 = vunpack.c.l.b16 %v784
        %v861 = vunpack.c.h.b16 %v784
        %v862 = vunpack.c.l.b16 %v785
        %v863 = vunpack.c.h.b16 %v785
        %v864 = vunpack.c.l.b16 %v786
        %v865 = vunpack.c.h.b16 %v786
        %v866 = vunpack.c.l.b16 %v787
        %v867 = vunpack.c.h.b16 %v787
        %v868 = vunpack.c.l.b16 %v788
        %v869 = vunpack.c.h.b16 %v788
        %v870 = vunpack.c.l.b16 %v789
        %v871 = vunpack.c.h.b16 %v789
        %v872 = vunpack.c.l.b16 %v790
        %v873 = vunpack.c.h.b16 %v790
        %v874 = vunpack.c.l.b16 %v791
        %v875 = vunpack.c.h.b16 %v791
        %v876 = vunpack.c.l.b16 %v792
        %v877 = vunpack.c.h.b16 %v792
        %v878 = vunpack.c.l.b16 %v793
        %v879 = vunpack.c.h.b16 %v793
        %v880 = vunpack.c.l.b16 %v794
        %v881 = vunpack.c.h.b16 %v794
        %v882 = vunpack.c.l.b16 %v795
        %v883 = vunpack.c.h.b16 %v795
        %v884 = vunpack.c.l.b16 %v796
        %v885 = vunpack.c.h.b16 %v796
        %v886 = vunpack.c.l.b16 %v797
        %v887 = vunpack.c.h.b16 %v797
        %v888 = vunpack.c.l.b16 %v798
        %v889 = vunpack.c.h.b16 %v798
        %v890 = vunpack.c.l.b16 %v799
        %v891 = vunpack.c.h.b16 %v799
        %v892 = vunpack.c.l.b16 %v800
        %v893 = vunpack.c.h.b16 %v800
        %v894 = vunpack.c.l.b16 %v801
        %v895 = vunpack.c.h.b16 %v801
        %v896 = vunpack.c.l.b16 %v802
        %v897 = vunpack.c.h.b16 %v802
        %v898 = vunpack.c.l.b16 %v803
        %v899 = vunpack.c.h.b16 %v803
        %v900 = vpack.c.b16 %v838, %v836
        %v901 = vpack.c.b16 %v839, %v837
        %v902 = vpack.c.b16 %v842, %v840
        %v903 = vpack.c.b16 %v843, %v841
        %v904 = vpack.c.b16 %v846, %v844
        %v905 = vpack.c.b16 %v847, %v845
        %v906 = vpack.c.b16 %v850, %v848
        %v907 = vpack.c.b16 %v851, %v849
        %v908 = vpack.c.b16 %v854, %v852
        %v909 = vpack.c.b16 %v855, %v853
        %v910 = vpack.c.b16 %v858, %v856
        %v911 = vpack.c.b16 %v859, %v857
        %v912 = vpack.c.b16 %v862, %v860
        %v913 = vpack.c.b16 %v863, %v861
        %v914 = vpack.c.b16 %v866, %v864
        %v915 = vpack.c.b16 %v867, %v865
        %v916 = vpack.c.b16 %v870, %v868
        %v917 = vpack.c.b16 %v871, %v869
        %v918 = vpack.c.b16 %v874, %v872
        %v919 = vpack.c.b16 %v875, %v873
        %v920 = vpack.c.b16 %v878, %v876
        %v921 = vpack.c.b16 %v879, %v877
        %v922 = vpack.c.b16 %v882, %v880
        %v923 = vpack.c.b16 %v883, %v881
        %v924 = vpack.c.b16 %v886, %v884
        %v925 = vpack.c.b16 %v887, %v885
        %v926 = vpack.c.b16 %v890, %v888
        %v927 = vpack.c.b16 %v891, %v889
        %v928 = vpack.c.b16 %v894, %v892
        %v929 = vpack.c.b16 %v895, %v893
        %v930 = vpack.c.b16 %v898, %v896
        %v931 = vpack.c.b16 %v899, %v897
        %964 = vmatprep.subr.bf16.mxu0 %v901
        %965 = vmatpush1.bf16.msra.mxu0 %v900
        %966 = vmatprep.subr.bf16.mxu0 %v903
        %967 = vmatpush1.bf16.msra.mxu0 %v902
        %968 = vmatprep.subr.bf16.mxu0 %v905
        %969 = vmatpush1.bf16.msra.mxu0 %v904
        %970 = vmatprep.subr.bf16.mxu0 %v907
        %971 = vmatpush1.bf16.msra.mxu0 %v906
        %972 = vmatprep.subr.bf16.mxu0 %v909
        %973 = vmatpush1.bf16.msra.mxu0 %v908
        %974 = vmatprep.subr.bf16.mxu0 %v911
        %975 = vmatpush1.bf16.msra.mxu0 %v910
        %976 = vmatprep.subr.bf16.mxu0 %v913
        %977 = vmatpush1.bf16.msra.mxu0 %v912
        %978 = vmatprep.subr.bf16.mxu0 %v915
        %979 = vmatpush1.bf16.msra.mxu0 %v914
        %980 = vmatprep.subr.bf16.mxu0 %v917
        %981 = vmatpush1.bf16.msra.mxu0 %v916
        %982 = vmatprep.subr.bf16.mxu0 %v919
        %983 = vmatpush1.bf16.msra.mxu0 %v918
        %984 = vmatprep.subr.bf16.mxu0 %v921
        %985 = vmatpush1.bf16.msra.mxu0 %v920
        %986 = vmatprep.subr.bf16.mxu0 %v923
        %987 = vmatpush1.bf16.msra.mxu0 %v922
        %988 = vmatprep.subr.bf16.mxu0 %v925
        %989 = vmatpush1.bf16.msra.mxu0 %v924
        %990 = vmatprep.subr.bf16.mxu0 %v927
        %991 = vmatpush1.bf16.msra.mxu0 %v926
        %992 = vmatprep.subr.bf16.mxu0 %v929
        %993 = vmatpush1.bf16.msra.mxu0 %v928
        %994 = vmatprep.subr.bf16.mxu0 %v931
        %995 = vmatpush1.bf16.msra.mxu0 %v930
        %996 = vmatprep.mubr.bf16.mxu0 %v771
        %997 = vmatmul.mubr.bf16.gmra.mrb[0].mxu0 %v770
        %v998 = vpop.f32.mrb[0].mxu0
        %v999 = vadd.f32 0.0, %v998
        %v1000 = vpop.f32.mrb[0].mxu0
        %v1001 = vadd.f32 0.0, %v1000
        %v1002 = vpop.f32.mrb[0].mxu0
        %v1003 = vadd.f32 0.0, %v1002
        %v1004 = vpop.f32.mrb[0].mxu0
        %v1005 = vadd.f32 0.0, %v1004
        %1006 = vdwg.mxu0
        %v1007 = vpack.c.bf16 %v1003, %v999
        %v1008 = vpack.c.bf16 %v1005, %v1001
        %v1009 = vld [vmem:[%s4] sm:$0xf]
        %v1010 = vld [vmem:[%s4 + $0x4] sm:$0xf]
        %v1011 = vld [vmem:[%s4 + $0x8] sm:$0xf]
        %v1012 = vld [vmem:[%s4 + $0xc] sm:$0xf]
        %s1013 = scalar_lea.vmem %s3, 256
        %v1014 = vld [vmem:[%s1013] sm:$0xff]
        %v1015 = vld [vmem:[%s1013 + $0x8] sm:$0xff]
        %v1016 = vld [vmem:[%s1013 + $0x10] sm:$0xff]
        %v1017 = vld [vmem:[%s1013 + $0x18] sm:$0xff]
        %v1018 = vld [vmem:[%s1013 + $0x20] sm:$0xff]
        %v1019 = vld [vmem:[%s1013 + $0x28] sm:$0xff]
        %v1020 = vld [vmem:[%s1013 + $0x30] sm:$0xff]
        %v1021 = vld [vmem:[%s1013 + $0x38] sm:$0xff]
        %v1022 = vld [vmem:[%s1013 + $0x40] sm:$0xff]
        %v1023 = vld [vmem:[%s1013 + $0x48] sm:$0xff]
        %v1024 = vld [vmem:[%s1013 + $0x50] sm:$0xff]
        %v1025 = vld [vmem:[%s1013 + $0x58] sm:$0xff]
        %v1026 = vld [vmem:[%s1013 + $0x60] sm:$0xff]
        %v1027 = vld [vmem:[%s1013 + $0x68] sm:$0xff]
        %v1028 = vld [vmem:[%s1013 + $0x70] sm:$0xff]
        %v1029 = vld [vmem:[%s1013 + $0x78] sm:$0xff]
        %v1030 = vld [vmem:[%s1013 + $0x80] sm:$0xff]
        %v1031 = vld [vmem:[%s1013 + $0x88] sm:$0xff]
        %v1032 = vld [vmem:[%s1013 + $0x90] sm:$0xff]
        %v1033 = vld [vmem:[%s1013 + $0x98] sm:$0xff]
        %v1034 = vld [vmem:[%s1013 + $0xa0] sm:$0xff]
        %v1035 = vld [vmem:[%s1013 + $0xa8] sm:$0xff]
        %v1036 = vld [vmem:[%s1013 + $0xb0] sm:$0xff]
        %v1037 = vld [vmem:[%s1013 + $0xb8] sm:$0xff]
        %v1038 = vld [vmem:[%s1013 + $0xc0] sm:$0xff]
        %v1039 = vld [vmem:[%s1013 + $0xc8] sm:$0xff]
        %v1040 = vld [vmem:[%s1013 + $0xd0] sm:$0xff]
        %v1041 = vld [vmem:[%s1013 + $0xd8] sm:$0xff]
        %v1042 = vld [vmem:[%s1013 + $0xe0] sm:$0xff]
        %v1043 = vld [vmem:[%s1013 + $0xe8] sm:$0xff]
        %v1044 = vld [vmem:[%s1013 + $0xf0] sm:$0xff]
        %v1045 = vld [vmem:[%s1013 + $0xf8] sm:$0xff]
        %v1078 = vunpack.c.l.b16 %v1014
        %v1079 = vunpack.c.h.b16 %v1014
        %v1080 = vunpack.c.l.b16 %v1015
        %v1081 = vunpack.c.h.b16 %v1015
        %v1082 = vunpack.c.l.b16 %v1016
        %v1083 = vunpack.c.h.b16 %v1016
        %v1084 = vunpack.c.l.b16 %v1017
        %v1085 = vunpack.c.h.b16 %v1017
        %v1086 = vunpack.c.l.b16 %v1018
        %v1087 = vunpack.c.h.b16 %v1018
        %v1088 = vunpack.c.l.b16 %v1019
        %v1089 = vunpack.c.h.b16 %v1019
        %v1090 = vunpack.c.l.b16 %v1020
        %v1091 = vunpack.c.h.b16 %v1020
        %v1092 = vunpack.c.l.b16 %v1021
        %v1093 = vunpack.c.h.b16 %v1021
        %v1094 = vunpack.c.l.b16 %v1022
        %v1095 = vunpack.c.h.b16 %v1022
        %v1096 = vunpack.c.l.b16 %v1023
        %v1097 = vunpack.c.h.b16 %v1023
        %v1098 = vunpack.c.l.b16 %v1024
        %v1099 = vunpack.c.h.b16 %v1024
        %v1100 = vunpack.c.l.b16 %v1025
        %v1101 = vunpack.c.h.b16 %v1025
        %v1102 = vunpack.c.l.b16 %v1026
        %v1103 = vunpack.c.h.b16 %v1026
        %v1104 = vunpack.c.l.b16 %v1027
        %v1105 = vunpack.c.h.b16 %v1027
        %v1106 = vunpack.c.l.b16 %v1028
        %v1107 = vunpack.c.h.b16 %v1028
        %v1108 = vunpack.c.l.b16 %v1029
        %v1109 = vunpack.c.h.b16 %v1029
        %v1110 = vunpack.c.l.b16 %v1030
        %v1111 = vunpack.c.h.b16 %v1030
        %v1112 = vunpack.c.l.b16 %v1031
        %v1113 = vunpack.c.h.b16 %v1031
        %v1114 = vunpack.c.l.b16 %v1032
        %v1115 = vunpack.c.h.b16 %v1032
        %v1116 = vunpack.c.l.b16 %v1033
        %v1117 = vunpack.c.h.b16 %v1033
        %v1118 = vunpack.c.l.b16 %v1034
        %v1119 = vunpack.c.h.b16 %v1034
        %v1120 = vunpack.c.l.b16 %v1035
        %v1121 = vunpack.c.h.b16 %v1035
        %v1122 = vunpack.c.l.b16 %v1036
        %v1123 = vunpack.c.h.b16 %v1036
        %v1124 = vunpack.c.l.b16 %v1037
        %v1125 = vunpack.c.h.b16 %v1037
        %v1126 = vunpack.c.l.b16 %v1038
        %v1127 = vunpack.c.h.b16 %v1038
        %v1128 = vunpack.c.l.b16 %v1039
        %v1129 = vunpack.c.h.b16 %v1039
        %v1130 = vunpack.c.l.b16 %v1040
        %v1131 = vunpack.c.h.b16 %v1040
        %v1132 = vunpack.c.l.b16 %v1041
        %v1133 = vunpack.c.h.b16 %v1041
        %v1134 = vunpack.c.l.b16 %v1042
        %v1135 = vunpack.c.h.b16 %v1042
        %v1136 = vunpack.c.l.b16 %v1043
        %v1137 = vunpack.c.h.b16 %v1043
        %v1138 = vunpack.c.l.b16 %v1044
        %v1139 = vunpack.c.h.b16 %v1044
        %v1140 = vunpack.c.l.b16 %v1045
        %v1141 = vunpack.c.h.b16 %v1045
        %v1142 = vpack.c.b16 %v1080, %v1078
        %v1143 = vpack.c.b16 %v1081, %v1079
        %v1144 = vpack.c.b16 %v1084, %v1082
        %v1145 = vpack.c.b16 %v1085, %v1083
        %v1146 = vpack.c.b16 %v1088, %v1086
        %v1147 = vpack.c.b16 %v1089, %v1087
        %v1148 = vpack.c.b16 %v1092, %v1090
        %v1149 = vpack.c.b16 %v1093, %v1091
        %v1150 = vpack.c.b16 %v1096, %v1094
        %v1151 = vpack.c.b16 %v1097, %v1095
        %v1152 = vpack.c.b16 %v1100, %v1098
        %v1153 = vpack.c.b16 %v1101, %v1099
        %v1154 = vpack.c.b16 %v1104, %v1102
        %v1155 = vpack.c.b16 %v1105, %v1103
        %v1156 = vpack.c.b16 %v1108, %v1106
        %v1157 = vpack.c.b16 %v1109, %v1107
        %v1158 = vpack.c.b16 %v1112, %v1110
        %v1159 = vpack.c.b16 %v1113, %v1111
        %v1160 = vpack.c.b16 %v1116, %v1114
        %v1161 = vpack.c.b16 %v1117, %v1115
        %v1162 = vpack.c.b16 %v1120, %v1118
        %v1163 = vpack.c.b16 %v1121, %v1119
        %v1164 = vpack.c.b16 %v1124, %v1122
        %v1165 = vpack.c.b16 %v1125, %v1123
        %v1166 = vpack.c.b16 %v1128, %v1126
        %v1167 = vpack.c.b16 %v1129, %v1127
        %v1168 = vpack.c.b16 %v1132, %v1130
        %v1169 = vpack.c.b16 %v1133, %v1131
        %v1170 = vpack.c.b16 %v1136, %v1134
        %v1171 = vpack.c.b16 %v1137, %v1135
        %v1172 = vpack.c.b16 %v1140, %v1138
        %v1173 = vpack.c.b16 %v1141, %v1139
        %1206 = vmatprep.subr.bf16.mxu0 %v1143
        %1207 = vmatpush1.bf16.msra.mxu0 %v1142
        %1208 = vmatprep.subr.bf16.mxu0 %v1145
        %1209 = vmatpush1.bf16.msra.mxu0 %v1144
        %1210 = vmatprep.subr.bf16.mxu0 %v1147
        %1211 = vmatpush1.bf16.msra.mxu0 %v1146
        %1212 = vmatprep.subr.bf16.mxu0 %v1149
        %1213 = vmatpush1.bf16.msra.mxu0 %v1148
        %1214 = vmatprep.subr.bf16.mxu0 %v1151
        %1215 = vmatpush1.bf16.msra.mxu0 %v1150
        %1216 = vmatprep.subr.bf16.mxu0 %v1153
        %1217 = vmatpush1.bf16.msra.mxu0 %v1152
        %1218 = vmatprep.subr.bf16.mxu0 %v1155
        %1219 = vmatpush1.bf16.msra.mxu0 %v1154
        %1220 = vmatprep.subr.bf16.mxu0 %v1157
        %1221 = vmatpush1.bf16.msra.mxu0 %v1156
        %1222 = vmatprep.subr.bf16.mxu0 %v1159
        %1223 = vmatpush1.bf16.msra.mxu0 %v1158
        %1224 = vmatprep.subr.bf16.mxu0 %v1161
        %1225 = vmatpush1.bf16.msra.mxu0 %v1160
        %1226 = vmatprep.subr.bf16.mxu0 %v1163
        %1227 = vmatpush1.bf16.msra.mxu0 %v1162
        %1228 = vmatprep.subr.bf16.mxu0 %v1165
        %1229 = vmatpush1.bf16.msra.mxu0 %v1164
        %1230 = vmatprep.subr.bf16.mxu0 %v1167
        %1231 = vmatpush1.bf16.msra.mxu0 %v1166
        %1232 = vmatprep.subr.bf16.mxu0 %v1169
        %1233 = vmatpush1.bf16.msra.mxu0 %v1168
        %1234 = vmatprep.subr.bf16.mxu0 %v1171
        %1235 = vmatpush1.bf16.msra.mxu0 %v1170
        %1236 = vmatprep.subr.bf16.mxu0 %v1173
        %1237 = vmatpush1.bf16.msra.mxu0 %v1172
        %1238 = vmatprep.mubr.bf16.mxu0 %v771
        %1239 = vmatmul.mubr.bf16.gmra.mrb[0].mxu0 %v770
        %v1240 = vpop.f32.mrb[0].mxu0
        %v1241 = vadd.f32 0.0, %v1240
        %v1242 = vpop.f32.mrb[0].mxu0
        %v1243 = vadd.f32 0.0, %v1242
        %v1244 = vpop.f32.mrb[0].mxu0
        %v1245 = vadd.f32 0.0, %v1244
        %v1246 = vpop.f32.mrb[0].mxu0
        %v1247 = vadd.f32 0.0, %v1246
        %1248 = vdwg.mxu0
        %v1249 = vpack.c.bf16 %v1245, %v1241
        %v1250 = vpack.c.bf16 %v1247, %v1243
        %s1251 = scalar_lea.vmem %s4, 16
        %v1252 = vld [vmem:[%s1251] sm:$0xf]
        %v1253 = vld [vmem:[%s1251 + $0x4] sm:$0xf]
        %v1254 = vld [vmem:[%s1251 + $0x8] sm:$0xf]
        %v1255 = vld [vmem:[%s1251 + $0xc] sm:$0xf]
        %v1260 = vunpack.c.l.b16 %v1252
        %v1261 = vunpack.c.l.b16 %v1253
        %v1262 = vunpack.c.l.b16 %v1254
        %v1263 = vunpack.c.l.b16 %v1255
        %v1264 = vpack.c.b16 %v1261, %v1260
        %v1265 = vpack.c.b16 %v1263, %v1262
        %vm1266 = vcmask 130048
        %v1268 = vsel %vm1266, %v1264, 0
        %v1271 = vsel %vm1266, %v1265, 0
        %1273 = vmatprep.subr.bf16.mxu0 %v1250
        %1274 = vmatpush1.bf16.msra.mxu0 %v1249
        %1275 = vmatprep.subr.bf16.mxu0 0
        %1276 = vmatpush1.bf16.msra.mxu0 0
        %1277 = vmatprep.subr.bf16.mxu0 0
        %1278 = vmatpush1.bf16.msra.mxu0 0
        %1279 = vmatprep.subr.bf16.mxu0 0
        %1280 = vmatpush1.bf16.msra.mxu0 0
        %1281 = vmatprep.subr.bf16.mxu0 0
        %1282 = vmatpush1.bf16.msra.mxu0 0
        %1283 = vmatprep.subr.bf16.mxu0 0
        %1284 = vmatpush1.bf16.msra.mxu0 0
        %1285 = vmatprep.subr.bf16.mxu0 0
        %1286 = vmatpush1.bf16.msra.mxu0 0
        %1287 = vmatprep.subr.bf16.mxu0 0
        %1288 = vmatpush1.bf16.msra.mxu0 0
        %1289 = vmatprep.subr.bf16.mxu0 0
        %1290 = vmatpush1.bf16.msra.mxu0 0
        %1291 = vmatprep.subr.bf16.mxu0 0
        %1292 = vmatpush1.bf16.msra.mxu0 0
        %1293 = vmatprep.subr.bf16.mxu0 0
        %1294 = vmatpush1.bf16.msra.mxu0 0
        %1295 = vmatprep.subr.bf16.mxu0 0
        %1296 = vmatpush1.bf16.msra.mxu0 0
        %1297 = vmatprep.subr.bf16.mxu0 0
        %1298 = vmatpush1.bf16.msra.mxu0 0
        %1299 = vmatprep.subr.bf16.mxu0 0
        %1300 = vmatpush1.bf16.msra.mxu0 0
        %1301 = vmatprep.subr.bf16.mxu0 0
        %1302 = vmatpush1.bf16.msra.mxu0 0
        %1303 = vmatprep.subr.bf16.mxu0 0
        %1304 = vmatpush1.bf16.msra.mxu0 0
        %1305 = vmatprep.mubr.bf16.mxu0 0
        %1306 = vmatmul.mubr.bf16.gmra.mrb[0].mxu0 %v1268
        %v1307 = vpop.f32.mrb[0].mxu0
        %v1308 = vadd.f32 0.0, %v1307
        %v1309 = vpop.f32.mrb[0].mxu0
        %v1310 = vadd.f32 0.0, %v1309
        %v1311 = vpop.f32.mrb[0].mxu0
        %v1312 = vadd.f32 0.0, %v1311
        %v1313 = vpop.f32.mrb[0].mxu0
        %v1314 = vadd.f32 0.0, %v1313
        %1315 = vmatprep.mubr.bf16.mxu0 0
        %1316 = vmatmul.mubr.bf16.gmra.mrb[0].mxu0 %v1271
        %v1317 = vpop.f32.mrb[0].mxu0
        %v1318 = vadd.f32 0.0, %v1317
        %v1319 = vpop.f32.mrb[0].mxu0
        %v1320 = vadd.f32 0.0, %v1319
        %v1321 = vpop.f32.mrb[0].mxu0
        %v1322 = vadd.f32 0.0, %v1321
        %v1323 = vpop.f32.mrb[0].mxu0
        %v1324 = vadd.f32 0.0, %v1323
        %1325 = vdwg.mxu0
        %v1330 = vunpack.c.l.b16 %v1009
        %v1331 = vunpack.c.l.b16 %v1010
        %v1332 = vunpack.c.l.b16 %v1011
        %v1333 = vunpack.c.l.b16 %v1012
        %v1334 = vpack.c.b16 %v1331, %v1330
        %v1335 = vpack.c.b16 %v1333, %v1332
        %v1337 = vsel %vm1266, %v1334, 0
        %v1340 = vsel %vm1266, %v1335, 0
        %1342 = vmatprep.subr.bf16.mxu0 %v1008
        %1343 = vmatpush1.bf16.msra.mxu0 %v1007
        %1344 = vmatprep.subr.bf16.mxu0 0
        %1345 = vmatpush1.bf16.msra.mxu0 0
        %1346 = vmatprep.subr.bf16.mxu0 0
        %1347 = vmatpush1.bf16.msra.mxu0 0
        %1348 = vmatprep.subr.bf16.mxu0 0
        %1349 = vmatpush1.bf16.msra.mxu0 0
        %1350 = vmatprep.subr.bf16.mxu0 0
        %1351 = vmatpush1.bf16.msra.mxu0 0
        %1352 = vmatprep.subr.bf16.mxu0 0
        %1353 = vmatpush1.bf16.msra.mxu0 0
        %1354 = vmatprep.subr.bf16.mxu0 0
        %1355 = vmatpush1.bf16.msra.mxu0 0
        %1356 = vmatprep.subr.bf16.mxu0 0
        %1357 = vmatpush1.bf16.msra.mxu0 0
        %1358 = vmatprep.subr.bf16.mxu0 0
        %1359 = vmatpush1.bf16.msra.mxu0 0
        %1360 = vmatprep.subr.bf16.mxu0 0
        %1361 = vmatpush1.bf16.msra.mxu0 0
        %1362 = vmatprep.subr.bf16.mxu0 0
        %1363 = vmatpush1.bf16.msra.mxu0 0
        %1364 = vmatprep.subr.bf16.mxu0 0
        %1365 = vmatpush1.bf16.msra.mxu0 0
        %1366 = vmatprep.subr.bf16.mxu0 0
        %1367 = vmatpush1.bf16.msra.mxu0 0
        %1368 = vmatprep.subr.bf16.mxu0 0
        %1369 = vmatpush1.bf16.msra.mxu0 0
        %1370 = vmatprep.subr.bf16.mxu0 0
        %1371 = vmatpush1.bf16.msra.mxu0 0
        %1372 = vmatprep.subr.bf16.mxu0 0
        %1373 = vmatpush1.bf16.msra.mxu0 0
        %1374 = vmatprep.mubr.bf16.mxu0 0
        %1375 = vmatmul.mubr.bf16.gmra.mrb[0].mxu0 %v1337
        %v1376 = vpop.f32.mrb[0].mxu0
        %v1377 = vadd.f32 %v1308, %v1376
        %v1378 = vpop.f32.mrb[0].mxu0
        %v1379 = vadd.f32 %v1310, %v1378
        %v1380 = vpop.f32.mrb[0].mxu0
        %v1381 = vadd.f32 %v1312, %v1380
        %v1382 = vpop.f32.mrb[0].mxu0
        %v1383 = vadd.f32 %v1314, %v1382
        %1384 = vmatprep.mubr.bf16.mxu0 0
        %1385 = vmatmul.mubr.bf16.gmra.mrb[0].mxu0 %v1340
        %v1386 = vpop.f32.mrb[0].mxu0
        %v1387 = vadd.f32 %v1318, %v1386
        %v1388 = vpop.f32.mrb[0].mxu0
        %v1389 = vadd.f32 %v1320, %v1388
        %v1390 = vpop.f32.mrb[0].mxu0
        %v1391 = vadd.f32 %v1322, %v1390
        %v1392 = vpop.f32.mrb[0].mxu0
        %v1393 = vadd.f32 %v1324, %v1392
        %1394 = vdwg.mxu0
        %s1395 = scalar_lea.vmem %s3, 512
        %v1396 = vld [vmem:[%s1395] sm:$0xff]
        %v1397 = vld [vmem:[%s1395 + $0x8] sm:$0xff]
        %v1398 = vld [vmem:[%s1395 + $0x10] sm:$0xff]
        %v1399 = vld [vmem:[%s1395 + $0x18] sm:$0xff]
        %v1400 = vld [vmem:[%s1395 + $0x20] sm:$0xff]
        %v1401 = vld [vmem:[%s1395 + $0x28] sm:$0xff]
        %v1402 = vld [vmem:[%s1395 + $0x30] sm:$0xff]
        %v1403 = vld [vmem:[%s1395 + $0x38] sm:$0xff]
        %v1404 = vld [vmem:[%s1395 + $0x40] sm:$0xff]
        %v1405 = vld [vmem:[%s1395 + $0x48] sm:$0xff]
        %v1406 = vld [vmem:[%s1395 + $0x50] sm:$0xff]
        %v1407 = vld [vmem:[%s1395 + $0x58] sm:$0xff]
        %v1408 = vld [vmem:[%s1395 + $0x60] sm:$0xff]
        %v1409 = vld [vmem:[%s1395 + $0x68] sm:$0xff]
        %v1410 = vld [vmem:[%s1395 + $0x70] sm:$0xff]
        %v1411 = vld [vmem:[%s1395 + $0x78] sm:$0xff]
        %v1412 = vld [vmem:[%s1395 + $0x80] sm:$0xff]
        %v1413 = vld [vmem:[%s1395 + $0x88] sm:$0xff]
        %v1414 = vld [vmem:[%s1395 + $0x90] sm:$0xff]
        %v1415 = vld [vmem:[%s1395 + $0x98] sm:$0xff]
        %v1416 = vld [vmem:[%s1395 + $0xa0] sm:$0xff]
        %v1417 = vld [vmem:[%s1395 + $0xa8] sm:$0xff]
        %v1418 = vld [vmem:[%s1395 + $0xb0] sm:$0xff]
        %v1419 = vld [vmem:[%s1395 + $0xb8] sm:$0xff]
        %v1420 = vld [vmem:[%s1395 + $0xc0] sm:$0xff]
        %v1421 = vld [vmem:[%s1395 + $0xc8] sm:$0xff]
        %v1422 = vld [vmem:[%s1395 + $0xd0] sm:$0xff]
        %v1423 = vld [vmem:[%s1395 + $0xd8] sm:$0xff]
        %v1424 = vld [vmem:[%s1395 + $0xe0] sm:$0xff]
        %v1425 = vld [vmem:[%s1395 + $0xe8] sm:$0xff]
        %v1426 = vld [vmem:[%s1395 + $0xf0] sm:$0xff]
        %v1427 = vld [vmem:[%s1395 + $0xf8] sm:$0xff]
        %v1460 = vunpack.c.l.b16 %v1396
        %v1461 = vunpack.c.h.b16 %v1396
        %v1462 = vunpack.c.l.b16 %v1397
        %v1463 = vunpack.c.h.b16 %v1397
        %v1464 = vunpack.c.l.b16 %v1398
        %v1465 = vunpack.c.h.b16 %v1398
        %v1466 = vunpack.c.l.b16 %v1399
        %v1467 = vunpack.c.h.b16 %v1399
        %v1468 = vunpack.c.l.b16 %v1400
        %v1469 = vunpack.c.h.b16 %v1400
        %v1470 = vunpack.c.l.b16 %v1401
        %v1471 = vunpack.c.h.b16 %v1401
        %v1472 = vunpack.c.l.b16 %v1402
        %v1473 = vunpack.c.h.b16 %v1402
        %v1474 = vunpack.c.l.b16 %v1403
        %v1475 = vunpack.c.h.b16 %v1403
        %v1476 = vunpack.c.l.b16 %v1404
        %v1477 = vunpack.c.h.b16 %v1404
        %v1478 = vunpack.c.l.b16 %v1405
        %v1479 = vunpack.c.h.b16 %v1405
        %v1480 = vunpack.c.l.b16 %v1406
        %v1481 = vunpack.c.h.b16 %v1406
        %v1482 = vunpack.c.l.b16 %v1407
        %v1483 = vunpack.c.h.b16 %v1407
        %v1484 = vunpack.c.l.b16 %v1408
        %v1485 = vunpack.c.h.b16 %v1408
        %v1486 = vunpack.c.l.b16 %v1409
        %v1487 = vunpack.c.h.b16 %v1409
        %v1488 = vunpack.c.l.b16 %v1410
        %v1489 = vunpack.c.h.b16 %v1410
        %v1490 = vunpack.c.l.b16 %v1411
        %v1491 = vunpack.c.h.b16 %v1411
        %v1492 = vunpack.c.l.b16 %v1412
        %v1493 = vunpack.c.h.b16 %v1412
        %v1494 = vunpack.c.l.b16 %v1413
        %v1495 = vunpack.c.h.b16 %v1413
        %v1496 = vunpack.c.l.b16 %v1414
        %v1497 = vunpack.c.h.b16 %v1414
        %v1498 = vunpack.c.l.b16 %v1415
        %v1499 = vunpack.c.h.b16 %v1415
        %v1500 = vunpack.c.l.b16 %v1416
        %v1501 = vunpack.c.h.b16 %v1416
        %v1502 = vunpack.c.l.b16 %v1417
        %v1503 = vunpack.c.h.b16 %v1417
        %v1504 = vunpack.c.l.b16 %v1418
        %v1505 = vunpack.c.h.b16 %v1418
        %v1506 = vunpack.c.l.b16 %v1419
        %v1507 = vunpack.c.h.b16 %v1419
        %v1508 = vunpack.c.l.b16 %v1420
        %v1509 = vunpack.c.h.b16 %v1420
        %v1510 = vunpack.c.l.b16 %v1421
        %v1511 = vunpack.c.h.b16 %v1421
        %v1512 = vunpack.c.l.b16 %v1422
        %v1513 = vunpack.c.h.b16 %v1422
        %v1514 = vunpack.c.l.b16 %v1423
        %v1515 = vunpack.c.h.b16 %v1423
        %v1516 = vunpack.c.l.b16 %v1424
        %v1517 = vunpack.c.h.b16 %v1424
        %v1518 = vunpack.c.l.b16 %v1425
        %v1519 = vunpack.c.h.b16 %v1425
        %v1520 = vunpack.c.l.b16 %v1426
        %v1521 = vunpack.c.h.b16 %v1426
        %v1522 = vunpack.c.l.b16 %v1427
        %v1523 = vunpack.c.h.b16 %v1427
        %v1524 = vpack.c.b16 %v1462, %v1460
        %v1525 = vpack.c.b16 %v1463, %v1461
        %v1526 = vpack.c.b16 %v1466, %v1464
        %v1527 = vpack.c.b16 %v1467, %v1465
        %v1528 = vpack.c.b16 %v1470, %v1468
        %v1529 = vpack.c.b16 %v1471, %v1469
        %v1530 = vpack.c.b16 %v1474, %v1472
        %v1531 = vpack.c.b16 %v1475, %v1473
        %v1532 = vpack.c.b16 %v1478, %v1476
        %v1533 = vpack.c.b16 %v1479, %v1477
        %v1534 = vpack.c.b16 %v1482, %v1480
        %v1535 = vpack.c.b16 %v1483, %v1481
        %v1536 = vpack.c.b16 %v1486, %v1484
        %v1537 = vpack.c.b16 %v1487, %v1485
        %v1538 = vpack.c.b16 %v1490, %v1488
        %v1539 = vpack.c.b16 %v1491, %v1489
        %v1540 = vpack.c.b16 %v1494, %v1492
        %v1541 = vpack.c.b16 %v1495, %v1493
        %v1542 = vpack.c.b16 %v1498, %v1496
        %v1543 = vpack.c.b16 %v1499, %v1497
        %v1544 = vpack.c.b16 %v1502, %v1500
        %v1545 = vpack.c.b16 %v1503, %v1501
        %v1546 = vpack.c.b16 %v1506, %v1504
        %v1547 = vpack.c.b16 %v1507, %v1505
        %v1548 = vpack.c.b16 %v1510, %v1508
        %v1549 = vpack.c.b16 %v1511, %v1509
        %v1550 = vpack.c.b16 %v1514, %v1512
        %v1551 = vpack.c.b16 %v1515, %v1513
        %v1552 = vpack.c.b16 %v1518, %v1516
        %v1553 = vpack.c.b16 %v1519, %v1517
        %v1554 = vpack.c.b16 %v1522, %v1520
        %v1555 = vpack.c.b16 %v1523, %v1521
        %1588 = vmatprep.subr.bf16.mxu0 %v1525
        %1589 = vmatpush1.bf16.msra.mxu0 %v1524
        %1590 = vmatprep.subr.bf16.mxu0 %v1527
        %1591 = vmatpush1.bf16.msra.mxu0 %v1526
        %1592 = vmatprep.subr.bf16.mxu0 %v1529
        %1593 = vmatpush1.bf16.msra.mxu0 %v1528
        %1594 = vmatprep.subr.bf16.mxu0 %v1531
        %1595 = vmatpush1.bf16.msra.mxu0 %v1530
        %1596 = vmatprep.subr.bf16.mxu0 %v1533
        %1597 = vmatpush1.bf16.msra.mxu0 %v1532
        %1598 = vmatprep.subr.bf16.mxu0 %v1535
        %1599 = vmatpush1.bf16.msra.mxu0 %v1534
        %1600 = vmatprep.subr.bf16.mxu0 %v1537
        %1601 = vmatpush1.bf16.msra.mxu0 %v1536
        %1602 = vmatprep.subr.bf16.mxu0 %v1539
        %1603 = vmatpush1.bf16.msra.mxu0 %v1538
        %1604 = vmatprep.subr.bf16.mxu0 %v1541
        %1605 = vmatpush1.bf16.msra.mxu0 %v1540
        %1606 = vmatprep.subr.bf16.mxu0 %v1543
        %1607 = vmatpush1.bf16.msra.mxu0 %v1542
        %1608 = vmatprep.subr.bf16.mxu0 %v1545
        %1609 = vmatpush1.bf16.msra.mxu0 %v1544
        %1610 = vmatprep.subr.bf16.mxu0 %v1547
        %1611 = vmatpush1.bf16.msra.mxu0 %v1546
        %1612 = vmatprep.subr.bf16.mxu0 %v1549
        %1613 = vmatpush1.bf16.msra.mxu0 %v1548
        %1614 = vmatprep.subr.bf16.mxu0 %v1551
        %1615 = vmatpush1.bf16.msra.mxu0 %v1550
        %1616 = vmatprep.subr.bf16.mxu0 %v1553
        %1617 = vmatpush1.bf16.msra.mxu0 %v1552
        %1618 = vmatprep.subr.bf16.mxu0 %v1555
        %1619 = vmatpush1.bf16.msra.mxu0 %v1554
        %1620 = vmatprep.mubr.bf16.mxu0 %v771
        %1621 = vmatmul.mubr.bf16.gmra.mrb[0].mxu0 %v770
        %v1622 = vpop.f32.mrb[0].mxu0
        %v1623 = vadd.f32 0.0, %v1622
        %v1624 = vpop.f32.mrb[0].mxu0
        %v1625 = vadd.f32 0.0, %v1624
        %v1626 = vpop.f32.mrb[0].mxu0
        %v1627 = vadd.f32 0.0, %v1626
        %v1628 = vpop.f32.mrb[0].mxu0
        %v1629 = vadd.f32 0.0, %v1628
        %1630 = vdwg.mxu0
        %v1631 = vpack.c.bf16 %v1627, %v1623
        %v1632 = vpack.c.bf16 %v1629, %v1625
        %s1633 = scalar_lea.vmem %s4, 32
        %v1634 = vld [vmem:[%s1633] sm:$0xf]
        %v1635 = vld [vmem:[%s1633 + $0x4] sm:$0xf]
        %v1636 = vld [vmem:[%s1633 + $0x8] sm:$0xf]
        %v1637 = vld [vmem:[%s1633 + $0xc] sm:$0xf]
        %v1642 = vunpack.c.l.b16 %v1634
        %v1643 = vunpack.c.l.b16 %v1635
        %v1644 = vunpack.c.l.b16 %v1636
        %v1645 = vunpack.c.l.b16 %v1637
        %v1646 = vpack.c.b16 %v1643, %v1642
        %v1647 = vpack.c.b16 %v1645, %v1644
        %v1649 = vsel %vm1266, %v1646, 0
        %v1652 = vsel %vm1266, %v1647, 0
        %1654 = vmatprep.subr.bf16.mxu0 %v1632
        %1655 = vmatpush1.bf16.msra.mxu0 %v1631
        %1656 = vmatprep.subr.bf16.mxu0 0
        %1657 = vmatpush1.bf16.msra.mxu0 0
        %1658 = vmatprep.subr.bf16.mxu0 0
        %1659 = vmatpush1.bf16.msra.mxu0 0
        %1660 = vmatprep.subr.bf16.mxu0 0
        %1661 = vmatpush1.bf16.msra.mxu0 0
        %1662 = vmatprep.subr.bf16.mxu0 0
        %1663 = vmatpush1.bf16.msra.mxu0 0
        %1664 = vmatprep.subr.bf16.mxu0 0
        %1665 = vmatpush1.bf16.msra.mxu0 0
        %1666 = vmatprep.subr.bf16.mxu0 0
        %1667 = vmatpush1.bf16.msra.mxu0 0
        %1668 = vmatprep.subr.bf16.mxu0 0
        %1669 = vmatpush1.bf16.msra.mxu0 0
        %1670 = vmatprep.subr.bf16.mxu0 0
        %1671 = vmatpush1.bf16.msra.mxu0 0
        %1672 = vmatprep.subr.bf16.mxu0 0
        %1673 = vmatpush1.bf16.msra.mxu0 0
        %1674 = vmatprep.subr.bf16.mxu0 0
        %1675 = vmatpush1.bf16.msra.mxu0 0
        %1676 = vmatprep.subr.bf16.mxu0 0
        %1677 = vmatpush1.bf16.msra.mxu0 0
        %1678 = vmatprep.subr.bf16.mxu0 0
        %1679 = vmatpush1.bf16.msra.mxu0 0
        %1680 = vmatprep.subr.bf16.mxu0 0
        %1681 = vmatpush1.bf16.msra.mxu0 0
        %1682 = vmatprep.subr.bf16.mxu0 0
        %1683 = vmatpush1.bf16.msra.mxu0 0
        %1684 = vmatprep.subr.bf16.mxu0 0
        %1685 = vmatpush1.bf16.msra.mxu0 0
        %1686 = vmatprep.mubr.bf16.mxu0 0
        %1687 = vmatmul.mubr.bf16.gmra.mrb[0].mxu0 %v1649
        %v1688 = vpop.f32.mrb[0].mxu0
        %v1689 = vadd.f32 0.0, %v1688
        %v1690 = vpop.f32.mrb[0].mxu0
        %v1691 = vadd.f32 0.0, %v1690
        %v1692 = vpop.f32.mrb[0].mxu0
        %v1693 = vadd.f32 0.0, %v1692
        %v1694 = vpop.f32.mrb[0].mxu0
        %v1695 = vadd.f32 0.0, %v1694
        %1696 = vmatprep.mubr.bf16.mxu0 0
        %1697 = vmatmul.mubr.bf16.gmra.mrb[0].mxu0 %v1652
        %v1698 = vpop.f32.mrb[0].mxu0
        %v1699 = vadd.f32 0.0, %v1698
        %v1700 = vpop.f32.mrb[0].mxu0
        %v1701 = vadd.f32 0.0, %v1700
        %v1702 = vpop.f32.mrb[0].mxu0
        %v1703 = vadd.f32 0.0, %v1702
        %v1704 = vpop.f32.mrb[0].mxu0
        %v1705 = vadd.f32 0.0, %v1704
        %1706 = vdwg.mxu0
        %v1707 = vadd.f32 %v1377, %v1689
        %v1708 = vadd.f32 %v1379, %v1691
        %v1709 = vadd.f32 %v1381, %v1693
        %v1710 = vadd.f32 %v1383, %v1695
        %v1711 = vadd.f32 %v1387, %v1699
        %v1712 = vadd.f32 %v1389, %v1701
        %v1713 = vadd.f32 %v1391, %v1703
        %v1714 = vadd.f32 %v1393, %v1705
        %s1715 = scalar_lea.vmem %s3, 768
        %v1716 = vld [vmem:[%s1715] sm:$0xff]
        %v1717 = vld [vmem:[%s1715 + $0x8] sm:$0xff]
        %v1718 = vld [vmem:[%s1715 + $0x10] sm:$0xff]
        %v1719 = vld [vmem:[%s1715 + $0x18] sm:$0xff]
        %v1720 = vld [vmem:[%s1715 + $0x20] sm:$0xff]
        %v1721 = vld [vmem:[%s1715 + $0x28] sm:$0xff]
        %v1722 = vld [vmem:[%s1715 + $0x30] sm:$0xff]
        %v1723 = vld [vmem:[%s1715 + $0x38] sm:$0xff]
        %v1724 = vld [vmem:[%s1715 + $0x40] sm:$0xff]
        %v1725 = vld [vmem:[%s1715 + $0x48] sm:$0xff]
        %v1726 = vld [vmem:[%s1715 + $0x50] sm:$0xff]
        %v1727 = vld [vmem:[%s1715 + $0x58] sm:$0xff]
        %v1728 = vld [vmem:[%s1715 + $0x60] sm:$0xff]
        %v1729 = vld [vmem:[%s1715 + $0x68] sm:$0xff]
        %v1730 = vld [vmem:[%s1715 + $0x70] sm:$0xff]
        %v1731 = vld [vmem:[%s1715 + $0x78] sm:$0xff]
        %v1732 = vld [vmem:[%s1715 + $0x80] sm:$0xff]
        %v1733 = vld [vmem:[%s1715 + $0x88] sm:$0xff]
        %v1734 = vld [vmem:[%s1715 + $0x90] sm:$0xff]
        %v1735 = vld [vmem:[%s1715 + $0x98] sm:$0xff]
        %v1736 = vld [vmem:[%s1715 + $0xa0] sm:$0xff]
        %v1737 = vld [vmem:[%s1715 + $0xa8] sm:$0xff]
        %v1738 = vld [vmem:[%s1715 + $0xb0] sm:$0xff]
        %v1739 = vld [vmem:[%s1715 + $0xb8] sm:$0xff]
        %v1740 = vld [vmem:[%s1715 + $0xc0] sm:$0xff]
        %v1741 = vld [vmem:[%s1715 + $0xc8] sm:$0xff]
        %v1742 = vld [vmem:[%s1715 + $0xd0] sm:$0xff]
        %v1743 = vld [vmem:[%s1715 + $0xd8] sm:$0xff]
        %v1744 = vld [vmem:[%s1715 + $0xe0] sm:$0xff]
        %v1745 = vld [vmem:[%s1715 + $0xe8] sm:$0xff]
        %v1746 = vld [vmem:[%s1715 + $0xf0] sm:$0xff]
        %v1747 = vld [vmem:[%s1715 + $0xf8] sm:$0xff]
        %v1780 = vunpack.c.l.b16 %v1716
        %v1781 = vunpack.c.h.b16 %v1716
        %v1782 = vunpack.c.l.b16 %v1717
        %v1783 = vunpack.c.h.b16 %v1717
        %v1784 = vunpack.c.l.b16 %v1718
        %v1785 = vunpack.c.h.b16 %v1718
        %v1786 = vunpack.c.l.b16 %v1719
        %v1787 = vunpack.c.h.b16 %v1719
        %v1788 = vunpack.c.l.b16 %v1720
        %v1789 = vunpack.c.h.b16 %v1720
        %v1790 = vunpack.c.l.b16 %v1721
        %v1791 = vunpack.c.h.b16 %v1721
        %v1792 = vunpack.c.l.b16 %v1722
        %v1793 = vunpack.c.h.b16 %v1722
        %v1794 = vunpack.c.l.b16 %v1723
        %v1795 = vunpack.c.h.b16 %v1723
        %v1796 = vunpack.c.l.b16 %v1724
        %v1797 = vunpack.c.h.b16 %v1724
        %v1798 = vunpack.c.l.b16 %v1725
        %v1799 = vunpack.c.h.b16 %v1725
        %v1800 = vunpack.c.l.b16 %v1726
        %v1801 = vunpack.c.h.b16 %v1726
        %v1802 = vunpack.c.l.b16 %v1727
        %v1803 = vunpack.c.h.b16 %v1727
        %v1804 = vunpack.c.l.b16 %v1728
        %v1805 = vunpack.c.h.b16 %v1728
        %v1806 = vunpack.c.l.b16 %v1729
        %v1807 = vunpack.c.h.b16 %v1729
        %v1808 = vunpack.c.l.b16 %v1730
        %v1809 = vunpack.c.h.b16 %v1730
        %v1810 = vunpack.c.l.b16 %v1731
        %v1811 = vunpack.c.h.b16 %v1731
        %v1812 = vunpack.c.l.b16 %v1732
        %v1813 = vunpack.c.h.b16 %v1732
        %v1814 = vunpack.c.l.b16 %v1733
        %v1815 = vunpack.c.h.b16 %v1733
        %v1816 = vunpack.c.l.b16 %v1734
        %v1817 = vunpack.c.h.b16 %v1734
        %v1818 = vunpack.c.l.b16 %v1735
        %v1819 = vunpack.c.h.b16 %v1735
        %v1820 = vunpack.c.l.b16 %v1736
        %v1821 = vunpack.c.h.b16 %v1736
        %v1822 = vunpack.c.l.b16 %v1737
        %v1823 = vunpack.c.h.b16 %v1737
        %v1824 = vunpack.c.l.b16 %v1738
        %v1825 = vunpack.c.h.b16 %v1738
        %v1826 = vunpack.c.l.b16 %v1739
        %v1827 = vunpack.c.h.b16 %v1739
        %v1828 = vunpack.c.l.b16 %v1740
        %v1829 = vunpack.c.h.b16 %v1740
        %v1830 = vunpack.c.l.b16 %v1741
        %v1831 = vunpack.c.h.b16 %v1741
        %v1832 = vunpack.c.l.b16 %v1742
        %v1833 = vunpack.c.h.b16 %v1742
        %v1834 = vunpack.c.l.b16 %v1743
        %v1835 = vunpack.c.h.b16 %v1743
        %v1836 = vunpack.c.l.b16 %v1744
        %v1837 = vunpack.c.h.b16 %v1744
        %v1838 = vunpack.c.l.b16 %v1745
        %v1839 = vunpack.c.h.b16 %v1745
        %v1840 = vunpack.c.l.b16 %v1746
        %v1841 = vunpack.c.h.b16 %v1746
        %v1842 = vunpack.c.l.b16 %v1747
        %v1843 = vunpack.c.h.b16 %v1747
        %v1844 = vpack.c.b16 %v1782, %v1780
        %v1845 = vpack.c.b16 %v1783, %v1781
        %v1846 = vpack.c.b16 %v1786, %v1784
        %v1847 = vpack.c.b16 %v1787, %v1785
        %v1848 = vpack.c.b16 %v1790, %v1788
        %v1849 = vpack.c.b16 %v1791, %v1789
        %v1850 = vpack.c.b16 %v1794, %v1792
        %v1851 = vpack.c.b16 %v1795, %v1793
        %v1852 = vpack.c.b16 %v1798, %v1796
        %v1853 = vpack.c.b16 %v1799, %v1797
        %v1854 = vpack.c.b16 %v1802, %v1800
        %v1855 = vpack.c.b16 %v1803, %v1801
        %v1856 = vpack.c.b16 %v1806, %v1804
        %v1857 = vpack.c.b16 %v1807, %v1805
        %v1858 = vpack.c.b16 %v1810, %v1808
        %v1859 = vpack.c.b16 %v1811, %v1809
        %v1860 = vpack.c.b16 %v1814, %v1812
        %v1861 = vpack.c.b16 %v1815, %v1813
        %v1862 = vpack.c.b16 %v1818, %v1816
        %v1863 = vpack.c.b16 %v1819, %v1817
        %v1864 = vpack.c.b16 %v1822, %v1820
        %v1865 = vpack.c.b16 %v1823, %v1821
        %v1866 = vpack.c.b16 %v1826, %v1824
        %v1867 = vpack.c.b16 %v1827, %v1825
        %v1868 = vpack.c.b16 %v1830, %v1828
        %v1869 = vpack.c.b16 %v1831, %v1829
        %v1870 = vpack.c.b16 %v1834, %v1832
        %v1871 = vpack.c.b16 %v1835, %v1833
        %v1872 = vpack.c.b16 %v1838, %v1836
        %v1873 = vpack.c.b16 %v1839, %v1837
        %v1874 = vpack.c.b16 %v1842, %v1840
        %v1875 = vpack.c.b16 %v1843, %v1841
        %1908 = vmatprep.subr.bf16.mxu0 %v1845
        %1909 = vmatpush1.bf16.msra.mxu0 %v1844
        %1910 = vmatprep.subr.bf16.mxu0 %v1847
        %1911 = vmatpush1.bf16.msra.mxu0 %v1846
        %1912 = vmatprep.subr.bf16.mxu0 %v1849
        %1913 = vmatpush1.bf16.msra.mxu0 %v1848
        %1914 = vmatprep.subr.bf16.mxu0 %v1851
        %1915 = vmatpush1.bf16.msra.mxu0 %v1850
        %1916 = vmatprep.subr.bf16.mxu0 %v1853
        %1917 = vmatpush1.bf16.msra.mxu0 %v1852
        %1918 = vmatprep.subr.bf16.mxu0 %v1855
        %1919 = vmatpush1.bf16.msra.mxu0 %v1854
        %1920 = vmatprep.subr.bf16.mxu0 %v1857
        %1921 = vmatpush1.bf16.msra.mxu0 %v1856
        %1922 = vmatprep.subr.bf16.mxu0 %v1859
        %1923 = vmatpush1.bf16.msra.mxu0 %v1858
        %1924 = vmatprep.subr.bf16.mxu0 %v1861
        %1925 = vmatpush1.bf16.msra.mxu0 %v1860
        %1926 = vmatprep.subr.bf16.mxu0 %v1863
        %1927 = vmatpush1.bf16.msra.mxu0 %v1862
        %1928 = vmatprep.subr.bf16.mxu0 %v1865
        %1929 = vmatpush1.bf16.msra.mxu0 %v1864
        %1930 = vmatprep.subr.bf16.mxu0 %v1867
        %1931 = vmatpush1.bf16.msra.mxu0 %v1866
        %1932 = vmatprep.subr.bf16.mxu0 %v1869
        %1933 = vmatpush1.bf16.msra.mxu0 %v1868
        %1934 = vmatprep.subr.bf16.mxu0 %v1871
        %1935 = vmatpush1.bf16.msra.mxu0 %v1870
        %1936 = vmatprep.subr.bf16.mxu0 %v1873
        %1937 = vmatpush1.bf16.msra.mxu0 %v1872
        %1938 = vmatprep.subr.bf16.mxu0 %v1875
        %1939 = vmatpush1.bf16.msra.mxu0 %v1874
        %1940 = vmatprep.mubr.bf16.mxu0 %v771
        %1941 = vmatmul.mubr.bf16.gmra.mrb[0].mxu0 %v770
        %v1942 = vpop.f32.mrb[0].mxu0
        %v1943 = vadd.f32 0.0, %v1942
        %v1944 = vpop.f32.mrb[0].mxu0
        %v1945 = vadd.f32 0.0, %v1944
        %v1946 = vpop.f32.mrb[0].mxu0
        %v1947 = vadd.f32 0.0, %v1946
        %v1948 = vpop.f32.mrb[0].mxu0
        %v1949 = vadd.f32 0.0, %v1948
        %1950 = vdwg.mxu0
        %v1951 = vpack.c.bf16 %v1947, %v1943
        %v1952 = vpack.c.bf16 %v1949, %v1945
        %s1953 = scalar_lea.vmem %s4, 48
        %v1954 = vld [vmem:[%s1953] sm:$0xf]
        %v1955 = vld [vmem:[%s1953 + $0x4] sm:$0xf]
        %v1956 = vld [vmem:[%s1953 + $0x8] sm:$0xf]
        %v1957 = vld [vmem:[%s1953 + $0xc] sm:$0xf]
        %v1962 = vunpack.c.l.b16 %v1954
        %v1963 = vunpack.c.l.b16 %v1955
        %v1964 = vunpack.c.l.b16 %v1956
        %v1965 = vunpack.c.l.b16 %v1957
        %v1966 = vpack.c.b16 %v1963, %v1962
        %v1967 = vpack.c.b16 %v1965, %v1964
        %v1969 = vsel %vm1266, %v1966, 0
        %v1972 = vsel %vm1266, %v1967, 0
        %1974 = vmatprep.subr.bf16.mxu0 %v1952
        %1975 = vmatpush1.bf16.msra.mxu0 %v1951
        %1976 = vmatprep.subr.bf16.mxu0 0
        %1977 = vmatpush1.bf16.msra.mxu0 0
        %1978 = vmatprep.subr.bf16.mxu0 0
        %1979 = vmatpush1.bf16.msra.mxu0 0
        %1980 = vmatprep.subr.bf16.mxu0 0
        %1981 = vmatpush1.bf16.msra.mxu0 0
        %1982 = vmatprep.subr.bf16.mxu0 0
        %1983 = vmatpush1.bf16.msra.mxu0 0
        %1984 = vmatprep.subr.bf16.mxu0 0
        %1985 = vmatpush1.bf16.msra.mxu0 0
        %1986 = vmatprep.subr.bf16.mxu0 0
        %1987 = vmatpush1.bf16.msra.mxu0 0
        %1988 = vmatprep.subr.bf16.mxu0 0
        %1989 = vmatpush1.bf16.msra.mxu0 0
        %1990 = vmatprep.subr.bf16.mxu0 0
        %1991 = vmatpush1.bf16.msra.mxu0 0
        %1992 = vmatprep.subr.bf16.mxu0 0
        %1993 = vmatpush1.bf16.msra.mxu0 0
        %1994 = vmatprep.subr.bf16.mxu0 0
        %1995 = vmatpush1.bf16.msra.mxu0 0
        %1996 = vmatprep.subr.bf16.mxu0 0
        %1997 = vmatpush1.bf16.msra.mxu0 0
        %1998 = vmatprep.subr.bf16.mxu0 0
        %1999 = vmatpush1.bf16.msra.mxu0 0
        %2000 = vmatprep.subr.bf16.mxu0 0
        %2001 = vmatpush1.bf16.msra.mxu0 0
        %2002 = vmatprep.subr.bf16.mxu0 0
        %2003 = vmatpush1.bf16.msra.mxu0 0
        %2004 = vmatprep.subr.bf16.mxu0 0
        %2005 = vmatpush1.bf16.msra.mxu0 0
        %2006 = vmatprep.mubr.bf16.mxu0 0
        %2007 = vmatmul.mubr.bf16.gmra.mrb[0].mxu0 %v1969
        %v2008 = vpop.f32.mrb[0].mxu0
        %v2009 = vadd.f32 0.0, %v2008
        %v2010 = vpop.f32.mrb[0].mxu0
        %v2011 = vadd.f32 0.0, %v2010
        %v2012 = vpop.f32.mrb[0].mxu0
        %v2013 = vadd.f32 0.0, %v2012
        %v2014 = vpop.f32.mrb[0].mxu0
        %v2015 = vadd.f32 0.0, %v2014
        %2016 = vmatprep.mubr.bf16.mxu0 0
        %2017 = vmatmul.mubr.bf16.gmra.mrb[0].mxu0 %v1972
        %v2018 = vpop.f32.mrb[0].mxu0
        %v2019 = vadd.f32 0.0, %v2018
        %v2020 = vpop.f32.mrb[0].mxu0
        %v2021 = vadd.f32 0.0, %v2020
        %v2022 = vpop.f32.mrb[0].mxu0
        %v2023 = vadd.f32 0.0, %v2022
        %v2024 = vpop.f32.mrb[0].mxu0
        %v2025 = vadd.f32 0.0, %v2024
        %2026 = vdwg.mxu0
        %v2027 = vadd.f32 %v1707, %v2009
        %v2028 = vadd.f32 %v1708, %v2011
        %v2029 = vadd.f32 %v1709, %v2013
        %v2030 = vadd.f32 %v1710, %v2015
        %v2031 = vadd.f32 %v1711, %v2019
        %v2032 = vadd.f32 %v1712, %v2021
        %v2033 = vadd.f32 %v1713, %v2023
        %v2034 = vadd.f32 %v1714, %v2025
        %s2035 = scalar_lea.vmem %s3, 1024
        %v2036 = vld [vmem:[%s2035] sm:$0xff]
        %v2037 = vld [vmem:[%s2035 + $0x8] sm:$0xff]
        %v2038 = vld [vmem:[%s2035 + $0x10] sm:$0xff]
        %v2039 = vld [vmem:[%s2035 + $0x18] sm:$0xff]
        %v2040 = vld [vmem:[%s2035 + $0x20] sm:$0xff]
        %v2041 = vld [vmem:[%s2035 + $0x28] sm:$0xff]
        %v2042 = vld [vmem:[%s2035 + $0x30] sm:$0xff]
        %v2043 = vld [vmem:[%s2035 + $0x38] sm:$0xff]
        %v2044 = vld [vmem:[%s2035 + $0x40] sm:$0xff]
        %v2045 = vld [vmem:[%s2035 + $0x48] sm:$0xff]
        %v2046 = vld [vmem:[%s2035 + $0x50] sm:$0xff]
        %v2047 = vld [vmem:[%s2035 + $0x58] sm:$0xff]
        %v2048 = vld [vmem:[%s2035 + $0x60] sm:$0xff]
        %v2049 = vld [vmem:[%s2035 + $0x68] sm:$0xff]
        %v2050 = vld [vmem:[%s2035 + $0x70] sm:$0xff]
        %v2051 = vld [vmem:[%s2035 + $0x78] sm:$0xff]
        %v2052 = vld [vmem:[%s2035 + $0x80] sm:$0xff]
        %v2053 = vld [vmem:[%s2035 + $0x88] sm:$0xff]
        %v2054 = vld [vmem:[%s2035 + $0x90] sm:$0xff]
        %v2055 = vld [vmem:[%s2035 + $0x98] sm:$0xff]
        %v2056 = vld [vmem:[%s2035 + $0xa0] sm:$0xff]
        %v2057 = vld [vmem:[%s2035 + $0xa8] sm:$0xff]
        %v2058 = vld [vmem:[%s2035 + $0xb0] sm:$0xff]
        %v2059 = vld [vmem:[%s2035 + $0xb8] sm:$0xff]
        %v2060 = vld [vmem:[%s2035 + $0xc0] sm:$0xff]
        %v2061 = vld [vmem:[%s2035 + $0xc8] sm:$0xff]
        %v2062 = vld [vmem:[%s2035 + $0xd0] sm:$0xff]
        %v2063 = vld [vmem:[%s2035 + $0xd8] sm:$0xff]
        %v2064 = vld [vmem:[%s2035 + $0xe0] sm:$0xff]
        %v2065 = vld [vmem:[%s2035 + $0xe8] sm:$0xff]
        %v2066 = vld [vmem:[%s2035 + $0xf0] sm:$0xff]
        %v2067 = vld [vmem:[%s2035 + $0xf8] sm:$0xff]
        %v2100 = vunpack.c.l.b16 %v2036
        %v2101 = vunpack.c.h.b16 %v2036
        %v2102 = vunpack.c.l.b16 %v2037
        %v2103 = vunpack.c.h.b16 %v2037
        %v2104 = vunpack.c.l.b16 %v2038
        %v2105 = vunpack.c.h.b16 %v2038
        %v2106 = vunpack.c.l.b16 %v2039
        %v2107 = vunpack.c.h.b16 %v2039
        %v2108 = vunpack.c.l.b16 %v2040
        %v2109 = vunpack.c.h.b16 %v2040
        %v2110 = vunpack.c.l.b16 %v2041
        %v2111 = vunpack.c.h.b16 %v2041
        %v2112 = vunpack.c.l.b16 %v2042
        %v2113 = vunpack.c.h.b16 %v2042
        %v2114 = vunpack.c.l.b16 %v2043
        %v2115 = vunpack.c.h.b16 %v2043
        %v2116 = vunpack.c.l.b16 %v2044
        %v2117 = vunpack.c.h.b16 %v2044
        %v2118 = vunpack.c.l.b16 %v2045
        %v2119 = vunpack.c.h.b16 %v2045
        %v2120 = vunpack.c.l.b16 %v2046
        %v2121 = vunpack.c.h.b16 %v2046
        %v2122 = vunpack.c.l.b16 %v2047
        %v2123 = vunpack.c.h.b16 %v2047
        %v2124 = vunpack.c.l.b16 %v2048
        %v2125 = vunpack.c.h.b16 %v2048
        %v2126 = vunpack.c.l.b16 %v2049
        %v2127 = vunpack.c.h.b16 %v2049
        %v2128 = vunpack.c.l.b16 %v2050
        %v2129 = vunpack.c.h.b16 %v2050
        %v2130 = vunpack.c.l.b16 %v2051
        %v2131 = vunpack.c.h.b16 %v2051
        %v2132 = vunpack.c.l.b16 %v2052
        %v2133 = vunpack.c.h.b16 %v2052
        %v2134 = vunpack.c.l.b16 %v2053
        %v2135 = vunpack.c.h.b16 %v2053
        %v2136 = vunpack.c.l.b16 %v2054
        %v2137 = vunpack.c.h.b16 %v2054
        %v2138 = vunpack.c.l.b16 %v2055
        %v2139 = vunpack.c.h.b16 %v2055
        %v2140 = vunpack.c.l.b16 %v2056
        %v2141 = vunpack.c.h.b16 %v2056
        %v2142 = vunpack.c.l.b16 %v2057
        %v2143 = vunpack.c.h.b16 %v2057
        %v2144 = vunpack.c.l.b16 %v2058
        %v2145 = vunpack.c.h.b16 %v2058
        %v2146 = vunpack.c.l.b16 %v2059
        %v2147 = vunpack.c.h.b16 %v2059
        %v2148 = vunpack.c.l.b16 %v2060
        %v2149 = vunpack.c.h.b16 %v2060
        %v2150 = vunpack.c.l.b16 %v2061
        %v2151 = vunpack.c.h.b16 %v2061
        %v2152 = vunpack.c.l.b16 %v2062
        %v2153 = vunpack.c.h.b16 %v2062
        %v2154 = vunpack.c.l.b16 %v2063
        %v2155 = vunpack.c.h.b16 %v2063
        %v2156 = vunpack.c.l.b16 %v2064
        %v2157 = vunpack.c.h.b16 %v2064
        %v2158 = vunpack.c.l.b16 %v2065
        %v2159 = vunpack.c.h.b16 %v2065
        %v2160 = vunpack.c.l.b16 %v2066
        %v2161 = vunpack.c.h.b16 %v2066
        %v2162 = vunpack.c.l.b16 %v2067
        %v2163 = vunpack.c.h.b16 %v2067
        %v2164 = vpack.c.b16 %v2102, %v2100
        %v2165 = vpack.c.b16 %v2103, %v2101
        %v2166 = vpack.c.b16 %v2106, %v2104
        %v2167 = vpack.c.b16 %v2107, %v2105
        %v2168 = vpack.c.b16 %v2110, %v2108
        %v2169 = vpack.c.b16 %v2111, %v2109
        %v2170 = vpack.c.b16 %v2114, %v2112
        %v2171 = vpack.c.b16 %v2115, %v2113
        %v2172 = vpack.c.b16 %v2118, %v2116
        %v2173 = vpack.c.b16 %v2119, %v2117
        %v2174 = vpack.c.b16 %v2122, %v2120
        %v2175 = vpack.c.b16 %v2123, %v2121
        %v2176 = vpack.c.b16 %v2126, %v2124
        %v2177 = vpack.c.b16 %v2127, %v2125
        %v2178 = vpack.c.b16 %v2130, %v2128
        %v2179 = vpack.c.b16 %v2131, %v2129
        %v2180 = vpack.c.b16 %v2134, %v2132
        %v2181 = vpack.c.b16 %v2135, %v2133
        %v2182 = vpack.c.b16 %v2138, %v2136
        %v2183 = vpack.c.b16 %v2139, %v2137
        %v2184 = vpack.c.b16 %v2142, %v2140
        %v2185 = vpack.c.b16 %v2143, %v2141
        %v2186 = vpack.c.b16 %v2146, %v2144
        %v2187 = vpack.c.b16 %v2147, %v2145
        %v2188 = vpack.c.b16 %v2150, %v2148
        %v2189 = vpack.c.b16 %v2151, %v2149
        %v2190 = vpack.c.b16 %v2154, %v2152
        %v2191 = vpack.c.b16 %v2155, %v2153
        %v2192 = vpack.c.b16 %v2158, %v2156
        %v2193 = vpack.c.b16 %v2159, %v2157
        %v2194 = vpack.c.b16 %v2162, %v2160
        %v2195 = vpack.c.b16 %v2163, %v2161
        %2228 = vmatprep.subr.bf16.mxu0 %v2165
        %2229 = vmatpush1.bf16.msra.mxu0 %v2164
        %2230 = vmatprep.subr.bf16.mxu0 %v2167
        %2231 = vmatpush1.bf16.msra.mxu0 %v2166
        %2232 = vmatprep.subr.bf16.mxu0 %v2169
        %2233 = vmatpush1.bf16.msra.mxu0 %v2168
        %2234 = vmatprep.subr.bf16.mxu0 %v2171
        %2235 = vmatpush1.bf16.msra.mxu0 %v2170
        %2236 = vmatprep.subr.bf16.mxu0 %v2173
        %2237 = vmatpush1.bf16.msra.mxu0 %v2172
        %2238 = vmatprep.subr.bf16.mxu0 %v2175
        %2239 = vmatpush1.bf16.msra.mxu0 %v2174
        %2240 = vmatprep.subr.bf16.mxu0 %v2177
        %2241 = vmatpush1.bf16.msra.mxu0 %v2176
        %2242 = vmatprep.subr.bf16.mxu0 %v2179
        %2243 = vmatpush1.bf16.msra.mxu0 %v2178
        %2244 = vmatprep.subr.bf16.mxu0 %v2181
        %2245 = vmatpush1.bf16.msra.mxu0 %v2180
        %2246 = vmatprep.subr.bf16.mxu0 %v2183
        %2247 = vmatpush1.bf16.msra.mxu0 %v2182
        %2248 = vmatprep.subr.bf16.mxu0 %v2185
        %2249 = vmatpush1.bf16.msra.mxu0 %v2184
        %2250 = vmatprep.subr.bf16.mxu0 %v2187
        %2251 = vmatpush1.bf16.msra.mxu0 %v2186
        %2252 = vmatprep.subr.bf16.mxu0 %v2189
        %2253 = vmatpush1.bf16.msra.mxu0 %v2188
        %2254 = vmatprep.subr.bf16.mxu0 %v2191
        %2255 = vmatpush1.bf16.msra.mxu0 %v2190
        %2256 = vmatprep.subr.bf16.mxu0 %v2193
        %2257 = vmatpush1.bf16.msra.mxu0 %v2192
        %2258 = vmatprep.subr.bf16.mxu0 %v2195
        %2259 = vmatpush1.bf16.msra.mxu0 %v2194
        %2260 = vmatprep.mubr.bf16.mxu0 %v771
        %2261 = vmatmul.mubr.bf16.gmra.mrb[0].mxu0 %v770
        %v2262 = vpop.f32.mrb[0].mxu0
        %v2263 = vadd.f32 0.0, %v2262
        %v2264 = vpop.f32.mrb[0].mxu0
        %v2265 = vadd.f32 0.0, %v2264
        %v2266 = vpop.f32.mrb[0].mxu0
        %v2267 = vadd.f32 0.0, %v2266
        %v2268 = vpop.f32.mrb[0].mxu0
        %v2269 = vadd.f32 0.0, %v2268
        %2270 = vdwg.mxu0
        %v2271 = vpack.c.bf16 %v2267, %v2263
        %v2272 = vpack.c.bf16 %v2269, %v2265
        %s2273 = scalar_lea.vmem %s4, 64
        %v2274 = vld [vmem:[%s2273] sm:$0xf]
        %v2275 = vld [vmem:[%s2273 + $0x4] sm:$0xf]
        %v2276 = vld [vmem:[%s2273 + $0x8] sm:$0xf]
        %v2277 = vld [vmem:[%s2273 + $0xc] sm:$0xf]
        %v2282 = vunpack.c.l.b16 %v2274
        %v2283 = vunpack.c.l.b16 %v2275
        %v2284 = vunpack.c.l.b16 %v2276
        %v2285 = vunpack.c.l.b16 %v2277
        %v2286 = vpack.c.b16 %v2283, %v2282
        %v2287 = vpack.c.b16 %v2285, %v2284
        %v2289 = vsel %vm1266, %v2286, 0
        %v2292 = vsel %vm1266, %v2287, 0
        %2294 = vmatprep.subr.bf16.mxu0 %v2272
        %2295 = vmatpush1.bf16.msra.mxu0 %v2271
        %2296 = vmatprep.subr.bf16.mxu0 0
        %2297 = vmatpush1.bf16.msra.mxu0 0
        %2298 = vmatprep.subr.bf16.mxu0 0
        %2299 = vmatpush1.bf16.msra.mxu0 0
        %2300 = vmatprep.subr.bf16.mxu0 0
        %2301 = vmatpush1.bf16.msra.mxu0 0
        %2302 = vmatprep.subr.bf16.mxu0 0
        %2303 = vmatpush1.bf16.msra.mxu0 0
        %2304 = vmatprep.subr.bf16.mxu0 0
        %2305 = vmatpush1.bf16.msra.mxu0 0
        %2306 = vmatprep.subr.bf16.mxu0 0
        %2307 = vmatpush1.bf16.msra.mxu0 0
        %2308 = vmatprep.subr.bf16.mxu0 0
        %2309 = vmatpush1.bf16.msra.mxu0 0
        %2310 = vmatprep.subr.bf16.mxu0 0
        %2311 = vmatpush1.bf16.msra.mxu0 0
        %2312 = vmatprep.subr.bf16.mxu0 0
        %2313 = vmatpush1.bf16.msra.mxu0 0
        %2314 = vmatprep.subr.bf16.mxu0 0
        %2315 = vmatpush1.bf16.msra.mxu0 0
        %2316 = vmatprep.subr.bf16.mxu0 0
        %2317 = vmatpush1.bf16.msra.mxu0 0
        %2318 = vmatprep.subr.bf16.mxu0 0
        %2319 = vmatpush1.bf16.msra.mxu0 0
        %2320 = vmatprep.subr.bf16.mxu0 0
        %2321 = vmatpush1.bf16.msra.mxu0 0
        %2322 = vmatprep.subr.bf16.mxu0 0
        %2323 = vmatpush1.bf16.msra.mxu0 0
        %2324 = vmatprep.subr.bf16.mxu0 0
        %2325 = vmatpush1.bf16.msra.mxu0 0
        %2326 = vmatprep.mubr.bf16.mxu0 0
        %2327 = vmatmul.mubr.bf16.gmra.mrb[0].mxu0 %v2289
        %v2328 = vpop.f32.mrb[0].mxu0
        %v2329 = vadd.f32 0.0, %v2328
        %v2330 = vpop.f32.mrb[0].mxu0
        %v2331 = vadd.f32 0.0, %v2330
        %v2332 = vpop.f32.mrb[0].mxu0
        %v2333 = vadd.f32 0.0, %v2332
        %v2334 = vpop.f32.mrb[0].mxu0
        %v2335 = vadd.f32 0.0, %v2334
        %2336 = vmatprep.mubr.bf16.mxu0 0
        %2337 = vmatmul.mubr.bf16.gmra.mrb[0].mxu0 %v2292
        %v2338 = vpop.f32.mrb[0].mxu0
        %v2339 = vadd.f32 0.0, %v2338
        %v2340 = vpop.f32.mrb[0].mxu0
        %v2341 = vadd.f32 0.0, %v2340
        %v2342 = vpop.f32.mrb[0].mxu0
        %v2343 = vadd.f32 0.0, %v2342
        %v2344 = vpop.f32.mrb[0].mxu0
        %v2345 = vadd.f32 0.0, %v2344
        %2346 = vdwg.mxu0
        %v2347 = vadd.f32 %v2027, %v2329
        %v2348 = vadd.f32 %v2028, %v2331
        %v2349 = vadd.f32 %v2029, %v2333
        %v2350 = vadd.f32 %v2030, %v2335
        %v2351 = vadd.f32 %v2031, %v2339
        %v2352 = vadd.f32 %v2032, %v2341
        %v2353 = vadd.f32 %v2033, %v2343
        %v2354 = vadd.f32 %v2034, %v2345
        %s2355 = scalar_lea.vmem %s3, 1280
        %v2356 = vld [vmem:[%s2355] sm:$0xff]
        %v2357 = vld [vmem:[%s2355 + $0x8] sm:$0xff]
        %v2358 = vld [vmem:[%s2355 + $0x10] sm:$0xff]
        %v2359 = vld [vmem:[%s2355 + $0x18] sm:$0xff]
        %v2360 = vld [vmem:[%s2355 + $0x20] sm:$0xff]
        %v2361 = vld [vmem:[%s2355 + $0x28] sm:$0xff]
        %v2362 = vld [vmem:[%s2355 + $0x30] sm:$0xff]
        %v2363 = vld [vmem:[%s2355 + $0x38] sm:$0xff]
        %v2364 = vld [vmem:[%s2355 + $0x40] sm:$0xff]
        %v2365 = vld [vmem:[%s2355 + $0x48] sm:$0xff]
        %v2366 = vld [vmem:[%s2355 + $0x50] sm:$0xff]
        %v2367 = vld [vmem:[%s2355 + $0x58] sm:$0xff]
        %v2368 = vld [vmem:[%s2355 + $0x60] sm:$0xff]
        %v2369 = vld [vmem:[%s2355 + $0x68] sm:$0xff]
        %v2370 = vld [vmem:[%s2355 + $0x70] sm:$0xff]
        %v2371 = vld [vmem:[%s2355 + $0x78] sm:$0xff]
        %v2372 = vld [vmem:[%s2355 + $0x80] sm:$0xff]
        %v2373 = vld [vmem:[%s2355 + $0x88] sm:$0xff]
        %v2374 = vld [vmem:[%s2355 + $0x90] sm:$0xff]
        %v2375 = vld [vmem:[%s2355 + $0x98] sm:$0xff]
        %v2376 = vld [vmem:[%s2355 + $0xa0] sm:$0xff]
        %v2377 = vld [vmem:[%s2355 + $0xa8] sm:$0xff]
        %v2378 = vld [vmem:[%s2355 + $0xb0] sm:$0xff]
        %v2379 = vld [vmem:[%s2355 + $0xb8] sm:$0xff]
        %v2380 = vld [vmem:[%s2355 + $0xc0] sm:$0xff]
        %v2381 = vld [vmem:[%s2355 + $0xc8] sm:$0xff]
        %v2382 = vld [vmem:[%s2355 + $0xd0] sm:$0xff]
        %v2383 = vld [vmem:[%s2355 + $0xd8] sm:$0xff]
        %v2384 = vld [vmem:[%s2355 + $0xe0] sm:$0xff]
        %v2385 = vld [vmem:[%s2355 + $0xe8] sm:$0xff]
        %v2386 = vld [vmem:[%s2355 + $0xf0] sm:$0xff]
        %v2387 = vld [vmem:[%s2355 + $0xf8] sm:$0xff]
        %v2420 = vunpack.c.l.b16 %v2356
        %v2421 = vunpack.c.h.b16 %v2356
        %v2422 = vunpack.c.l.b16 %v2357
        %v2423 = vunpack.c.h.b16 %v2357
        %v2424 = vunpack.c.l.b16 %v2358
        %v2425 = vunpack.c.h.b16 %v2358
        %v2426 = vunpack.c.l.b16 %v2359
        %v2427 = vunpack.c.h.b16 %v2359
        %v2428 = vunpack.c.l.b16 %v2360
        %v2429 = vunpack.c.h.b16 %v2360
        %v2430 = vunpack.c.l.b16 %v2361
        %v2431 = vunpack.c.h.b16 %v2361
        %v2432 = vunpack.c.l.b16 %v2362
        %v2433 = vunpack.c.h.b16 %v2362
        %v2434 = vunpack.c.l.b16 %v2363
        %v2435 = vunpack.c.h.b16 %v2363
        %v2436 = vunpack.c.l.b16 %v2364
        %v2437 = vunpack.c.h.b16 %v2364
        %v2438 = vunpack.c.l.b16 %v2365
        %v2439 = vunpack.c.h.b16 %v2365
        %v2440 = vunpack.c.l.b16 %v2366
        %v2441 = vunpack.c.h.b16 %v2366
        %v2442 = vunpack.c.l.b16 %v2367
        %v2443 = vunpack.c.h.b16 %v2367
        %v2444 = vunpack.c.l.b16 %v2368
        %v2445 = vunpack.c.h.b16 %v2368
        %v2446 = vunpack.c.l.b16 %v2369
        %v2447 = vunpack.c.h.b16 %v2369
        %v2448 = vunpack.c.l.b16 %v2370
        %v2449 = vunpack.c.h.b16 %v2370
        %v2450 = vunpack.c.l.b16 %v2371
        %v2451 = vunpack.c.h.b16 %v2371
        %v2452 = vunpack.c.l.b16 %v2372
        %v2453 = vunpack.c.h.b16 %v2372
        %v2454 = vunpack.c.l.b16 %v2373
        %v2455 = vunpack.c.h.b16 %v2373
        %v2456 = vunpack.c.l.b16 %v2374
        %v2457 = vunpack.c.h.b16 %v2374
        %v2458 = vunpack.c.l.b16 %v2375
        %v2459 = vunpack.c.h.b16 %v2375
        %v2460 = vunpack.c.l.b16 %v2376
        %v2461 = vunpack.c.h.b16 %v2376
        %v2462 = vunpack.c.l.b16 %v2377
        %v2463 = vunpack.c.h.b16 %v2377
        %v2464 = vunpack.c.l.b16 %v2378
        %v2465 = vunpack.c.h.b16 %v2378
        %v2466 = vunpack.c.l.b16 %v2379
        %v2467 = vunpack.c.h.b16 %v2379
        %v2468 = vunpack.c.l.b16 %v2380
        %v2469 = vunpack.c.h.b16 %v2380
        %v2470 = vunpack.c.l.b16 %v2381
        %v2471 = vunpack.c.h.b16 %v2381
        %v2472 = vunpack.c.l.b16 %v2382
        %v2473 = vunpack.c.h.b16 %v2382
        %v2474 = vunpack.c.l.b16 %v2383
        %v2475 = vunpack.c.h.b16 %v2383
        %v2476 = vunpack.c.l.b16 %v2384
        %v2477 = vunpack.c.h.b16 %v2384
        %v2478 = vunpack.c.l.b16 %v2385
        %v2479 = vunpack.c.h.b16 %v2385
        %v2480 = vunpack.c.l.b16 %v2386
        %v2481 = vunpack.c.h.b16 %v2386
        %v2482 = vunpack.c.l.b16 %v2387
        %v2483 = vunpack.c.h.b16 %v2387
        %v2484 = vpack.c.b16 %v2422, %v2420
        %v2485 = vpack.c.b16 %v2423, %v2421
        %v2486 = vpack.c.b16 %v2426, %v2424
        %v2487 = vpack.c.b16 %v2427, %v2425
        %v2488 = vpack.c.b16 %v2430, %v2428
        %v2489 = vpack.c.b16 %v2431, %v2429
        %v2490 = vpack.c.b16 %v2434, %v2432
        %v2491 = vpack.c.b16 %v2435, %v2433
        %v2492 = vpack.c.b16 %v2438, %v2436
        %v2493 = vpack.c.b16 %v2439, %v2437
        %v2494 = vpack.c.b16 %v2442, %v2440
        %v2495 = vpack.c.b16 %v2443, %v2441
        %v2496 = vpack.c.b16 %v2446, %v2444
        %v2497 = vpack.c.b16 %v2447, %v2445
        %v2498 = vpack.c.b16 %v2450, %v2448
        %v2499 = vpack.c.b16 %v2451, %v2449
        %v2500 = vpack.c.b16 %v2454, %v2452
        %v2501 = vpack.c.b16 %v2455, %v2453
        %v2502 = vpack.c.b16 %v2458, %v2456
        %v2503 = vpack.c.b16 %v2459, %v2457
        %v2504 = vpack.c.b16 %v2462, %v2460
        %v2505 = vpack.c.b16 %v2463, %v2461
        %v2506 = vpack.c.b16 %v2466, %v2464
        %v2507 = vpack.c.b16 %v2467, %v2465
        %v2508 = vpack.c.b16 %v2470, %v2468
        %v2509 = vpack.c.b16 %v2471, %v2469
        %v2510 = vpack.c.b16 %v2474, %v2472
        %v2511 = vpack.c.b16 %v2475, %v2473
        %v2512 = vpack.c.b16 %v2478, %v2476
        %v2513 = vpack.c.b16 %v2479, %v2477
        %v2514 = vpack.c.b16 %v2482, %v2480
        %v2515 = vpack.c.b16 %v2483, %v2481
        %2548 = vmatprep.subr.bf16.mxu0 %v2485
        %2549 = vmatpush1.bf16.msra.mxu0 %v2484
        %2550 = vmatprep.subr.bf16.mxu0 %v2487
        %2551 = vmatpush1.bf16.msra.mxu0 %v2486
        %2552 = vmatprep.subr.bf16.mxu0 %v2489
        %2553 = vmatpush1.bf16.msra.mxu0 %v2488
        %2554 = vmatprep.subr.bf16.mxu0 %v2491
        %2555 = vmatpush1.bf16.msra.mxu0 %v2490
        %2556 = vmatprep.subr.bf16.mxu0 %v2493
        %2557 = vmatpush1.bf16.msra.mxu0 %v2492
        %2558 = vmatprep.subr.bf16.mxu0 %v2495
        %2559 = vmatpush1.bf16.msra.mxu0 %v2494
        %2560 = vmatprep.subr.bf16.mxu0 %v2497
        %2561 = vmatpush1.bf16.msra.mxu0 %v2496
        %2562 = vmatprep.subr.bf16.mxu0 %v2499
        %2563 = vmatpush1.bf16.msra.mxu0 %v2498
        %2564 = vmatprep.subr.bf16.mxu0 %v2501
        %2565 = vmatpush1.bf16.msra.mxu0 %v2500
        %2566 = vmatprep.subr.bf16.mxu0 %v2503
        %2567 = vmatpush1.bf16.msra.mxu0 %v2502
        %2568 = vmatprep.subr.bf16.mxu0 %v2505
        %2569 = vmatpush1.bf16.msra.mxu0 %v2504
        %2570 = vmatprep.subr.bf16.mxu0 %v2507
        %2571 = vmatpush1.bf16.msra.mxu0 %v2506
        %2572 = vmatprep.subr.bf16.mxu0 %v2509
        %2573 = vmatpush1.bf16.msra.mxu0 %v2508
        %2574 = vmatprep.subr.bf16.mxu0 %v2511
        %2575 = vmatpush1.bf16.msra.mxu0 %v2510
        %2576 = vmatprep.subr.bf16.mxu0 %v2513
        %2577 = vmatpush1.bf16.msra.mxu0 %v2512
        %2578 = vmatprep.subr.bf16.mxu0 %v2515
        %2579 = vmatpush1.bf16.msra.mxu0 %v2514
        %2580 = vmatprep.mubr.bf16.mxu0 %v771
        %2581 = vmatmul.mubr.bf16.gmra.mrb[0].mxu0 %v770
        %v2582 = vpop.f32.mrb[0].mxu0
        %v2583 = vadd.f32 0.0, %v2582
        %v2584 = vpop.f32.mrb[0].mxu0
        %v2585 = vadd.f32 0.0, %v2584
        %v2586 = vpop.f32.mrb[0].mxu0
        %v2587 = vadd.f32 0.0, %v2586
        %v2588 = vpop.f32.mrb[0].mxu0
        %v2589 = vadd.f32 0.0, %v2588
        %2590 = vdwg.mxu0
        %v2591 = vpack.c.bf16 %v2587, %v2583
        %v2592 = vpack.c.bf16 %v2589, %v2585
        %s2593 = scalar_lea.vmem %s4, 80
        %v2594 = vld [vmem:[%s2593] sm:$0xf]
        %v2595 = vld [vmem:[%s2593 + $0x4] sm:$0xf]
        %v2596 = vld [vmem:[%s2593 + $0x8] sm:$0xf]
        %v2597 = vld [vmem:[%s2593 + $0xc] sm:$0xf]
        %v2602 = vunpack.c.l.b16 %v2594
        %v2603 = vunpack.c.l.b16 %v2595
        %v2604 = vunpack.c.l.b16 %v2596
        %v2605 = vunpack.c.l.b16 %v2597
        %v2606 = vpack.c.b16 %v2603, %v2602
        %v2607 = vpack.c.b16 %v2605, %v2604
        %v2609 = vsel %vm1266, %v2606, 0
        %v2612 = vsel %vm1266, %v2607, 0
        %2614 = vmatprep.subr.bf16.mxu0 %v2592
        %2615 = vmatpush1.bf16.msra.mxu0 %v2591
        %2616 = vmatprep.subr.bf16.mxu0 0
        %2617 = vmatpush1.bf16.msra.mxu0 0
        %2618 = vmatprep.subr.bf16.mxu0 0
        %2619 = vmatpush1.bf16.msra.mxu0 0
        %2620 = vmatprep.subr.bf16.mxu0 0
        %2621 = vmatpush1.bf16.msra.mxu0 0
        %2622 = vmatprep.subr.bf16.mxu0 0
        %2623 = vmatpush1.bf16.msra.mxu0 0
        %2624 = vmatprep.subr.bf16.mxu0 0
        %2625 = vmatpush1.bf16.msra.mxu0 0
        %2626 = vmatprep.subr.bf16.mxu0 0
        %2627 = vmatpush1.bf16.msra.mxu0 0
        %2628 = vmatprep.subr.bf16.mxu0 0
        %2629 = vmatpush1.bf16.msra.mxu0 0
        %2630 = vmatprep.subr.bf16.mxu0 0
        %2631 = vmatpush1.bf16.msra.mxu0 0
        %2632 = vmatprep.subr.bf16.mxu0 0
        %2633 = vmatpush1.bf16.msra.mxu0 0
        %2634 = vmatprep.subr.bf16.mxu0 0
        %2635 = vmatpush1.bf16.msra.mxu0 0
        %2636 = vmatprep.subr.bf16.mxu0 0
        %2637 = vmatpush1.bf16.msra.mxu0 0
        %2638 = vmatprep.subr.bf16.mxu0 0
        %2639 = vmatpush1.bf16.msra.mxu0 0
        %2640 = vmatprep.subr.bf16.mxu0 0
        %2641 = vmatpush1.bf16.msra.mxu0 0
        %2642 = vmatprep.subr.bf16.mxu0 0
        %2643 = vmatpush1.bf16.msra.mxu0 0
        %2644 = vmatprep.subr.bf16.mxu0 0
        %2645 = vmatpush1.bf16.msra.mxu0 0
        %2646 = vmatprep.mubr.bf16.mxu0 0
        %2647 = vmatmul.mubr.bf16.gmra.mrb[0].mxu0 %v2609
        %v2648 = vpop.f32.mrb[0].mxu0
        %v2649 = vadd.f32 0.0, %v2648
        %v2650 = vpop.f32.mrb[0].mxu0
        %v2651 = vadd.f32 0.0, %v2650
        %v2652 = vpop.f32.mrb[0].mxu0
        %v2653 = vadd.f32 0.0, %v2652
        %v2654 = vpop.f32.mrb[0].mxu0
        %v2655 = vadd.f32 0.0, %v2654
        %2656 = vmatprep.mubr.bf16.mxu0 0
        %2657 = vmatmul.mubr.bf16.gmra.mrb[0].mxu0 %v2612
        %v2658 = vpop.f32.mrb[0].mxu0
        %v2659 = vadd.f32 0.0, %v2658
        %v2660 = vpop.f32.mrb[0].mxu0
        %v2661 = vadd.f32 0.0, %v2660
        %v2662 = vpop.f32.mrb[0].mxu0
        %v2663 = vadd.f32 0.0, %v2662
        %v2664 = vpop.f32.mrb[0].mxu0
        %v2665 = vadd.f32 0.0, %v2664
        %2666 = vdwg.mxu0
        %v2667 = vadd.f32 %v2347, %v2649
        %v2668 = vadd.f32 %v2348, %v2651
        %v2669 = vadd.f32 %v2349, %v2653
        %v2670 = vadd.f32 %v2350, %v2655
        %v2671 = vadd.f32 %v2351, %v2659
        %v2672 = vadd.f32 %v2352, %v2661
        %v2673 = vadd.f32 %v2353, %v2663
        %v2674 = vadd.f32 %v2354, %v2665
        %s2675 = scalar_lea.vmem %s3, 1536
        %v2676 = vld [vmem:[%s2675] sm:$0xff]
        %v2677 = vld [vmem:[%s2675 + $0x8] sm:$0xff]
        %v2678 = vld [vmem:[%s2675 + $0x10] sm:$0xff]
        %v2679 = vld [vmem:[%s2675 + $0x18] sm:$0xff]
        %v2680 = vld [vmem:[%s2675 + $0x20] sm:$0xff]
        %v2681 = vld [vmem:[%s2675 + $0x28] sm:$0xff]
        %v2682 = vld [vmem:[%s2675 + $0x30] sm:$0xff]
        %v2683 = vld [vmem:[%s2675 + $0x38] sm:$0xff]
        %v2684 = vld [vmem:[%s2675 + $0x40] sm:$0xff]
        %v2685 = vld [vmem:[%s2675 + $0x48] sm:$0xff]
        %v2686 = vld [vmem:[%s2675 + $0x50] sm:$0xff]
        %v2687 = vld [vmem:[%s2675 + $0x58] sm:$0xff]
        %v2688 = vld [vmem:[%s2675 + $0x60] sm:$0xff]
        %v2689 = vld [vmem:[%s2675 + $0x68] sm:$0xff]
        %v2690 = vld [vmem:[%s2675 + $0x70] sm:$0xff]
        %v2691 = vld [vmem:[%s2675 + $0x78] sm:$0xff]
        %v2692 = vld [vmem:[%s2675 + $0x80] sm:$0xff]
        %v2693 = vld [vmem:[%s2675 + $0x88] sm:$0xff]
        %v2694 = vld [vmem:[%s2675 + $0x90] sm:$0xff]
        %v2695 = vld [vmem:[%s2675 + $0x98] sm:$0xff]
        %v2696 = vld [vmem:[%s2675 + $0xa0] sm:$0xff]
        %v2697 = vld [vmem:[%s2675 + $0xa8] sm:$0xff]
        %v2698 = vld [vmem:[%s2675 + $0xb0] sm:$0xff]
        %v2699 = vld [vmem:[%s2675 + $0xb8] sm:$0xff]
        %v2700 = vld [vmem:[%s2675 + $0xc0] sm:$0xff]
        %v2701 = vld [vmem:[%s2675 + $0xc8] sm:$0xff]
        %v2702 = vld [vmem:[%s2675 + $0xd0] sm:$0xff]
        %v2703 = vld [vmem:[%s2675 + $0xd8] sm:$0xff]
        %v2704 = vld [vmem:[%s2675 + $0xe0] sm:$0xff]
        %v2705 = vld [vmem:[%s2675 + $0xe8] sm:$0xff]
        %v2706 = vld [vmem:[%s2675 + $0xf0] sm:$0xff]
        %v2707 = vld [vmem:[%s2675 + $0xf8] sm:$0xff]
        %v2740 = vunpack.c.l.b16 %v2676
        %v2741 = vunpack.c.h.b16 %v2676
        %v2742 = vunpack.c.l.b16 %v2677
        %v2743 = vunpack.c.h.b16 %v2677
        %v2744 = vunpack.c.l.b16 %v2678
        %v2745 = vunpack.c.h.b16 %v2678
        %v2746 = vunpack.c.l.b16 %v2679
        %v2747 = vunpack.c.h.b16 %v2679
        %v2748 = vunpack.c.l.b16 %v2680
        %v2749 = vunpack.c.h.b16 %v2680
        %v2750 = vunpack.c.l.b16 %v2681
        %v2751 = vunpack.c.h.b16 %v2681
        %v2752 = vunpack.c.l.b16 %v2682
        %v2753 = vunpack.c.h.b16 %v2682
        %v2754 = vunpack.c.l.b16 %v2683
        %v2755 = vunpack.c.h.b16 %v2683
        %v2756 = vunpack.c.l.b16 %v2684
        %v2757 = vunpack.c.h.b16 %v2684
        %v2758 = vunpack.c.l.b16 %v2685
        %v2759 = vunpack.c.h.b16 %v2685
        %v2760 = vunpack.c.l.b16 %v2686
        %v2761 = vunpack.c.h.b16 %v2686
        %v2762 = vunpack.c.l.b16 %v2687
        %v2763 = vunpack.c.h.b16 %v2687
        %v2764 = vunpack.c.l.b16 %v2688
        %v2765 = vunpack.c.h.b16 %v2688
        %v2766 = vunpack.c.l.b16 %v2689
        %v2767 = vunpack.c.h.b16 %v2689
        %v2768 = vunpack.c.l.b16 %v2690
        %v2769 = vunpack.c.h.b16 %v2690
        %v2770 = vunpack.c.l.b16 %v2691
        %v2771 = vunpack.c.h.b16 %v2691
        %v2772 = vunpack.c.l.b16 %v2692
        %v2773 = vunpack.c.h.b16 %v2692
        %v2774 = vunpack.c.l.b16 %v2693
        %v2775 = vunpack.c.h.b16 %v2693
        %v2776 = vunpack.c.l.b16 %v2694
        %v2777 = vunpack.c.h.b16 %v2694
        %v2778 = vunpack.c.l.b16 %v2695
        %v2779 = vunpack.c.h.b16 %v2695
        %v2780 = vunpack.c.l.b16 %v2696
        %v2781 = vunpack.c.h.b16 %v2696
        %v2782 = vunpack.c.l.b16 %v2697
        %v2783 = vunpack.c.h.b16 %v2697
        %v2784 = vunpack.c.l.b16 %v2698
        %v2785 = vunpack.c.h.b16 %v2698
        %v2786 = vunpack.c.l.b16 %v2699
        %v2787 = vunpack.c.h.b16 %v2699
        %v2788 = vunpack.c.l.b16 %v2700
        %v2789 = vunpack.c.h.b16 %v2700
        %v2790 = vunpack.c.l.b16 %v2701
        %v2791 = vunpack.c.h.b16 %v2701
        %v2792 = vunpack.c.l.b16 %v2702
        %v2793 = vunpack.c.h.b16 %v2702
        %v2794 = vunpack.c.l.b16 %v2703
        %v2795 = vunpack.c.h.b16 %v2703
        %v2796 = vunpack.c.l.b16 %v2704
        %v2797 = vunpack.c.h.b16 %v2704
        %v2798 = vunpack.c.l.b16 %v2705
        %v2799 = vunpack.c.h.b16 %v2705
        %v2800 = vunpack.c.l.b16 %v2706
        %v2801 = vunpack.c.h.b16 %v2706
        %v2802 = vunpack.c.l.b16 %v2707
        %v2803 = vunpack.c.h.b16 %v2707
        %v2804 = vpack.c.b16 %v2742, %v2740
        %v2805 = vpack.c.b16 %v2743, %v2741
        %v2806 = vpack.c.b16 %v2746, %v2744
        %v2807 = vpack.c.b16 %v2747, %v2745
        %v2808 = vpack.c.b16 %v2750, %v2748
        %v2809 = vpack.c.b16 %v2751, %v2749
        %v2810 = vpack.c.b16 %v2754, %v2752
        %v2811 = vpack.c.b16 %v2755, %v2753
        %v2812 = vpack.c.b16 %v2758, %v2756
        %v2813 = vpack.c.b16 %v2759, %v2757
        %v2814 = vpack.c.b16 %v2762, %v2760
        %v2815 = vpack.c.b16 %v2763, %v2761
        %v2816 = vpack.c.b16 %v2766, %v2764
        %v2817 = vpack.c.b16 %v2767, %v2765
        %v2818 = vpack.c.b16 %v2770, %v2768
        %v2819 = vpack.c.b16 %v2771, %v2769
        %v2820 = vpack.c.b16 %v2774, %v2772
        %v2821 = vpack.c.b16 %v2775, %v2773
        %v2822 = vpack.c.b16 %v2778, %v2776
        %v2823 = vpack.c.b16 %v2779, %v2777
        %v2824 = vpack.c.b16 %v2782, %v2780
        %v2825 = vpack.c.b16 %v2783, %v2781
        %v2826 = vpack.c.b16 %v2786, %v2784
        %v2827 = vpack.c.b16 %v2787, %v2785
        %v2828 = vpack.c.b16 %v2790, %v2788
        %v2829 = vpack.c.b16 %v2791, %v2789
        %v2830 = vpack.c.b16 %v2794, %v2792
        %v2831 = vpack.c.b16 %v2795, %v2793
        %v2832 = vpack.c.b16 %v2798, %v2796
        %v2833 = vpack.c.b16 %v2799, %v2797
        %v2834 = vpack.c.b16 %v2802, %v2800
        %v2835 = vpack.c.b16 %v2803, %v2801
        %2868 = vmatprep.subr.bf16.mxu0 %v2805
        %2869 = vmatpush1.bf16.msra.mxu0 %v2804
        %2870 = vmatprep.subr.bf16.mxu0 %v2807
        %2871 = vmatpush1.bf16.msra.mxu0 %v2806
        %2872 = vmatprep.subr.bf16.mxu0 %v2809
        %2873 = vmatpush1.bf16.msra.mxu0 %v2808
        %2874 = vmatprep.subr.bf16.mxu0 %v2811
        %2875 = vmatpush1.bf16.msra.mxu0 %v2810
        %2876 = vmatprep.subr.bf16.mxu0 %v2813
        %2877 = vmatpush1.bf16.msra.mxu0 %v2812
        %2878 = vmatprep.subr.bf16.mxu0 %v2815
        %2879 = vmatpush1.bf16.msra.mxu0 %v2814
        %2880 = vmatprep.subr.bf16.mxu0 %v2817
        %2881 = vmatpush1.bf16.msra.mxu0 %v2816
        %2882 = vmatprep.subr.bf16.mxu0 %v2819
        %2883 = vmatpush1.bf16.msra.mxu0 %v2818
        %2884 = vmatprep.subr.bf16.mxu0 %v2821
        %2885 = vmatpush1.bf16.msra.mxu0 %v2820
        %2886 = vmatprep.subr.bf16.mxu0 %v2823
        %2887 = vmatpush1.bf16.msra.mxu0 %v2822
        %2888 = vmatprep.subr.bf16.mxu0 %v2825
        %2889 = vmatpush1.bf16.msra.mxu0 %v2824
        %2890 = vmatprep.subr.bf16.mxu0 %v2827
        %2891 = vmatpush1.bf16.msra.mxu0 %v2826
        %2892 = vmatprep.subr.bf16.mxu0 %v2829
        %2893 = vmatpush1.bf16.msra.mxu0 %v2828
        %2894 = vmatprep.subr.bf16.mxu0 %v2831
        %2895 = vmatpush1.bf16.msra.mxu0 %v2830
        %2896 = vmatprep.subr.bf16.mxu0 %v2833
        %2897 = vmatpush1.bf16.msra.mxu0 %v2832
        %2898 = vmatprep.subr.bf16.mxu0 %v2835
        %2899 = vmatpush1.bf16.msra.mxu0 %v2834
        %2900 = vmatprep.mubr.bf16.mxu0 %v771
        %2901 = vmatmul.mubr.bf16.gmra.mrb[0].mxu0 %v770
        %v2902 = vpop.f32.mrb[0].mxu0
        %v2903 = vadd.f32 0.0, %v2902
        %v2904 = vpop.f32.mrb[0].mxu0
        %v2905 = vadd.f32 0.0, %v2904
        %v2906 = vpop.f32.mrb[0].mxu0
        %v2907 = vadd.f32 0.0, %v2906
        %v2908 = vpop.f32.mrb[0].mxu0
        %v2909 = vadd.f32 0.0, %v2908
        %2910 = vdwg.mxu0
        %v2911 = vpack.c.bf16 %v2907, %v2903
        %v2912 = vpack.c.bf16 %v2909, %v2905
        %s2913 = scalar_lea.vmem %s4, 96
        %v2914 = vld [vmem:[%s2913] sm:$0xf]
        %v2915 = vld [vmem:[%s2913 + $0x4] sm:$0xf]
        %v2916 = vld [vmem:[%s2913 + $0x8] sm:$0xf]
        %v2917 = vld [vmem:[%s2913 + $0xc] sm:$0xf]
        %v2922 = vunpack.c.l.b16 %v2914
        %v2923 = vunpack.c.l.b16 %v2915
        %v2924 = vunpack.c.l.b16 %v2916
        %v2925 = vunpack.c.l.b16 %v2917
        %v2926 = vpack.c.b16 %v2923, %v2922
        %v2927 = vpack.c.b16 %v2925, %v2924
        %v2929 = vsel %vm1266, %v2926, 0
        %v2932 = vsel %vm1266, %v2927, 0
        %2934 = vmatprep.subr.bf16.mxu0 %v2912
        %2935 = vmatpush1.bf16.msra.mxu0 %v2911
        %2936 = vmatprep.subr.bf16.mxu0 0
        %2937 = vmatpush1.bf16.msra.mxu0 0
        %2938 = vmatprep.subr.bf16.mxu0 0
        %2939 = vmatpush1.bf16.msra.mxu0 0
        %2940 = vmatprep.subr.bf16.mxu0 0
        %2941 = vmatpush1.bf16.msra.mxu0 0
        %2942 = vmatprep.subr.bf16.mxu0 0
        %2943 = vmatpush1.bf16.msra.mxu0 0
        %2944 = vmatprep.subr.bf16.mxu0 0
        %2945 = vmatpush1.bf16.msra.mxu0 0
        %2946 = vmatprep.subr.bf16.mxu0 0
        %2947 = vmatpush1.bf16.msra.mxu0 0
        %2948 = vmatprep.subr.bf16.mxu0 0
        %2949 = vmatpush1.bf16.msra.mxu0 0
        %2950 = vmatprep.subr.bf16.mxu0 0
        %2951 = vmatpush1.bf16.msra.mxu0 0
        %2952 = vmatprep.subr.bf16.mxu0 0
        %2953 = vmatpush1.bf16.msra.mxu0 0
        %2954 = vmatprep.subr.bf16.mxu0 0
        %2955 = vmatpush1.bf16.msra.mxu0 0
        %2956 = vmatprep.subr.bf16.mxu0 0
        %2957 = vmatpush1.bf16.msra.mxu0 0
        %2958 = vmatprep.subr.bf16.mxu0 0
        %2959 = vmatpush1.bf16.msra.mxu0 0
        %2960 = vmatprep.subr.bf16.mxu0 0
        %2961 = vmatpush1.bf16.msra.mxu0 0
        %2962 = vmatprep.subr.bf16.mxu0 0
        %2963 = vmatpush1.bf16.msra.mxu0 0
        %2964 = vmatprep.subr.bf16.mxu0 0
        %2965 = vmatpush1.bf16.msra.mxu0 0
        %2966 = vmatprep.mubr.bf16.mxu0 0
        %2967 = vmatmul.mubr.bf16.gmra.mrb[0].mxu0 %v2929
        %v2968 = vpop.f32.mrb[0].mxu0
        %v2969 = vadd.f32 0.0, %v2968
        %v2970 = vpop.f32.mrb[0].mxu0
        %v2971 = vadd.f32 0.0, %v2970
        %v2972 = vpop.f32.mrb[0].mxu0
        %v2973 = vadd.f32 0.0, %v2972
        %v2974 = vpop.f32.mrb[0].mxu0
        %v2975 = vadd.f32 0.0, %v2974
        %2976 = vmatprep.mubr.bf16.mxu0 0
        %2977 = vmatmul.mubr.bf16.gmra.mrb[0].mxu0 %v2932
        %v2978 = vpop.f32.mrb[0].mxu0
        %v2979 = vadd.f32 0.0, %v2978
        %v2980 = vpop.f32.mrb[0].mxu0
        %v2981 = vadd.f32 0.0, %v2980
        %v2982 = vpop.f32.mrb[0].mxu0
        %v2983 = vadd.f32 0.0, %v2982
        %v2984 = vpop.f32.mrb[0].mxu0
        %v2985 = vadd.f32 0.0, %v2984
        %2986 = vdwg.mxu0
        %v2987 = vadd.f32 %v2667, %v2969
        %v2988 = vadd.f32 %v2668, %v2971
        %v2989 = vadd.f32 %v2669, %v2973
        %v2990 = vadd.f32 %v2670, %v2975
        %v2991 = vadd.f32 %v2671, %v2979
        %v2992 = vadd.f32 %v2672, %v2981
        %v2993 = vadd.f32 %v2673, %v2983
        %v2994 = vadd.f32 %v2674, %v2985
        %s2995 = scalar_lea.vmem %s3, 1792
        %v2996 = vld [vmem:[%s2995] sm:$0xff]
        %v2997 = vld [vmem:[%s2995 + $0x8] sm:$0xff]
        %v2998 = vld [vmem:[%s2995 + $0x10] sm:$0xff]
        %v2999 = vld [vmem:[%s2995 + $0x18] sm:$0xff]
        %v3000 = vld [vmem:[%s2995 + $0x20] sm:$0xff]
        %v3001 = vld [vmem:[%s2995 + $0x28] sm:$0xff]
        %v3002 = vld [vmem:[%s2995 + $0x30] sm:$0xff]
        %v3003 = vld [vmem:[%s2995 + $0x38] sm:$0xff]
        %v3004 = vld [vmem:[%s2995 + $0x40] sm:$0xff]
        %v3005 = vld [vmem:[%s2995 + $0x48] sm:$0xff]
        %v3006 = vld [vmem:[%s2995 + $0x50] sm:$0xff]
        %v3007 = vld [vmem:[%s2995 + $0x58] sm:$0xff]
        %v3008 = vld [vmem:[%s2995 + $0x60] sm:$0xff]
        %v3009 = vld [vmem:[%s2995 + $0x68] sm:$0xff]
        %v3010 = vld [vmem:[%s2995 + $0x70] sm:$0xff]
        %v3011 = vld [vmem:[%s2995 + $0x78] sm:$0xff]
        %v3012 = vld [vmem:[%s2995 + $0x80] sm:$0xff]
        %v3013 = vld [vmem:[%s2995 + $0x88] sm:$0xff]
        %v3014 = vld [vmem:[%s2995 + $0x90] sm:$0xff]
        %v3015 = vld [vmem:[%s2995 + $0x98] sm:$0xff]
        %v3016 = vld [vmem:[%s2995 + $0xa0] sm:$0xff]
        %v3017 = vld [vmem:[%s2995 + $0xa8] sm:$0xff]
        %v3018 = vld [vmem:[%s2995 + $0xb0] sm:$0xff]
        %v3019 = vld [vmem:[%s2995 + $0xb8] sm:$0xff]
        %v3020 = vld [vmem:[%s2995 + $0xc0] sm:$0xff]
        %v3021 = vld [vmem:[%s2995 + $0xc8] sm:$0xff]
        %v3022 = vld [vmem:[%s2995 + $0xd0] sm:$0xff]
        %v3023 = vld [vmem:[%s2995 + $0xd8] sm:$0xff]
        %v3024 = vld [vmem:[%s2995 + $0xe0] sm:$0xff]
        %v3025 = vld [vmem:[%s2995 + $0xe8] sm:$0xff]
        %v3026 = vld [vmem:[%s2995 + $0xf0] sm:$0xff]
        %v3027 = vld [vmem:[%s2995 + $0xf8] sm:$0xff]
        %v3060 = vunpack.c.l.b16 %v2996
        %v3061 = vunpack.c.h.b16 %v2996
        %v3062 = vunpack.c.l.b16 %v2997
        %v3063 = vunpack.c.h.b16 %v2997
        %v3064 = vunpack.c.l.b16 %v2998
        %v3065 = vunpack.c.h.b16 %v2998
        %v3066 = vunpack.c.l.b16 %v2999
        %v3067 = vunpack.c.h.b16 %v2999
        %v3068 = vunpack.c.l.b16 %v3000
        %v3069 = vunpack.c.h.b16 %v3000
        %v3070 = vunpack.c.l.b16 %v3001
        %v3071 = vunpack.c.h.b16 %v3001
        %v3072 = vunpack.c.l.b16 %v3002
        %v3073 = vunpack.c.h.b16 %v3002
        %v3074 = vunpack.c.l.b16 %v3003
        %v3075 = vunpack.c.h.b16 %v3003
        %v3076 = vunpack.c.l.b16 %v3004
        %v3077 = vunpack.c.h.b16 %v3004
        %v3078 = vunpack.c.l.b16 %v3005
        %v3079 = vunpack.c.h.b16 %v3005
        %v3080 = vunpack.c.l.b16 %v3006
        %v3081 = vunpack.c.h.b16 %v3006
        %v3082 = vunpack.c.l.b16 %v3007
        %v3083 = vunpack.c.h.b16 %v3007
        %v3084 = vunpack.c.l.b16 %v3008
        %v3085 = vunpack.c.h.b16 %v3008
        %v3086 = vunpack.c.l.b16 %v3009
        %v3087 = vunpack.c.h.b16 %v3009
        %v3088 = vunpack.c.l.b16 %v3010
        %v3089 = vunpack.c.h.b16 %v3010
        %v3090 = vunpack.c.l.b16 %v3011
        %v3091 = vunpack.c.h.b16 %v3011
        %v3092 = vunpack.c.l.b16 %v3012
        %v3093 = vunpack.c.h.b16 %v3012
        %v3094 = vunpack.c.l.b16 %v3013
        %v3095 = vunpack.c.h.b16 %v3013
        %v3096 = vunpack.c.l.b16 %v3014
        %v3097 = vunpack.c.h.b16 %v3014
        %v3098 = vunpack.c.l.b16 %v3015
        %v3099 = vunpack.c.h.b16 %v3015
        %v3100 = vunpack.c.l.b16 %v3016
        %v3101 = vunpack.c.h.b16 %v3016
        %v3102 = vunpack.c.l.b16 %v3017
        %v3103 = vunpack.c.h.b16 %v3017
        %v3104 = vunpack.c.l.b16 %v3018
        %v3105 = vunpack.c.h.b16 %v3018
        %v3106 = vunpack.c.l.b16 %v3019
        %v3107 = vunpack.c.h.b16 %v3019
        %v3108 = vunpack.c.l.b16 %v3020
        %v3109 = vunpack.c.h.b16 %v3020
        %v3110 = vunpack.c.l.b16 %v3021
        %v3111 = vunpack.c.h.b16 %v3021
        %v3112 = vunpack.c.l.b16 %v3022
        %v3113 = vunpack.c.h.b16 %v3022
        %v3114 = vunpack.c.l.b16 %v3023
        %v3115 = vunpack.c.h.b16 %v3023
        %v3116 = vunpack.c.l.b16 %v3024
        %v3117 = vunpack.c.h.b16 %v3024
        %v3118 = vunpack.c.l.b16 %v3025
        %v3119 = vunpack.c.h.b16 %v3025
        %v3120 = vunpack.c.l.b16 %v3026
        %v3121 = vunpack.c.h.b16 %v3026
        %v3122 = vunpack.c.l.b16 %v3027
        %v3123 = vunpack.c.h.b16 %v3027
        %v3124 = vpack.c.b16 %v3062, %v3060
        %v3125 = vpack.c.b16 %v3063, %v3061
        %v3126 = vpack.c.b16 %v3066, %v3064
        %v3127 = vpack.c.b16 %v3067, %v3065
        %v3128 = vpack.c.b16 %v3070, %v3068
        %v3129 = vpack.c.b16 %v3071, %v3069
        %v3130 = vpack.c.b16 %v3074, %v3072
        %v3131 = vpack.c.b16 %v3075, %v3073
        %v3132 = vpack.c.b16 %v3078, %v3076
        %v3133 = vpack.c.b16 %v3079, %v3077
        %v3134 = vpack.c.b16 %v3082, %v3080
        %v3135 = vpack.c.b16 %v3083, %v3081
        %v3136 = vpack.c.b16 %v3086, %v3084
        %v3137 = vpack.c.b16 %v3087, %v3085
        %v3138 = vpack.c.b16 %v3090, %v3088
        %v3139 = vpack.c.b16 %v3091, %v3089
        %v3140 = vpack.c.b16 %v3094, %v3092
        %v3141 = vpack.c.b16 %v3095, %v3093
        %v3142 = vpack.c.b16 %v3098, %v3096
        %v3143 = vpack.c.b16 %v3099, %v3097
        %v3144 = vpack.c.b16 %v3102, %v3100
        %v3145 = vpack.c.b16 %v3103, %v3101
        %v3146 = vpack.c.b16 %v3106, %v3104
        %v3147 = vpack.c.b16 %v3107, %v3105
        %v3148 = vpack.c.b16 %v3110, %v3108
        %v3149 = vpack.c.b16 %v3111, %v3109
        %v3150 = vpack.c.b16 %v3114, %v3112
        %v3151 = vpack.c.b16 %v3115, %v3113
        %v3152 = vpack.c.b16 %v3118, %v3116
        %v3153 = vpack.c.b16 %v3119, %v3117
        %v3154 = vpack.c.b16 %v3122, %v3120
        %v3155 = vpack.c.b16 %v3123, %v3121
        %3188 = vmatprep.subr.bf16.mxu0 %v3125
        %3189 = vmatpush1.bf16.msra.mxu0 %v3124
        %3190 = vmatprep.subr.bf16.mxu0 %v3127
        %3191 = vmatpush1.bf16.msra.mxu0 %v3126
        %3192 = vmatprep.subr.bf16.mxu0 %v3129
        %3193 = vmatpush1.bf16.msra.mxu0 %v3128
        %3194 = vmatprep.subr.bf16.mxu0 %v3131
        %3195 = vmatpush1.bf16.msra.mxu0 %v3130
        %3196 = vmatprep.subr.bf16.mxu0 %v3133
        %3197 = vmatpush1.bf16.msra.mxu0 %v3132
        %3198 = vmatprep.subr.bf16.mxu0 %v3135
        %3199 = vmatpush1.bf16.msra.mxu0 %v3134
        %3200 = vmatprep.subr.bf16.mxu0 %v3137
        %3201 = vmatpush1.bf16.msra.mxu0 %v3136
        %3202 = vmatprep.subr.bf16.mxu0 %v3139
        %3203 = vmatpush1.bf16.msra.mxu0 %v3138
        %3204 = vmatprep.subr.bf16.mxu0 %v3141
        %3205 = vmatpush1.bf16.msra.mxu0 %v3140
        %3206 = vmatprep.subr.bf16.mxu0 %v3143
        %3207 = vmatpush1.bf16.msra.mxu0 %v3142
        %3208 = vmatprep.subr.bf16.mxu0 %v3145
        %3209 = vmatpush1.bf16.msra.mxu0 %v3144
        %3210 = vmatprep.subr.bf16.mxu0 %v3147
        %3211 = vmatpush1.bf16.msra.mxu0 %v3146
        %3212 = vmatprep.subr.bf16.mxu0 %v3149
        %3213 = vmatpush1.bf16.msra.mxu0 %v3148
        %3214 = vmatprep.subr.bf16.mxu0 %v3151
        %3215 = vmatpush1.bf16.msra.mxu0 %v3150
        %3216 = vmatprep.subr.bf16.mxu0 %v3153
        %3217 = vmatpush1.bf16.msra.mxu0 %v3152
        %3218 = vmatprep.subr.bf16.mxu0 %v3155
        %3219 = vmatpush1.bf16.msra.mxu0 %v3154
        %3220 = vmatprep.mubr.bf16.mxu0 %v771
        %3221 = vmatmul.mubr.bf16.gmra.mrb[0].mxu0 %v770
        %v3222 = vpop.f32.mrb[0].mxu0
        %v3223 = vadd.f32 0.0, %v3222
        %v3224 = vpop.f32.mrb[0].mxu0
        %v3225 = vadd.f32 0.0, %v3224
        %v3226 = vpop.f32.mrb[0].mxu0
        %v3227 = vadd.f32 0.0, %v3226
        %v3228 = vpop.f32.mrb[0].mxu0
        %v3229 = vadd.f32 0.0, %v3228
        %3230 = vdwg.mxu0
        %v3231 = vpack.c.bf16 %v3227, %v3223
        %v3232 = vpack.c.bf16 %v3229, %v3225
        %s3233 = scalar_lea.vmem %s4, 112
        %v3234 = vld [vmem:[%s3233] sm:$0xf]
        %v3235 = vld [vmem:[%s3233 + $0x4] sm:$0xf]
        %v3236 = vld [vmem:[%s3233 + $0x8] sm:$0xf]
        %v3237 = vld [vmem:[%s3233 + $0xc] sm:$0xf]
        %v3242 = vunpack.c.l.b16 %v3234
        %v3243 = vunpack.c.l.b16 %v3235
        %v3244 = vunpack.c.l.b16 %v3236
        %v3245 = vunpack.c.l.b16 %v3237
        %v3246 = vpack.c.b16 %v3243, %v3242
        %v3247 = vpack.c.b16 %v3245, %v3244
        %v3249 = vsel %vm1266, %v3246, 0
        %v3252 = vsel %vm1266, %v3247, 0
        %3254 = vmatprep.subr.bf16.mxu0 %v3232
        %3255 = vmatpush1.bf16.msra.mxu0 %v3231
        %3256 = vmatprep.subr.bf16.mxu0 0
        %3257 = vmatpush1.bf16.msra.mxu0 0
        %3258 = vmatprep.subr.bf16.mxu0 0
        %3259 = vmatpush1.bf16.msra.mxu0 0
        %3260 = vmatprep.subr.bf16.mxu0 0
        %3261 = vmatpush1.bf16.msra.mxu0 0
        %3262 = vmatprep.subr.bf16.mxu0 0
        %3263 = vmatpush1.bf16.msra.mxu0 0
        %3264 = vmatprep.subr.bf16.mxu0 0
        %3265 = vmatpush1.bf16.msra.mxu0 0
        %3266 = vmatprep.subr.bf16.mxu0 0
        %3267 = vmatpush1.bf16.msra.mxu0 0
        %3268 = vmatprep.subr.bf16.mxu0 0
        %3269 = vmatpush1.bf16.msra.mxu0 0
        %3270 = vmatprep.subr.bf16.mxu0 0
        %3271 = vmatpush1.bf16.msra.mxu0 0
        %3272 = vmatprep.subr.bf16.mxu0 0
        %3273 = vmatpush1.bf16.msra.mxu0 0
        %3274 = vmatprep.subr.bf16.mxu0 0
        %3275 = vmatpush1.bf16.msra.mxu0 0
        %3276 = vmatprep.subr.bf16.mxu0 0
        %3277 = vmatpush1.bf16.msra.mxu0 0
        %3278 = vmatprep.subr.bf16.mxu0 0
        %3279 = vmatpush1.bf16.msra.mxu0 0
        %3280 = vmatprep.subr.bf16.mxu0 0
        %3281 = vmatpush1.bf16.msra.mxu0 0
        %3282 = vmatprep.subr.bf16.mxu0 0
        %3283 = vmatpush1.bf16.msra.mxu0 0
        %3284 = vmatprep.subr.bf16.mxu0 0
        %3285 = vmatpush1.bf16.msra.mxu0 0
        %3286 = vmatprep.mubr.bf16.mxu0 0
        %3287 = vmatmul.mubr.bf16.gmra.mrb[0].mxu0 %v3249
        %v3288 = vpop.f32.mrb[0].mxu0
        %v3289 = vadd.f32 0.0, %v3288
        %v3290 = vpop.f32.mrb[0].mxu0
        %v3291 = vadd.f32 0.0, %v3290
        %v3292 = vpop.f32.mrb[0].mxu0
        %v3293 = vadd.f32 0.0, %v3292
        %v3294 = vpop.f32.mrb[0].mxu0
        %v3295 = vadd.f32 0.0, %v3294
        %3296 = vmatprep.mubr.bf16.mxu0 0
        %3297 = vmatmul.mubr.bf16.gmra.mrb[0].mxu0 %v3252
        %v3298 = vpop.f32.mrb[0].mxu0
        %v3299 = vadd.f32 0.0, %v3298
        %v3300 = vpop.f32.mrb[0].mxu0
        %v3301 = vadd.f32 0.0, %v3300
        %v3302 = vpop.f32.mrb[0].mxu0
        %v3303 = vadd.f32 0.0, %v3302
        %v3304 = vpop.f32.mrb[0].mxu0
        %v3305 = vadd.f32 0.0, %v3304
        %3306 = vdwg.mxu0
        %v3307 = vadd.f32 %v2987, %v3289
        %v3308 = vadd.f32 %v2988, %v3291
        %v3309 = vadd.f32 %v2989, %v3293
        %v3310 = vadd.f32 %v2990, %v3295
        %v3311 = vadd.f32 %v2991, %v3299
        %v3312 = vadd.f32 %v2992, %v3301
        %v3313 = vadd.f32 %v2993, %v3303
        %v3314 = vadd.f32 %v2994, %v3305
        %s3315 = scalar_lea.vmem %s3, 2048
        %v3316 = vld [vmem:[%s3315] sm:$0xff]
        %v3317 = vld [vmem:[%s3315 + $0x8] sm:$0xff]
        %v3318 = vld [vmem:[%s3315 + $0x10] sm:$0xff]
        %v3319 = vld [vmem:[%s3315 + $0x18] sm:$0xff]
        %v3320 = vld [vmem:[%s3315 + $0x20] sm:$0xff]
        %v3321 = vld [vmem:[%s3315 + $0x28] sm:$0xff]
        %v3322 = vld [vmem:[%s3315 + $0x30] sm:$0xff]
        %v3323 = vld [vmem:[%s3315 + $0x38] sm:$0xff]
        %v3324 = vld [vmem:[%s3315 + $0x40] sm:$0xff]
        %v3325 = vld [vmem:[%s3315 + $0x48] sm:$0xff]
        %v3326 = vld [vmem:[%s3315 + $0x50] sm:$0xff]
        %v3327 = vld [vmem:[%s3315 + $0x58] sm:$0xff]
        %v3328 = vld [vmem:[%s3315 + $0x60] sm:$0xff]
        %v3329 = vld [vmem:[%s3315 + $0x68] sm:$0xff]
        %v3330 = vld [vmem:[%s3315 + $0x70] sm:$0xff]
        %v3331 = vld [vmem:[%s3315 + $0x78] sm:$0xff]
        %v3332 = vld [vmem:[%s3315 + $0x80] sm:$0xff]
        %v3333 = vld [vmem:[%s3315 + $0x88] sm:$0xff]
        %v3334 = vld [vmem:[%s3315 + $0x90] sm:$0xff]
        %v3335 = vld [vmem:[%s3315 + $0x98] sm:$0xff]
        %v3336 = vld [vmem:[%s3315 + $0xa0] sm:$0xff]
        %v3337 = vld [vmem:[%s3315 + $0xa8] sm:$0xff]
        %v3338 = vld [vmem:[%s3315 + $0xb0] sm:$0xff]
        %v3339 = vld [vmem:[%s3315 + $0xb8] sm:$0xff]
        %v3340 = vld [vmem:[%s3315 + $0xc0] sm:$0xff]
        %v3341 = vld [vmem:[%s3315 + $0xc8] sm:$0xff]
        %v3342 = vld [vmem:[%s3315 + $0xd0] sm:$0xff]
        %v3343 = vld [vmem:[%s3315 + $0xd8] sm:$0xff]
        %v3344 = vld [vmem:[%s3315 + $0xe0] sm:$0xff]
        %v3345 = vld [vmem:[%s3315 + $0xe8] sm:$0xff]
        %v3346 = vld [vmem:[%s3315 + $0xf0] sm:$0xff]
        %v3347 = vld [vmem:[%s3315 + $0xf8] sm:$0xff]
        %v3380 = vunpack.c.l.b16 %v3316
        %v3381 = vunpack.c.h.b16 %v3316
        %v3382 = vunpack.c.l.b16 %v3317
        %v3383 = vunpack.c.h.b16 %v3317
        %v3384 = vunpack.c.l.b16 %v3318
        %v3385 = vunpack.c.h.b16 %v3318
        %v3386 = vunpack.c.l.b16 %v3319
        %v3387 = vunpack.c.h.b16 %v3319
        %v3388 = vunpack.c.l.b16 %v3320
        %v3389 = vunpack.c.h.b16 %v3320
        %v3390 = vunpack.c.l.b16 %v3321
        %v3391 = vunpack.c.h.b16 %v3321
        %v3392 = vunpack.c.l.b16 %v3322
        %v3393 = vunpack.c.h.b16 %v3322
        %v3394 = vunpack.c.l.b16 %v3323
        %v3395 = vunpack.c.h.b16 %v3323
        %v3396 = vunpack.c.l.b16 %v3324
        %v3397 = vunpack.c.h.b16 %v3324
        %v3398 = vunpack.c.l.b16 %v3325
        %v3399 = vunpack.c.h.b16 %v3325
        %v3400 = vunpack.c.l.b16 %v3326
        %v3401 = vunpack.c.h.b16 %v3326
        %v3402 = vunpack.c.l.b16 %v3327
        %v3403 = vunpack.c.h.b16 %v3327
        %v3404 = vunpack.c.l.b16 %v3328
        %v3405 = vunpack.c.h.b16 %v3328
        %v3406 = vunpack.c.l.b16 %v3329
        %v3407 = vunpack.c.h.b16 %v3329
        %v3408 = vunpack.c.l.b16 %v3330
        %v3409 = vunpack.c.h.b16 %v3330
        %v3410 = vunpack.c.l.b16 %v3331
        %v3411 = vunpack.c.h.b16 %v3331
        %v3412 = vunpack.c.l.b16 %v3332
        %v3413 = vunpack.c.h.b16 %v3332
        %v3414 = vunpack.c.l.b16 %v3333
        %v3415 = vunpack.c.h.b16 %v3333
        %v3416 = vunpack.c.l.b16 %v3334
        %v3417 = vunpack.c.h.b16 %v3334
        %v3418 = vunpack.c.l.b16 %v3335
        %v3419 = vunpack.c.h.b16 %v3335
        %v3420 = vunpack.c.l.b16 %v3336
        %v3421 = vunpack.c.h.b16 %v3336
        %v3422 = vunpack.c.l.b16 %v3337
        %v3423 = vunpack.c.h.b16 %v3337
        %v3424 = vunpack.c.l.b16 %v3338
        %v3425 = vunpack.c.h.b16 %v3338
        %v3426 = vunpack.c.l.b16 %v3339
        %v3427 = vunpack.c.h.b16 %v3339
        %v3428 = vunpack.c.l.b16 %v3340
        %v3429 = vunpack.c.h.b16 %v3340
        %v3430 = vunpack.c.l.b16 %v3341
        %v3431 = vunpack.c.h.b16 %v3341
        %v3432 = vunpack.c.l.b16 %v3342
        %v3433 = vunpack.c.h.b16 %v3342
        %v3434 = vunpack.c.l.b16 %v3343
        %v3435 = vunpack.c.h.b16 %v3343
        %v3436 = vunpack.c.l.b16 %v3344
        %v3437 = vunpack.c.h.b16 %v3344
        %v3438 = vunpack.c.l.b16 %v3345
        %v3439 = vunpack.c.h.b16 %v3345
        %v3440 = vunpack.c.l.b16 %v3346
        %v3441 = vunpack.c.h.b16 %v3346
        %v3442 = vunpack.c.l.b16 %v3347
        %v3443 = vunpack.c.h.b16 %v3347
        %v3444 = vpack.c.b16 %v3382, %v3380
        %v3445 = vpack.c.b16 %v3383, %v3381
        %v3446 = vpack.c.b16 %v3386, %v3384
        %v3447 = vpack.c.b16 %v3387, %v3385
        %v3448 = vpack.c.b16 %v3390, %v3388
        %v3449 = vpack.c.b16 %v3391, %v3389
        %v3450 = vpack.c.b16 %v3394, %v3392
        %v3451 = vpack.c.b16 %v3395, %v3393
        %v3452 = vpack.c.b16 %v3398, %v3396
        %v3453 = vpack.c.b16 %v3399, %v3397
        %v3454 = vpack.c.b16 %v3402, %v3400
        %v3455 = vpack.c.b16 %v3403, %v3401
        %v3456 = vpack.c.b16 %v3406, %v3404
        %v3457 = vpack.c.b16 %v3407, %v3405
        %v3458 = vpack.c.b16 %v3410, %v3408
        %v3459 = vpack.c.b16 %v3411, %v3409
        %v3460 = vpack.c.b16 %v3414, %v3412
        %v3461 = vpack.c.b16 %v3415, %v3413
        %v3462 = vpack.c.b16 %v3418, %v3416
        %v3463 = vpack.c.b16 %v3419, %v3417
        %v3464 = vpack.c.b16 %v3422, %v3420
        %v3465 = vpack.c.b16 %v3423, %v3421
        %v3466 = vpack.c.b16 %v3426, %v3424
        %v3467 = vpack.c.b16 %v3427, %v3425
        %v3468 = vpack.c.b16 %v3430, %v3428
        %v3469 = vpack.c.b16 %v3431, %v3429
        %v3470 = vpack.c.b16 %v3434, %v3432
        %v3471 = vpack.c.b16 %v3435, %v3433
        %v3472 = vpack.c.b16 %v3438, %v3436
        %v3473 = vpack.c.b16 %v3439, %v3437
        %v3474 = vpack.c.b16 %v3442, %v3440
        %v3475 = vpack.c.b16 %v3443, %v3441
        %3508 = vmatprep.subr.bf16.mxu0 %v3445
        %3509 = vmatpush1.bf16.msra.mxu0 %v3444
        %3510 = vmatprep.subr.bf16.mxu0 %v3447
        %3511 = vmatpush1.bf16.msra.mxu0 %v3446
        %3512 = vmatprep.subr.bf16.mxu0 %v3449
        %3513 = vmatpush1.bf16.msra.mxu0 %v3448
        %3514 = vmatprep.subr.bf16.mxu0 %v3451
        %3515 = vmatpush1.bf16.msra.mxu0 %v3450
        %3516 = vmatprep.subr.bf16.mxu0 %v3453
        %3517 = vmatpush1.bf16.msra.mxu0 %v3452
        %3518 = vmatprep.subr.bf16.mxu0 %v3455
        %3519 = vmatpush1.bf16.msra.mxu0 %v3454
        %3520 = vmatprep.subr.bf16.mxu0 %v3457
        %3521 = vmatpush1.bf16.msra.mxu0 %v3456
        %3522 = vmatprep.subr.bf16.mxu0 %v3459
        %3523 = vmatpush1.bf16.msra.mxu0 %v3458
        %3524 = vmatprep.subr.bf16.mxu0 %v3461
        %3525 = vmatpush1.bf16.msra.mxu0 %v3460
        %3526 = vmatprep.subr.bf16.mxu0 %v3463
        %3527 = vmatpush1.bf16.msra.mxu0 %v3462
        %3528 = vmatprep.subr.bf16.mxu0 %v3465
        %3529 = vmatpush1.bf16.msra.mxu0 %v3464
        %3530 = vmatprep.subr.bf16.mxu0 %v3467
        %3531 = vmatpush1.bf16.msra.mxu0 %v3466
        %3532 = vmatprep.subr.bf16.mxu0 %v3469
        %3533 = vmatpush1.bf16.msra.mxu0 %v3468
        %3534 = vmatprep.subr.bf16.mxu0 %v3471
        %3535 = vmatpush1.bf16.msra.mxu0 %v3470
        %3536 = vmatprep.subr.bf16.mxu0 %v3473
        %3537 = vmatpush1.bf16.msra.mxu0 %v3472
        %3538 = vmatprep.subr.bf16.mxu0 %v3475
        %3539 = vmatpush1.bf16.msra.mxu0 %v3474
        %3540 = vmatprep.mubr.bf16.mxu0 %v771
        %3541 = vmatmul.mubr.bf16.gmra.mrb[0].mxu0 %v770
        %v3542 = vpop.f32.mrb[0].mxu0
        %v3543 = vadd.f32 0.0, %v3542
        %v3544 = vpop.f32.mrb[0].mxu0
        %v3545 = vadd.f32 0.0, %v3544
        %v3546 = vpop.f32.mrb[0].mxu0
        %v3547 = vadd.f32 0.0, %v3546
        %v3548 = vpop.f32.mrb[0].mxu0
        %v3549 = vadd.f32 0.0, %v3548
        %3550 = vdwg.mxu0
        %v3551 = vpack.c.bf16 %v3547, %v3543
        %v3552 = vpack.c.bf16 %v3549, %v3545
        %s3553 = scalar_lea.vmem %s4, 128
        %v3554 = vld [vmem:[%s3553] sm:$0xf]
        %v3555 = vld [vmem:[%s3553 + $0x4] sm:$0xf]
        %v3556 = vld [vmem:[%s3553 + $0x8] sm:$0xf]
        %v3557 = vld [vmem:[%s3553 + $0xc] sm:$0xf]
        %v3562 = vunpack.c.l.b16 %v3554
        %v3563 = vunpack.c.l.b16 %v3555
        %v3564 = vunpack.c.l.b16 %v3556
        %v3565 = vunpack.c.l.b16 %v3557
        %v3566 = vpack.c.b16 %v3563, %v3562
        %v3567 = vpack.c.b16 %v3565, %v3564
        %v3569 = vsel %vm1266, %v3566, 0
        %v3572 = vsel %vm1266, %v3567, 0
        %3574 = vmatprep.subr.bf16.mxu0 %v3552
        %3575 = vmatpush1.bf16.msra.mxu0 %v3551
        %3576 = vmatprep.subr.bf16.mxu0 0
        %3577 = vmatpush1.bf16.msra.mxu0 0
        %3578 = vmatprep.subr.bf16.mxu0 0
        %3579 = vmatpush1.bf16.msra.mxu0 0
        %3580 = vmatprep.subr.bf16.mxu0 0
        %3581 = vmatpush1.bf16.msra.mxu0 0
        %3582 = vmatprep.subr.bf16.mxu0 0
        %3583 = vmatpush1.bf16.msra.mxu0 0
        %3584 = vmatprep.subr.bf16.mxu0 0
        %3585 = vmatpush1.bf16.msra.mxu0 0
        %3586 = vmatprep.subr.bf16.mxu0 0
        %3587 = vmatpush1.bf16.msra.mxu0 0
        %3588 = vmatprep.subr.bf16.mxu0 0
        %3589 = vmatpush1.bf16.msra.mxu0 0
        %3590 = vmatprep.subr.bf16.mxu0 0
        %3591 = vmatpush1.bf16.msra.mxu0 0
        %3592 = vmatprep.subr.bf16.mxu0 0
        %3593 = vmatpush1.bf16.msra.mxu0 0
        %3594 = vmatprep.subr.bf16.mxu0 0
        %3595 = vmatpush1.bf16.msra.mxu0 0
        %3596 = vmatprep.subr.bf16.mxu0 0
        %3597 = vmatpush1.bf16.msra.mxu0 0
        %3598 = vmatprep.subr.bf16.mxu0 0
        %3599 = vmatpush1.bf16.msra.mxu0 0
        %3600 = vmatprep.subr.bf16.mxu0 0
        %3601 = vmatpush1.bf16.msra.mxu0 0
        %3602 = vmatprep.subr.bf16.mxu0 0
        %3603 = vmatpush1.bf16.msra.mxu0 0
        %3604 = vmatprep.subr.bf16.mxu0 0
        %3605 = vmatpush1.bf16.msra.mxu0 0
        %3606 = vmatprep.mubr.bf16.mxu0 0
        %3607 = vmatmul.mubr.bf16.gmra.mrb[0].mxu0 %v3569
        %v3608 = vpop.f32.mrb[0].mxu0
        %v3609 = vadd.f32 0.0, %v3608
        %v3610 = vpop.f32.mrb[0].mxu0
        %v3611 = vadd.f32 0.0, %v3610
        %v3612 = vpop.f32.mrb[0].mxu0
        %v3613 = vadd.f32 0.0, %v3612
        %v3614 = vpop.f32.mrb[0].mxu0
        %v3615 = vadd.f32 0.0, %v3614
        %3616 = vmatprep.mubr.bf16.mxu0 0
        %3617 = vmatmul.mubr.bf16.gmra.mrb[0].mxu0 %v3572
        %v3618 = vpop.f32.mrb[0].mxu0
        %v3619 = vadd.f32 0.0, %v3618
        %v3620 = vpop.f32.mrb[0].mxu0
        %v3621 = vadd.f32 0.0, %v3620
        %v3622 = vpop.f32.mrb[0].mxu0
        %v3623 = vadd.f32 0.0, %v3622
        %v3624 = vpop.f32.mrb[0].mxu0
        %v3625 = vadd.f32 0.0, %v3624
        %3626 = vdwg.mxu0
        %v3627 = vadd.f32 %v3307, %v3609
        %v3628 = vadd.f32 %v3308, %v3611
        %v3629 = vadd.f32 %v3309, %v3613
        %v3630 = vadd.f32 %v3310, %v3615
        %v3631 = vadd.f32 %v3311, %v3619
        %v3632 = vadd.f32 %v3312, %v3621
        %v3633 = vadd.f32 %v3313, %v3623
        %v3634 = vadd.f32 %v3314, %v3625
        %3639 = vrot.lane.b32.xlu0 %v3627, 64
        %v3640 = vpop.permute.xlu0 %3639
        %3641 = vrot.lane.b32.xlu0 %v3629, 64
        %v3642 = vpop.permute.xlu0 %3641
        %3643 = vrot.lane.b32.xlu0 %v3631, 64
        %v3644 = vpop.permute.xlu0 %3643
        %3645 = vrot.lane.b32.xlu0 %v3633, 64
        %v3646 = vpop.permute.xlu0 %3645
        %v3651 = vmax.f32 %v3627, %v3640
        %v3652 = vmax.f32 %v3629, %v3642
        %v3653 = vmax.f32 %v3631, %v3644
        %v3654 = vmax.f32 %v3633, %v3646
        %3659 = vrot.lane.b32.xlu0 %v3628, 64
        %v3660 = vpop.permute.xlu0 %3659
        %3661 = vrot.lane.b32.xlu0 %v3630, 64
        %v3662 = vpop.permute.xlu0 %3661
        %3663 = vrot.lane.b32.xlu0 %v3632, 64
        %v3664 = vpop.permute.xlu0 %3663
        %3665 = vrot.lane.b32.xlu0 %v3634, 64
        %v3666 = vpop.permute.xlu0 %3665
        %v3671 = vmax.f32 %v3628, %v3660
        %v3672 = vmax.f32 %v3630, %v3662
        %v3673 = vmax.f32 %v3632, %v3664
        %v3674 = vmax.f32 %v3634, %v3666
        %v3675 = vmax.f32 %v3651, %v3671
        %v3676 = vmax.f32 %v3652, %v3672
        %v3677 = vmax.f32 %v3653, %v3673
        %v3678 = vmax.f32 %v3654, %v3674
        %v3679 = vld [vmem:[%s5] sm:$0xff]
        %v3680 = vld [vmem:[%s5 + $0x8] sm:$0xff]
        %v3681 = vld [vmem:[%s5 + $0x10] sm:$0xff]
        %v3682 = vld [vmem:[%s5 + $0x18] sm:$0xff]
        %3684 = vset.pattern.permute.xlu0 0
        %3685 = vperm.xlu0 %3684, %v3679
        %v3686 = vpop.permute.xlu0 %3685
        %3689 = vset.pattern.permute.xlu0 0
        %3690 = vperm.xlu0 %3689, %v3680
        %v3691 = vpop.permute.xlu0 %3690
        %3694 = vset.pattern.permute.xlu0 0
        %3695 = vperm.xlu0 %3694, %v3681
        %v3696 = vpop.permute.xlu0 %3695
        %3699 = vset.pattern.permute.xlu0 0
        %3700 = vperm.xlu0 %3699, %v3682
        %v3701 = vpop.permute.xlu0 %3700
        %v3703 = vadd.f32 %v3675, %v3686
        %v3704 = vadd.f32 %v3676, %v3691
        %v3705 = vadd.f32 %v3677, %v3696
        %v3706 = vadd.f32 %v3678, %v3701
        %v3707 = vmax.f32 %v3703, 0.0
        %v3708 = vmax.f32 %v3704, 0.0
        %v3709 = vmax.f32 %v3705, 0.0
        %v3710 = vmax.f32 %v3706, 0.0
        %v3711 = vpack.c.bf16 %v3708, %v3707
        %v3712 = vpack.c.bf16 %v3710, %v3709
        %v3713 = vld [vmem:[%s6] sm:$0xf]
        %v3714 = vld [vmem:[%s6 + $0x4] sm:$0xf]
        %v3715 = vld [vmem:[%s6 + $0x8] sm:$0xf]
        %v3716 = vld [vmem:[%s6 + $0xc] sm:$0xf]
        %v3717 = vld [vmem:[%s6 + $0x10] sm:$0xf]
        %v3718 = vld [vmem:[%s6 + $0x14] sm:$0xf]
        %v3719 = vld [vmem:[%s6 + $0x18] sm:$0xf]
        %v3720 = vld [vmem:[%s6 + $0x1c] sm:$0xf]
        %v3729 = vunpack.c.l.b16 %v3713
        %v3730 = vunpack.c.l.b16 %v3714
        %v3731 = vunpack.c.l.b16 %v3715
        %v3732 = vunpack.c.l.b16 %v3716
        %v3733 = vunpack.c.l.b16 %v3717
        %v3734 = vunpack.c.l.b16 %v3718
        %v3735 = vunpack.c.l.b16 %v3719
        %v3736 = vunpack.c.l.b16 %v3720
        %v3737 = vpack.c.b16 %v3730, %v3729
        %v3738 = vpack.c.b16 %v3732, %v3731
        %v3739 = vpack.c.b16 %v3734, %v3733
        %v3740 = vpack.c.b16 %v3736, %v3735
        %vm3745 = vcmask 523264
        %v3747 = vsel %vm3745, %v3711, 0
        %v3750 = vsel %vm3745, %v3712, 0
        %3752 = vmatprep.subr.bf16.mxu0 0
        %3753 = vmatpush1.bf16.msra.mxu0 %v3737
        %3754 = vmatprep.subr.bf16.mxu0 0
        %3755 = vmatpush1.bf16.msra.mxu0 %v3738
        %3756 = vmatprep.subr.bf16.mxu0 0
        %3757 = vmatpush1.bf16.msra.mxu0 %v3739
        %3758 = vmatprep.subr.bf16.mxu0 0
        %3759 = vmatpush1.bf16.msra.mxu0 %v3740
        %3760 = vmatprep.subr.bf16.mxu0 0
        %3761 = vmatpush1.bf16.msra.mxu0 0
        %3762 = vmatprep.subr.bf16.mxu0 0
        %3763 = vmatpush1.bf16.msra.mxu0 0
        %3764 = vmatprep.subr.bf16.mxu0 0
        %3765 = vmatpush1.bf16.msra.mxu0 0
        %3766 = vmatprep.subr.bf16.mxu0 0
        %3767 = vmatpush1.bf16.msra.mxu0 0
        %3768 = vmatprep.subr.bf16.mxu0 0
        %3769 = vmatpush1.bf16.msra.mxu0 0
        %3770 = vmatprep.subr.bf16.mxu0 0
        %3771 = vmatpush1.bf16.msra.mxu0 0
        %3772 = vmatprep.subr.bf16.mxu0 0
        %3773 = vmatpush1.bf16.msra.mxu0 0
        %3774 = vmatprep.subr.bf16.mxu0 0
        %3775 = vmatpush1.bf16.msra.mxu0 0
        %3776 = vmatprep.subr.bf16.mxu0 0
        %3777 = vmatpush1.bf16.msra.mxu0 0
        %3778 = vmatprep.subr.bf16.mxu0 0
        %3779 = vmatpush1.bf16.msra.mxu0 0
        %3780 = vmatprep.subr.bf16.mxu0 0
        %3781 = vmatpush1.bf16.msra.mxu0 0
        %3782 = vmatprep.subr.bf16.mxu0 0
        %3783 = vmatpush1.bf16.msra.mxu0 0
        %3784 = vmatprep.mubr.bf16.mxu0 0
        %3785 = vmatmul.mubr.bf16.gmra.mrb[0].mxu0 %v3747
        %v3786 = vpop.f32.mrb[0].mxu0
        %v3787 = vadd.f32 0.0, %v3786
        %v3788 = vpop.f32.mrb[0].mxu0
        %v3789 = vpop.f32.mrb[0].mxu0
        %v3790 = vadd.f32 0.0, %v3789
        %v3791 = vpop.f32.mrb[0].mxu0
        %3792 = vmatprep.mubr.bf16.mxu0 0
        %3793 = vmatmul.mubr.bf16.gmra.mrb[0].mxu0 %v3750
        %v3794 = vpop.f32.mrb[0].mxu0
        %v3795 = vadd.f32 0.0, %v3794
        %v3796 = vpop.f32.mrb[0].mxu0
        %v3797 = vpop.f32.mrb[0].mxu0
        %v3798 = vadd.f32 0.0, %v3797
        %v3799 = vpop.f32.mrb[0].mxu0
        %3800 = vdwg.mxu0
        %v3801 = vpack.c.bf16 %v3790, %v3787
        %v3802 = vpack.c.bf16 %v3798, %v3795
        %v3803 = vld [vmem:[%s7] sm:$0xf]
        %v3804 = vld [vmem:[%s7 + $0x4] sm:$0xf]
        %v3805 = vld [vmem:[%s7 + $0x8] sm:$0xf]
        %v3806 = vld [vmem:[%s7 + $0xc] sm:$0xf]
        %v3807 = vld [vmem:[%s7 + $0x10] sm:$0xf]
        %v3808 = vld [vmem:[%s7 + $0x14] sm:$0xf]
        %v3809 = vld [vmem:[%s7 + $0x18] sm:$0xf]
        %v3810 = vld [vmem:[%s7 + $0x1c] sm:$0xf]
        %s3811 = scalar_lea.vmem %s6, 32
        %v3812 = vld [vmem:[%s3811] sm:$0xf]
        %v3813 = vld [vmem:[%s3811 + $0x4] sm:$0xf]
        %v3814 = vld [vmem:[%s3811 + $0x8] sm:$0xf]
        %v3815 = vld [vmem:[%s3811 + $0xc] sm:$0xf]
        %v3816 = vld [vmem:[%s3811 + $0x10] sm:$0xf]
        %v3817 = vld [vmem:[%s3811 + $0x14] sm:$0xf]
        %v3818 = vld [vmem:[%s3811 + $0x18] sm:$0xf]
        %v3819 = vld [vmem:[%s3811 + $0x1c] sm:$0xf]
        %v3828 = vunpack.c.l.b16 %v3812
        %v3829 = vunpack.c.l.b16 %v3813
        %v3830 = vunpack.c.l.b16 %v3814
        %v3831 = vunpack.c.l.b16 %v3815
        %v3832 = vunpack.c.l.b16 %v3816
        %v3833 = vunpack.c.l.b16 %v3817
        %v3834 = vunpack.c.l.b16 %v3818
        %v3835 = vunpack.c.l.b16 %v3819
        %v3836 = vpack.c.b16 %v3829, %v3828
        %v3837 = vpack.c.b16 %v3831, %v3830
        %v3838 = vpack.c.b16 %v3833, %v3832
        %v3839 = vpack.c.b16 %v3835, %v3834
        %3844 = vmatprep.subr.bf16.mxu0 0
        %3845 = vmatpush1.bf16.msra.mxu0 %v3836
        %3846 = vmatprep.subr.bf16.mxu0 0
        %3847 = vmatpush1.bf16.msra.mxu0 %v3837
        %3848 = vmatprep.subr.bf16.mxu0 0
        %3849 = vmatpush1.bf16.msra.mxu0 %v3838
        %3850 = vmatprep.subr.bf16.mxu0 0
        %3851 = vmatpush1.bf16.msra.mxu0 %v3839
        %3852 = vmatprep.subr.bf16.mxu0 0
        %3853 = vmatpush1.bf16.msra.mxu0 0
        %3854 = vmatprep.subr.bf16.mxu0 0
        %3855 = vmatpush1.bf16.msra.mxu0 0
        %3856 = vmatprep.subr.bf16.mxu0 0
        %3857 = vmatpush1.bf16.msra.mxu0 0
        %3858 = vmatprep.subr.bf16.mxu0 0
        %3859 = vmatpush1.bf16.msra.mxu0 0
        %3860 = vmatprep.subr.bf16.mxu0 0
        %3861 = vmatpush1.bf16.msra.mxu0 0
        %3862 = vmatprep.subr.bf16.mxu0 0
        %3863 = vmatpush1.bf16.msra.mxu0 0
        %3864 = vmatprep.subr.bf16.mxu0 0
        %3865 = vmatpush1.bf16.msra.mxu0 0
        %3866 = vmatprep.subr.bf16.mxu0 0
        %3867 = vmatpush1.bf16.msra.mxu0 0
        %3868 = vmatprep.subr.bf16.mxu0 0
        %3869 = vmatpush1.bf16.msra.mxu0 0
        %3870 = vmatprep.subr.bf16.mxu0 0
        %3871 = vmatpush1.bf16.msra.mxu0 0
        %3872 = vmatprep.subr.bf16.mxu0 0
        %3873 = vmatpush1.bf16.msra.mxu0 0
        %3874 = vmatprep.subr.bf16.mxu0 0
        %3875 = vmatpush1.bf16.msra.mxu0 0
        %3876 = vmatprep.mubr.bf16.mxu0 0
        %3877 = vmatmul.mubr.bf16.gmra.mrb[0].mxu0 %v3747
        %v3878 = vpop.f32.mrb[0].mxu0
        %v3879 = vadd.f32 0.0, %v3878
        %v3880 = vpop.f32.mrb[0].mxu0
        %v3881 = vpop.f32.mrb[0].mxu0
        %v3882 = vadd.f32 0.0, %v3881
        %v3883 = vpop.f32.mrb[0].mxu0
        %3884 = vmatprep.mubr.bf16.mxu0 0
        %3885 = vmatmul.mubr.bf16.gmra.mrb[0].mxu0 %v3750
        %v3886 = vpop.f32.mrb[0].mxu0
        %v3887 = vadd.f32 0.0, %v3886
        %v3888 = vpop.f32.mrb[0].mxu0
        %v3889 = vpop.f32.mrb[0].mxu0
        %v3890 = vadd.f32 0.0, %v3889
        %v3891 = vpop.f32.mrb[0].mxu0
        %3892 = vdwg.mxu0
        %v3893 = vpack.c.bf16 %v3882, %v3879
        %v3894 = vpack.c.bf16 %v3890, %v3887
        %s3895 = scalar_lea.vmem %s7, 32
        %v3896 = vld [vmem:[%s3895] sm:$0xf]
        %v3897 = vld [vmem:[%s3895 + $0x4] sm:$0xf]
        %v3898 = vld [vmem:[%s3895 + $0x8] sm:$0xf]
        %v3899 = vld [vmem:[%s3895 + $0xc] sm:$0xf]
        %v3900 = vld [vmem:[%s3895 + $0x10] sm:$0xf]
        %v3901 = vld [vmem:[%s3895 + $0x14] sm:$0xf]
        %v3902 = vld [vmem:[%s3895 + $0x18] sm:$0xf]
        %v3903 = vld [vmem:[%s3895 + $0x1c] sm:$0xf]
        %v3912 = vunpack.c.l.b16 %v3896
        %v3913 = vunpack.c.l.b16 %v3897
        %v3914 = vunpack.c.l.b16 %v3898
        %v3915 = vunpack.c.l.b16 %v3899
        %v3916 = vunpack.c.l.b16 %v3900
        %v3917 = vunpack.c.l.b16 %v3901
        %v3918 = vunpack.c.l.b16 %v3902
        %v3919 = vunpack.c.l.b16 %v3903
        %v3920 = vpack.c.b16 %v3913, %v3912
        %v3921 = vpack.c.b16 %v3915, %v3914
        %v3922 = vpack.c.b16 %v3917, %v3916
        %v3923 = vpack.c.b16 %v3919, %v3918
        %vm3924 = vcmask 261120
        %v3926 = vsel %vm3924, %v3920, 0
        %v3929 = vsel %vm3924, %v3921, 0
        %v3932 = vsel %vm3924, %v3922, 0
        %v3935 = vsel %vm3924, %v3923, 0
        %3937 = vmatprep.subr.bf16.mxu0 0
        %3938 = vmatpush1.bf16.msra.mxu0 %v3893
        %3939 = vmatprep.subr.bf16.mxu0 0
        %3940 = vmatpush1.bf16.msra.mxu0 %v3894
        %3941 = vmatprep.subr.bf16.mxu0 0
        %3942 = vmatpush1.bf16.msra.mxu0 0
        %3943 = vmatprep.subr.bf16.mxu0 0
        %3944 = vmatpush1.bf16.msra.mxu0 0
        %3945 = vmatprep.subr.bf16.mxu0 0
        %3946 = vmatpush1.bf16.msra.mxu0 0
        %3947 = vmatprep.subr.bf16.mxu0 0
        %3948 = vmatpush1.bf16.msra.mxu0 0
        %3949 = vmatprep.subr.bf16.mxu0 0
        %3950 = vmatpush1.bf16.msra.mxu0 0
        %3951 = vmatprep.subr.bf16.mxu0 0
        %3952 = vmatpush1.bf16.msra.mxu0 0
        %3953 = vmatprep.subr.bf16.mxu0 0
        %3954 = vmatpush1.bf16.msra.mxu0 0
        %3955 = vmatprep.subr.bf16.mxu0 0
        %3956 = vmatpush1.bf16.msra.mxu0 0
        %3957 = vmatprep.subr.bf16.mxu0 0
        %3958 = vmatpush1.bf16.msra.mxu0 0
        %3959 = vmatprep.subr.bf16.mxu0 0
        %3960 = vmatpush1.bf16.msra.mxu0 0
        %3961 = vmatprep.subr.bf16.mxu0 0
        %3962 = vmatpush1.bf16.msra.mxu0 0
        %3963 = vmatprep.subr.bf16.mxu0 0
        %3964 = vmatpush1.bf16.msra.mxu0 0
        %3965 = vmatprep.subr.bf16.mxu0 0
        %3966 = vmatpush1.bf16.msra.mxu0 0
        %3967 = vmatprep.subr.bf16.mxu0 0
        %3968 = vmatpush1.bf16.msra.mxu0 0
        %3969 = vmatprep.mubr.bf16.mxu0 0
        %3970 = vmatmul.mubr.bf16.gmra.mrb[0].mxu0 %v3926
        %v3971 = vpop.f32.mrb[0].mxu0
        %v3972 = vadd.f32 0.0, %v3971
        %v3973 = vpop.f32.mrb[0].mxu0
        %v3974 = vpop.f32.mrb[0].mxu0
        %v3975 = vadd.f32 0.0, %v3974
        %v3976 = vpop.f32.mrb[0].mxu0
        %3977 = vmatprep.mubr.bf16.mxu0 0
        %3978 = vmatmul.mubr.bf16.gmra.mrb[0].mxu0 %v3929
        %v3979 = vpop.f32.mrb[0].mxu0
        %v3980 = vadd.f32 0.0, %v3979
        %v3981 = vpop.f32.mrb[0].mxu0
        %v3982 = vpop.f32.mrb[0].mxu0
        %v3983 = vadd.f32 0.0, %v3982
        %v3984 = vpop.f32.mrb[0].mxu0
        %3985 = vmatprep.mubr.bf16.mxu0 0
        %3986 = vmatmul.mubr.bf16.gmra.mrb[0].mxu0 %v3932
        %v3987 = vpop.f32.mrb[0].mxu0
        %v3988 = vadd.f32 0.0, %v3987
        %v3989 = vpop.f32.mrb[0].mxu0
        %v3990 = vpop.f32.mrb[0].mxu0
        %v3991 = vadd.f32 0.0, %v3990
        %v3992 = vpop.f32.mrb[0].mxu0
        %3993 = vmatprep.mubr.bf16.mxu0 0
        %3994 = vmatmul.mubr.bf16.gmra.mrb[0].mxu0 %v3935
        %v3995 = vpop.f32.mrb[0].mxu0
        %v3996 = vadd.f32 0.0, %v3995
        %v3997 = vpop.f32.mrb[0].mxu0
        %v3998 = vpop.f32.mrb[0].mxu0
        %v3999 = vadd.f32 0.0, %v3998
        %v4000 = vpop.f32.mrb[0].mxu0
        %4001 = vdwg.mxu0
        %v4010 = vunpack.c.l.b16 %v3803
        %v4011 = vunpack.c.l.b16 %v3804
        %v4012 = vunpack.c.l.b16 %v3805
        %v4013 = vunpack.c.l.b16 %v3806
        %v4014 = vunpack.c.l.b16 %v3807
        %v4015 = vunpack.c.l.b16 %v3808
        %v4016 = vunpack.c.l.b16 %v3809
        %v4017 = vunpack.c.l.b16 %v3810
        %v4018 = vpack.c.b16 %v4011, %v4010
        %v4019 = vpack.c.b16 %v4013, %v4012
        %v4020 = vpack.c.b16 %v4015, %v4014
        %v4021 = vpack.c.b16 %v4017, %v4016
        %v4023 = vsel %vm3924, %v4018, 0
        %v4026 = vsel %vm3924, %v4019, 0
        %v4029 = vsel %vm3924, %v4020, 0
        %v4032 = vsel %vm3924, %v4021, 0
        %4034 = vmatprep.subr.bf16.mxu0 0
        %4035 = vmatpush1.bf16.msra.mxu0 %v3801
        %4036 = vmatprep.subr.bf16.mxu0 0
        %4037 = vmatpush1.bf16.msra.mxu0 %v3802
        %4038 = vmatprep.subr.bf16.mxu0 0
        %4039 = vmatpush1.bf16.msra.mxu0 0
        %4040 = vmatprep.subr.bf16.mxu0 0
        %4041 = vmatpush1.bf16.msra.mxu0 0
        %4042 = vmatprep.subr.bf16.mxu0 0
        %4043 = vmatpush1.bf16.msra.mxu0 0
        %4044 = vmatprep.subr.bf16.mxu0 0
        %4045 = vmatpush1.bf16.msra.mxu0 0
        %4046 = vmatprep.subr.bf16.mxu0 0
        %4047 = vmatpush1.bf16.msra.mxu0 0
        %4048 = vmatprep.subr.bf16.mxu0 0
        %4049 = vmatpush1.bf16.msra.mxu0 0
        %4050 = vmatprep.subr.bf16.mxu0 0
        %4051 = vmatpush1.bf16.msra.mxu0 0
        %4052 = vmatprep.subr.bf16.mxu0 0
        %4053 = vmatpush1.bf16.msra.mxu0 0
        %4054 = vmatprep.subr.bf16.mxu0 0
        %4055 = vmatpush1.bf16.msra.mxu0 0
        %4056 = vmatprep.subr.bf16.mxu0 0
        %4057 = vmatpush1.bf16.msra.mxu0 0
        %4058 = vmatprep.subr.bf16.mxu0 0
        %4059 = vmatpush1.bf16.msra.mxu0 0
        %4060 = vmatprep.subr.bf16.mxu0 0
        %4061 = vmatpush1.bf16.msra.mxu0 0
        %4062 = vmatprep.subr.bf16.mxu0 0
        %4063 = vmatpush1.bf16.msra.mxu0 0
        %4064 = vmatprep.subr.bf16.mxu0 0
        %4065 = vmatpush1.bf16.msra.mxu0 0
        %4066 = vmatprep.mubr.bf16.mxu0 0
        %4067 = vmatmul.mubr.bf16.gmra.mrb[0].mxu0 %v4023
        %v4068 = vpop.f32.mrb[0].mxu0
        %v4069 = vadd.f32 %v3972, %v4068
        %v4070 = vpop.f32.mrb[0].mxu0
        %v4071 = vpop.f32.mrb[0].mxu0
        %v4072 = vadd.f32 %v3975, %v4071
        %v4073 = vpop.f32.mrb[0].mxu0
        %4074 = vmatprep.mubr.bf16.mxu0 0
        %4075 = vmatmul.mubr.bf16.gmra.mrb[0].mxu0 %v4026
        %v4076 = vpop.f32.mrb[0].mxu0
        %v4077 = vadd.f32 %v3980, %v4076
        %v4078 = vpop.f32.mrb[0].mxu0
        %v4079 = vpop.f32.mrb[0].mxu0
        %v4080 = vadd.f32 %v3983, %v4079
        %v4081 = vpop.f32.mrb[0].mxu0
        %4082 = vmatprep.mubr.bf16.mxu0 0
        %4083 = vmatmul.mubr.bf16.gmra.mrb[0].mxu0 %v4029
        %v4084 = vpop.f32.mrb[0].mxu0
        %v4085 = vadd.f32 %v3988, %v4084
        %v4086 = vpop.f32.mrb[0].mxu0
        %v4087 = vpop.f32.mrb[0].mxu0
        %v4088 = vadd.f32 %v3991, %v4087
        %v4089 = vpop.f32.mrb[0].mxu0
        %4090 = vmatprep.mubr.bf16.mxu0 0
        %4091 = vmatmul.mubr.bf16.gmra.mrb[0].mxu0 %v4032
        %v4092 = vpop.f32.mrb[0].mxu0
        %v4093 = vadd.f32 %v3996, %v4092
        %v4094 = vpop.f32.mrb[0].mxu0
        %v4095 = vpop.f32.mrb[0].mxu0
        %v4096 = vadd.f32 %v3999, %v4095
        %v4097 = vpop.f32.mrb[0].mxu0
        %4098 = vdwg.mxu0
        %s4099 = scalar_lea.vmem %s6, 64
        %v4100 = vld [vmem:[%s4099] sm:$0xf]
        %v4101 = vld [vmem:[%s4099 + $0x4] sm:$0xf]
        %v4102 = vld [vmem:[%s4099 + $0x8] sm:$0xf]
        %v4103 = vld [vmem:[%s4099 + $0xc] sm:$0xf]
        %v4104 = vld [vmem:[%s4099 + $0x10] sm:$0xf]
        %v4105 = vld [vmem:[%s4099 + $0x14] sm:$0xf]
        %v4106 = vld [vmem:[%s4099 + $0x18] sm:$0xf]
        %v4107 = vld [vmem:[%s4099 + $0x1c] sm:$0xf]
        %v4116 = vunpack.c.l.b16 %v4100
        %v4117 = vunpack.c.l.b16 %v4101
        %v4118 = vunpack.c.l.b16 %v4102
        %v4119 = vunpack.c.l.b16 %v4103
        %v4120 = vunpack.c.l.b16 %v4104
        %v4121 = vunpack.c.l.b16 %v4105
        %v4122 = vunpack.c.l.b16 %v4106
        %v4123 = vunpack.c.l.b16 %v4107
        %v4124 = vpack.c.b16 %v4117, %v4116
        %v4125 = vpack.c.b16 %v4119, %v4118
        %v4126 = vpack.c.b16 %v4121, %v4120
        %v4127 = vpack.c.b16 %v4123, %v4122
        %4132 = vmatprep.subr.bf16.mxu0 0
        %4133 = vmatpush1.bf16.msra.mxu0 %v4124
        %4134 = vmatprep.subr.bf16.mxu0 0
        %4135 = vmatpush1.bf16.msra.mxu0 %v4125
        %4136 = vmatprep.subr.bf16.mxu0 0
        %4137 = vmatpush1.bf16.msra.mxu0 %v4126
        %4138 = vmatprep.subr.bf16.mxu0 0
        %4139 = vmatpush1.bf16.msra.mxu0 %v4127
        %4140 = vmatprep.subr.bf16.mxu0 0
        %4141 = vmatpush1.bf16.msra.mxu0 0
        %4142 = vmatprep.subr.bf16.mxu0 0
        %4143 = vmatpush1.bf16.msra.mxu0 0
        %4144 = vmatprep.subr.bf16.mxu0 0
        %4145 = vmatpush1.bf16.msra.mxu0 0
        %4146 = vmatprep.subr.bf16.mxu0 0
        %4147 = vmatpush1.bf16.msra.mxu0 0
        %4148 = vmatprep.subr.bf16.mxu0 0
        %4149 = vmatpush1.bf16.msra.mxu0 0
        %4150 = vmatprep.subr.bf16.mxu0 0
        %4151 = vmatpush1.bf16.msra.mxu0 0
        %4152 = vmatprep.subr.bf16.mxu0 0
        %4153 = vmatpush1.bf16.msra.mxu0 0
        %4154 = vmatprep.subr.bf16.mxu0 0
        %4155 = vmatpush1.bf16.msra.mxu0 0
        %4156 = vmatprep.subr.bf16.mxu0 0
        %4157 = vmatpush1.bf16.msra.mxu0 0
        %4158 = vmatprep.subr.bf16.mxu0 0
        %4159 = vmatpush1.bf16.msra.mxu0 0
        %4160 = vmatprep.subr.bf16.mxu0 0
        %4161 = vmatpush1.bf16.msra.mxu0 0
        %4162 = vmatprep.subr.bf16.mxu0 0
        %4163 = vmatpush1.bf16.msra.mxu0 0
        %4164 = vmatprep.mubr.bf16.mxu0 0
        %4165 = vmatmul.mubr.bf16.gmra.mrb[0].mxu0 %v3747
        %v4166 = vpop.f32.mrb[0].mxu0
        %v4167 = vadd.f32 0.0, %v4166
        %v4168 = vpop.f32.mrb[0].mxu0
        %v4169 = vpop.f32.mrb[0].mxu0
        %v4170 = vadd.f32 0.0, %v4169
        %v4171 = vpop.f32.mrb[0].mxu0
        %4172 = vmatprep.mubr.bf16.mxu0 0
        %4173 = vmatmul.mubr.bf16.gmra.mrb[0].mxu0 %v3750
        %v4174 = vpop.f32.mrb[0].mxu0
        %v4175 = vadd.f32 0.0, %v4174
        %v4176 = vpop.f32.mrb[0].mxu0
        %v4177 = vpop.f32.mrb[0].mxu0
        %v4178 = vadd.f32 0.0, %v4177
        %v4179 = vpop.f32.mrb[0].mxu0
        %4180 = vdwg.mxu0
        %v4181 = vpack.c.bf16 %v4170, %v4167
        %v4182 = vpack.c.bf16 %v4178, %v4175
        %s4183 = scalar_lea.vmem %s7, 64
        %v4184 = vld [vmem:[%s4183] sm:$0xf]
        %v4185 = vld [vmem:[%s4183 + $0x4] sm:$0xf]
        %v4186 = vld [vmem:[%s4183 + $0x8] sm:$0xf]
        %v4187 = vld [vmem:[%s4183 + $0xc] sm:$0xf]
        %v4188 = vld [vmem:[%s4183 + $0x10] sm:$0xf]
        %v4189 = vld [vmem:[%s4183 + $0x14] sm:$0xf]
        %v4190 = vld [vmem:[%s4183 + $0x18] sm:$0xf]
        %v4191 = vld [vmem:[%s4183 + $0x1c] sm:$0xf]
        %v4200 = vunpack.c.l.b16 %v4184
        %v4201 = vunpack.c.l.b16 %v4185
        %v4202 = vunpack.c.l.b16 %v4186
        %v4203 = vunpack.c.l.b16 %v4187
        %v4204 = vunpack.c.l.b16 %v4188
        %v4205 = vunpack.c.l.b16 %v4189
        %v4206 = vunpack.c.l.b16 %v4190
        %v4207 = vunpack.c.l.b16 %v4191
        %v4208 = vpack.c.b16 %v4201, %v4200
        %v4209 = vpack.c.b16 %v4203, %v4202
        %v4210 = vpack.c.b16 %v4205, %v4204
        %v4211 = vpack.c.b16 %v4207, %v4206
        %v4213 = vsel %vm3924, %v4208, 0
        %v4216 = vsel %vm3924, %v4209, 0
        %v4219 = vsel %vm3924, %v4210, 0
        %v4222 = vsel %vm3924, %v4211, 0
        %4224 = vmatprep.subr.bf16.mxu0 0
        %4225 = vmatpush1.bf16.msra.mxu0 %v4181
        %4226 = vmatprep.subr.bf16.mxu0 0
        %4227 = vmatpush1.bf16.msra.mxu0 %v4182
        %4228 = vmatprep.subr.bf16.mxu0 0
        %4229 = vmatpush1.bf16.msra.mxu0 0
        %4230 = vmatprep.subr.bf16.mxu0 0
        %4231 = vmatpush1.bf16.msra.mxu0 0
        %4232 = vmatprep.subr.bf16.mxu0 0
        %4233 = vmatpush1.bf16.msra.mxu0 0
        %4234 = vmatprep.subr.bf16.mxu0 0
        %4235 = vmatpush1.bf16.msra.mxu0 0
        %4236 = vmatprep.subr.bf16.mxu0 0
        %4237 = vmatpush1.bf16.msra.mxu0 0
        %4238 = vmatprep.subr.bf16.mxu0 0
        %4239 = vmatpush1.bf16.msra.mxu0 0
        %4240 = vmatprep.subr.bf16.mxu0 0
        %4241 = vmatpush1.bf16.msra.mxu0 0
        %4242 = vmatprep.subr.bf16.mxu0 0
        %4243 = vmatpush1.bf16.msra.mxu0 0
        %4244 = vmatprep.subr.bf16.mxu0 0
        %4245 = vmatpush1.bf16.msra.mxu0 0
        %4246 = vmatprep.subr.bf16.mxu0 0
        %4247 = vmatpush1.bf16.msra.mxu0 0
        %4248 = vmatprep.subr.bf16.mxu0 0
        %4249 = vmatpush1.bf16.msra.mxu0 0
        %4250 = vmatprep.subr.bf16.mxu0 0
        %4251 = vmatpush1.bf16.msra.mxu0 0
        %4252 = vmatprep.subr.bf16.mxu0 0
        %4253 = vmatpush1.bf16.msra.mxu0 0
        %4254 = vmatprep.subr.bf16.mxu0 0
        %4255 = vmatpush1.bf16.msra.mxu0 0
        %4256 = vmatprep.mubr.bf16.mxu0 0
        %4257 = vmatmul.mubr.bf16.gmra.mrb[0].mxu0 %v4213
        %v4258 = vpop.f32.mrb[0].mxu0
        %v4259 = vadd.f32 0.0, %v4258
        %v4260 = vpop.f32.mrb[0].mxu0
        %v4261 = vpop.f32.mrb[0].mxu0
        %v4262 = vadd.f32 0.0, %v4261
        %v4263 = vpop.f32.mrb[0].mxu0
        %4264 = vmatprep.mubr.bf16.mxu0 0
        %4265 = vmatmul.mubr.bf16.gmra.mrb[0].mxu0 %v4216
        %v4266 = vpop.f32.mrb[0].mxu0
        %v4267 = vadd.f32 0.0, %v4266
        %v4268 = vpop.f32.mrb[0].mxu0
        %v4269 = vpop.f32.mrb[0].mxu0
        %v4270 = vadd.f32 0.0, %v4269
        %v4271 = vpop.f32.mrb[0].mxu0
        %4272 = vmatprep.mubr.bf16.mxu0 0
        %4273 = vmatmul.mubr.bf16.gmra.mrb[0].mxu0 %v4219
        %v4274 = vpop.f32.mrb[0].mxu0
        %v4275 = vadd.f32 0.0, %v4274
        %v4276 = vpop.f32.mrb[0].mxu0
        %v4277 = vpop.f32.mrb[0].mxu0
        %v4278 = vadd.f32 0.0, %v4277
        %v4279 = vpop.f32.mrb[0].mxu0
        %4280 = vmatprep.mubr.bf16.mxu0 0
        %4281 = vmatmul.mubr.bf16.gmra.mrb[0].mxu0 %v4222
        %v4282 = vpop.f32.mrb[0].mxu0
        %v4283 = vadd.f32 0.0, %v4282
        %v4284 = vpop.f32.mrb[0].mxu0
        %v4285 = vpop.f32.mrb[0].mxu0
        %v4286 = vadd.f32 0.0, %v4285
        %v4287 = vpop.f32.mrb[0].mxu0
        %4288 = vdwg.mxu0
        %v4289 = vadd.f32 %v4069, %v4259
        %v4290 = vadd.f32 %v4072, %v4262
        %v4291 = vadd.f32 %v4077, %v4267
        %v4292 = vadd.f32 %v4080, %v4270
        %v4293 = vadd.f32 %v4085, %v4275
        %v4294 = vadd.f32 %v4088, %v4278
        %v4295 = vadd.f32 %v4093, %v4283
        %v4296 = vadd.f32 %v4096, %v4286
        %s4297 = scalar_lea.vmem %s6, 96
        %v4298 = vld [vmem:[%s4297] sm:$0xf]
        %v4299 = vld [vmem:[%s4297 + $0x4] sm:$0xf]
        %v4300 = vld [vmem:[%s4297 + $0x8] sm:$0xf]
        %v4301 = vld [vmem:[%s4297 + $0xc] sm:$0xf]
        %v4302 = vld [vmem:[%s4297 + $0x10] sm:$0xf]
        %v4303 = vld [vmem:[%s4297 + $0x14] sm:$0xf]
        %v4304 = vld [vmem:[%s4297 + $0x18] sm:$0xf]
        %v4305 = vld [vmem:[%s4297 + $0x1c] sm:$0xf]
        %v4314 = vunpack.c.l.b16 %v4298
        %v4315 = vunpack.c.l.b16 %v4299
        %v4316 = vunpack.c.l.b16 %v4300
        %v4317 = vunpack.c.l.b16 %v4301
        %v4318 = vunpack.c.l.b16 %v4302
        %v4319 = vunpack.c.l.b16 %v4303
        %v4320 = vunpack.c.l.b16 %v4304
        %v4321 = vunpack.c.l.b16 %v4305
        %v4322 = vpack.c.b16 %v4315, %v4314
        %v4323 = vpack.c.b16 %v4317, %v4316
        %v4324 = vpack.c.b16 %v4319, %v4318
        %v4325 = vpack.c.b16 %v4321, %v4320
        %4330 = vmatprep.subr.bf16.mxu0 0
        %4331 = vmatpush1.bf16.msra.mxu0 %v4322
        %4332 = vmatprep.subr.bf16.mxu0 0
        %4333 = vmatpush1.bf16.msra.mxu0 %v4323
        %4334 = vmatprep.subr.bf16.mxu0 0
        %4335 = vmatpush1.bf16.msra.mxu0 %v4324
        %4336 = vmatprep.subr.bf16.mxu0 0
        %4337 = vmatpush1.bf16.msra.mxu0 %v4325
        %4338 = vmatprep.subr.bf16.mxu0 0
        %4339 = vmatpush1.bf16.msra.mxu0 0
        %4340 = vmatprep.subr.bf16.mxu0 0
        %4341 = vmatpush1.bf16.msra.mxu0 0
        %4342 = vmatprep.subr.bf16.mxu0 0
        %4343 = vmatpush1.bf16.msra.mxu0 0
        %4344 = vmatprep.subr.bf16.mxu0 0
        %4345 = vmatpush1.bf16.msra.mxu0 0
        %4346 = vmatprep.subr.bf16.mxu0 0
        %4347 = vmatpush1.bf16.msra.mxu0 0
        %4348 = vmatprep.subr.bf16.mxu0 0
        %4349 = vmatpush1.bf16.msra.mxu0 0
        %4350 = vmatprep.subr.bf16.mxu0 0
        %4351 = vmatpush1.bf16.msra.mxu0 0
        %4352 = vmatprep.subr.bf16.mxu0 0
        %4353 = vmatpush1.bf16.msra.mxu0 0
        %4354 = vmatprep.subr.bf16.mxu0 0
        %4355 = vmatpush1.bf16.msra.mxu0 0
        %4356 = vmatprep.subr.bf16.mxu0 0
        %4357 = vmatpush1.bf16.msra.mxu0 0
        %4358 = vmatprep.subr.bf16.mxu0 0
        %4359 = vmatpush1.bf16.msra.mxu0 0
        %4360 = vmatprep.subr.bf16.mxu0 0
        %4361 = vmatpush1.bf16.msra.mxu0 0
        %4362 = vmatprep.mubr.bf16.mxu0 0
        %4363 = vmatmul.mubr.bf16.gmra.mrb[0].mxu0 %v3747
        %v4364 = vpop.f32.mrb[0].mxu0
        %v4365 = vadd.f32 0.0, %v4364
        %v4366 = vpop.f32.mrb[0].mxu0
        %v4367 = vpop.f32.mrb[0].mxu0
        %v4368 = vadd.f32 0.0, %v4367
        %v4369 = vpop.f32.mrb[0].mxu0
        %4370 = vmatprep.mubr.bf16.mxu0 0
        %4371 = vmatmul.mubr.bf16.gmra.mrb[0].mxu0 %v3750
        %v4372 = vpop.f32.mrb[0].mxu0
        %v4373 = vadd.f32 0.0, %v4372
        %v4374 = vpop.f32.mrb[0].mxu0
        %v4375 = vpop.f32.mrb[0].mxu0
        %v4376 = vadd.f32 0.0, %v4375
        %v4377 = vpop.f32.mrb[0].mxu0
        %4378 = vdwg.mxu0
        %v4379 = vpack.c.bf16 %v4368, %v4365
        %v4380 = vpack.c.bf16 %v4376, %v4373
        %s4381 = scalar_lea.vmem %s7, 96
        %v4382 = vld [vmem:[%s4381] sm:$0xf]
        %v4383 = vld [vmem:[%s4381 + $0x4] sm:$0xf]
        %v4384 = vld [vmem:[%s4381 + $0x8] sm:$0xf]
        %v4385 = vld [vmem:[%s4381 + $0xc] sm:$0xf]
        %v4386 = vld [vmem:[%s4381 + $0x10] sm:$0xf]
        %v4387 = vld [vmem:[%s4381 + $0x14] sm:$0xf]
        %v4388 = vld [vmem:[%s4381 + $0x18] sm:$0xf]
        %v4389 = vld [vmem:[%s4381 + $0x1c] sm:$0xf]
        %v4398 = vunpack.c.l.b16 %v4382
        %v4399 = vunpack.c.l.b16 %v4383
        %v4400 = vunpack.c.l.b16 %v4384
        %v4401 = vunpack.c.l.b16 %v4385
        %v4402 = vunpack.c.l.b16 %v4386
        %v4403 = vunpack.c.l.b16 %v4387
        %v4404 = vunpack.c.l.b16 %v4388
        %v4405 = vunpack.c.l.b16 %v4389
        %v4406 = vpack.c.b16 %v4399, %v4398
        %v4407 = vpack.c.b16 %v4401, %v4400
        %v4408 = vpack.c.b16 %v4403, %v4402
        %v4409 = vpack.c.b16 %v4405, %v4404
        %v4411 = vsel %vm3924, %v4406, 0
        %v4414 = vsel %vm3924, %v4407, 0
        %v4417 = vsel %vm3924, %v4408, 0
        %v4420 = vsel %vm3924, %v4409, 0
        %4422 = vmatprep.subr.bf16.mxu0 0
        %4423 = vmatpush1.bf16.msra.mxu0 %v4379
        %4424 = vmatprep.subr.bf16.mxu0 0
        %4425 = vmatpush1.bf16.msra.mxu0 %v4380
        %4426 = vmatprep.subr.bf16.mxu0 0
        %4427 = vmatpush1.bf16.msra.mxu0 0
        %4428 = vmatprep.subr.bf16.mxu0 0
        %4429 = vmatpush1.bf16.msra.mxu0 0
        %4430 = vmatprep.subr.bf16.mxu0 0
        %4431 = vmatpush1.bf16.msra.mxu0 0
        %4432 = vmatprep.subr.bf16.mxu0 0
        %4433 = vmatpush1.bf16.msra.mxu0 0
        %4434 = vmatprep.subr.bf16.mxu0 0
        %4435 = vmatpush1.bf16.msra.mxu0 0
        %4436 = vmatprep.subr.bf16.mxu0 0
        %4437 = vmatpush1.bf16.msra.mxu0 0
        %4438 = vmatprep.subr.bf16.mxu0 0
        %4439 = vmatpush1.bf16.msra.mxu0 0
        %4440 = vmatprep.subr.bf16.mxu0 0
        %4441 = vmatpush1.bf16.msra.mxu0 0
        %4442 = vmatprep.subr.bf16.mxu0 0
        %4443 = vmatpush1.bf16.msra.mxu0 0
        %4444 = vmatprep.subr.bf16.mxu0 0
        %4445 = vmatpush1.bf16.msra.mxu0 0
        %4446 = vmatprep.subr.bf16.mxu0 0
        %4447 = vmatpush1.bf16.msra.mxu0 0
        %4448 = vmatprep.subr.bf16.mxu0 0
        %4449 = vmatpush1.bf16.msra.mxu0 0
        %4450 = vmatprep.subr.bf16.mxu0 0
        %4451 = vmatpush1.bf16.msra.mxu0 0
        %4452 = vmatprep.subr.bf16.mxu0 0
        %4453 = vmatpush1.bf16.msra.mxu0 0
        %4454 = vmatprep.mubr.bf16.mxu0 0
        %4455 = vmatmul.mubr.bf16.gmra.mrb[0].mxu0 %v4411
        %v4456 = vpop.f32.mrb[0].mxu0
        %v4457 = vadd.f32 0.0, %v4456
        %v4458 = vpop.f32.mrb[0].mxu0
        %v4459 = vpop.f32.mrb[0].mxu0
        %v4460 = vadd.f32 0.0, %v4459
        %v4461 = vpop.f32.mrb[0].mxu0
        %4462 = vmatprep.mubr.bf16.mxu0 0
        %4463 = vmatmul.mubr.bf16.gmra.mrb[0].mxu0 %v4414
        %v4464 = vpop.f32.mrb[0].mxu0
        %v4465 = vadd.f32 0.0, %v4464
        %v4466 = vpop.f32.mrb[0].mxu0
        %v4467 = vpop.f32.mrb[0].mxu0
        %v4468 = vadd.f32 0.0, %v4467
        %v4469 = vpop.f32.mrb[0].mxu0
        %4470 = vmatprep.mubr.bf16.mxu0 0
        %4471 = vmatmul.mubr.bf16.gmra.mrb[0].mxu0 %v4417
        %v4472 = vpop.f32.mrb[0].mxu0
        %v4473 = vadd.f32 0.0, %v4472
        %v4474 = vpop.f32.mrb[0].mxu0
        %v4475 = vpop.f32.mrb[0].mxu0
        %v4476 = vadd.f32 0.0, %v4475
        %v4477 = vpop.f32.mrb[0].mxu0
        %4478 = vmatprep.mubr.bf16.mxu0 0
        %4479 = vmatmul.mubr.bf16.gmra.mrb[0].mxu0 %v4420
        %v4480 = vpop.f32.mrb[0].mxu0
        %v4481 = vadd.f32 0.0, %v4480
        %v4482 = vpop.f32.mrb[0].mxu0
        %v4483 = vpop.f32.mrb[0].mxu0
        %v4484 = vadd.f32 0.0, %v4483
        %v4485 = vpop.f32.mrb[0].mxu0
        %4486 = vdwg.mxu0
        %v4487 = vadd.f32 %v4289, %v4457
        %v4488 = vadd.f32 %v4290, %v4460
        %v4489 = vadd.f32 %v4291, %v4465
        %v4490 = vadd.f32 %v4292, %v4468
        %v4491 = vadd.f32 %v4293, %v4473
        %v4492 = vadd.f32 %v4294, %v4476
        %v4493 = vadd.f32 %v4295, %v4481
        %v4494 = vadd.f32 %v4296, %v4484
        %s4495 = scalar_lea.vmem %s6, 128
        %v4496 = vld [vmem:[%s4495] sm:$0xf]
        %v4497 = vld [vmem:[%s4495 + $0x4] sm:$0xf]
        %v4498 = vld [vmem:[%s4495 + $0x8] sm:$0xf]
        %v4499 = vld [vmem:[%s4495 + $0xc] sm:$0xf]
        %v4500 = vld [vmem:[%s4495 + $0x10] sm:$0xf]
        %v4501 = vld [vmem:[%s4495 + $0x14] sm:$0xf]
        %v4502 = vld [vmem:[%s4495 + $0x18] sm:$0xf]
        %v4503 = vld [vmem:[%s4495 + $0x1c] sm:$0xf]
        %v4512 = vunpack.c.l.b16 %v4496
        %v4513 = vunpack.c.l.b16 %v4497
        %v4514 = vunpack.c.l.b16 %v4498
        %v4515 = vunpack.c.l.b16 %v4499
        %v4516 = vunpack.c.l.b16 %v4500
        %v4517 = vunpack.c.l.b16 %v4501
        %v4518 = vunpack.c.l.b16 %v4502
        %v4519 = vunpack.c.l.b16 %v4503
        %v4520 = vpack.c.b16 %v4513, %v4512
        %v4521 = vpack.c.b16 %v4515, %v4514
        %v4522 = vpack.c.b16 %v4517, %v4516
        %v4523 = vpack.c.b16 %v4519, %v4518
        %4528 = vmatprep.subr.bf16.mxu0 0
        %4529 = vmatpush1.bf16.msra.mxu0 %v4520
        %4530 = vmatprep.subr.bf16.mxu0 0
        %4531 = vmatpush1.bf16.msra.mxu0 %v4521
        %4532 = vmatprep.subr.bf16.mxu0 0
        %4533 = vmatpush1.bf16.msra.mxu0 %v4522
        %4534 = vmatprep.subr.bf16.mxu0 0
        %4535 = vmatpush1.bf16.msra.mxu0 %v4523
        %4536 = vmatprep.subr.bf16.mxu0 0
        %4537 = vmatpush1.bf16.msra.mxu0 0
        %4538 = vmatprep.subr.bf16.mxu0 0
        %4539 = vmatpush1.bf16.msra.mxu0 0
        %4540 = vmatprep.subr.bf16.mxu0 0
        %4541 = vmatpush1.bf16.msra.mxu0 0
        %4542 = vmatprep.subr.bf16.mxu0 0
        %4543 = vmatpush1.bf16.msra.mxu0 0
        %4544 = vmatprep.subr.bf16.mxu0 0
        %4545 = vmatpush1.bf16.msra.mxu0 0
        %4546 = vmatprep.subr.bf16.mxu0 0
        %4547 = vmatpush1.bf16.msra.mxu0 0
        %4548 = vmatprep.subr.bf16.mxu0 0
        %4549 = vmatpush1.bf16.msra.mxu0 0
        %4550 = vmatprep.subr.bf16.mxu0 0
        %4551 = vmatpush1.bf16.msra.mxu0 0
        %4552 = vmatprep.subr.bf16.mxu0 0
        %4553 = vmatpush1.bf16.msra.mxu0 0
        %4554 = vmatprep.subr.bf16.mxu0 0
        %4555 = vmatpush1.bf16.msra.mxu0 0
        %4556 = vmatprep.subr.bf16.mxu0 0
        %4557 = vmatpush1.bf16.msra.mxu0 0
        %4558 = vmatprep.subr.bf16.mxu0 0
        %4559 = vmatpush1.bf16.msra.mxu0 0
        %4560 = vmatprep.mubr.bf16.mxu0 0
        %4561 = vmatmul.mubr.bf16.gmra.mrb[0].mxu0 %v3747
        %v4562 = vpop.f32.mrb[0].mxu0
        %v4563 = vadd.f32 0.0, %v4562
        %v4564 = vpop.f32.mrb[0].mxu0
        %v4565 = vpop.f32.mrb[0].mxu0
        %v4566 = vadd.f32 0.0, %v4565
        %v4567 = vpop.f32.mrb[0].mxu0
        %4568 = vmatprep.mubr.bf16.mxu0 0
        %4569 = vmatmul.mubr.bf16.gmra.mrb[0].mxu0 %v3750
        %v4570 = vpop.f32.mrb[0].mxu0
        %v4571 = vadd.f32 0.0, %v4570
        %v4572 = vpop.f32.mrb[0].mxu0
        %v4573 = vpop.f32.mrb[0].mxu0
        %v4574 = vadd.f32 0.0, %v4573
        %v4575 = vpop.f32.mrb[0].mxu0
        %4576 = vdwg.mxu0
        %v4577 = vpack.c.bf16 %v4566, %v4563
        %v4578 = vpack.c.bf16 %v4574, %v4571
        %s4579 = scalar_lea.vmem %s7, 128
        %v4580 = vld [vmem:[%s4579] sm:$0xf]
        %v4581 = vld [vmem:[%s4579 + $0x4] sm:$0xf]
        %v4582 = vld [vmem:[%s4579 + $0x8] sm:$0xf]
        %v4583 = vld [vmem:[%s4579 + $0xc] sm:$0xf]
        %v4584 = vld [vmem:[%s4579 + $0x10] sm:$0xf]
        %v4585 = vld [vmem:[%s4579 + $0x14] sm:$0xf]
        %v4586 = vld [vmem:[%s4579 + $0x18] sm:$0xf]
        %v4587 = vld [vmem:[%s4579 + $0x1c] sm:$0xf]
        %v4596 = vunpack.c.l.b16 %v4580
        %v4597 = vunpack.c.l.b16 %v4581
        %v4598 = vunpack.c.l.b16 %v4582
        %v4599 = vunpack.c.l.b16 %v4583
        %v4600 = vunpack.c.l.b16 %v4584
        %v4601 = vunpack.c.l.b16 %v4585
        %v4602 = vunpack.c.l.b16 %v4586
        %v4603 = vunpack.c.l.b16 %v4587
        %v4604 = vpack.c.b16 %v4597, %v4596
        %v4605 = vpack.c.b16 %v4599, %v4598
        %v4606 = vpack.c.b16 %v4601, %v4600
        %v4607 = vpack.c.b16 %v4603, %v4602
        %v4609 = vsel %vm3924, %v4604, 0
        %v4612 = vsel %vm3924, %v4605, 0
        %v4615 = vsel %vm3924, %v4606, 0
        %v4618 = vsel %vm3924, %v4607, 0
        %4620 = vmatprep.subr.bf16.mxu0 0
        %4621 = vmatpush1.bf16.msra.mxu0 %v4577
        %4622 = vmatprep.subr.bf16.mxu0 0
        %4623 = vmatpush1.bf16.msra.mxu0 %v4578
        %4624 = vmatprep.subr.bf16.mxu0 0
        %4625 = vmatpush1.bf16.msra.mxu0 0
        %4626 = vmatprep.subr.bf16.mxu0 0
        %4627 = vmatpush1.bf16.msra.mxu0 0
        %4628 = vmatprep.subr.bf16.mxu0 0
        %4629 = vmatpush1.bf16.msra.mxu0 0
        %4630 = vmatprep.subr.bf16.mxu0 0
        %4631 = vmatpush1.bf16.msra.mxu0 0
        %4632 = vmatprep.subr.bf16.mxu0 0
        %4633 = vmatpush1.bf16.msra.mxu0 0
        %4634 = vmatprep.subr.bf16.mxu0 0
        %4635 = vmatpush1.bf16.msra.mxu0 0
        %4636 = vmatprep.subr.bf16.mxu0 0
        %4637 = vmatpush1.bf16.msra.mxu0 0
        %4638 = vmatprep.subr.bf16.mxu0 0
        %4639 = vmatpush1.bf16.msra.mxu0 0
        %4640 = vmatprep.subr.bf16.mxu0 0
        %4641 = vmatpush1.bf16.msra.mxu0 0
        %4642 = vmatprep.subr.bf16.mxu0 0
        %4643 = vmatpush1.bf16.msra.mxu0 0
        %4644 = vmatprep.subr.bf16.mxu0 0
        %4645 = vmatpush1.bf16.msra.mxu0 0
        %4646 = vmatprep.subr.bf16.mxu0 0
        %4647 = vmatpush1.bf16.msra.mxu0 0
        %4648 = vmatprep.subr.bf16.mxu0 0
        %4649 = vmatpush1.bf16.msra.mxu0 0
        %4650 = vmatprep.subr.bf16.mxu0 0
        %4651 = vmatpush1.bf16.msra.mxu0 0
        %4652 = vmatprep.mubr.bf16.mxu0 0
        %4653 = vmatmul.mubr.bf16.gmra.mrb[0].mxu0 %v4609
        %v4654 = vpop.f32.mrb[0].mxu0
        %v4655 = vadd.f32 0.0, %v4654
        %v4656 = vpop.f32.mrb[0].mxu0
        %v4657 = vpop.f32.mrb[0].mxu0
        %v4658 = vadd.f32 0.0, %v4657
        %v4659 = vpop.f32.mrb[0].mxu0
        %4660 = vmatprep.mubr.bf16.mxu0 0
        %4661 = vmatmul.mubr.bf16.gmra.mrb[0].mxu0 %v4612
        %v4662 = vpop.f32.mrb[0].mxu0
        %v4663 = vadd.f32 0.0, %v4662
        %v4664 = vpop.f32.mrb[0].mxu0
        %v4665 = vpop.f32.mrb[0].mxu0
        %v4666 = vadd.f32 0.0, %v4665
        %v4667 = vpop.f32.mrb[0].mxu0
        %4668 = vmatprep.mubr.bf16.mxu0 0
        %4669 = vmatmul.mubr.bf16.gmra.mrb[0].mxu0 %v4615
        %v4670 = vpop.f32.mrb[0].mxu0
        %v4671 = vadd.f32 0.0, %v4670
        %v4672 = vpop.f32.mrb[0].mxu0
        %v4673 = vpop.f32.mrb[0].mxu0
        %v4674 = vadd.f32 0.0, %v4673
        %v4675 = vpop.f32.mrb[0].mxu0
        %4676 = vmatprep.mubr.bf16.mxu0 0
        %4677 = vmatmul.mubr.bf16.gmra.mrb[0].mxu0 %v4618
        %v4678 = vpop.f32.mrb[0].mxu0
        %v4679 = vadd.f32 0.0, %v4678
        %v4680 = vpop.f32.mrb[0].mxu0
        %v4681 = vpop.f32.mrb[0].mxu0
        %v4682 = vadd.f32 0.0, %v4681
        %v4683 = vpop.f32.mrb[0].mxu0
        %4684 = vdwg.mxu0
        %v4685 = vadd.f32 %v4487, %v4655
        %v4686 = vadd.f32 %v4488, %v4658
        %v4687 = vadd.f32 %v4489, %v4663
        %v4688 = vadd.f32 %v4490, %v4666
        %v4689 = vadd.f32 %v4491, %v4671
        %v4690 = vadd.f32 %v4492, %v4674
        %v4691 = vadd.f32 %v4493, %v4679
        %v4692 = vadd.f32 %v4494, %v4682
        %s4693 = scalar_lea.vmem %s6, 160
        %v4694 = vld [vmem:[%s4693] sm:$0xf]
        %v4695 = vld [vmem:[%s4693 + $0x4] sm:$0xf]
        %v4696 = vld [vmem:[%s4693 + $0x8] sm:$0xf]
        %v4697 = vld [vmem:[%s4693 + $0xc] sm:$0xf]
        %v4698 = vld [vmem:[%s4693 + $0x10] sm:$0xf]
        %v4699 = vld [vmem:[%s4693 + $0x14] sm:$0xf]
        %v4700 = vld [vmem:[%s4693 + $0x18] sm:$0xf]
        %v4701 = vld [vmem:[%s4693 + $0x1c] sm:$0xf]
        %v4710 = vunpack.c.l.b16 %v4694
        %v4711 = vunpack.c.l.b16 %v4695
        %v4712 = vunpack.c.l.b16 %v4696
        %v4713 = vunpack.c.l.b16 %v4697
        %v4714 = vunpack.c.l.b16 %v4698
        %v4715 = vunpack.c.l.b16 %v4699
        %v4716 = vunpack.c.l.b16 %v4700
        %v4717 = vunpack.c.l.b16 %v4701
        %v4718 = vpack.c.b16 %v4711, %v4710
        %v4719 = vpack.c.b16 %v4713, %v4712
        %v4720 = vpack.c.b16 %v4715, %v4714
        %v4721 = vpack.c.b16 %v4717, %v4716
        %4726 = vmatprep.subr.bf16.mxu0 0
        %4727 = vmatpush1.bf16.msra.mxu0 %v4718
        %4728 = vmatprep.subr.bf16.mxu0 0
        %4729 = vmatpush1.bf16.msra.mxu0 %v4719
        %4730 = vmatprep.subr.bf16.mxu0 0
        %4731 = vmatpush1.bf16.msra.mxu0 %v4720
        %4732 = vmatprep.subr.bf16.mxu0 0
        %4733 = vmatpush1.bf16.msra.mxu0 %v4721
        %4734 = vmatprep.subr.bf16.mxu0 0
        %4735 = vmatpush1.bf16.msra.mxu0 0
        %4736 = vmatprep.subr.bf16.mxu0 0
        %4737 = vmatpush1.bf16.msra.mxu0 0
        %4738 = vmatprep.subr.bf16.mxu0 0
        %4739 = vmatpush1.bf16.msra.mxu0 0
        %4740 = vmatprep.subr.bf16.mxu0 0
        %4741 = vmatpush1.bf16.msra.mxu0 0
        %4742 = vmatprep.subr.bf16.mxu0 0
        %4743 = vmatpush1.bf16.msra.mxu0 0
        %4744 = vmatprep.subr.bf16.mxu0 0
        %4745 = vmatpush1.bf16.msra.mxu0 0
        %4746 = vmatprep.subr.bf16.mxu0 0
        %4747 = vmatpush1.bf16.msra.mxu0 0
        %4748 = vmatprep.subr.bf16.mxu0 0
        %4749 = vmatpush1.bf16.msra.mxu0 0
        %4750 = vmatprep.subr.bf16.mxu0 0
        %4751 = vmatpush1.bf16.msra.mxu0 0
        %4752 = vmatprep.subr.bf16.mxu0 0
        %4753 = vmatpush1.bf16.msra.mxu0 0
        %4754 = vmatprep.subr.bf16.mxu0 0
        %4755 = vmatpush1.bf16.msra.mxu0 0
        %4756 = vmatprep.subr.bf16.mxu0 0
        %4757 = vmatpush1.bf16.msra.mxu0 0
        %4758 = vmatprep.mubr.bf16.mxu0 0
        %4759 = vmatmul.mubr.bf16.gmra.mrb[0].mxu0 %v3747
        %v4760 = vpop.f32.mrb[0].mxu0
        %v4761 = vadd.f32 0.0, %v4760
        %v4762 = vpop.f32.mrb[0].mxu0
        %v4763 = vpop.f32.mrb[0].mxu0
        %v4764 = vadd.f32 0.0, %v4763
        %v4765 = vpop.f32.mrb[0].mxu0
        %4766 = vmatprep.mubr.bf16.mxu0 0
        %4767 = vmatmul.mubr.bf16.gmra.mrb[0].mxu0 %v3750
        %v4768 = vpop.f32.mrb[0].mxu0
        %v4769 = vadd.f32 0.0, %v4768
        %v4770 = vpop.f32.mrb[0].mxu0
        %v4771 = vpop.f32.mrb[0].mxu0
        %v4772 = vadd.f32 0.0, %v4771
        %v4773 = vpop.f32.mrb[0].mxu0
        %4774 = vdwg.mxu0
        %v4775 = vpack.c.bf16 %v4764, %v4761
        %v4776 = vpack.c.bf16 %v4772, %v4769
        %s4777 = scalar_lea.vmem %s7, 160
        %v4778 = vld [vmem:[%s4777] sm:$0xf]
        %v4779 = vld [vmem:[%s4777 + $0x4] sm:$0xf]
        %v4780 = vld [vmem:[%s4777 + $0x8] sm:$0xf]
        %v4781 = vld [vmem:[%s4777 + $0xc] sm:$0xf]
        %v4782 = vld [vmem:[%s4777 + $0x10] sm:$0xf]
        %v4783 = vld [vmem:[%s4777 + $0x14] sm:$0xf]
        %v4784 = vld [vmem:[%s4777 + $0x18] sm:$0xf]
        %v4785 = vld [vmem:[%s4777 + $0x1c] sm:$0xf]
        %v4794 = vunpack.c.l.b16 %v4778
        %v4795 = vunpack.c.l.b16 %v4779
        %v4796 = vunpack.c.l.b16 %v4780
        %v4797 = vunpack.c.l.b16 %v4781
        %v4798 = vunpack.c.l.b16 %v4782
        %v4799 = vunpack.c.l.b16 %v4783
        %v4800 = vunpack.c.l.b16 %v4784
        %v4801 = vunpack.c.l.b16 %v4785
        %v4802 = vpack.c.b16 %v4795, %v4794
        %v4803 = vpack.c.b16 %v4797, %v4796
        %v4804 = vpack.c.b16 %v4799, %v4798
        %v4805 = vpack.c.b16 %v4801, %v4800
        %v4807 = vsel %vm3924, %v4802, 0
        %v4810 = vsel %vm3924, %v4803, 0
        %v4813 = vsel %vm3924, %v4804, 0
        %v4816 = vsel %vm3924, %v4805, 0
        %4818 = vmatprep.subr.bf16.mxu0 0
        %4819 = vmatpush1.bf16.msra.mxu0 %v4775
        %4820 = vmatprep.subr.bf16.mxu0 0
        %4821 = vmatpush1.bf16.msra.mxu0 %v4776
        %4822 = vmatprep.subr.bf16.mxu0 0
        %4823 = vmatpush1.bf16.msra.mxu0 0
        %4824 = vmatprep.subr.bf16.mxu0 0
        %4825 = vmatpush1.bf16.msra.mxu0 0
        %4826 = vmatprep.subr.bf16.mxu0 0
        %4827 = vmatpush1.bf16.msra.mxu0 0
        %4828 = vmatprep.subr.bf16.mxu0 0
        %4829 = vmatpush1.bf16.msra.mxu0 0
        %4830 = vmatprep.subr.bf16.mxu0 0
        %4831 = vmatpush1.bf16.msra.mxu0 0
        %4832 = vmatprep.subr.bf16.mxu0 0
        %4833 = vmatpush1.bf16.msra.mxu0 0
        %4834 = vmatprep.subr.bf16.mxu0 0
        %4835 = vmatpush1.bf16.msra.mxu0 0
        %4836 = vmatprep.subr.bf16.mxu0 0
        %4837 = vmatpush1.bf16.msra.mxu0 0
        %4838 = vmatprep.subr.bf16.mxu0 0
        %4839 = vmatpush1.bf16.msra.mxu0 0
        %4840 = vmatprep.subr.bf16.mxu0 0
        %4841 = vmatpush1.bf16.msra.mxu0 0
        %4842 = vmatprep.subr.bf16.mxu0 0
        %4843 = vmatpush1.bf16.msra.mxu0 0
        %4844 = vmatprep.subr.bf16.mxu0 0
        %4845 = vmatpush1.bf16.msra.mxu0 0
        %4846 = vmatprep.subr.bf16.mxu0 0
        %4847 = vmatpush1.bf16.msra.mxu0 0
        %4848 = vmatprep.subr.bf16.mxu0 0
        %4849 = vmatpush1.bf16.msra.mxu0 0
        %4850 = vmatprep.mubr.bf16.mxu0 0
        %4851 = vmatmul.mubr.bf16.gmra.mrb[0].mxu0 %v4807
        %v4852 = vpop.f32.mrb[0].mxu0
        %v4853 = vadd.f32 0.0, %v4852
        %v4854 = vpop.f32.mrb[0].mxu0
        %v4855 = vpop.f32.mrb[0].mxu0
        %v4856 = vadd.f32 0.0, %v4855
        %v4857 = vpop.f32.mrb[0].mxu0
        %4858 = vmatprep.mubr.bf16.mxu0 0
        %4859 = vmatmul.mubr.bf16.gmra.mrb[0].mxu0 %v4810
        %v4860 = vpop.f32.mrb[0].mxu0
        %v4861 = vadd.f32 0.0, %v4860
        %v4862 = vpop.f32.mrb[0].mxu0
        %v4863 = vpop.f32.mrb[0].mxu0
        %v4864 = vadd.f32 0.0, %v4863
        %v4865 = vpop.f32.mrb[0].mxu0
        %4866 = vmatprep.mubr.bf16.mxu0 0
        %4867 = vmatmul.mubr.bf16.gmra.mrb[0].mxu0 %v4813
        %v4868 = vpop.f32.mrb[0].mxu0
        %v4869 = vadd.f32 0.0, %v4868
        %v4870 = vpop.f32.mrb[0].mxu0
        %v4871 = vpop.f32.mrb[0].mxu0
        %v4872 = vadd.f32 0.0, %v4871
        %v4873 = vpop.f32.mrb[0].mxu0
        %4874 = vmatprep.mubr.bf16.mxu0 0
        %4875 = vmatmul.mubr.bf16.gmra.mrb[0].mxu0 %v4816
        %v4876 = vpop.f32.mrb[0].mxu0
        %v4877 = vadd.f32 0.0, %v4876
        %v4878 = vpop.f32.mrb[0].mxu0
        %v4879 = vpop.f32.mrb[0].mxu0
        %v4880 = vadd.f32 0.0, %v4879
        %v4881 = vpop.f32.mrb[0].mxu0
        %4882 = vdwg.mxu0
        %v4883 = vadd.f32 %v4685, %v4853
        %v4884 = vadd.f32 %v4686, %v4856
        %v4885 = vadd.f32 %v4687, %v4861
        %v4886 = vadd.f32 %v4688, %v4864
        %v4887 = vadd.f32 %v4689, %v4869
        %v4888 = vadd.f32 %v4690, %v4872
        %v4889 = vadd.f32 %v4691, %v4877
        %v4890 = vadd.f32 %v4692, %v4880
        %s4891 = scalar_lea.vmem %s6, 192
        %v4892 = vld [vmem:[%s4891] sm:$0xf]
        %v4893 = vld [vmem:[%s4891 + $0x4] sm:$0xf]
        %v4894 = vld [vmem:[%s4891 + $0x8] sm:$0xf]
        %v4895 = vld [vmem:[%s4891 + $0xc] sm:$0xf]
        %v4896 = vld [vmem:[%s4891 + $0x10] sm:$0xf]
        %v4897 = vld [vmem:[%s4891 + $0x14] sm:$0xf]
        %v4898 = vld [vmem:[%s4891 + $0x18] sm:$0xf]
        %v4899 = vld [vmem:[%s4891 + $0x1c] sm:$0xf]
        %v4908 = vunpack.c.l.b16 %v4892
        %v4909 = vunpack.c.l.b16 %v4893
        %v4910 = vunpack.c.l.b16 %v4894
        %v4911 = vunpack.c.l.b16 %v4895
        %v4912 = vunpack.c.l.b16 %v4896
        %v4913 = vunpack.c.l.b16 %v4897
        %v4914 = vunpack.c.l.b16 %v4898
        %v4915 = vunpack.c.l.b16 %v4899
        %v4916 = vpack.c.b16 %v4909, %v4908
        %v4917 = vpack.c.b16 %v4911, %v4910
        %v4918 = vpack.c.b16 %v4913, %v4912
        %v4919 = vpack.c.b16 %v4915, %v4914
        %4924 = vmatprep.subr.bf16.mxu0 0
        %4925 = vmatpush1.bf16.msra.mxu0 %v4916
        %4926 = vmatprep.subr.bf16.mxu0 0
        %4927 = vmatpush1.bf16.msra.mxu0 %v4917
        %4928 = vmatprep.subr.bf16.mxu0 0
        %4929 = vmatpush1.bf16.msra.mxu0 %v4918
        %4930 = vmatprep.subr.bf16.mxu0 0
        %4931 = vmatpush1.bf16.msra.mxu0 %v4919
        %4932 = vmatprep.subr.bf16.mxu0 0
        %4933 = vmatpush1.bf16.msra.mxu0 0
        %4934 = vmatprep.subr.bf16.mxu0 0
        %4935 = vmatpush1.bf16.msra.mxu0 0
        %4936 = vmatprep.subr.bf16.mxu0 0
        %4937 = vmatpush1.bf16.msra.mxu0 0
        %4938 = vmatprep.subr.bf16.mxu0 0
        %4939 = vmatpush1.bf16.msra.mxu0 0
        %4940 = vmatprep.subr.bf16.mxu0 0
        %4941 = vmatpush1.bf16.msra.mxu0 0
        %4942 = vmatprep.subr.bf16.mxu0 0
        %4943 = vmatpush1.bf16.msra.mxu0 0
        %4944 = vmatprep.subr.bf16.mxu0 0
        %4945 = vmatpush1.bf16.msra.mxu0 0
        %4946 = vmatprep.subr.bf16.mxu0 0
        %4947 = vmatpush1.bf16.msra.mxu0 0
        %4948 = vmatprep.subr.bf16.mxu0 0
        %4949 = vmatpush1.bf16.msra.mxu0 0
        %4950 = vmatprep.subr.bf16.mxu0 0
        %4951 = vmatpush1.bf16.msra.mxu0 0
        %4952 = vmatprep.subr.bf16.mxu0 0
        %4953 = vmatpush1.bf16.msra.mxu0 0
        %4954 = vmatprep.subr.bf16.mxu0 0
        %4955 = vmatpush1.bf16.msra.mxu0 0
        %4956 = vmatprep.mubr.bf16.mxu0 0
        %4957 = vmatmul.mubr.bf16.gmra.mrb[0].mxu0 %v3747
        %v4958 = vpop.f32.mrb[0].mxu0
        %v4959 = vadd.f32 0.0, %v4958
        %v4960 = vpop.f32.mrb[0].mxu0
        %v4961 = vpop.f32.mrb[0].mxu0
        %v4962 = vadd.f32 0.0, %v4961
        %v4963 = vpop.f32.mrb[0].mxu0
        %4964 = vmatprep.mubr.bf16.mxu0 0
        %4965 = vmatmul.mubr.bf16.gmra.mrb[0].mxu0 %v3750
        %v4966 = vpop.f32.mrb[0].mxu0
        %v4967 = vadd.f32 0.0, %v4966
        %v4968 = vpop.f32.mrb[0].mxu0
        %v4969 = vpop.f32.mrb[0].mxu0
        %v4970 = vadd.f32 0.0, %v4969
        %v4971 = vpop.f32.mrb[0].mxu0
        %4972 = vdwg.mxu0
        %v4973 = vpack.c.bf16 %v4962, %v4959
        %v4974 = vpack.c.bf16 %v4970, %v4967
        %s4975 = scalar_lea.vmem %s7, 192
        %v4976 = vld [vmem:[%s4975] sm:$0xf]
        %v4977 = vld [vmem:[%s4975 + $0x4] sm:$0xf]
        %v4978 = vld [vmem:[%s4975 + $0x8] sm:$0xf]
        %v4979 = vld [vmem:[%s4975 + $0xc] sm:$0xf]
        %v4980 = vld [vmem:[%s4975 + $0x10] sm:$0xf]
        %v4981 = vld [vmem:[%s4975 + $0x14] sm:$0xf]
        %v4982 = vld [vmem:[%s4975 + $0x18] sm:$0xf]
        %v4983 = vld [vmem:[%s4975 + $0x1c] sm:$0xf]
        %v4992 = vunpack.c.l.b16 %v4976
        %v4993 = vunpack.c.l.b16 %v4977
        %v4994 = vunpack.c.l.b16 %v4978
        %v4995 = vunpack.c.l.b16 %v4979
        %v4996 = vunpack.c.l.b16 %v4980
        %v4997 = vunpack.c.l.b16 %v4981
        %v4998 = vunpack.c.l.b16 %v4982
        %v4999 = vunpack.c.l.b16 %v4983
        %v5000 = vpack.c.b16 %v4993, %v4992
        %v5001 = vpack.c.b16 %v4995, %v4994
        %v5002 = vpack.c.b16 %v4997, %v4996
        %v5003 = vpack.c.b16 %v4999, %v4998
        %v5005 = vsel %vm3924, %v5000, 0
        %v5008 = vsel %vm3924, %v5001, 0
        %v5011 = vsel %vm3924, %v5002, 0
        %v5014 = vsel %vm3924, %v5003, 0
        %5016 = vmatprep.subr.bf16.mxu0 0
        %5017 = vmatpush1.bf16.msra.mxu0 %v4973
        %5018 = vmatprep.subr.bf16.mxu0 0
        %5019 = vmatpush1.bf16.msra.mxu0 %v4974
        %5020 = vmatprep.subr.bf16.mxu0 0
        %5021 = vmatpush1.bf16.msra.mxu0 0
        %5022 = vmatprep.subr.bf16.mxu0 0
        %5023 = vmatpush1.bf16.msra.mxu0 0
        %5024 = vmatprep.subr.bf16.mxu0 0
        %5025 = vmatpush1.bf16.msra.mxu0 0
        %5026 = vmatprep.subr.bf16.mxu0 0
        %5027 = vmatpush1.bf16.msra.mxu0 0
        %5028 = vmatprep.subr.bf16.mxu0 0
        %5029 = vmatpush1.bf16.msra.mxu0 0
        %5030 = vmatprep.subr.bf16.mxu0 0
        %5031 = vmatpush1.bf16.msra.mxu0 0
        %5032 = vmatprep.subr.bf16.mxu0 0
        %5033 = vmatpush1.bf16.msra.mxu0 0
        %5034 = vmatprep.subr.bf16.mxu0 0
        %5035 = vmatpush1.bf16.msra.mxu0 0
        %5036 = vmatprep.subr.bf16.mxu0 0
        %5037 = vmatpush1.bf16.msra.mxu0 0
        %5038 = vmatprep.subr.bf16.mxu0 0
        %5039 = vmatpush1.bf16.msra.mxu0 0
        %5040 = vmatprep.subr.bf16.mxu0 0
        %5041 = vmatpush1.bf16.msra.mxu0 0
        %5042 = vmatprep.subr.bf16.mxu0 0
        %5043 = vmatpush1.bf16.msra.mxu0 0
        %5044 = vmatprep.subr.bf16.mxu0 0
        %5045 = vmatpush1.bf16.msra.mxu0 0
        %5046 = vmatprep.subr.bf16.mxu0 0
        %5047 = vmatpush1.bf16.msra.mxu0 0
        %5048 = vmatprep.mubr.bf16.mxu0 0
        %5049 = vmatmul.mubr.bf16.gmra.mrb[0].mxu0 %v5005
        %v5050 = vpop.f32.mrb[0].mxu0
        %v5051 = vadd.f32 0.0, %v5050
        %v5052 = vpop.f32.mrb[0].mxu0
        %v5053 = vpop.f32.mrb[0].mxu0
        %v5054 = vadd.f32 0.0, %v5053
        %v5055 = vpop.f32.mrb[0].mxu0
        %5056 = vmatprep.mubr.bf16.mxu0 0
        %5057 = vmatmul.mubr.bf16.gmra.mrb[0].mxu0 %v5008
        %v5058 = vpop.f32.mrb[0].mxu0
        %v5059 = vadd.f32 0.0, %v5058
        %v5060 = vpop.f32.mrb[0].mxu0
        %v5061 = vpop.f32.mrb[0].mxu0
        %v5062 = vadd.f32 0.0, %v5061
        %v5063 = vpop.f32.mrb[0].mxu0
        %5064 = vmatprep.mubr.bf16.mxu0 0
        %5065 = vmatmul.mubr.bf16.gmra.mrb[0].mxu0 %v5011
        %v5066 = vpop.f32.mrb[0].mxu0
        %v5067 = vadd.f32 0.0, %v5066
        %v5068 = vpop.f32.mrb[0].mxu0
        %v5069 = vpop.f32.mrb[0].mxu0
        %v5070 = vadd.f32 0.0, %v5069
        %v5071 = vpop.f32.mrb[0].mxu0
        %5072 = vmatprep.mubr.bf16.mxu0 0
        %5073 = vmatmul.mubr.bf16.gmra.mrb[0].mxu0 %v5014
        %v5074 = vpop.f32.mrb[0].mxu0
        %v5075 = vadd.f32 0.0, %v5074
        %v5076 = vpop.f32.mrb[0].mxu0
        %v5077 = vpop.f32.mrb[0].mxu0
        %v5078 = vadd.f32 0.0, %v5077
        %v5079 = vpop.f32.mrb[0].mxu0
        %5080 = vdwg.mxu0
        %v5081 = vadd.f32 %v4883, %v5051
        %v5082 = vadd.f32 %v4884, %v5054
        %v5083 = vadd.f32 %v4885, %v5059
        %v5084 = vadd.f32 %v4886, %v5062
        %v5085 = vadd.f32 %v4887, %v5067
        %v5086 = vadd.f32 %v4888, %v5070
        %v5087 = vadd.f32 %v4889, %v5075
        %v5088 = vadd.f32 %v4890, %v5078
        %s5089 = scalar_lea.vmem %s6, 224
        %v5090 = vld [vmem:[%s5089] sm:$0xf]
        %v5091 = vld [vmem:[%s5089 + $0x4] sm:$0xf]
        %v5092 = vld [vmem:[%s5089 + $0x8] sm:$0xf]
        %v5093 = vld [vmem:[%s5089 + $0xc] sm:$0xf]
        %v5094 = vld [vmem:[%s5089 + $0x10] sm:$0xf]
        %v5095 = vld [vmem:[%s5089 + $0x14] sm:$0xf]
        %v5096 = vld [vmem:[%s5089 + $0x18] sm:$0xf]
        %v5097 = vld [vmem:[%s5089 + $0x1c] sm:$0xf]
        %v5106 = vunpack.c.l.b16 %v5090
        %v5107 = vunpack.c.l.b16 %v5091
        %v5108 = vunpack.c.l.b16 %v5092
        %v5109 = vunpack.c.l.b16 %v5093
        %v5110 = vunpack.c.l.b16 %v5094
        %v5111 = vunpack.c.l.b16 %v5095
        %v5112 = vunpack.c.l.b16 %v5096
        %v5113 = vunpack.c.l.b16 %v5097
        %v5114 = vpack.c.b16 %v5107, %v5106
        %v5115 = vpack.c.b16 %v5109, %v5108
        %v5116 = vpack.c.b16 %v5111, %v5110
        %v5117 = vpack.c.b16 %v5113, %v5112
        %5122 = vmatprep.subr.bf16.mxu0 0
        %5123 = vmatpush1.bf16.msra.mxu0 %v5114
        %5124 = vmatprep.subr.bf16.mxu0 0
        %5125 = vmatpush1.bf16.msra.mxu0 %v5115
        %5126 = vmatprep.subr.bf16.mxu0 0
        %5127 = vmatpush1.bf16.msra.mxu0 %v5116
        %5128 = vmatprep.subr.bf16.mxu0 0
        %5129 = vmatpush1.bf16.msra.mxu0 %v5117
        %5130 = vmatprep.subr.bf16.mxu0 0
        %5131 = vmatpush1.bf16.msra.mxu0 0
        %5132 = vmatprep.subr.bf16.mxu0 0
        %5133 = vmatpush1.bf16.msra.mxu0 0
        %5134 = vmatprep.subr.bf16.mxu0 0
        %5135 = vmatpush1.bf16.msra.mxu0 0
        %5136 = vmatprep.subr.bf16.mxu0 0
        %5137 = vmatpush1.bf16.msra.mxu0 0
        %5138 = vmatprep.subr.bf16.mxu0 0
        %5139 = vmatpush1.bf16.msra.mxu0 0
        %5140 = vmatprep.subr.bf16.mxu0 0
        %5141 = vmatpush1.bf16.msra.mxu0 0
        %5142 = vmatprep.subr.bf16.mxu0 0
        %5143 = vmatpush1.bf16.msra.mxu0 0
        %5144 = vmatprep.subr.bf16.mxu0 0
        %5145 = vmatpush1.bf16.msra.mxu0 0
        %5146 = vmatprep.subr.bf16.mxu0 0
        %5147 = vmatpush1.bf16.msra.mxu0 0
        %5148 = vmatprep.subr.bf16.mxu0 0
        %5149 = vmatpush1.bf16.msra.mxu0 0
        %5150 = vmatprep.subr.bf16.mxu0 0
        %5151 = vmatpush1.bf16.msra.mxu0 0
        %5152 = vmatprep.subr.bf16.mxu0 0
        %5153 = vmatpush1.bf16.msra.mxu0 0
        %5154 = vmatprep.mubr.bf16.mxu0 0
        %5155 = vmatmul.mubr.bf16.gmra.mrb[0].mxu0 %v3747
        %v5156 = vpop.f32.mrb[0].mxu0
        %v5157 = vadd.f32 0.0, %v5156
        %v5158 = vpop.f32.mrb[0].mxu0
        %v5159 = vpop.f32.mrb[0].mxu0
        %v5160 = vadd.f32 0.0, %v5159
        %v5161 = vpop.f32.mrb[0].mxu0
        %5162 = vmatprep.mubr.bf16.mxu0 0
        %5163 = vmatmul.mubr.bf16.gmra.mrb[0].mxu0 %v3750
        %v5164 = vpop.f32.mrb[0].mxu0
        %v5165 = vadd.f32 0.0, %v5164
        %v5166 = vpop.f32.mrb[0].mxu0
        %v5167 = vpop.f32.mrb[0].mxu0
        %v5168 = vadd.f32 0.0, %v5167
        %v5169 = vpop.f32.mrb[0].mxu0
        %5170 = vdwg.mxu0
        %v5171 = vpack.c.bf16 %v5160, %v5157
        %v5172 = vpack.c.bf16 %v5168, %v5165
        %s5173 = scalar_lea.vmem %s7, 224
        %v5174 = vld [vmem:[%s5173] sm:$0xf]
        %v5175 = vld [vmem:[%s5173 + $0x4] sm:$0xf]
        %v5176 = vld [vmem:[%s5173 + $0x8] sm:$0xf]
        %v5177 = vld [vmem:[%s5173 + $0xc] sm:$0xf]
        %v5178 = vld [vmem:[%s5173 + $0x10] sm:$0xf]
        %v5179 = vld [vmem:[%s5173 + $0x14] sm:$0xf]
        %v5180 = vld [vmem:[%s5173 + $0x18] sm:$0xf]
        %v5181 = vld [vmem:[%s5173 + $0x1c] sm:$0xf]
        %v5190 = vunpack.c.l.b16 %v5174
        %v5191 = vunpack.c.l.b16 %v5175
        %v5192 = vunpack.c.l.b16 %v5176
        %v5193 = vunpack.c.l.b16 %v5177
        %v5194 = vunpack.c.l.b16 %v5178
        %v5195 = vunpack.c.l.b16 %v5179
        %v5196 = vunpack.c.l.b16 %v5180
        %v5197 = vunpack.c.l.b16 %v5181
        %v5198 = vpack.c.b16 %v5191, %v5190
        %v5199 = vpack.c.b16 %v5193, %v5192
        %v5200 = vpack.c.b16 %v5195, %v5194
        %v5201 = vpack.c.b16 %v5197, %v5196
        %v5203 = vsel %vm3924, %v5198, 0
        %v5206 = vsel %vm3924, %v5199, 0
        %v5209 = vsel %vm3924, %v5200, 0
        %v5212 = vsel %vm3924, %v5201, 0
        %5214 = vmatprep.subr.bf16.mxu0 0
        %5215 = vmatpush1.bf16.msra.mxu0 %v5171
        %5216 = vmatprep.subr.bf16.mxu0 0
        %5217 = vmatpush1.bf16.msra.mxu0 %v5172
        %5218 = vmatprep.subr.bf16.mxu0 0
        %5219 = vmatpush1.bf16.msra.mxu0 0
        %5220 = vmatprep.subr.bf16.mxu0 0
        %5221 = vmatpush1.bf16.msra.mxu0 0
        %5222 = vmatprep.subr.bf16.mxu0 0
        %5223 = vmatpush1.bf16.msra.mxu0 0
        %5224 = vmatprep.subr.bf16.mxu0 0
        %5225 = vmatpush1.bf16.msra.mxu0 0
        %5226 = vmatprep.subr.bf16.mxu0 0
        %5227 = vmatpush1.bf16.msra.mxu0 0
        %5228 = vmatprep.subr.bf16.mxu0 0
        %5229 = vmatpush1.bf16.msra.mxu0 0
        %5230 = vmatprep.subr.bf16.mxu0 0
        %5231 = vmatpush1.bf16.msra.mxu0 0
        %5232 = vmatprep.subr.bf16.mxu0 0
        %5233 = vmatpush1.bf16.msra.mxu0 0
        %5234 = vmatprep.subr.bf16.mxu0 0
        %5235 = vmatpush1.bf16.msra.mxu0 0
        %5236 = vmatprep.subr.bf16.mxu0 0
        %5237 = vmatpush1.bf16.msra.mxu0 0
        %5238 = vmatprep.subr.bf16.mxu0 0
        %5239 = vmatpush1.bf16.msra.mxu0 0
        %5240 = vmatprep.subr.bf16.mxu0 0
        %5241 = vmatpush1.bf16.msra.mxu0 0
        %5242 = vmatprep.subr.bf16.mxu0 0
        %5243 = vmatpush1.bf16.msra.mxu0 0
        %5244 = vmatprep.subr.bf16.mxu0 0
        %5245 = vmatpush1.bf16.msra.mxu0 0
        %5246 = vmatprep.mubr.bf16.mxu0 0
        %5247 = vmatmul.mubr.bf16.gmra.mrb[0].mxu0 %v5203
        %v5248 = vpop.f32.mrb[0].mxu0
        %v5249 = vadd.f32 0.0, %v5248
        %v5250 = vpop.f32.mrb[0].mxu0
        %v5251 = vpop.f32.mrb[0].mxu0
        %v5252 = vadd.f32 0.0, %v5251
        %v5253 = vpop.f32.mrb[0].mxu0
        %5254 = vmatprep.mubr.bf16.mxu0 0
        %5255 = vmatmul.mubr.bf16.gmra.mrb[0].mxu0 %v5206
        %v5256 = vpop.f32.mrb[0].mxu0
        %v5257 = vadd.f32 0.0, %v5256
        %v5258 = vpop.f32.mrb[0].mxu0
        %v5259 = vpop.f32.mrb[0].mxu0
        %v5260 = vadd.f32 0.0, %v5259
        %v5261 = vpop.f32.mrb[0].mxu0
        %5262 = vmatprep.mubr.bf16.mxu0 0
        %5263 = vmatmul.mubr.bf16.gmra.mrb[0].mxu0 %v5209
        %v5264 = vpop.f32.mrb[0].mxu0
        %v5265 = vadd.f32 0.0, %v5264
        %v5266 = vpop.f32.mrb[0].mxu0
        %v5267 = vpop.f32.mrb[0].mxu0
        %v5268 = vadd.f32 0.0, %v5267
        %v5269 = vpop.f32.mrb[0].mxu0
        %5270 = vmatprep.mubr.bf16.mxu0 0
        %5271 = vmatmul.mubr.bf16.gmra.mrb[0].mxu0 %v5212
        %v5272 = vpop.f32.mrb[0].mxu0
        %v5273 = vadd.f32 0.0, %v5272
        %v5274 = vpop.f32.mrb[0].mxu0
        %v5275 = vpop.f32.mrb[0].mxu0
        %v5276 = vadd.f32 0.0, %v5275
        %v5277 = vpop.f32.mrb[0].mxu0
        %5278 = vdwg.mxu0
        %v5279 = vadd.f32 %v5081, %v5249
        %v5280 = vadd.f32 %v5082, %v5252
        %v5281 = vadd.f32 %v5083, %v5257
        %v5282 = vadd.f32 %v5084, %v5260
        %v5283 = vadd.f32 %v5085, %v5265
        %v5284 = vadd.f32 %v5086, %v5268
        %v5285 = vadd.f32 %v5087, %v5273
        %v5286 = vadd.f32 %v5088, %v5276
        %s5287 = scalar_lea.vmem %s6, 256
        %v5288 = vld [vmem:[%s5287] sm:$0xf]
        %v5289 = vld [vmem:[%s5287 + $0x4] sm:$0xf]
        %v5290 = vld [vmem:[%s5287 + $0x8] sm:$0xf]
        %v5291 = vld [vmem:[%s5287 + $0xc] sm:$0xf]
        %v5292 = vld [vmem:[%s5287 + $0x10] sm:$0xf]
        %v5293 = vld [vmem:[%s5287 + $0x14] sm:$0xf]
        %v5294 = vld [vmem:[%s5287 + $0x18] sm:$0xf]
        %v5295 = vld [vmem:[%s5287 + $0x1c] sm:$0xf]
        %v5304 = vunpack.c.l.b16 %v5288
        %v5305 = vunpack.c.l.b16 %v5289
        %v5306 = vunpack.c.l.b16 %v5290
        %v5307 = vunpack.c.l.b16 %v5291
        %v5308 = vunpack.c.l.b16 %v5292
        %v5309 = vunpack.c.l.b16 %v5293
        %v5310 = vunpack.c.l.b16 %v5294
        %v5311 = vunpack.c.l.b16 %v5295
        %v5312 = vpack.c.b16 %v5305, %v5304
        %v5313 = vpack.c.b16 %v5307, %v5306
        %v5314 = vpack.c.b16 %v5309, %v5308
        %v5315 = vpack.c.b16 %v5311, %v5310
        %5320 = vmatprep.subr.bf16.mxu0 0
        %5321 = vmatpush1.bf16.msra.mxu0 %v5312
        %5322 = vmatprep.subr.bf16.mxu0 0
        %5323 = vmatpush1.bf16.msra.mxu0 %v5313
        %5324 = vmatprep.subr.bf16.mxu0 0
        %5325 = vmatpush1.bf16.msra.mxu0 %v5314
        %5326 = vmatprep.subr.bf16.mxu0 0
        %5327 = vmatpush1.bf16.msra.mxu0 %v5315
        %5328 = vmatprep.subr.bf16.mxu0 0
        %5329 = vmatpush1.bf16.msra.mxu0 0
        %5330 = vmatprep.subr.bf16.mxu0 0
        %5331 = vmatpush1.bf16.msra.mxu0 0
        %5332 = vmatprep.subr.bf16.mxu0 0
        %5333 = vmatpush1.bf16.msra.mxu0 0
        %5334 = vmatprep.subr.bf16.mxu0 0
        %5335 = vmatpush1.bf16.msra.mxu0 0
        %5336 = vmatprep.subr.bf16.mxu0 0
        %5337 = vmatpush1.bf16.msra.mxu0 0
        %5338 = vmatprep.subr.bf16.mxu0 0
        %5339 = vmatpush1.bf16.msra.mxu0 0
        %5340 = vmatprep.subr.bf16.mxu0 0
        %5341 = vmatpush1.bf16.msra.mxu0 0
        %5342 = vmatprep.subr.bf16.mxu0 0
        %5343 = vmatpush1.bf16.msra.mxu0 0
        %5344 = vmatprep.subr.bf16.mxu0 0
        %5345 = vmatpush1.bf16.msra.mxu0 0
        %5346 = vmatprep.subr.bf16.mxu0 0
        %5347 = vmatpush1.bf16.msra.mxu0 0
        %5348 = vmatprep.subr.bf16.mxu0 0
        %5349 = vmatpush1.bf16.msra.mxu0 0
        %5350 = vmatprep.subr.bf16.mxu0 0
        %5351 = vmatpush1.bf16.msra.mxu0 0
        %5352 = vmatprep.mubr.bf16.mxu0 0
        %5353 = vmatmul.mubr.bf16.gmra.mrb[0].mxu0 %v3747
        %v5354 = vpop.f32.mrb[0].mxu0
        %v5355 = vadd.f32 0.0, %v5354
        %v5356 = vpop.f32.mrb[0].mxu0
        %v5357 = vpop.f32.mrb[0].mxu0
        %v5358 = vadd.f32 0.0, %v5357
        %v5359 = vpop.f32.mrb[0].mxu0
        %5360 = vmatprep.mubr.bf16.mxu0 0
        %5361 = vmatmul.mubr.bf16.gmra.mrb[0].mxu0 %v3750
        %v5362 = vpop.f32.mrb[0].mxu0
        %v5363 = vadd.f32 0.0, %v5362
        %v5364 = vpop.f32.mrb[0].mxu0
        %v5365 = vpop.f32.mrb[0].mxu0
        %v5366 = vadd.f32 0.0, %v5365
        %v5367 = vpop.f32.mrb[0].mxu0
        %5368 = vdwg.mxu0
        %v5369 = vpack.c.bf16 %v5358, %v5355
        %v5370 = vpack.c.bf16 %v5366, %v5363
        %s5371 = scalar_lea.vmem %s7, 256
        %v5372 = vld [vmem:[%s5371] sm:$0xf]
        %v5373 = vld [vmem:[%s5371 + $0x4] sm:$0xf]
        %v5374 = vld [vmem:[%s5371 + $0x8] sm:$0xf]
        %v5375 = vld [vmem:[%s5371 + $0xc] sm:$0xf]
        %v5376 = vld [vmem:[%s5371 + $0x10] sm:$0xf]
        %v5377 = vld [vmem:[%s5371 + $0x14] sm:$0xf]
        %v5378 = vld [vmem:[%s5371 + $0x18] sm:$0xf]
        %v5379 = vld [vmem:[%s5371 + $0x1c] sm:$0xf]
        %v5388 = vunpack.c.l.b16 %v5372
        %v5389 = vunpack.c.l.b16 %v5373
        %v5390 = vunpack.c.l.b16 %v5374
        %v5391 = vunpack.c.l.b16 %v5375
        %v5392 = vunpack.c.l.b16 %v5376
        %v5393 = vunpack.c.l.b16 %v5377
        %v5394 = vunpack.c.l.b16 %v5378
        %v5395 = vunpack.c.l.b16 %v5379
        %v5396 = vpack.c.b16 %v5389, %v5388
        %v5397 = vpack.c.b16 %v5391, %v5390
        %v5398 = vpack.c.b16 %v5393, %v5392
        %v5399 = vpack.c.b16 %v5395, %v5394
        %v5401 = vsel %vm3924, %v5396, 0
        %v5404 = vsel %vm3924, %v5397, 0
        %v5407 = vsel %vm3924, %v5398, 0
        %v5410 = vsel %vm3924, %v5399, 0
        %5412 = vmatprep.subr.bf16.mxu0 0
        %5413 = vmatpush1.bf16.msra.mxu0 %v5369
        %5414 = vmatprep.subr.bf16.mxu0 0
        %5415 = vmatpush1.bf16.msra.mxu0 %v5370
        %5416 = vmatprep.subr.bf16.mxu0 0
        %5417 = vmatpush1.bf16.msra.mxu0 0
        %5418 = vmatprep.subr.bf16.mxu0 0
        %5419 = vmatpush1.bf16.msra.mxu0 0
        %5420 = vmatprep.subr.bf16.mxu0 0
        %5421 = vmatpush1.bf16.msra.mxu0 0
        %5422 = vmatprep.subr.bf16.mxu0 0
        %5423 = vmatpush1.bf16.msra.mxu0 0
        %5424 = vmatprep.subr.bf16.mxu0 0
        %5425 = vmatpush1.bf16.msra.mxu0 0
        %5426 = vmatprep.subr.bf16.mxu0 0
        %5427 = vmatpush1.bf16.msra.mxu0 0
        %5428 = vmatprep.subr.bf16.mxu0 0
        %5429 = vmatpush1.bf16.msra.mxu0 0
        %5430 = vmatprep.subr.bf16.mxu0 0
        %5431 = vmatpush1.bf16.msra.mxu0 0
        %5432 = vmatprep.subr.bf16.mxu0 0
        %5433 = vmatpush1.bf16.msra.mxu0 0
        %5434 = vmatprep.subr.bf16.mxu0 0
        %5435 = vmatpush1.bf16.msra.mxu0 0
        %5436 = vmatprep.subr.bf16.mxu0 0
        %5437 = vmatpush1.bf16.msra.mxu0 0
        %5438 = vmatprep.subr.bf16.mxu0 0
        %5439 = vmatpush1.bf16.msra.mxu0 0
        %5440 = vmatprep.subr.bf16.mxu0 0
        %5441 = vmatpush1.bf16.msra.mxu0 0
        %5442 = vmatprep.subr.bf16.mxu0 0
        %5443 = vmatpush1.bf16.msra.mxu0 0
        %5444 = vmatprep.mubr.bf16.mxu0 0
        %5445 = vmatmul.mubr.bf16.gmra.mrb[0].mxu0 %v5401
        %v5446 = vpop.f32.mrb[0].mxu0
        %v5447 = vadd.f32 0.0, %v5446
        %v5448 = vpop.f32.mrb[0].mxu0
        %v5449 = vpop.f32.mrb[0].mxu0
        %v5450 = vadd.f32 0.0, %v5449
        %v5451 = vpop.f32.mrb[0].mxu0
        %5452 = vmatprep.mubr.bf16.mxu0 0
        %5453 = vmatmul.mubr.bf16.gmra.mrb[0].mxu0 %v5404
        %v5454 = vpop.f32.mrb[0].mxu0
        %v5455 = vadd.f32 0.0, %v5454
        %v5456 = vpop.f32.mrb[0].mxu0
        %v5457 = vpop.f32.mrb[0].mxu0
        %v5458 = vadd.f32 0.0, %v5457
        %v5459 = vpop.f32.mrb[0].mxu0
        %5460 = vmatprep.mubr.bf16.mxu0 0
        %5461 = vmatmul.mubr.bf16.gmra.mrb[0].mxu0 %v5407
        %v5462 = vpop.f32.mrb[0].mxu0
        %v5463 = vadd.f32 0.0, %v5462
        %v5464 = vpop.f32.mrb[0].mxu0
        %v5465 = vpop.f32.mrb[0].mxu0
        %v5466 = vadd.f32 0.0, %v5465
        %v5467 = vpop.f32.mrb[0].mxu0
        %5468 = vmatprep.mubr.bf16.mxu0 0
        %5469 = vmatmul.mubr.bf16.gmra.mrb[0].mxu0 %v5410
        %v5470 = vpop.f32.mrb[0].mxu0
        %v5471 = vadd.f32 0.0, %v5470
        %v5472 = vpop.f32.mrb[0].mxu0
        %v5473 = vpop.f32.mrb[0].mxu0
        %v5474 = vadd.f32 0.0, %v5473
        %v5475 = vpop.f32.mrb[0].mxu0
        %5476 = vdwg.mxu0
        %v5477 = vadd.f32 %v5279, %v5447
        %v5478 = vadd.f32 %v5280, %v5450
        %v5479 = vadd.f32 %v5281, %v5455
        %v5480 = vadd.f32 %v5282, %v5458
        %v5481 = vadd.f32 %v5283, %v5463
        %v5482 = vadd.f32 %v5284, %v5466
        %v5483 = vadd.f32 %v5285, %v5471
        %v5484 = vadd.f32 %v5286, %v5474
        %5493 = vrot.lane.b32.xlu0 %v5477, 112
        %v5494 = vpop.permute.xlu0 %5493
        %5495 = vrot.lane.b32.xlu0 %v5478, 112
        %v5496 = vpop.permute.xlu0 %5495
        %5497 = vrot.lane.b32.xlu0 %v5479, 112
        %v5498 = vpop.permute.xlu0 %5497
        %5499 = vrot.lane.b32.xlu0 %v5480, 112
        %v5500 = vpop.permute.xlu0 %5499
        %5501 = vrot.lane.b32.xlu0 %v5481, 112
        %v5502 = vpop.permute.xlu0 %5501
        %5503 = vrot.lane.b32.xlu0 %v5482, 112
        %v5504 = vpop.permute.xlu0 %5503
        %5505 = vrot.lane.b32.xlu0 %v5483, 112
        %v5506 = vpop.permute.xlu0 %5505
        %5507 = vrot.lane.b32.xlu0 %v5484, 112
        %v5508 = vpop.permute.xlu0 %5507
        %v5517 = vmax.f32 %v5477, %v5494
        %v5518 = vmax.f32 %v5478, %v5496
        %v5519 = vmax.f32 %v5479, %v5498
        %v5520 = vmax.f32 %v5480, %v5500
        %v5521 = vmax.f32 %v5481, %v5502
        %v5522 = vmax.f32 %v5482, %v5504
        %v5523 = vmax.f32 %v5483, %v5506
        %v5524 = vmax.f32 %v5484, %v5508
        %5533 = vrot.lane.b32.xlu0 %v5517, 96
        %v5534 = vpop.permute.xlu0 %5533
        %5535 = vrot.lane.b32.xlu0 %v5518, 96
        %v5536 = vpop.permute.xlu0 %5535
        %5537 = vrot.lane.b32.xlu0 %v5519, 96
        %v5538 = vpop.permute.xlu0 %5537
        %5539 = vrot.lane.b32.xlu0 %v5520, 96
        %v5540 = vpop.permute.xlu0 %5539
        %5541 = vrot.lane.b32.xlu0 %v5521, 96
        %v5542 = vpop.permute.xlu0 %5541
        %5543 = vrot.lane.b32.xlu0 %v5522, 96
        %v5544 = vpop.permute.xlu0 %5543
        %5545 = vrot.lane.b32.xlu0 %v5523, 96
        %v5546 = vpop.permute.xlu0 %5545
        %5547 = vrot.lane.b32.xlu0 %v5524, 96
        %v5548 = vpop.permute.xlu0 %5547
        %v5557 = vmax.f32 %v5517, %v5534
        %v5558 = vmax.f32 %v5518, %v5536
        %v5559 = vmax.f32 %v5519, %v5538
        %v5560 = vmax.f32 %v5520, %v5540
        %v5561 = vmax.f32 %v5521, %v5542
        %v5562 = vmax.f32 %v5522, %v5544
        %v5563 = vmax.f32 %v5523, %v5546
        %v5564 = vmax.f32 %v5524, %v5548
        %5565 = vxpose.xlu0.b32.start [1/16] %v5557, 128
        %5566 = vxpose.xlu0.b32.cont [2/16] %v5558, 128
        %5567 = vxpose.xlu0.b32.cont [3/16] %v5559, 128
        %5568 = vxpose.xlu0.b32.cont [4/16] %v5560, 128
        %5569 = vxpose.xlu0.b32.cont [5/16] %v5561, 128
        %5570 = vxpose.xlu0.b32.cont [6/16] %v5562, 128
        %5571 = vxpose.xlu0.b32.cont [7/16] %v5563, 128
        %5572 = vxpose.xlu0.b32.cont [8/16] %v5564, 128
        %5573 = vxpose.xlu0.b32.cont [9/16] 0.0, 128
        %5574 = vxpose.xlu0.b32.cont [10/16] 0.0, 128
        %5575 = vxpose.xlu0.b32.cont [11/16] 0.0, 128
        %5576 = vxpose.xlu0.b32.cont [12/16] 0.0, 128
        %5577 = vxpose.xlu0.b32.cont [13/16] 0.0, 128
        %5578 = vxpose.xlu0.b32.cont [14/16] 0.0, 128
        %5579 = vxpose.xlu0.b32.cont [15/16] 0.0, 128
        %5580 = vxpose.xlu0.b32.end [16/16] 0.0, 128
        %v5581 = vpop.trf.xlu0
        %v5582 = vpop.trf.xlu0
        %v5583 = vpop.trf.xlu0
        %v5584 = vpop.trf.xlu0
        %v5585 = vpop.trf.xlu0
        %v5586 = vpop.trf.xlu0
        %v5587 = vpop.trf.xlu0
        %v5588 = vpop.trf.xlu0
        %v5589 = vpop.trf.xlu0
        %v5590 = vpop.trf.xlu0
        %v5591 = vpop.trf.xlu0
        %v5592 = vpop.trf.xlu0
        %v5593 = vpop.trf.xlu0
        %v5594 = vpop.trf.xlu0
        %v5595 = vpop.trf.xlu0
        %v5596 = vpop.trf.xlu0
        %v5597 = vld [vmem:[%s8] sm:$0x1]
        %v5599 = vlaneseq
        %v5600 = vshrl.u32 %v5599, 7
        %v5601 = vsub.s32 0, %v5600
        %v5602 = vrot.slane %v5597, %v5601
        %v5604 = vadd.f32 %v5581, %v5602
        %v5605 = vadd.f32 %v5582, %v5602
        %v5606 = vmax.f32 %v5604, 0.0
        %v5607 = vmax.f32 %v5605, 0.0
        %v5608 = vlaneseq
        %vm5609 = vcmp.ge.s32.totalorder %v5608, 0
        %vm5610 = vcmp.lt.s32.totalorder %v5608, 64
        %vm5611 = vmand %vm5609, %vm5610
        %5612 = vst.msk [vmem:[#allocation2] sm:$0x1] %vm5611, %v5606
        %v5615 = vunpack.c.l.s4 1966171168
        %v5616 = vunpack.c.0.s8 %v5615
        %v5617 = vlaneseq
        %v5618 = vshrl.u32 %v5617, 7
        %v5619 = vsub.s32 %v5616, %v5618
        %v5620 = vrot.slane %v5606, %v5619
        %v5621 = vcombine.high %v5620, %v5620
        %v5623 = vunpack.c.l.s4 1966171168
        %v5624 = vunpack.c.0.s8 %v5623
        %v5625 = vlaneseq
        %v5626 = vshrl.u32 %v5625, 7
        %v5627 = vsub.s32 %v5624, %v5626
        %v5628 = vrot.slane %v5620, %v5627
        %v5630 = vunpack.c.l.s4 1966171168
        %v5631 = vunpack.c.0.s8 %v5630
        %v5632 = vlaneseq
        %v5633 = vshrl.u32 %v5632, 7
        %v5634 = vsub.s32 %v5631, %v5633
        %v5635 = vrot.slane %v5621, %v5634
        %5636 = vrot.lane.b32.xlu0 %v5635, 64
        %v5637 = vpop.permute.xlu0 %5636
        %vm5639 = vcmp.ge.s32.totalorder %v5608, 64
        %vm5640 = vcmp.lt.s32.totalorder %v5608, 128
        %vm5641 = vmand %vm5639, %vm5640
        %5642 = vst.msk [vmem:[#allocation2] sm:$0x1] %vm5641, %v5637
        %v5643 = vcombine.high %v5628, %v5628
        %5645 = vst.msk [vmem:[#allocation2 + $0x1] sm:$0x1] %vm5611, %v5643
        %v5646 = vcombine.high %v5635, %v5635
        %5647 = vrot.lane.b32.xlu0 %v5646, 64
        %v5648 = vpop.permute.xlu0 %5647
        %5650 = vst.msk [vmem:[#allocation2 + $0x1] sm:$0x1] %vm5641, %v5648
        %v5651 = vcombine.high %v5606, %v5606
        %v5653 = vunpack.c.l.s4 1966171168
        %v5654 = vunpack.c.0.s8 %v5653
        %v5655 = vlaneseq
        %v5656 = vshrl.u32 %v5655, 7
        %v5657 = vsub.s32 %v5654, %v5656
        %v5658 = vrot.slane %v5651, %v5657
        %v5660 = vunpack.c.l.s4 1966171168
        %v5661 = vunpack.c.0.s8 %v5660
        %v5662 = vlaneseq
        %v5663 = vshrl.u32 %v5662, 7
        %v5664 = vsub.s32 %v5661, %v5663
        %v5665 = vrot.slane %v5658, %v5664
        %5667 = vst.msk [vmem:[#allocation2 + $0x2] sm:$0x1] %vm5611, %v5665
        %v5668 = vcombine.high %v5658, %v5658
        %v5670 = vunpack.c.l.s4 1966171168
        %v5671 = vunpack.c.0.s8 %v5670
        %v5672 = vlaneseq
        %v5673 = vshrl.u32 %v5672, 7
        %v5674 = vsub.s32 %v5671, %v5673
        %v5675 = vrot.slane %v5668, %v5674
        %5676 = vrot.lane.b32.xlu0 %v5675, 64
        %v5677 = vpop.permute.xlu0 %5676
        %5679 = vst.msk [vmem:[#allocation2 + $0x2] sm:$0x1] %vm5641, %v5677
        %v5680 = vcombine.high %v5665, %v5665
        %5682 = vst.msk [vmem:[#allocation2 + $0x3] sm:$0x1] %vm5611, %v5680
        %v5683 = vcombine.high %v5675, %v5675
        %5684 = vrot.lane.b32.xlu0 %v5683, 64
        %v5685 = vpop.permute.xlu0 %5684
        %5687 = vst.msk [vmem:[#allocation2 + $0x3] sm:$0x1] %vm5641, %v5685
        %5688 = vst.msk [vmem:[#allocation2 + $0x4] sm:$0x1] %vm5611, %v5607
        %v5691 = vunpack.c.l.s4 1966171168
        %v5692 = vunpack.c.0.s8 %v5691
        %v5693 = vlaneseq
        %v5694 = vshrl.u32 %v5693, 7
        %v5695 = vsub.s32 %v5692, %v5694
        %v5696 = vrot.slane %v5607, %v5695
        %v5697 = vcombine.high %v5696, %v5696
        %v5699 = vunpack.c.l.s4 1966171168
        %v5700 = vunpack.c.0.s8 %v5699
        %v5701 = vlaneseq
        %v5702 = vshrl.u32 %v5701, 7
        %v5703 = vsub.s32 %v5700, %v5702
        %v5704 = vrot.slane %v5696, %v5703
        %v5706 = vunpack.c.l.s4 1966171168
        %v5707 = vunpack.c.0.s8 %v5706
        %v5708 = vlaneseq
        %v5709 = vshrl.u32 %v5708, 7
        %v5710 = vsub.s32 %v5707, %v5709
        %v5711 = vrot.slane %v5697, %v5710
        %5712 = vrot.lane.b32.xlu0 %v5711, 64
        %v5713 = vpop.permute.xlu0 %5712
        %5715 = vst.msk [vmem:[#allocation2 + $0x4] sm:$0x1] %vm5641, %v5713
        %v5716 = vcombine.high %v5704, %v5704
        %5718 = vst.msk [vmem:[#allocation2 + $0x5] sm:$0x1] %vm5611, %v5716
        %v5719 = vcombine.high %v5711, %v5711
        %5720 = vrot.lane.b32.xlu0 %v5719, 64
        %v5721 = vpop.permute.xlu0 %5720
        %5723 = vst.msk [vmem:[#allocation2 + $0x5] sm:$0x1] %vm5641, %v5721
        %v5724 = vcombine.high %v5607, %v5607
        %v5726 = vunpack.c.l.s4 1966171168
        %v5727 = vunpack.c.0.s8 %v5726
        %v5728 = vlaneseq
        %v5729 = vshrl.u32 %v5728, 7
        %v5730 = vsub.s32 %v5727, %v5729
        %v5731 = vrot.slane %v5724, %v5730
        %v5733 = vunpack.c.l.s4 1966171168
        %v5734 = vunpack.c.0.s8 %v5733
        %v5735 = vlaneseq
        %v5736 = vshrl.u32 %v5735, 7
        %v5737 = vsub.s32 %v5734, %v5736
        %v5738 = vrot.slane %v5731, %v5737
        %5740 = vst.msk [vmem:[#allocation2 + $0x6] sm:$0x1] %vm5611, %v5738
        %v5741 = vcombine.high %v5731, %v5731
        %v5743 = vunpack.c.l.s4 1966171168
        %v5744 = vunpack.c.0.s8 %v5743
        %v5745 = vlaneseq
        %v5746 = vshrl.u32 %v5745, 7
        %v5747 = vsub.s32 %v5744, %v5746
        %v5748 = vrot.slane %v5741, %v5747
        %5749 = vrot.lane.b32.xlu0 %v5748, 64
        %v5750 = vpop.permute.xlu0 %5749
        %5752 = vst.msk [vmem:[#allocation2 + $0x6] sm:$0x1] %vm5641, %v5750
        %v5753 = vcombine.high %v5738, %v5738
        %5755 = vst.msk [vmem:[#allocation2 + $0x7] sm:$0x1] %vm5611, %v5753
        %v5756 = vcombine.high %v5748, %v5748
        %5757 = vrot.lane.b32.xlu0 %v5756, 64
        %v5758 = vpop.permute.xlu0 %5757
        %5760 = vst.msk [vmem:[#allocation2 + $0x7] sm:$0x1] %vm5641, %v5758
        %v5761 = vld [vmem:[#allocation2] sm:$0xff]
        %v5763 = vlaneseq
        %v5764 = vshrl.u32 %v5763, 7
        %v5765 = vsub.s32 0, %v5764
        %v5766 = vrot.slane %v5761, %v5765
        %v5767 = vlaneseq
        %v5768 = vshrl.u32 %v5767, 7
        %v5769 = vsub.s32 1, %v5768
        %v5770 = vrot.slane %v5761, %v5769
        %v5771 = vlaneseq
        %v5772 = vshrl.u32 %v5771, 7
        %v5773 = vsub.s32 2, %v5772
        %v5774 = vrot.slane %v5761, %v5773
        %v5775 = vlaneseq
        %v5776 = vshrl.u32 %v5775, 7
        %v5777 = vsub.s32 3, %v5776
        %v5778 = vrot.slane %v5761, %v5777
        %v5779 = vlaneseq
        %v5780 = vshrl.u32 %v5779, 7
        %v5781 = vsub.s32 4, %v5780
        %v5782 = vrot.slane %v5761, %v5781
        %v5783 = vlaneseq
        %v5784 = vshrl.u32 %v5783, 7
        %v5785 = vsub.s32 5, %v5784
        %v5786 = vrot.slane %v5761, %v5785
        %v5787 = vlaneseq
        %v5788 = vshrl.u32 %v5787, 7
        %v5789 = vsub.s32 6, %v5788
        %v5790 = vrot.slane %v5761, %v5789
        %v5791 = vlaneseq
        %v5792 = vshrl.u32 %v5791, 7
        %v5793 = vsub.s32 7, %v5792
        %v5794 = vrot.slane %v5761, %v5793
        %v5803 = vpack.c.bf16 %v5766, %v5766
        %v5804 = vpack.c.bf16 %v5770, %v5770
        %v5805 = vpack.c.bf16 %v5774, %v5774
        %v5806 = vpack.c.bf16 %v5778, %v5778
        %v5807 = vpack.c.bf16 %v5782, %v5782
        %v5808 = vpack.c.bf16 %v5786, %v5786
        %v5809 = vpack.c.bf16 %v5790, %v5790
        %v5810 = vpack.c.bf16 %v5794, %v5794
        %v5811 = vld [vmem:[%s9] sm:$0xff]
        %v5812 = vld [vmem:[%s9 + $0x8] sm:$0xff]
        %v5813 = vld [vmem:[%s9 + $0x10] sm:$0xff]
        %v5814 = vld [vmem:[%s9 + $0x18] sm:$0xff]
        %v5815 = vld [vmem:[%s9 + $0x20] sm:$0xff]
        %v5816 = vld [vmem:[%s9 + $0x28] sm:$0xff]
        %v5817 = vld [vmem:[%s9 + $0x30] sm:$0xff]
        %v5818 = vld [vmem:[%s9 + $0x38] sm:$0xff]
        %v5819 = vld [vmem:[%s9 + $0x40] sm:$0xff]
        %v5820 = vld [vmem:[%s9 + $0x48] sm:$0xff]
        %v5821 = vld [vmem:[%s9 + $0x50] sm:$0xff]
        %v5822 = vld [vmem:[%s9 + $0x58] sm:$0xff]
        %v5823 = vld [vmem:[%s9 + $0x60] sm:$0xff]
        %v5824 = vld [vmem:[%s9 + $0x68] sm:$0xff]
        %v5825 = vld [vmem:[%s9 + $0x70] sm:$0xff]
        %v5826 = vld [vmem:[%s9 + $0x78] sm:$0xff]
        %v5827 = vld [vmem:[%s9 + $0x80] sm:$0xff]
        %v5828 = vld [vmem:[%s9 + $0x88] sm:$0xff]
        %v5829 = vld [vmem:[%s9 + $0x90] sm:$0xff]
        %v5830 = vld [vmem:[%s9 + $0x98] sm:$0xff]
        %v5831 = vld [vmem:[%s9 + $0xa0] sm:$0xff]
        %v5832 = vld [vmem:[%s9 + $0xa8] sm:$0xff]
        %v5833 = vld [vmem:[%s9 + $0xb0] sm:$0xff]
        %v5834 = vld [vmem:[%s9 + $0xb8] sm:$0xff]
        %v5835 = vld [vmem:[%s9 + $0xc0] sm:$0xff]
        %v5836 = vld [vmem:[%s9 + $0xc8] sm:$0xff]
        %v5837 = vld [vmem:[%s9 + $0xd0] sm:$0xff]
        %v5838 = vld [vmem:[%s9 + $0xd8] sm:$0xff]
        %v5839 = vld [vmem:[%s9 + $0xe0] sm:$0xff]
        %v5840 = vld [vmem:[%s9 + $0xe8] sm:$0xff]
        %v5841 = vld [vmem:[%s9 + $0xf0] sm:$0xff]
        %v5842 = vld [vmem:[%s9 + $0xf8] sm:$0xff]
        %v5843 = vld [vmem:[%s9 + $0x100] sm:$0xff]
        %v5844 = vld [vmem:[%s9 + $0x108] sm:$0xff]
        %v5845 = vld [vmem:[%s9 + $0x110] sm:$0xff]
        %v5846 = vld [vmem:[%s9 + $0x118] sm:$0xff]
        %v5847 = vld [vmem:[%s9 + $0x120] sm:$0xff]
        %v5848 = vld [vmem:[%s9 + $0x128] sm:$0xff]
        %v5849 = vld [vmem:[%s9 + $0x130] sm:$0xff]
        %v5850 = vld [vmem:[%s9 + $0x138] sm:$0xff]
        %v5851 = vld [vmem:[%s9 + $0x140] sm:$0xff]
        %v5852 = vld [vmem:[%s9 + $0x148] sm:$0xff]
        %v5853 = vld [vmem:[%s9 + $0x150] sm:$0xff]
        %v5854 = vld [vmem:[%s9 + $0x158] sm:$0xff]
        %v5855 = vld [vmem:[%s9 + $0x160] sm:$0xff]
        %v5856 = vld [vmem:[%s9 + $0x168] sm:$0xff]
        %v5857 = vld [vmem:[%s9 + $0x170] sm:$0xff]
        %v5858 = vld [vmem:[%s9 + $0x178] sm:$0xff]
        %v5859 = vld [vmem:[%s9 + $0x180] sm:$0xff]
        %v5860 = vld [vmem:[%s9 + $0x188] sm:$0xff]
        %v5861 = vld [vmem:[%s9 + $0x190] sm:$0xff]
        %v5862 = vld [vmem:[%s9 + $0x198] sm:$0xff]
        %v5863 = vld [vmem:[%s9 + $0x1a0] sm:$0xff]
        %v5864 = vld [vmem:[%s9 + $0x1a8] sm:$0xff]
        %v5865 = vld [vmem:[%s9 + $0x1b0] sm:$0xff]
        %v5866 = vld [vmem:[%s9 + $0x1b8] sm:$0xff]
        %v5867 = vld [vmem:[%s9 + $0x1c0] sm:$0xff]
        %v5868 = vld [vmem:[%s9 + $0x1c8] sm:$0xff]
        %v5869 = vld [vmem:[%s9 + $0x1d0] sm:$0xff]
        %v5870 = vld [vmem:[%s9 + $0x1d8] sm:$0xff]
        %v5871 = vld [vmem:[%s9 + $0x1e0] sm:$0xff]
        %v5872 = vld [vmem:[%s9 + $0x1e8] sm:$0xff]
        %v5873 = vld [vmem:[%s9 + $0x1f0] sm:$0xff]
        %v5874 = vld [vmem:[%s9 + $0x1f8] sm:$0xff]
        %v5875 = vld [vmem:[%s9 + $0x200] sm:$0xff]
        %v5876 = vld [vmem:[%s9 + $0x208] sm:$0xff]
        %v5877 = vld [vmem:[%s9 + $0x210] sm:$0xff]
        %v5878 = vld [vmem:[%s9 + $0x218] sm:$0xff]
        %v5879 = vld [vmem:[%s9 + $0x220] sm:$0xff]
        %v5880 = vld [vmem:[%s9 + $0x228] sm:$0xff]
        %v5881 = vld [vmem:[%s9 + $0x230] sm:$0xff]
        %v5882 = vld [vmem:[%s9 + $0x238] sm:$0xff]
        %v5883 = vld [vmem:[%s9 + $0x240] sm:$0xff]
        %v5884 = vld [vmem:[%s9 + $0x248] sm:$0xff]
        %v5885 = vld [vmem:[%s9 + $0x250] sm:$0xff]
        %v5886 = vld [vmem:[%s9 + $0x258] sm:$0xff]
        %v5887 = vld [vmem:[%s9 + $0x260] sm:$0xff]
        %v5888 = vld [vmem:[%s9 + $0x268] sm:$0xff]
        %v5889 = vld [vmem:[%s9 + $0x270] sm:$0xff]
        %v5890 = vld [vmem:[%s9 + $0x278] sm:$0xff]
        %v5891 = vld [vmem:[%s9 + $0x280] sm:$0xff]
        %v5892 = vld [vmem:[%s9 + $0x288] sm:$0xff]
        %v5893 = vld [vmem:[%s9 + $0x290] sm:$0xff]
        %v5894 = vld [vmem:[%s9 + $0x298] sm:$0xff]
        %v5895 = vld [vmem:[%s9 + $0x2a0] sm:$0xff]
        %v5896 = vld [vmem:[%s9 + $0x2a8] sm:$0xff]
        %v5897 = vld [vmem:[%s9 + $0x2b0] sm:$0xff]
        %v5898 = vld [vmem:[%s9 + $0x2b8] sm:$0xff]
        %v5899 = vld [vmem:[%s9 + $0x2c0] sm:$0xff]
        %v5900 = vld [vmem:[%s9 + $0x2c8] sm:$0xff]
        %v5901 = vld [vmem:[%s9 + $0x2d0] sm:$0xff]
        %v5902 = vld [vmem:[%s9 + $0x2d8] sm:$0xff]
        %v5903 = vld [vmem:[%s9 + $0x2e0] sm:$0xff]
        %v5904 = vld [vmem:[%s9 + $0x2e8] sm:$0xff]
        %v5905 = vld [vmem:[%s9 + $0x2f0] sm:$0xff]
        %v5906 = vld [vmem:[%s9 + $0x2f8] sm:$0xff]
        %v5907 = vld [vmem:[%s9 + $0x300] sm:$0xff]
        %v5908 = vld [vmem:[%s9 + $0x308] sm:$0xff]
        %v5909 = vld [vmem:[%s9 + $0x310] sm:$0xff]
        %v5910 = vld [vmem:[%s9 + $0x318] sm:$0xff]
        %v5911 = vld [vmem:[%s9 + $0x320] sm:$0xff]
        %v5912 = vld [vmem:[%s9 + $0x328] sm:$0xff]
        %v5913 = vld [vmem:[%s9 + $0x330] sm:$0xff]
        %v5914 = vld [vmem:[%s9 + $0x338] sm:$0xff]
        %v5915 = vld [vmem:[%s9 + $0x340] sm:$0xff]
        %v5916 = vld [vmem:[%s9 + $0x348] sm:$0xff]
        %v5917 = vld [vmem:[%s9 + $0x350] sm:$0xff]
        %v5918 = vld [vmem:[%s9 + $0x358] sm:$0xff]
        %v5919 = vld [vmem:[%s9 + $0x360] sm:$0xff]
        %v5920 = vld [vmem:[%s9 + $0x368] sm:$0xff]
        %v5921 = vld [vmem:[%s9 + $0x370] sm:$0xff]
        %v5922 = vld [vmem:[%s9 + $0x378] sm:$0xff]
        %v5923 = vld [vmem:[%s9 + $0x380] sm:$0xff]
        %v5924 = vld [vmem:[%s9 + $0x388] sm:$0xff]
        %v5925 = vld [vmem:[%s9 + $0x390] sm:$0xff]
        %v5926 = vld [vmem:[%s9 + $0x398] sm:$0xff]
        %v5927 = vld [vmem:[%s9 + $0x3a0] sm:$0xff]
        %v5928 = vld [vmem:[%s9 + $0x3a8] sm:$0xff]
        %v5929 = vld [vmem:[%s9 + $0x3b0] sm:$0xff]
        %v5930 = vld [vmem:[%s9 + $0x3b8] sm:$0xff]
        %v5931 = vld [vmem:[%s9 + $0x3c0] sm:$0xff]
        %v5932 = vld [vmem:[%s9 + $0x3c8] sm:$0xff]
        %v5933 = vld [vmem:[%s9 + $0x3d0] sm:$0xff]
        %v5934 = vld [vmem:[%s9 + $0x3d8] sm:$0xff]
        %v5935 = vld [vmem:[%s9 + $0x3e0] sm:$0xff]
        %v5936 = vld [vmem:[%s9 + $0x3e8] sm:$0xff]
        %v5937 = vld [vmem:[%s9 + $0x3f0] sm:$0xff]
        %v5938 = vld [vmem:[%s9 + $0x3f8] sm:$0xff]
        %v5939 = vld [vmem:[%s9 + $0x400] sm:$0xff]
        %v5940 = vld [vmem:[%s9 + $0x408] sm:$0xff]
        %v5941 = vld [vmem:[%s9 + $0x410] sm:$0xff]
        %v5942 = vld [vmem:[%s9 + $0x418] sm:$0xff]
        %v5943 = vld [vmem:[%s9 + $0x420] sm:$0xff]
        %v5944 = vld [vmem:[%s9 + $0x428] sm:$0xff]
        %v5945 = vld [vmem:[%s9 + $0x430] sm:$0xff]
        %v5946 = vld [vmem:[%s9 + $0x438] sm:$0xff]
        %v5947 = vld [vmem:[%s9 + $0x440] sm:$0xff]
        %v5948 = vld [vmem:[%s9 + $0x448] sm:$0xff]
        %v5949 = vld [vmem:[%s9 + $0x450] sm:$0xff]
        %v5950 = vld [vmem:[%s9 + $0x458] sm:$0xff]
        %v5951 = vld [vmem:[%s9 + $0x460] sm:$0xff]
        %v5952 = vld [vmem:[%s9 + $0x468] sm:$0xff]
        %v5953 = vld [vmem:[%s9 + $0x470] sm:$0xff]
        %v5954 = vld [vmem:[%s9 + $0x478] sm:$0xff]
        %v5955 = vld [vmem:[%s9 + $0x480] sm:$0xff]
        %v5956 = vld [vmem:[%s9 + $0x488] sm:$0xff]
        %v5957 = vld [vmem:[%s9 + $0x490] sm:$0xff]
        %v5958 = vld [vmem:[%s9 + $0x498] sm:$0xff]
        %v5959 = vld [vmem:[%s9 + $0x4a0] sm:$0xff]
        %v5960 = vld [vmem:[%s9 + $0x4a8] sm:$0xff]
        %v5961 = vld [vmem:[%s9 + $0x4b0] sm:$0xff]
        %v5962 = vld [vmem:[%s9 + $0x4b8] sm:$0xff]
        %v5963 = vld [vmem:[%s9 + $0x4c0] sm:$0xff]
        %v5964 = vld [vmem:[%s9 + $0x4c8] sm:$0xff]
        %v5965 = vld [vmem:[%s9 + $0x4d0] sm:$0xff]
        %v5966 = vld [vmem:[%s9 + $0x4d8] sm:$0xff]
        %v5967 = vld [vmem:[%s9 + $0x4e0] sm:$0xff]
        %v5968 = vld [vmem:[%s9 + $0x4e8] sm:$0xff]
        %v5969 = vld [vmem:[%s9 + $0x4f0] sm:$0xff]
        %v5970 = vld [vmem:[%s9 + $0x4f8] sm:$0xff]
        %v5971 = vld [vmem:[%s9 + $0x500] sm:$0xff]
        %v5972 = vld [vmem:[%s9 + $0x508] sm:$0xff]
        %v5973 = vld [vmem:[%s9 + $0x510] sm:$0xff]
        %v5974 = vld [vmem:[%s9 + $0x518] sm:$0xff]
        %v5975 = vld [vmem:[%s9 + $0x520] sm:$0xff]
        %v5976 = vld [vmem:[%s9 + $0x528] sm:$0xff]
        %v5977 = vld [vmem:[%s9 + $0x530] sm:$0xff]
        %v5978 = vld [vmem:[%s9 + $0x538] sm:$0xff]
        %v5979 = vld [vmem:[%s9 + $0x540] sm:$0xff]
        %v5980 = vld [vmem:[%s9 + $0x548] sm:$0xff]
        %v5981 = vld [vmem:[%s9 + $0x550] sm:$0xff]
        %v5982 = vld [vmem:[%s9 + $0x558] sm:$0xff]
        %v5983 = vld [vmem:[%s9 + $0x560] sm:$0xff]
        %v5984 = vld [vmem:[%s9 + $0x568] sm:$0xff]
        %v5985 = vld [vmem:[%s9 + $0x570] sm:$0xff]
        %v5986 = vld [vmem:[%s9 + $0x578] sm:$0xff]
        %v5987 = vld [vmem:[%s9 + $0x580] sm:$0xff]
        %v5988 = vld [vmem:[%s9 + $0x588] sm:$0xff]
        %v5989 = vld [vmem:[%s9 + $0x590] sm:$0xff]
        %v5990 = vld [vmem:[%s9 + $0x598] sm:$0xff]
        %v5991 = vld [vmem:[%s9 + $0x5a0] sm:$0xff]
        %v5992 = vld [vmem:[%s9 + $0x5a8] sm:$0xff]
        %v5993 = vld [vmem:[%s9 + $0x5b0] sm:$0xff]
        %v5994 = vld [vmem:[%s9 + $0x5b8] sm:$0xff]
        %v5995 = vld [vmem:[%s9 + $0x5c0] sm:$0xff]
        %v5996 = vld [vmem:[%s9 + $0x5c8] sm:$0xff]
        %v5997 = vld [vmem:[%s9 + $0x5d0] sm:$0xff]
        %v5998 = vld [vmem:[%s9 + $0x5d8] sm:$0xff]
        %v5999 = vld [vmem:[%s9 + $0x5e0] sm:$0xff]
        %v6000 = vld [vmem:[%s9 + $0x5e8] sm:$0xff]
        %v6001 = vld [vmem:[%s9 + $0x5f0] sm:$0xff]
        %v6002 = vld [vmem:[%s9 + $0x5f8] sm:$0xff]
        %v6003 = vld [vmem:[%s9 + $0x600] sm:$0xff]
        %v6004 = vld [vmem:[%s9 + $0x608] sm:$0xff]
        %v6005 = vld [vmem:[%s9 + $0x610] sm:$0xff]
        %v6006 = vld [vmem:[%s9 + $0x618] sm:$0xff]
        %v6007 = vld [vmem:[%s9 + $0x620] sm:$0xff]
        %v6008 = vld [vmem:[%s9 + $0x628] sm:$0xff]
        %v6009 = vld [vmem:[%s9 + $0x630] sm:$0xff]
        %v6010 = vld [vmem:[%s9 + $0x638] sm:$0xff]
        %v6011 = vld [vmem:[%s9 + $0x640] sm:$0xff]
        %v6012 = vld [vmem:[%s9 + $0x648] sm:$0xff]
        %v6013 = vld [vmem:[%s9 + $0x650] sm:$0xff]
        %v6014 = vld [vmem:[%s9 + $0x658] sm:$0xff]
        %v6015 = vld [vmem:[%s9 + $0x660] sm:$0xff]
        %v6016 = vld [vmem:[%s9 + $0x668] sm:$0xff]
        %v6017 = vld [vmem:[%s9 + $0x670] sm:$0xff]
        %v6018 = vld [vmem:[%s9 + $0x678] sm:$0xff]
        %v6019 = vld [vmem:[%s9 + $0x680] sm:$0xff]
        %v6020 = vld [vmem:[%s9 + $0x688] sm:$0xff]
        %v6021 = vld [vmem:[%s9 + $0x690] sm:$0xff]
        %v6022 = vld [vmem:[%s9 + $0x698] sm:$0xff]
        %v6023 = vld [vmem:[%s9 + $0x6a0] sm:$0xff]
        %v6024 = vld [vmem:[%s9 + $0x6a8] sm:$0xff]
        %v6025 = vld [vmem:[%s9 + $0x6b0] sm:$0xff]
        %v6026 = vld [vmem:[%s9 + $0x6b8] sm:$0xff]
        %v6027 = vld [vmem:[%s9 + $0x6c0] sm:$0xff]
        %v6028 = vld [vmem:[%s9 + $0x6c8] sm:$0xff]
        %v6029 = vld [vmem:[%s9 + $0x6d0] sm:$0xff]
        %v6030 = vld [vmem:[%s9 + $0x6d8] sm:$0xff]
        %v6031 = vld [vmem:[%s9 + $0x6e0] sm:$0xff]
        %v6032 = vld [vmem:[%s9 + $0x6e8] sm:$0xff]
        %v6033 = vld [vmem:[%s9 + $0x6f0] sm:$0xff]
        %v6034 = vld [vmem:[%s9 + $0x6f8] sm:$0xff]
        %v6035 = vld [vmem:[%s9 + $0x700] sm:$0xff]
        %v6036 = vld [vmem:[%s9 + $0x708] sm:$0xff]
        %v6037 = vld [vmem:[%s9 + $0x710] sm:$0xff]
        %v6038 = vld [vmem:[%s9 + $0x718] sm:$0xff]
        %v6039 = vld [vmem:[%s9 + $0x720] sm:$0xff]
        %v6040 = vld [vmem:[%s9 + $0x728] sm:$0xff]
        %v6041 = vld [vmem:[%s9 + $0x730] sm:$0xff]
        %v6042 = vld [vmem:[%s9 + $0x738] sm:$0xff]
        %v6043 = vld [vmem:[%s9 + $0x740] sm:$0xff]
        %v6044 = vld [vmem:[%s9 + $0x748] sm:$0xff]
        %v6045 = vld [vmem:[%s9 + $0x750] sm:$0xff]
        %v6046 = vld [vmem:[%s9 + $0x758] sm:$0xff]
        %v6047 = vld [vmem:[%s9 + $0x760] sm:$0xff]
        %v6048 = vld [vmem:[%s9 + $0x768] sm:$0xff]
        %v6049 = vld [vmem:[%s9 + $0x770] sm:$0xff]
        %v6050 = vld [vmem:[%s9 + $0x778] sm:$0xff]
        %v6051 = vld [vmem:[%s9 + $0x780] sm:$0xff]
        %v6052 = vld [vmem:[%s9 + $0x788] sm:$0xff]
        %v6053 = vld [vmem:[%s9 + $0x790] sm:$0xff]
        %v6054 = vld [vmem:[%s9 + $0x798] sm:$0xff]
        %v6055 = vld [vmem:[%s9 + $0x7a0] sm:$0xff]
        %v6056 = vld [vmem:[%s9 + $0x7a8] sm:$0xff]
        %v6057 = vld [vmem:[%s9 + $0x7b0] sm:$0xff]
        %v6058 = vld [vmem:[%s9 + $0x7b8] sm:$0xff]
        %v6059 = vld [vmem:[%s9 + $0x7c0] sm:$0xff]
        %v6060 = vld [vmem:[%s9 + $0x7c8] sm:$0xff]
        %v6061 = vld [vmem:[%s9 + $0x7d0] sm:$0xff]
        %v6062 = vld [vmem:[%s9 + $0x7d8] sm:$0xff]
        %v6063 = vld [vmem:[%s9 + $0x7e0] sm:$0xff]
        %v6064 = vld [vmem:[%s9 + $0x7e8] sm:$0xff]
        %v6065 = vld [vmem:[%s9 + $0x7f0] sm:$0xff]
        %v6066 = vld [vmem:[%s9 + $0x7f8] sm:$0xff]
        %v6067 = vld [vmem:[%s10] sm:$0xf]
        %v6324 = vunpack.c.l.b16 %v5811
        %v6325 = vunpack.c.h.b16 %v5811
        %v6326 = vunpack.c.l.b16 %v5812
        %v6327 = vunpack.c.h.b16 %v5812
        %v6328 = vunpack.c.l.b16 %v5813
        %v6329 = vunpack.c.h.b16 %v5813
        %v6330 = vunpack.c.l.b16 %v5814
        %v6331 = vunpack.c.h.b16 %v5814
        %v6332 = vunpack.c.l.b16 %v5815
        %v6333 = vunpack.c.h.b16 %v5815
        %v6334 = vunpack.c.l.b16 %v5816
        %v6335 = vunpack.c.h.b16 %v5816
        %v6336 = vunpack.c.l.b16 %v5817
        %v6337 = vunpack.c.h.b16 %v5817
        %v6338 = vunpack.c.l.b16 %v5818
        %v6339 = vunpack.c.h.b16 %v5818
        %v6340 = vunpack.c.l.b16 %v5819
        %v6341 = vunpack.c.h.b16 %v5819
        %v6342 = vunpack.c.l.b16 %v5820
        %v6343 = vunpack.c.h.b16 %v5820
        %v6344 = vunpack.c.l.b16 %v5821
        %v6345 = vunpack.c.h.b16 %v5821
        %v6346 = vunpack.c.l.b16 %v5822
        %v6347 = vunpack.c.h.b16 %v5822
        %v6348 = vunpack.c.l.b16 %v5823
        %v6349 = vunpack.c.h.b16 %v5823
        %v6350 = vunpack.c.l.b16 %v5824
        %v6351 = vunpack.c.h.b16 %v5824
        %v6352 = vunpack.c.l.b16 %v5825
        %v6353 = vunpack.c.h.b16 %v5825
        %v6354 = vunpack.c.l.b16 %v5826
        %v6355 = vunpack.c.h.b16 %v5826
        %v6356 = vunpack.c.l.b16 %v5827
        %v6357 = vunpack.c.h.b16 %v5827
        %v6358 = vunpack.c.l.b16 %v5828
        %v6359 = vunpack.c.h.b16 %v5828
        %v6360 = vunpack.c.l.b16 %v5829
        %v6361 = vunpack.c.h.b16 %v5829
        %v6362 = vunpack.c.l.b16 %v5830
        %v6363 = vunpack.c.h.b16 %v5830
        %v6364 = vunpack.c.l.b16 %v5831
        %v6365 = vunpack.c.h.b16 %v5831
        %v6366 = vunpack.c.l.b16 %v5832
        %v6367 = vunpack.c.h.b16 %v5832
        %v6368 = vunpack.c.l.b16 %v5833
        %v6369 = vunpack.c.h.b16 %v5833
        %v6370 = vunpack.c.l.b16 %v5834
        %v6371 = vunpack.c.h.b16 %v5834
        %v6372 = vunpack.c.l.b16 %v5835
        %v6373 = vunpack.c.h.b16 %v5835
        %v6374 = vunpack.c.l.b16 %v5836
        %v6375 = vunpack.c.h.b16 %v5836
        %v6376 = vunpack.c.l.b16 %v5837
        %v6377 = vunpack.c.h.b16 %v5837
        %v6378 = vunpack.c.l.b16 %v5838
        %v6379 = vunpack.c.h.b16 %v5838
        %v6380 = vunpack.c.l.b16 %v5839
        %v6381 = vunpack.c.h.b16 %v5839
        %v6382 = vunpack.c.l.b16 %v5840
        %v6383 = vunpack.c.h.b16 %v5840
        %v6384 = vunpack.c.l.b16 %v5841
        %v6385 = vunpack.c.h.b16 %v5841
        %v6386 = vunpack.c.l.b16 %v5842
        %v6387 = vunpack.c.h.b16 %v5842
        %v6388 = vunpack.c.l.b16 %v5843
        %v6389 = vunpack.c.h.b16 %v5843
        %v6390 = vunpack.c.l.b16 %v5844
        %v6391 = vunpack.c.h.b16 %v5844
        %v6392 = vunpack.c.l.b16 %v5845
        %v6393 = vunpack.c.h.b16 %v5845
        %v6394 = vunpack.c.l.b16 %v5846
        %v6395 = vunpack.c.h.b16 %v5846
        %v6396 = vunpack.c.l.b16 %v5847
        %v6397 = vunpack.c.h.b16 %v5847
        %v6398 = vunpack.c.l.b16 %v5848
        %v6399 = vunpack.c.h.b16 %v5848
        %v6400 = vunpack.c.l.b16 %v5849
        %v6401 = vunpack.c.h.b16 %v5849
        %v6402 = vunpack.c.l.b16 %v5850
        %v6403 = vunpack.c.h.b16 %v5850
        %v6404 = vunpack.c.l.b16 %v5851
        %v6405 = vunpack.c.h.b16 %v5851
        %v6406 = vunpack.c.l.b16 %v5852
        %v6407 = vunpack.c.h.b16 %v5852
        %v6408 = vunpack.c.l.b16 %v5853
        %v6409 = vunpack.c.h.b16 %v5853
        %v6410 = vunpack.c.l.b16 %v5854
        %v6411 = vunpack.c.h.b16 %v5854
        %v6412 = vunpack.c.l.b16 %v5855
        %v6413 = vunpack.c.h.b16 %v5855
        %v6414 = vunpack.c.l.b16 %v5856
        %v6415 = vunpack.c.h.b16 %v5856
        %v6416 = vunpack.c.l.b16 %v5857
        %v6417 = vunpack.c.h.b16 %v5857
        %v6418 = vunpack.c.l.b16 %v5858
        %v6419 = vunpack.c.h.b16 %v5858
        %v6420 = vunpack.c.l.b16 %v5859
        %v6421 = vunpack.c.h.b16 %v5859
        %v6422 = vunpack.c.l.b16 %v5860
        %v6423 = vunpack.c.h.b16 %v5860
        %v6424 = vunpack.c.l.b16 %v5861
        %v6425 = vunpack.c.h.b16 %v5861
        %v6426 = vunpack.c.l.b16 %v5862
        %v6427 = vunpack.c.h.b16 %v5862
        %v6428 = vunpack.c.l.b16 %v5863
        %v6429 = vunpack.c.h.b16 %v5863
        %v6430 = vunpack.c.l.b16 %v5864
        %v6431 = vunpack.c.h.b16 %v5864
        %v6432 = vunpack.c.l.b16 %v5865
        %v6433 = vunpack.c.h.b16 %v5865
        %v6434 = vunpack.c.l.b16 %v5866
        %v6435 = vunpack.c.h.b16 %v5866
        %v6436 = vunpack.c.l.b16 %v5867
        %v6437 = vunpack.c.h.b16 %v5867
        %v6438 = vunpack.c.l.b16 %v5868
        %v6439 = vunpack.c.h.b16 %v5868
        %v6440 = vunpack.c.l.b16 %v5869
        %v6441 = vunpack.c.h.b16 %v5869
        %v6442 = vunpack.c.l.b16 %v5870
        %v6443 = vunpack.c.h.b16 %v5870
        %v6444 = vunpack.c.l.b16 %v5871
        %v6445 = vunpack.c.h.b16 %v5871
        %v6446 = vunpack.c.l.b16 %v5872
        %v6447 = vunpack.c.h.b16 %v5872
        %v6448 = vunpack.c.l.b16 %v5873
        %v6449 = vunpack.c.h.b16 %v5873
        %v6450 = vunpack.c.l.b16 %v5874
        %v6451 = vunpack.c.h.b16 %v5874
        %v6452 = vunpack.c.l.b16 %v5875
        %v6453 = vunpack.c.h.b16 %v5875
        %v6454 = vunpack.c.l.b16 %v5876
        %v6455 = vunpack.c.h.b16 %v5876
        %v6456 = vunpack.c.l.b16 %v5877
        %v6457 = vunpack.c.h.b16 %v5877
        %v6458 = vunpack.c.l.b16 %v5878
        %v6459 = vunpack.c.h.b16 %v5878
        %v6460 = vunpack.c.l.b16 %v5879
        %v6461 = vunpack.c.h.b16 %v5879
        %v6462 = vunpack.c.l.b16 %v5880
        %v6463 = vunpack.c.h.b16 %v5880
        %v6464 = vunpack.c.l.b16 %v5881
        %v6465 = vunpack.c.h.b16 %v5881
        %v6466 = vunpack.c.l.b16 %v5882
        %v6467 = vunpack.c.h.b16 %v5882
        %v6468 = vunpack.c.l.b16 %v5883
        %v6469 = vunpack.c.h.b16 %v5883
        %v6470 = vunpack.c.l.b16 %v5884
        %v6471 = vunpack.c.h.b16 %v5884
        %v6472 = vunpack.c.l.b16 %v5885
        %v6473 = vunpack.c.h.b16 %v5885
        %v6474 = vunpack.c.l.b16 %v5886
        %v6475 = vunpack.c.h.b16 %v5886
        %v6476 = vunpack.c.l.b16 %v5887
        %v6477 = vunpack.c.h.b16 %v5887
        %v6478 = vunpack.c.l.b16 %v5888
        %v6479 = vunpack.c.h.b16 %v5888
        %v6480 = vunpack.c.l.b16 %v5889
        %v6481 = vunpack.c.h.b16 %v5889
        %v6482 = vunpack.c.l.b16 %v5890
        %v6483 = vunpack.c.h.b16 %v5890
        %v6484 = vunpack.c.l.b16 %v5891
        %v6485 = vunpack.c.h.b16 %v5891
        %v6486 = vunpack.c.l.b16 %v5892
        %v6487 = vunpack.c.h.b16 %v5892
        %v6488 = vunpack.c.l.b16 %v5893
        %v6489 = vunpack.c.h.b16 %v5893
        %v6490 = vunpack.c.l.b16 %v5894
        %v6491 = vunpack.c.h.b16 %v5894
        %v6492 = vunpack.c.l.b16 %v5895
        %v6493 = vunpack.c.h.b16 %v5895
        %v6494 = vunpack.c.l.b16 %v5896
        %v6495 = vunpack.c.h.b16 %v5896
        %v6496 = vunpack.c.l.b16 %v5897
        %v6497 = vunpack.c.h.b16 %v5897
        %v6498 = vunpack.c.l.b16 %v5898
        %v6499 = vunpack.c.h.b16 %v5898
        %v6500 = vunpack.c.l.b16 %v5899
        %v6501 = vunpack.c.h.b16 %v5899
        %v6502 = vunpack.c.l.b16 %v5900
        %v6503 = vunpack.c.h.b16 %v5900
        %v6504 = vunpack.c.l.b16 %v5901
        %v6505 = vunpack.c.h.b16 %v5901
        %v6506 = vunpack.c.l.b16 %v5902
        %v6507 = vunpack.c.h.b16 %v5902
        %v6508 = vunpack.c.l.b16 %v5903
        %v6509 = vunpack.c.h.b16 %v5903
        %v6510 = vunpack.c.l.b16 %v5904
        %v6511 = vunpack.c.h.b16 %v5904
        %v6512 = vunpack.c.l.b16 %v5905
        %v6513 = vunpack.c.h.b16 %v5905
        %v6514 = vunpack.c.l.b16 %v5906
        %v6515 = vunpack.c.h.b16 %v5906
        %v6516 = vunpack.c.l.b16 %v5907
        %v6517 = vunpack.c.h.b16 %v5907
        %v6518 = vunpack.c.l.b16 %v5908
        %v6519 = vunpack.c.h.b16 %v5908
        %v6520 = vunpack.c.l.b16 %v5909
        %v6521 = vunpack.c.h.b16 %v5909
        %v6522 = vunpack.c.l.b16 %v5910
        %v6523 = vunpack.c.h.b16 %v5910
        %v6524 = vunpack.c.l.b16 %v5911
        %v6525 = vunpack.c.h.b16 %v5911
        %v6526 = vunpack.c.l.b16 %v5912
        %v6527 = vunpack.c.h.b16 %v5912
        %v6528 = vunpack.c.l.b16 %v5913
        %v6529 = vunpack.c.h.b16 %v5913
        %v6530 = vunpack.c.l.b16 %v5914
        %v6531 = vunpack.c.h.b16 %v5914
        %v6532 = vunpack.c.l.b16 %v5915
        %v6533 = vunpack.c.h.b16 %v5915
        %v6534 = vunpack.c.l.b16 %v5916
        %v6535 = vunpack.c.h.b16 %v5916
        %v6536 = vunpack.c.l.b16 %v5917
        %v6537 = vunpack.c.h.b16 %v5917
        %v6538 = vunpack.c.l.b16 %v5918
        %v6539 = vunpack.c.h.b16 %v5918
        %v6540 = vunpack.c.l.b16 %v5919
        %v6541 = vunpack.c.h.b16 %v5919
        %v6542 = vunpack.c.l.b16 %v5920
        %v6543 = vunpack.c.h.b16 %v5920
        %v6544 = vunpack.c.l.b16 %v5921
        %v6545 = vunpack.c.h.b16 %v5921
        %v6546 = vunpack.c.l.b16 %v5922
        %v6547 = vunpack.c.h.b16 %v5922
        %v6548 = vunpack.c.l.b16 %v5923
        %v6549 = vunpack.c.h.b16 %v5923
        %v6550 = vunpack.c.l.b16 %v5924
        %v6551 = vunpack.c.h.b16 %v5924
        %v6552 = vunpack.c.l.b16 %v5925
        %v6553 = vunpack.c.h.b16 %v5925
        %v6554 = vunpack.c.l.b16 %v5926
        %v6555 = vunpack.c.h.b16 %v5926
        %v6556 = vunpack.c.l.b16 %v5927
        %v6557 = vunpack.c.h.b16 %v5927
        %v6558 = vunpack.c.l.b16 %v5928
        %v6559 = vunpack.c.h.b16 %v5928
        %v6560 = vunpack.c.l.b16 %v5929
        %v6561 = vunpack.c.h.b16 %v5929
        %v6562 = vunpack.c.l.b16 %v5930
        %v6563 = vunpack.c.h.b16 %v5930
        %v6564 = vunpack.c.l.b16 %v5931
        %v6565 = vunpack.c.h.b16 %v5931
        %v6566 = vunpack.c.l.b16 %v5932
        %v6567 = vunpack.c.h.b16 %v5932
        %v6568 = vunpack.c.l.b16 %v5933
        %v6569 = vunpack.c.h.b16 %v5933
        %v6570 = vunpack.c.l.b16 %v5934
        %v6571 = vunpack.c.h.b16 %v5934
        %v6572 = vunpack.c.l.b16 %v5935
        %v6573 = vunpack.c.h.b16 %v5935
        %v6574 = vunpack.c.l.b16 %v5936
        %v6575 = vunpack.c.h.b16 %v5936
        %v6576 = vunpack.c.l.b16 %v5937
        %v6577 = vunpack.c.h.b16 %v5937
        %v6578 = vunpack.c.l.b16 %v5938
        %v6579 = vunpack.c.h.b16 %v5938
        %v6580 = vunpack.c.l.b16 %v5939
        %v6581 = vunpack.c.h.b16 %v5939
        %v6582 = vunpack.c.l.b16 %v5940
        %v6583 = vunpack.c.h.b16 %v5940
        %v6584 = vunpack.c.l.b16 %v5941
        %v6585 = vunpack.c.h.b16 %v5941
        %v6586 = vunpack.c.l.b16 %v5942
        %v6587 = vunpack.c.h.b16 %v5942
        %v6588 = vunpack.c.l.b16 %v5943
        %v6589 = vunpack.c.h.b16 %v5943
        %v6590 = vunpack.c.l.b16 %v5944
        %v6591 = vunpack.c.h.b16 %v5944
        %v6592 = vunpack.c.l.b16 %v5945
        %v6593 = vunpack.c.h.b16 %v5945
        %v6594 = vunpack.c.l.b16 %v5946
        %v6595 = vunpack.c.h.b16 %v5946
        %v6596 = vunpack.c.l.b16 %v5947
        %v6597 = vunpack.c.h.b16 %v5947
        %v6598 = vunpack.c.l.b16 %v5948
        %v6599 = vunpack.c.h.b16 %v5948
        %v6600 = vunpack.c.l.b16 %v5949
        %v6601 = vunpack.c.h.b16 %v5949
        %v6602 = vunpack.c.l.b16 %v5950
        %v6603 = vunpack.c.h.b16 %v5950
        %v6604 = vunpack.c.l.b16 %v5951
        %v6605 = vunpack.c.h.b16 %v5951
        %v6606 = vunpack.c.l.b16 %v5952
        %v6607 = vunpack.c.h.b16 %v5952
        %v6608 = vunpack.c.l.b16 %v5953
        %v6609 = vunpack.c.h.b16 %v5953
        %v6610 = vunpack.c.l.b16 %v5954
        %v6611 = vunpack.c.h.b16 %v5954
        %v6612 = vunpack.c.l.b16 %v5955
        %v6613 = vunpack.c.h.b16 %v5955
        %v6614 = vunpack.c.l.b16 %v5956
        %v6615 = vunpack.c.h.b16 %v5956
        %v6616 = vunpack.c.l.b16 %v5957
        %v6617 = vunpack.c.h.b16 %v5957
        %v6618 = vunpack.c.l.b16 %v5958
        %v6619 = vunpack.c.h.b16 %v5958
        %v6620 = vunpack.c.l.b16 %v5959
        %v6621 = vunpack.c.h.b16 %v5959
        %v6622 = vunpack.c.l.b16 %v5960
        %v6623 = vunpack.c.h.b16 %v5960
        %v6624 = vunpack.c.l.b16 %v5961
        %v6625 = vunpack.c.h.b16 %v5961
        %v6626 = vunpack.c.l.b16 %v5962
        %v6627 = vunpack.c.h.b16 %v5962
        %v6628 = vunpack.c.l.b16 %v5963
        %v6629 = vunpack.c.h.b16 %v5963
        %v6630 = vunpack.c.l.b16 %v5964
        %v6631 = vunpack.c.h.b16 %v5964
        %v6632 = vunpack.c.l.b16 %v5965
        %v6633 = vunpack.c.h.b16 %v5965
        %v6634 = vunpack.c.l.b16 %v5966
        %v6635 = vunpack.c.h.b16 %v5966
        %v6636 = vunpack.c.l.b16 %v5967
        %v6637 = vunpack.c.h.b16 %v5967
        %v6638 = vunpack.c.l.b16 %v5968
        %v6639 = vunpack.c.h.b16 %v5968
        %v6640 = vunpack.c.l.b16 %v5969
        %v6641 = vunpack.c.h.b16 %v5969
        %v6642 = vunpack.c.l.b16 %v5970
        %v6643 = vunpack.c.h.b16 %v5970
        %v6644 = vunpack.c.l.b16 %v5971
        %v6645 = vunpack.c.h.b16 %v5971
        %v6646 = vunpack.c.l.b16 %v5972
        %v6647 = vunpack.c.h.b16 %v5972
        %v6648 = vunpack.c.l.b16 %v5973
        %v6649 = vunpack.c.h.b16 %v5973
        %v6650 = vunpack.c.l.b16 %v5974
        %v6651 = vunpack.c.h.b16 %v5974
        %v6652 = vunpack.c.l.b16 %v5975
        %v6653 = vunpack.c.h.b16 %v5975
        %v6654 = vunpack.c.l.b16 %v5976
        %v6655 = vunpack.c.h.b16 %v5976
        %v6656 = vunpack.c.l.b16 %v5977
        %v6657 = vunpack.c.h.b16 %v5977
        %v6658 = vunpack.c.l.b16 %v5978
        %v6659 = vunpack.c.h.b16 %v5978
        %v6660 = vunpack.c.l.b16 %v5979
        %v6661 = vunpack.c.h.b16 %v5979
        %v6662 = vunpack.c.l.b16 %v5980
        %v6663 = vunpack.c.h.b16 %v5980
        %v6664 = vunpack.c.l.b16 %v5981
        %v6665 = vunpack.c.h.b16 %v5981
        %v6666 = vunpack.c.l.b16 %v5982
        %v6667 = vunpack.c.h.b16 %v5982
        %v6668 = vunpack.c.l.b16 %v5983
        %v6669 = vunpack.c.h.b16 %v5983
        %v6670 = vunpack.c.l.b16 %v5984
        %v6671 = vunpack.c.h.b16 %v5984
        %v6672 = vunpack.c.l.b16 %v5985
        %v6673 = vunpack.c.h.b16 %v5985
        %v6674 = vunpack.c.l.b16 %v5986
        %v6675 = vunpack.c.h.b16 %v5986
        %v6676 = vunpack.c.l.b16 %v5987
        %v6677 = vunpack.c.h.b16 %v5987
        %v6678 = vunpack.c.l.b16 %v5988
        %v6679 = vunpack.c.h.b16 %v5988
        %v6680 = vunpack.c.l.b16 %v5989
        %v6681 = vunpack.c.h.b16 %v5989
        %v6682 = vunpack.c.l.b16 %v5990
        %v6683 = vunpack.c.h.b16 %v5990
        %v6684 = vunpack.c.l.b16 %v5991
        %v6685 = vunpack.c.h.b16 %v5991
        %v6686 = vunpack.c.l.b16 %v5992
        %v6687 = vunpack.c.h.b16 %v5992
        %v6688 = vunpack.c.l.b16 %v5993
        %v6689 = vunpack.c.h.b16 %v5993
        %v6690 = vunpack.c.l.b16 %v5994
        %v6691 = vunpack.c.h.b16 %v5994
        %v6692 = vunpack.c.l.b16 %v5995
        %v6693 = vunpack.c.h.b16 %v5995
        %v6694 = vunpack.c.l.b16 %v5996
        %v6695 = vunpack.c.h.b16 %v5996
        %v6696 = vunpack.c.l.b16 %v5997
        %v6697 = vunpack.c.h.b16 %v5997
        %v6698 = vunpack.c.l.b16 %v5998
        %v6699 = vunpack.c.h.b16 %v5998
        %v6700 = vunpack.c.l.b16 %v5999
        %v6701 = vunpack.c.h.b16 %v5999
        %v6702 = vunpack.c.l.b16 %v6000
        %v6703 = vunpack.c.h.b16 %v6000
        %v6704 = vunpack.c.l.b16 %v6001
        %v6705 = vunpack.c.h.b16 %v6001
        %v6706 = vunpack.c.l.b16 %v6002
        %v6707 = vunpack.c.h.b16 %v6002
        %v6708 = vunpack.c.l.b16 %v6003
        %v6709 = vunpack.c.h.b16 %v6003
        %v6710 = vunpack.c.l.b16 %v6004
        %v6711 = vunpack.c.h.b16 %v6004
        %v6712 = vunpack.c.l.b16 %v6005
        %v6713 = vunpack.c.h.b16 %v6005
        %v6714 = vunpack.c.l.b16 %v6006
        %v6715 = vunpack.c.h.b16 %v6006
        %v6716 = vunpack.c.l.b16 %v6007
        %v6717 = vunpack.c.h.b16 %v6007
        %v6718 = vunpack.c.l.b16 %v6008
        %v6719 = vunpack.c.h.b16 %v6008
        %v6720 = vunpack.c.l.b16 %v6009
        %v6721 = vunpack.c.h.b16 %v6009
        %v6722 = vunpack.c.l.b16 %v6010
        %v6723 = vunpack.c.h.b16 %v6010
        %v6724 = vunpack.c.l.b16 %v6011
        %v6725 = vunpack.c.h.b16 %v6011
        %v6726 = vunpack.c.l.b16 %v6012
        %v6727 = vunpack.c.h.b16 %v6012
        %v6728 = vunpack.c.l.b16 %v6013
        %v6729 = vunpack.c.h.b16 %v6013
        %v6730 = vunpack.c.l.b16 %v6014
        %v6731 = vunpack.c.h.b16 %v6014
        %v6732 = vunpack.c.l.b16 %v6015
        %v6733 = vunpack.c.h.b16 %v6015
        %v6734 = vunpack.c.l.b16 %v6016
        %v6735 = vunpack.c.h.b16 %v6016
        %v6736 = vunpack.c.l.b16 %v6017
        %v6737 = vunpack.c.h.b16 %v6017
        %v6738 = vunpack.c.l.b16 %v6018
        %v6739 = vunpack.c.h.b16 %v6018
        %v6740 = vunpack.c.l.b16 %v6019
        %v6741 = vunpack.c.h.b16 %v6019
        %v6742 = vunpack.c.l.b16 %v6020
        %v6743 = vunpack.c.h.b16 %v6020
        %v6744 = vunpack.c.l.b16 %v6021
        %v6745 = vunpack.c.h.b16 %v6021
        %v6746 = vunpack.c.l.b16 %v6022
        %v6747 = vunpack.c.h.b16 %v6022
        %v6748 = vunpack.c.l.b16 %v6023
        %v6749 = vunpack.c.h.b16 %v6023
        %v6750 = vunpack.c.l.b16 %v6024
        %v6751 = vunpack.c.h.b16 %v6024
        %v6752 = vunpack.c.l.b16 %v6025
        %v6753 = vunpack.c.h.b16 %v6025
        %v6754 = vunpack.c.l.b16 %v6026
        %v6755 = vunpack.c.h.b16 %v6026
        %v6756 = vunpack.c.l.b16 %v6027
        %v6757 = vunpack.c.h.b16 %v6027
        %v6758 = vunpack.c.l.b16 %v6028
        %v6759 = vunpack.c.h.b16 %v6028
        %v6760 = vunpack.c.l.b16 %v6029
        %v6761 = vunpack.c.h.b16 %v6029
        %v6762 = vunpack.c.l.b16 %v6030
        %v6763 = vunpack.c.h.b16 %v6030
        %v6764 = vunpack.c.l.b16 %v6031
        %v6765 = vunpack.c.h.b16 %v6031
        %v6766 = vunpack.c.l.b16 %v6032
        %v6767 = vunpack.c.h.b16 %v6032
        %v6768 = vunpack.c.l.b16 %v6033
        %v6769 = vunpack.c.h.b16 %v6033
        %v6770 = vunpack.c.l.b16 %v6034
        %v6771 = vunpack.c.h.b16 %v6034
        %v6772 = vunpack.c.l.b16 %v6035
        %v6773 = vunpack.c.h.b16 %v6035
        %v6774 = vunpack.c.l.b16 %v6036
        %v6775 = vunpack.c.h.b16 %v6036
        %v6776 = vunpack.c.l.b16 %v6037
        %v6777 = vunpack.c.h.b16 %v6037
        %v6778 = vunpack.c.l.b16 %v6038
        %v6779 = vunpack.c.h.b16 %v6038
        %v6780 = vunpack.c.l.b16 %v6039
        %v6781 = vunpack.c.h.b16 %v6039
        %v6782 = vunpack.c.l.b16 %v6040
        %v6783 = vunpack.c.h.b16 %v6040
        %v6784 = vunpack.c.l.b16 %v6041
        %v6785 = vunpack.c.h.b16 %v6041
        %v6786 = vunpack.c.l.b16 %v6042
        %v6787 = vunpack.c.h.b16 %v6042
        %v6788 = vunpack.c.l.b16 %v6043
        %v6789 = vunpack.c.h.b16 %v6043
        %v6790 = vunpack.c.l.b16 %v6044
        %v6791 = vunpack.c.h.b16 %v6044
        %v6792 = vunpack.c.l.b16 %v6045
        %v6793 = vunpack.c.h.b16 %v6045
        %v6794 = vunpack.c.l.b16 %v6046
        %v6795 = vunpack.c.h.b16 %v6046
        %v6796 = vunpack.c.l.b16 %v6047
        %v6797 = vunpack.c.h.b16 %v6047
        %v6798 = vunpack.c.l.b16 %v6048
        %v6799 = vunpack.c.h.b16 %v6048
        %v6800 = vunpack.c.l.b16 %v6049
        %v6801 = vunpack.c.h.b16 %v6049
        %v6802 = vunpack.c.l.b16 %v6050
        %v6803 = vunpack.c.h.b16 %v6050
        %v6804 = vunpack.c.l.b16 %v6051
        %v6805 = vunpack.c.h.b16 %v6051
        %v6806 = vunpack.c.l.b16 %v6052
        %v6807 = vunpack.c.h.b16 %v6052
        %v6808 = vunpack.c.l.b16 %v6053
        %v6809 = vunpack.c.h.b16 %v6053
        %v6810 = vunpack.c.l.b16 %v6054
        %v6811 = vunpack.c.h.b16 %v6054
        %v6812 = vunpack.c.l.b16 %v6055
        %v6813 = vunpack.c.h.b16 %v6055
        %v6814 = vunpack.c.l.b16 %v6056
        %v6815 = vunpack.c.h.b16 %v6056
        %v6816 = vunpack.c.l.b16 %v6057
        %v6817 = vunpack.c.h.b16 %v6057
        %v6818 = vunpack.c.l.b16 %v6058
        %v6819 = vunpack.c.h.b16 %v6058
        %v6820 = vunpack.c.l.b16 %v6059
        %v6821 = vunpack.c.h.b16 %v6059
        %v6822 = vunpack.c.l.b16 %v6060
        %v6823 = vunpack.c.h.b16 %v6060
        %v6824 = vunpack.c.l.b16 %v6061
        %v6825 = vunpack.c.h.b16 %v6061
        %v6826 = vunpack.c.l.b16 %v6062
        %v6827 = vunpack.c.h.b16 %v6062
        %v6828 = vunpack.c.l.b16 %v6063
        %v6829 = vunpack.c.h.b16 %v6063
        %v6830 = vunpack.c.l.b16 %v6064
        %v6831 = vunpack.c.h.b16 %v6064
        %v6832 = vunpack.c.l.b16 %v6065
        %v6833 = vunpack.c.h.b16 %v6065
        %v6834 = vunpack.c.l.b16 %v6066
        %v6835 = vunpack.c.h.b16 %v6066
        %v6836 = vpack.c.b16 %v6328, %v6324
        %v6837 = vpack.c.b16 %v6329, %v6325
        %v6838 = vpack.c.b16 %v6330, %v6326
        %v6839 = vpack.c.b16 %v6331, %v6327
        %v6840 = vpack.c.b16 %v6336, %v6332
        %v6841 = vpack.c.b16 %v6337, %v6333
        %v6842 = vpack.c.b16 %v6338, %v6334
        %v6843 = vpack.c.b16 %v6339, %v6335
        %v6844 = vpack.c.b16 %v6344, %v6340
        %v6845 = vpack.c.b16 %v6345, %v6341
        %v6846 = vpack.c.b16 %v6346, %v6342
        %v6847 = vpack.c.b16 %v6347, %v6343
        %v6848 = vpack.c.b16 %v6352, %v6348
        %v6849 = vpack.c.b16 %v6353, %v6349
        %v6850 = vpack.c.b16 %v6354, %v6350
        %v6851 = vpack.c.b16 %v6355, %v6351
        %v6852 = vpack.c.b16 %v6360, %v6356
        %v6853 = vpack.c.b16 %v6361, %v6357
        %v6854 = vpack.c.b16 %v6362, %v6358
        %v6855 = vpack.c.b16 %v6363, %v6359
        %v6856 = vpack.c.b16 %v6368, %v6364
        %v6857 = vpack.c.b16 %v6369, %v6365
        %v6858 = vpack.c.b16 %v6370, %v6366
        %v6859 = vpack.c.b16 %v6371, %v6367
        %v6860 = vpack.c.b16 %v6376, %v6372
        %v6861 = vpack.c.b16 %v6377, %v6373
        %v6862 = vpack.c.b16 %v6378, %v6374
        %v6863 = vpack.c.b16 %v6379, %v6375
        %v6864 = vpack.c.b16 %v6384, %v6380
        %v6865 = vpack.c.b16 %v6385, %v6381
        %v6866 = vpack.c.b16 %v6386, %v6382
        %v6867 = vpack.c.b16 %v6387, %v6383
        %v6868 = vpack.c.b16 %v6392, %v6388
        %v6869 = vpack.c.b16 %v6393, %v6389
        %v6870 = vpack.c.b16 %v6394, %v6390
        %v6871 = vpack.c.b16 %v6395, %v6391
        %v6872 = vpack.c.b16 %v6400, %v6396
        %v6873 = vpack.c.b16 %v6401, %v6397
        %v6874 = vpack.c.b16 %v6402, %v6398
        %v6875 = vpack.c.b16 %v6403, %v6399
        %v6876 = vpack.c.b16 %v6408, %v6404
        %v6877 = vpack.c.b16 %v6409, %v6405
        %v6878 = vpack.c.b16 %v6410, %v6406
        %v6879 = vpack.c.b16 %v6411, %v6407
        %v6880 = vpack.c.b16 %v6416, %v6412
        %v6881 = vpack.c.b16 %v6417, %v6413
        %v6882 = vpack.c.b16 %v6418, %v6414
        %v6883 = vpack.c.b16 %v6419, %v6415
        %v6884 = vpack.c.b16 %v6424, %v6420
        %v6885 = vpack.c.b16 %v6425, %v6421
        %v6886 = vpack.c.b16 %v6426, %v6422
        %v6887 = vpack.c.b16 %v6427, %v6423
        %v6888 = vpack.c.b16 %v6432, %v6428
        %v6889 = vpack.c.b16 %v6433, %v6429
        %v6890 = vpack.c.b16 %v6434, %v6430
        %v6891 = vpack.c.b16 %v6435, %v6431
        %v6892 = vpack.c.b16 %v6440, %v6436
        %v6893 = vpack.c.b16 %v6441, %v6437
        %v6894 = vpack.c.b16 %v6442, %v6438
        %v6895 = vpack.c.b16 %v6443, %v6439
        %v6896 = vpack.c.b16 %v6448, %v6444
        %v6897 = vpack.c.b16 %v6449, %v6445
        %v6898 = vpack.c.b16 %v6450, %v6446
        %v6899 = vpack.c.b16 %v6451, %v6447
        %v6900 = vpack.c.b16 %v6456, %v6452
        %v6901 = vpack.c.b16 %v6457, %v6453
        %v6902 = vpack.c.b16 %v6458, %v6454
        %v6903 = vpack.c.b16 %v6459, %v6455
        %v6904 = vpack.c.b16 %v6464, %v6460
        %v6905 = vpack.c.b16 %v6465, %v6461
        %v6906 = vpack.c.b16 %v6466, %v6462
        %v6907 = vpack.c.b16 %v6467, %v6463
        %v6908 = vpack.c.b16 %v6472, %v6468
        %v6909 = vpack.c.b16 %v6473, %v6469
        %v6910 = vpack.c.b16 %v6474, %v6470
        %v6911 = vpack.c.b16 %v6475, %v6471
        %v6912 = vpack.c.b16 %v6480, %v6476
        %v6913 = vpack.c.b16 %v6481, %v6477
        %v6914 = vpack.c.b16 %v6482, %v6478
        %v6915 = vpack.c.b16 %v6483, %v6479
        %v6916 = vpack.c.b16 %v6488, %v6484
        %v6917 = vpack.c.b16 %v6489, %v6485
        %v6918 = vpack.c.b16 %v6490, %v6486
        %v6919 = vpack.c.b16 %v6491, %v6487
        %v6920 = vpack.c.b16 %v6496, %v6492
        %v6921 = vpack.c.b16 %v6497, %v6493
        %v6922 = vpack.c.b16 %v6498, %v6494
        %v6923 = vpack.c.b16 %v6499, %v6495
        %v6924 = vpack.c.b16 %v6504, %v6500
        %v6925 = vpack.c.b16 %v6505, %v6501
        %v6926 = vpack.c.b16 %v6506, %v6502
        %v6927 = vpack.c.b16 %v6507, %v6503
        %v6928 = vpack.c.b16 %v6512, %v6508
        %v6929 = vpack.c.b16 %v6513, %v6509
        %v6930 = vpack.c.b16 %v6514, %v6510
        %v6931 = vpack.c.b16 %v6515, %v6511
        %v6932 = vpack.c.b16 %v6520, %v6516
        %v6933 = vpack.c.b16 %v6521, %v6517
        %v6934 = vpack.c.b16 %v6522, %v6518
        %v6935 = vpack.c.b16 %v6523, %v6519
        %v6936 = vpack.c.b16 %v6528, %v6524
        %v6937 = vpack.c.b16 %v6529, %v6525
        %v6938 = vpack.c.b16 %v6530, %v6526
        %v6939 = vpack.c.b16 %v6531, %v6527
        %v6940 = vpack.c.b16 %v6536, %v6532
        %v6941 = vpack.c.b16 %v6537, %v6533
        %v6942 = vpack.c.b16 %v6538, %v6534
        %v6943 = vpack.c.b16 %v6539, %v6535
        %v6944 = vpack.c.b16 %v6544, %v6540
        %v6945 = vpack.c.b16 %v6545, %v6541
        %v6946 = vpack.c.b16 %v6546, %v6542
        %v6947 = vpack.c.b16 %v6547, %v6543
        %v6948 = vpack.c.b16 %v6552, %v6548
        %v6949 = vpack.c.b16 %v6553, %v6549
        %v6950 = vpack.c.b16 %v6554, %v6550
        %v6951 = vpack.c.b16 %v6555, %v6551
        %v6952 = vpack.c.b16 %v6560, %v6556
        %v6953 = vpack.c.b16 %v6561, %v6557
        %v6954 = vpack.c.b16 %v6562, %v6558
        %v6955 = vpack.c.b16 %v6563, %v6559
        %v6956 = vpack.c.b16 %v6568, %v6564
        %v6957 = vpack.c.b16 %v6569, %v6565
        %v6958 = vpack.c.b16 %v6570, %v6566
        %v6959 = vpack.c.b16 %v6571, %v6567
        %v6960 = vpack.c.b16 %v6576, %v6572
        %v6961 = vpack.c.b16 %v6577, %v6573
        %v6962 = vpack.c.b16 %v6578, %v6574
        %v6963 = vpack.c.b16 %v6579, %v6575
        %v6964 = vpack.c.b16 %v6584, %v6580
        %v6965 = vpack.c.b16 %v6585, %v6581
        %v6966 = vpack.c.b16 %v6586, %v6582
        %v6967 = vpack.c.b16 %v6587, %v6583
        %v6968 = vpack.c.b16 %v6592, %v6588
        %v6969 = vpack.c.b16 %v6593, %v6589
        %v6970 = vpack.c.b16 %v6594, %v6590
        %v6971 = vpack.c.b16 %v6595, %v6591
        %v6972 = vpack.c.b16 %v6600, %v6596
        %v6973 = vpack.c.b16 %v6601, %v6597
        %v6974 = vpack.c.b16 %v6602, %v6598
        %v6975 = vpack.c.b16 %v6603, %v6599
        %v6976 = vpack.c.b16 %v6608, %v6604
        %v6977 = vpack.c.b16 %v6609, %v6605
        %v6978 = vpack.c.b16 %v6610, %v6606
        %v6979 = vpack.c.b16 %v6611, %v6607
        %v6980 = vpack.c.b16 %v6616, %v6612
        %v6981 = vpack.c.b16 %v6617, %v6613
        %v6982 = vpack.c.b16 %v6618, %v6614
        %v6983 = vpack.c.b16 %v6619, %v6615
        %v6984 = vpack.c.b16 %v6624, %v6620
        %v6985 = vpack.c.b16 %v6625, %v6621
        %v6986 = vpack.c.b16 %v6626, %v6622
        %v6987 = vpack.c.b16 %v6627, %v6623
        %v6988 = vpack.c.b16 %v6632, %v6628
        %v6989 = vpack.c.b16 %v6633, %v6629
        %v6990 = vpack.c.b16 %v6634, %v6630
        %v6991 = vpack.c.b16 %v6635, %v6631
        %v6992 = vpack.c.b16 %v6640, %v6636
        %v6993 = vpack.c.b16 %v6641, %v6637
        %v6994 = vpack.c.b16 %v6642, %v6638
        %v6995 = vpack.c.b16 %v6643, %v6639
        %v6996 = vpack.c.b16 %v6648, %v6644
        %v6997 = vpack.c.b16 %v6649, %v6645
        %v6998 = vpack.c.b16 %v6650, %v6646
        %v6999 = vpack.c.b16 %v6651, %v6647
        %v7000 = vpack.c.b16 %v6656, %v6652
        %v7001 = vpack.c.b16 %v6657, %v6653
        %v7002 = vpack.c.b16 %v6658, %v6654
        %v7003 = vpack.c.b16 %v6659, %v6655
        %v7004 = vpack.c.b16 %v6664, %v6660
        %v7005 = vpack.c.b16 %v6665, %v6661
        %v7006 = vpack.c.b16 %v6666, %v6662
        %v7007 = vpack.c.b16 %v6667, %v6663
        %v7008 = vpack.c.b16 %v6672, %v6668
        %v7009 = vpack.c.b16 %v6673, %v6669
        %v7010 = vpack.c.b16 %v6674, %v6670
        %v7011 = vpack.c.b16 %v6675, %v6671
        %v7012 = vpack.c.b16 %v6680, %v6676
        %v7013 = vpack.c.b16 %v6681, %v6677
        %v7014 = vpack.c.b16 %v6682, %v6678
        %v7015 = vpack.c.b16 %v6683, %v6679
        %v7016 = vpack.c.b16 %v6688, %v6684
        %v7017 = vpack.c.b16 %v6689, %v6685
        %v7018 = vpack.c.b16 %v6690, %v6686
        %v7019 = vpack.c.b16 %v6691, %v6687
        %v7020 = vpack.c.b16 %v6696, %v6692
        %v7021 = vpack.c.b16 %v6697, %v6693
        %v7022 = vpack.c.b16 %v6698, %v6694
        %v7023 = vpack.c.b16 %v6699, %v6695
        %v7024 = vpack.c.b16 %v6704, %v6700
        %v7025 = vpack.c.b16 %v6705, %v6701
        %v7026 = vpack.c.b16 %v6706, %v6702
        %v7027 = vpack.c.b16 %v6707, %v6703
        %v7028 = vpack.c.b16 %v6712, %v6708
        %v7029 = vpack.c.b16 %v6713, %v6709
        %v7030 = vpack.c.b16 %v6714, %v6710
        %v7031 = vpack.c.b16 %v6715, %v6711
        %v7032 = vpack.c.b16 %v6720, %v6716
        %v7033 = vpack.c.b16 %v6721, %v6717
        %v7034 = vpack.c.b16 %v6722, %v6718
        %v7035 = vpack.c.b16 %v6723, %v6719
        %v7036 = vpack.c.b16 %v6728, %v6724
        %v7037 = vpack.c.b16 %v6729, %v6725
        %v7038 = vpack.c.b16 %v6730, %v6726
        %v7039 = vpack.c.b16 %v6731, %v6727
        %v7040 = vpack.c.b16 %v6736, %v6732
        %v7041 = vpack.c.b16 %v6737, %v6733
        %v7042 = vpack.c.b16 %v6738, %v6734
        %v7043 = vpack.c.b16 %v6739, %v6735
        %v7044 = vpack.c.b16 %v6744, %v6740
        %v7045 = vpack.c.b16 %v6745, %v6741
        %v7046 = vpack.c.b16 %v6746, %v6742
        %v7047 = vpack.c.b16 %v6747, %v6743
        %v7048 = vpack.c.b16 %v6752, %v6748
        %v7049 = vpack.c.b16 %v6753, %v6749
        %v7050 = vpack.c.b16 %v6754, %v6750
        %v7051 = vpack.c.b16 %v6755, %v6751
        %v7052 = vpack.c.b16 %v6760, %v6756
        %v7053 = vpack.c.b16 %v6761, %v6757
        %v7054 = vpack.c.b16 %v6762, %v6758
        %v7055 = vpack.c.b16 %v6763, %v6759
        %v7056 = vpack.c.b16 %v6768, %v6764
        %v7057 = vpack.c.b16 %v6769, %v6765
        %v7058 = vpack.c.b16 %v6770, %v6766
        %v7059 = vpack.c.b16 %v6771, %v6767
        %v7060 = vpack.c.b16 %v6776, %v6772
        %v7061 = vpack.c.b16 %v6777, %v6773
        %v7062 = vpack.c.b16 %v6778, %v6774
        %v7063 = vpack.c.b16 %v6779, %v6775
        %v7064 = vpack.c.b16 %v6784, %v6780
        %v7065 = vpack.c.b16 %v6785, %v6781
        %v7066 = vpack.c.b16 %v6786, %v6782
        %v7067 = vpack.c.b16 %v6787, %v6783
        %v7068 = vpack.c.b16 %v6792, %v6788
        %v7069 = vpack.c.b16 %v6793, %v6789
        %v7070 = vpack.c.b16 %v6794, %v6790
        %v7071 = vpack.c.b16 %v6795, %v6791
        %v7072 = vpack.c.b16 %v6800, %v6796
        %v7073 = vpack.c.b16 %v6801, %v6797
        %v7074 = vpack.c.b16 %v6802, %v6798
        %v7075 = vpack.c.b16 %v6803, %v6799
        %v7076 = vpack.c.b16 %v6808, %v6804
        %v7077 = vpack.c.b16 %v6809, %v6805
        %v7078 = vpack.c.b16 %v6810, %v6806
        %v7079 = vpack.c.b16 %v6811, %v6807
        %v7080 = vpack.c.b16 %v6816, %v6812
        %v7081 = vpack.c.b16 %v6817, %v6813
        %v7082 = vpack.c.b16 %v6818, %v6814
        %v7083 = vpack.c.b16 %v6819, %v6815
        %v7084 = vpack.c.b16 %v6824, %v6820
        %v7085 = vpack.c.b16 %v6825, %v6821
        %v7086 = vpack.c.b16 %v6826, %v6822
        %v7087 = vpack.c.b16 %v6827, %v6823
        %v7088 = vpack.c.b16 %v6832, %v6828
        %v7089 = vpack.c.b16 %v6833, %v6829
        %v7090 = vpack.c.b16 %v6834, %v6830
        %v7091 = vpack.c.b16 %v6835, %v6831
        %v7349 = vlaneseq
        %v7350 = vshrl.u32 %v7349, 7
        %v7351 = vsub.s32 0, %v7350
        %v7352 = vrot.slane %v6067, %v7351
        %v7353 = vlaneseq
        %v7354 = vshrl.u32 %v7353, 7
        %v7355 = vsub.s32 1, %v7354
        %v7356 = vrot.slane %v6067, %v7355
        %v7357 = vlaneseq
        %v7358 = vshrl.u32 %v7357, 7
        %v7359 = vsub.s32 2, %v7358
        %v7360 = vrot.slane %v6067, %v7359
        %v7361 = vlaneseq
        %v7362 = vshrl.u32 %v7361, 7
        %v7363 = vsub.s32 3, %v7362
        %v7364 = vrot.slane %v6067, %v7363
        %7369 = vmatprep.subr.bf16.mxu0 %v6837
        %7370 = vmatpush1.bf16.msra.mxu0 %v6836
        %7371 = vmatprep.subr.bf16.mxu0 %v6841
        %7372 = vmatpush1.bf16.msra.mxu0 %v6840
        %7373 = vmatprep.subr.bf16.mxu0 %v6845
        %7374 = vmatpush1.bf16.msra.mxu0 %v6844
        %7375 = vmatprep.subr.bf16.mxu0 %v6849
        %7376 = vmatpush1.bf16.msra.mxu0 %v6848
        %7377 = vmatprep.subr.bf16.mxu0 %v6853
        %7378 = vmatpush1.bf16.msra.mxu0 %v6852
        %7379 = vmatprep.subr.bf16.mxu0 %v6857
        %7380 = vmatpush1.bf16.msra.mxu0 %v6856
        %7381 = vmatprep.subr.bf16.mxu0 %v6861
        %7382 = vmatpush1.bf16.msra.mxu0 %v6860
        %7383 = vmatprep.subr.bf16.mxu0 %v6865
        %7384 = vmatpush1.bf16.msra.mxu0 %v6864
        %7385 = vmatprep.subr.bf16.mxu0 %v6869
        %7386 = vmatpush1.bf16.msra.mxu0 %v6868
        %7387 = vmatprep.subr.bf16.mxu0 %v6873
        %7388 = vmatpush1.bf16.msra.mxu0 %v6872
        %7389 = vmatprep.subr.bf16.mxu0 %v6877
        %7390 = vmatpush1.bf16.msra.mxu0 %v6876
        %7391 = vmatprep.subr.bf16.mxu0 %v6881
        %7392 = vmatpush1.bf16.msra.mxu0 %v6880
        %7393 = vmatprep.subr.bf16.mxu0 %v6885
        %7394 = vmatpush1.bf16.msra.mxu0 %v6884
        %7395 = vmatprep.subr.bf16.mxu0 %v6889
        %7396 = vmatpush1.bf16.msra.mxu0 %v6888
        %7397 = vmatprep.subr.bf16.mxu0 %v6893
        %7398 = vmatpush1.bf16.msra.mxu0 %v6892
        %7399 = vmatprep.subr.bf16.mxu0 %v6897
        %7400 = vmatpush1.bf16.msra.mxu0 %v6896
        %7401 = vmatprep.mubr.bf16.mxu0 %v5804
        %7402 = vmatmul.mubr.bf16.gmra.mrb[0].mxu0 %v5803
        %v7403 = vpop.f32.mrb[0].mxu0
        %v7404 = vadd.f32 %v7352, %v7403
        %v7405 = vpop.f32.mrb[0].mxu0
        %v7406 = vadd.f32 %v7356, %v7405
        %v7407 = vpop.f32.mrb[0].mxu0
        %v7408 = vpop.f32.mrb[0].mxu0
        %7409 = vdwg.mxu0
        %7410 = vmatprep.subr.bf16.mxu0 %v6901
        %7411 = vmatpush1.bf16.msra.mxu0 %v6900
        %7412 = vmatprep.subr.bf16.mxu0 %v6905
        %7413 = vmatpush1.bf16.msra.mxu0 %v6904
        %7414 = vmatprep.subr.bf16.mxu0 %v6909
        %7415 = vmatpush1.bf16.msra.mxu0 %v6908
        %7416 = vmatprep.subr.bf16.mxu0 %v6913
        %7417 = vmatpush1.bf16.msra.mxu0 %v6912
        %7418 = vmatprep.subr.bf16.mxu0 %v6917
        %7419 = vmatpush1.bf16.msra.mxu0 %v6916
        %7420 = vmatprep.subr.bf16.mxu0 %v6921
        %7421 = vmatpush1.bf16.msra.mxu0 %v6920
        %7422 = vmatprep.subr.bf16.mxu0 %v6925
        %7423 = vmatpush1.bf16.msra.mxu0 %v6924
        %7424 = vmatprep.subr.bf16.mxu0 %v6929
        %7425 = vmatpush1.bf16.msra.mxu0 %v6928
        %7426 = vmatprep.subr.bf16.mxu0 %v6933
        %7427 = vmatpush1.bf16.msra.mxu0 %v6932
        %7428 = vmatprep.subr.bf16.mxu0 %v6937
        %7429 = vmatpush1.bf16.msra.mxu0 %v6936
        %7430 = vmatprep.subr.bf16.mxu0 %v6941
        %7431 = vmatpush1.bf16.msra.mxu0 %v6940
        %7432 = vmatprep.subr.bf16.mxu0 %v6945
        %7433 = vmatpush1.bf16.msra.mxu0 %v6944
        %7434 = vmatprep.subr.bf16.mxu0 %v6949
        %7435 = vmatpush1.bf16.msra.mxu0 %v6948
        %7436 = vmatprep.subr.bf16.mxu0 %v6953
        %7437 = vmatpush1.bf16.msra.mxu0 %v6952
        %7438 = vmatprep.subr.bf16.mxu0 %v6957
        %7439 = vmatpush1.bf16.msra.mxu0 %v6956
        %7440 = vmatprep.subr.bf16.mxu0 %v6961
        %7441 = vmatpush1.bf16.msra.mxu0 %v6960
        %7442 = vmatprep.mubr.bf16.mxu0 %v5806
        %7443 = vmatmul.mubr.bf16.gmra.mrb[0].mxu0 %v5805
        %v7444 = vpop.f32.mrb[0].mxu0
        %v7445 = vadd.f32 %v7404, %v7444
        %v7446 = vpop.f32.mrb[0].mxu0
        %v7447 = vadd.f32 %v7406, %v7446
        %v7448 = vpop.f32.mrb[0].mxu0
        %v7449 = vpop.f32.mrb[0].mxu0
        %7450 = vdwg.mxu0
        %7451 = vmatprep.subr.bf16.mxu0 %v6965
        %7452 = vmatpush1.bf16.msra.mxu0 %v6964
        %7453 = vmatprep.subr.bf16.mxu0 %v6969
        %7454 = vmatpush1.bf16.msra.mxu0 %v6968
        %7455 = vmatprep.subr.bf16.mxu0 %v6973
        %7456 = vmatpush1.bf16.msra.mxu0 %v6972
        %7457 = vmatprep.subr.bf16.mxu0 %v6977
        %7458 = vmatpush1.bf16.msra.mxu0 %v6976
        %7459 = vmatprep.subr.bf16.mxu0 %v6981
        %7460 = vmatpush1.bf16.msra.mxu0 %v6980
        %7461 = vmatprep.subr.bf16.mxu0 %v6985
        %7462 = vmatpush1.bf16.msra.mxu0 %v6984
        %7463 = vmatprep.subr.bf16.mxu0 %v6989
        %7464 = vmatpush1.bf16.msra.mxu0 %v6988
        %7465 = vmatprep.subr.bf16.mxu0 %v6993
        %7466 = vmatpush1.bf16.msra.mxu0 %v6992
        %7467 = vmatprep.subr.bf16.mxu0 %v6997
        %7468 = vmatpush1.bf16.msra.mxu0 %v6996
        %7469 = vmatprep.subr.bf16.mxu0 %v7001
        %7470 = vmatpush1.bf16.msra.mxu0 %v7000
        %7471 = vmatprep.subr.bf16.mxu0 %v7005
        %7472 = vmatpush1.bf16.msra.mxu0 %v7004
        %7473 = vmatprep.subr.bf16.mxu0 %v7009
        %7474 = vmatpush1.bf16.msra.mxu0 %v7008
        %7475 = vmatprep.subr.bf16.mxu0 %v7013
        %7476 = vmatpush1.bf16.msra.mxu0 %v7012
        %7477 = vmatprep.subr.bf16.mxu0 %v7017
        %7478 = vmatpush1.bf16.msra.mxu0 %v7016
        %7479 = vmatprep.subr.bf16.mxu0 %v7021
        %7480 = vmatpush1.bf16.msra.mxu0 %v7020
        %7481 = vmatprep.subr.bf16.mxu0 %v7025
        %7482 = vmatpush1.bf16.msra.mxu0 %v7024
        %7483 = vmatprep.mubr.bf16.mxu0 %v5808
        %7484 = vmatmul.mubr.bf16.gmra.mrb[0].mxu0 %v5807
        %v7485 = vpop.f32.mrb[0].mxu0
        %v7486 = vadd.f32 %v7445, %v7485
        %v7487 = vpop.f32.mrb[0].mxu0
        %v7488 = vadd.f32 %v7447, %v7487
        %v7489 = vpop.f32.mrb[0].mxu0
        %v7490 = vpop.f32.mrb[0].mxu0
        %7491 = vdwg.mxu0
        %7492 = vmatprep.subr.bf16.mxu0 %v7029
        %7493 = vmatpush1.bf16.msra.mxu0 %v7028
        %7494 = vmatprep.subr.bf16.mxu0 %v7033
        %7495 = vmatpush1.bf16.msra.mxu0 %v7032
        %7496 = vmatprep.subr.bf16.mxu0 %v7037
        %7497 = vmatpush1.bf16.msra.mxu0 %v7036
        %7498 = vmatprep.subr.bf16.mxu0 %v7041
        %7499 = vmatpush1.bf16.msra.mxu0 %v7040
        %7500 = vmatprep.subr.bf16.mxu0 %v7045
        %7501 = vmatpush1.bf16.msra.mxu0 %v7044
        %7502 = vmatprep.subr.bf16.mxu0 %v7049
        %7503 = vmatpush1.bf16.msra.mxu0 %v7048
        %7504 = vmatprep.subr.bf16.mxu0 %v7053
        %7505 = vmatpush1.bf16.msra.mxu0 %v7052
        %7506 = vmatprep.subr.bf16.mxu0 %v7057
        %7507 = vmatpush1.bf16.msra.mxu0 %v7056
        %7508 = vmatprep.subr.bf16.mxu0 %v7061
        %7509 = vmatpush1.bf16.msra.mxu0 %v7060
        %7510 = vmatprep.subr.bf16.mxu0 %v7065
        %7511 = vmatpush1.bf16.msra.mxu0 %v7064
        %7512 = vmatprep.subr.bf16.mxu0 %v7069
        %7513 = vmatpush1.bf16.msra.mxu0 %v7068
        %7514 = vmatprep.subr.bf16.mxu0 %v7073
        %7515 = vmatpush1.bf16.msra.mxu0 %v7072
        %7516 = vmatprep.subr.bf16.mxu0 %v7077
        %7517 = vmatpush1.bf16.msra.mxu0 %v7076
        %7518 = vmatprep.subr.bf16.mxu0 %v7081
        %7519 = vmatpush1.bf16.msra.mxu0 %v7080
        %7520 = vmatprep.subr.bf16.mxu0 %v7085
        %7521 = vmatpush1.bf16.msra.mxu0 %v7084
        %7522 = vmatprep.subr.bf16.mxu0 %v7089
        %7523 = vmatpush1.bf16.msra.mxu0 %v7088
        %7524 = vmatprep.mubr.bf16.mxu0 %v5810
        %7525 = vmatmul.mubr.bf16.gmra.mrb[0].mxu0 %v5809
        %v7526 = vpop.f32.mrb[0].mxu0
        %v7527 = vadd.f32 %v7486, %v7526
        %v7528 = vpop.f32.mrb[0].mxu0
        %v7529 = vadd.f32 %v7488, %v7528
        %v7530 = vpop.f32.mrb[0].mxu0
        %v7531 = vpop.f32.mrb[0].mxu0
        %7532 = vdwg.mxu0
        %7533 = vmatprep.subr.bf16.mxu0 %v6839
        %7534 = vmatpush1.bf16.msra.mxu0 %v6838
        %7535 = vmatprep.subr.bf16.mxu0 %v6843
        %7536 = vmatpush1.bf16.msra.mxu0 %v6842
        %7537 = vmatprep.subr.bf16.mxu0 %v6847
        %7538 = vmatpush1.bf16.msra.mxu0 %v6846
        %7539 = vmatprep.subr.bf16.mxu0 %v6851
        %7540 = vmatpush1.bf16.msra.mxu0 %v6850
        %7541 = vmatprep.subr.bf16.mxu0 %v6855
        %7542 = vmatpush1.bf16.msra.mxu0 %v6854
        %7543 = vmatprep.subr.bf16.mxu0 %v6859
        %7544 = vmatpush1.bf16.msra.mxu0 %v6858
        %7545 = vmatprep.subr.bf16.mxu0 %v6863
        %7546 = vmatpush1.bf16.msra.mxu0 %v6862
        %7547 = vmatprep.subr.bf16.mxu0 %v6867
        %7548 = vmatpush1.bf16.msra.mxu0 %v6866
        %7549 = vmatprep.subr.bf16.mxu0 %v6871
        %7550 = vmatpush1.bf16.msra.mxu0 %v6870
        %7551 = vmatprep.subr.bf16.mxu0 %v6875
        %7552 = vmatpush1.bf16.msra.mxu0 %v6874
        %7553 = vmatprep.subr.bf16.mxu0 %v6879
        %7554 = vmatpush1.bf16.msra.mxu0 %v6878
        %7555 = vmatprep.subr.bf16.mxu0 %v6883
        %7556 = vmatpush1.bf16.msra.mxu0 %v6882
        %7557 = vmatprep.subr.bf16.mxu0 %v6887
        %7558 = vmatpush1.bf16.msra.mxu0 %v6886
        %7559 = vmatprep.subr.bf16.mxu0 %v6891
        %7560 = vmatpush1.bf16.msra.mxu0 %v6890
        %7561 = vmatprep.subr.bf16.mxu0 %v6895
        %7562 = vmatpush1.bf16.msra.mxu0 %v6894
        %7563 = vmatprep.subr.bf16.mxu0 %v6899
        %7564 = vmatpush1.bf16.msra.mxu0 %v6898
        %7565 = vmatprep.mubr.bf16.mxu0 %v5804
        %7566 = vmatmul.mubr.bf16.gmra.mrb[0].mxu0 %v5803
        %v7567 = vpop.f32.mrb[0].mxu0
        %v7568 = vadd.f32 %v7360, %v7567
        %v7569 = vpop.f32.mrb[0].mxu0
        %v7570 = vadd.f32 %v7364, %v7569
        %v7571 = vpop.f32.mrb[0].mxu0
        %v7572 = vpop.f32.mrb[0].mxu0
        %7573 = vdwg.mxu0
        %7574 = vmatprep.subr.bf16.mxu0 %v6903
        %7575 = vmatpush1.bf16.msra.mxu0 %v6902
        %7576 = vmatprep.subr.bf16.mxu0 %v6907
        %7577 = vmatpush1.bf16.msra.mxu0 %v6906
        %7578 = vmatprep.subr.bf16.mxu0 %v6911
        %7579 = vmatpush1.bf16.msra.mxu0 %v6910
        %7580 = vmatprep.subr.bf16.mxu0 %v6915
        %7581 = vmatpush1.bf16.msra.mxu0 %v6914
        %7582 = vmatprep.subr.bf16.mxu0 %v6919
        %7583 = vmatpush1.bf16.msra.mxu0 %v6918
        %7584 = vmatprep.subr.bf16.mxu0 %v6923
        %7585 = vmatpush1.bf16.msra.mxu0 %v6922
        %7586 = vmatprep.subr.bf16.mxu0 %v6927
        %7587 = vmatpush1.bf16.msra.mxu0 %v6926
        %7588 = vmatprep.subr.bf16.mxu0 %v6931
        %7589 = vmatpush1.bf16.msra.mxu0 %v6930
        %7590 = vmatprep.subr.bf16.mxu0 %v6935
        %7591 = vmatpush1.bf16.msra.mxu0 %v6934
        %7592 = vmatprep.subr.bf16.mxu0 %v6939
        %7593 = vmatpush1.bf16.msra.mxu0 %v6938
        %7594 = vmatprep.subr.bf16.mxu0 %v6943
        %7595 = vmatpush1.bf16.msra.mxu0 %v6942
        %7596 = vmatprep.subr.bf16.mxu0 %v6947
        %7597 = vmatpush1.bf16.msra.mxu0 %v6946
        %7598 = vmatprep.subr.bf16.mxu0 %v6951
        %7599 = vmatpush1.bf16.msra.mxu0 %v6950
        %7600 = vmatprep.subr.bf16.mxu0 %v6955
        %7601 = vmatpush1.bf16.msra.mxu0 %v6954
        %7602 = vmatprep.subr.bf16.mxu0 %v6959
        %7603 = vmatpush1.bf16.msra.mxu0 %v6958
        %7604 = vmatprep.subr.bf16.mxu0 %v6963
        %7605 = vmatpush1.bf16.msra.mxu0 %v6962
        %7606 = vmatprep.mubr.bf16.mxu0 %v5806
        %7607 = vmatmul.mubr.bf16.gmra.mrb[0].mxu0 %v5805
        %v7608 = vpop.f32.mrb[0].mxu0
        %v7609 = vadd.f32 %v7568, %v7608
        %v7610 = vpop.f32.mrb[0].mxu0
        %v7611 = vadd.f32 %v7570, %v7610
        %v7612 = vpop.f32.mrb[0].mxu0
        %v7613 = vpop.f32.mrb[0].mxu0
        %7614 = vdwg.mxu0
        %7615 = vmatprep.subr.bf16.mxu0 %v6967
        %7616 = vmatpush1.bf16.msra.mxu0 %v6966
        %7617 = vmatprep.subr.bf16.mxu0 %v6971
        %7618 = vmatpush1.bf16.msra.mxu0 %v6970
        %7619 = vmatprep.subr.bf16.mxu0 %v6975
        %7620 = vmatpush1.bf16.msra.mxu0 %v6974
        %7621 = vmatprep.subr.bf16.mxu0 %v6979
        %7622 = vmatpush1.bf16.msra.mxu0 %v6978
        %7623 = vmatprep.subr.bf16.mxu0 %v6983
        %7624 = vmatpush1.bf16.msra.mxu0 %v6982
        %7625 = vmatprep.subr.bf16.mxu0 %v6987
        %7626 = vmatpush1.bf16.msra.mxu0 %v6986
        %7627 = vmatprep.subr.bf16.mxu0 %v6991
        %7628 = vmatpush1.bf16.msra.mxu0 %v6990
        %7629 = vmatprep.subr.bf16.mxu0 %v6995
        %7630 = vmatpush1.bf16.msra.mxu0 %v6994
        %7631 = vmatprep.subr.bf16.mxu0 %v6999
        %7632 = vmatpush1.bf16.msra.mxu0 %v6998
        %7633 = vmatprep.subr.bf16.mxu0 %v7003
        %7634 = vmatpush1.bf16.msra.mxu0 %v7002
        %7635 = vmatprep.subr.bf16.mxu0 %v7007
        %7636 = vmatpush1.bf16.msra.mxu0 %v7006
        %7637 = vmatprep.subr.bf16.mxu0 %v7011
        %7638 = vmatpush1.bf16.msra.mxu0 %v7010
        %7639 = vmatprep.subr.bf16.mxu0 %v7015
        %7640 = vmatpush1.bf16.msra.mxu0 %v7014
        %7641 = vmatprep.subr.bf16.mxu0 %v7019
        %7642 = vmatpush1.bf16.msra.mxu0 %v7018
        %7643 = vmatprep.subr.bf16.mxu0 %v7023
        %7644 = vmatpush1.bf16.msra.mxu0 %v7022
        %7645 = vmatprep.subr.bf16.mxu0 %v7027
        %7646 = vmatpush1.bf16.msra.mxu0 %v7026
        %7647 = vmatprep.mubr.bf16.mxu0 %v5808
        %7648 = vmatmul.mubr.bf16.gmra.mrb[0].mxu0 %v5807
        %v7649 = vpop.f32.mrb[0].mxu0
        %v7650 = vadd.f32 %v7609, %v7649
        %v7651 = vpop.f32.mrb[0].mxu0
        %v7652 = vadd.f32 %v7611, %v7651
        %v7653 = vpop.f32.mrb[0].mxu0
        %v7654 = vpop.f32.mrb[0].mxu0
        %7655 = vdwg.mxu0
        %7656 = vmatprep.subr.bf16.mxu0 %v7031
        %7657 = vmatpush1.bf16.msra.mxu0 %v7030
        %7658 = vmatprep.subr.bf16.mxu0 %v7035
        %7659 = vmatpush1.bf16.msra.mxu0 %v7034
        %7660 = vmatprep.subr.bf16.mxu0 %v7039
        %7661 = vmatpush1.bf16.msra.mxu0 %v7038
        %7662 = vmatprep.subr.bf16.mxu0 %v7043
        %7663 = vmatpush1.bf16.msra.mxu0 %v7042
        %7664 = vmatprep.subr.bf16.mxu0 %v7047
        %7665 = vmatpush1.bf16.msra.mxu0 %v7046
        %7666 = vmatprep.subr.bf16.mxu0 %v7051
        %7667 = vmatpush1.bf16.msra.mxu0 %v7050
        %7668 = vmatprep.subr.bf16.mxu0 %v7055
        %7669 = vmatpush1.bf16.msra.mxu0 %v7054
        %7670 = vmatprep.subr.bf16.mxu0 %v7059
        %7671 = vmatpush1.bf16.msra.mxu0 %v7058
        %7672 = vmatprep.subr.bf16.mxu0 %v7063
        %7673 = vmatpush1.bf16.msra.mxu0 %v7062
        %7674 = vmatprep.subr.bf16.mxu0 %v7067
        %7675 = vmatpush1.bf16.msra.mxu0 %v7066
        %7676 = vmatprep.subr.bf16.mxu0 %v7071
        %7677 = vmatpush1.bf16.msra.mxu0 %v7070
        %7678 = vmatprep.subr.bf16.mxu0 %v7075
        %7679 = vmatpush1.bf16.msra.mxu0 %v7074
        %7680 = vmatprep.subr.bf16.mxu0 %v7079
        %7681 = vmatpush1.bf16.msra.mxu0 %v7078
        %7682 = vmatprep.subr.bf16.mxu0 %v7083
        %7683 = vmatpush1.bf16.msra.mxu0 %v7082
        %7684 = vmatprep.subr.bf16.mxu0 %v7087
        %7685 = vmatpush1.bf16.msra.mxu0 %v7086
        %7686 = vmatprep.subr.bf16.mxu0 %v7091
        %7687 = vmatpush1.bf16.msra.mxu0 %v7090
        %7688 = vmatprep.mubr.bf16.mxu0 %v5810
        %7689 = vmatmul.mubr.bf16.gmra.mrb[0].mxu0 %v5809
        %v7690 = vpop.f32.mrb[0].mxu0
        %v7691 = vadd.f32 %v7650, %v7690
        %v7692 = vpop.f32.mrb[0].mxu0
        %v7693 = vadd.f32 %v7652, %v7692
        %v7694 = vpop.f32.mrb[0].mxu0
        %v7695 = vpop.f32.mrb[0].mxu0
        %7696 = vdwg.mxu0
        %v7697 = vmax.f32 %v7527, 0.0
        %v7698 = vmax.f32 %v7529, 0.0
        %v7699 = vmax.f32 %v7691, 0.0
        %v7700 = vmax.f32 %v7693, 0.0
        %v7701 = vpack.c.bf16 %v7697, %v7697
        %v7702 = vpack.c.bf16 %v7698, %v7698
        %v7703 = vpack.c.bf16 %v7699, %v7699
        %v7704 = vpack.c.bf16 %v7700, %v7700
        %v7705 = vld [vmem:[%s11] sm:$0xf]
        %v7706 = vld [vmem:[%s11 + $0x4] sm:$0xf]
        %v7707 = vld [vmem:[%s11 + $0x8] sm:$0xf]
        %v7708 = vld [vmem:[%s11 + $0xc] sm:$0xf]
        %v7709 = vld [vmem:[%s11 + $0x10] sm:$0xf]
        %v7710 = vld [vmem:[%s11 + $0x14] sm:$0xf]
        %v7711 = vld [vmem:[%s11 + $0x18] sm:$0xf]
        %v7712 = vld [vmem:[%s11 + $0x1c] sm:$0xf]
        %v7713 = vld [vmem:[%s11 + $0x20] sm:$0xf]
        %v7714 = vld [vmem:[%s11 + $0x24] sm:$0xf]
        %v7715 = vld [vmem:[%s11 + $0x28] sm:$0xf]
        %v7716 = vld [vmem:[%s11 + $0x2c] sm:$0xf]
        %v7717 = vld [vmem:[%s11 + $0x30] sm:$0xf]
        %v7718 = vld [vmem:[%s11 + $0x34] sm:$0xf]
        %v7719 = vld [vmem:[%s11 + $0x38] sm:$0xf]
        %v7720 = vld [vmem:[%s11 + $0x3c] sm:$0xf]
        %v7721 = vld [vmem:[%s11 + $0x40] sm:$0xf]
        %v7722 = vld [vmem:[%s11 + $0x44] sm:$0xf]
        %v7723 = vld [vmem:[%s11 + $0x48] sm:$0xf]
        %v7724 = vld [vmem:[%s11 + $0x4c] sm:$0xf]
        %v7725 = vld [vmem:[%s11 + $0x50] sm:$0xf]
        %v7726 = vld [vmem:[%s11 + $0x54] sm:$0xf]
        %v7727 = vld [vmem:[%s11 + $0x58] sm:$0xf]
        %v7728 = vld [vmem:[%s11 + $0x5c] sm:$0xf]
        %v7729 = vld [vmem:[%s11 + $0x60] sm:$0xf]
        %v7730 = vld [vmem:[%s11 + $0x64] sm:$0xf]
        %v7731 = vld [vmem:[%s11 + $0x68] sm:$0xf]
        %v7732 = vld [vmem:[%s11 + $0x6c] sm:$0xf]
        %v7733 = vld [vmem:[%s11 + $0x70] sm:$0xf]
        %v7734 = vld [vmem:[%s11 + $0x74] sm:$0xf]
        %v7735 = vld [vmem:[%s11 + $0x78] sm:$0xf]
        %v7736 = vld [vmem:[%s11 + $0x7c] sm:$0xf]
        %v7737 = vld [vmem:[%s11 + $0x80] sm:$0xf]
        %v7738 = vld [vmem:[%s11 + $0x84] sm:$0xf]
        %v7739 = vld [vmem:[%s11 + $0x88] sm:$0xf]
        %v7740 = vld [vmem:[%s11 + $0x8c] sm:$0xf]
        %v7741 = vld [vmem:[%s11 + $0x90] sm:$0xf]
        %v7742 = vld [vmem:[%s11 + $0x94] sm:$0xf]
        %v7743 = vld [vmem:[%s11 + $0x98] sm:$0xf]
        %v7744 = vld [vmem:[%s11 + $0x9c] sm:$0xf]
        %v7745 = vld [vmem:[%s11 + $0xa0] sm:$0xf]
        %v7746 = vld [vmem:[%s11 + $0xa4] sm:$0xf]
        %v7747 = vld [vmem:[%s11 + $0xa8] sm:$0xf]
        %v7748 = vld [vmem:[%s11 + $0xac] sm:$0xf]
        %v7749 = vld [vmem:[%s11 + $0xb0] sm:$0xf]
        %v7750 = vld [vmem:[%s11 + $0xb4] sm:$0xf]
        %v7751 = vld [vmem:[%s11 + $0xb8] sm:$0xf]
        %v7752 = vld [vmem:[%s11 + $0xbc] sm:$0xf]
        %v7753 = vld [vmem:[%s11 + $0xc0] sm:$0xf]
        %v7754 = vld [vmem:[%s11 + $0xc4] sm:$0xf]
        %v7755 = vld [vmem:[%s11 + $0xc8] sm:$0xf]
        %v7756 = vld [vmem:[%s11 + $0xcc] sm:$0xf]
        %v7757 = vld [vmem:[%s11 + $0xd0] sm:$0xf]
        %v7758 = vld [vmem:[%s11 + $0xd4] sm:$0xf]
        %v7759 = vld [vmem:[%s11 + $0xd8] sm:$0xf]
        %v7760 = vld [vmem:[%s11 + $0xdc] sm:$0xf]
        %v7761 = vld [vmem:[%s11 + $0xe0] sm:$0xf]
        %v7762 = vld [vmem:[%s11 + $0xe4] sm:$0xf]
        %v7763 = vld [vmem:[%s11 + $0xe8] sm:$0xf]
        %v7764 = vld [vmem:[%s11 + $0xec] sm:$0xf]
        %v7765 = vld [vmem:[%s11 + $0xf0] sm:$0xf]
        %v7766 = vld [vmem:[%s11 + $0xf4] sm:$0xf]
        %v7767 = vld [vmem:[%s11 + $0xf8] sm:$0xf]
        %v7768 = vld [vmem:[%s11 + $0xfc] sm:$0xf]
        %v7769 = vld [vmem:[%s12] sm:$0x1]
        %v7834 = vunpack.c.l.b16 %v7705
        %v7835 = vunpack.c.l.b16 %v7706
        %v7836 = vunpack.c.l.b16 %v7707
        %v7837 = vunpack.c.l.b16 %v7708
        %v7838 = vunpack.c.l.b16 %v7709
        %v7839 = vunpack.c.l.b16 %v7710
        %v7840 = vunpack.c.l.b16 %v7711
        %v7841 = vunpack.c.l.b16 %v7712
        %v7842 = vunpack.c.l.b16 %v7713
        %v7843 = vunpack.c.l.b16 %v7714
        %v7844 = vunpack.c.l.b16 %v7715
        %v7845 = vunpack.c.l.b16 %v7716
        %v7846 = vunpack.c.l.b16 %v7717
        %v7847 = vunpack.c.l.b16 %v7718
        %v7848 = vunpack.c.l.b16 %v7719
        %v7849 = vunpack.c.l.b16 %v7720
        %v7850 = vunpack.c.l.b16 %v7721
        %v7851 = vunpack.c.l.b16 %v7722
        %v7852 = vunpack.c.l.b16 %v7723
        %v7853 = vunpack.c.l.b16 %v7724
        %v7854 = vunpack.c.l.b16 %v7725
        %v7855 = vunpack.c.l.b16 %v7726
        %v7856 = vunpack.c.l.b16 %v7727
        %v7857 = vunpack.c.l.b16 %v7728
        %v7858 = vunpack.c.l.b16 %v7729
        %v7859 = vunpack.c.l.b16 %v7730
        %v7860 = vunpack.c.l.b16 %v7731
        %v7861 = vunpack.c.l.b16 %v7732
        %v7862 = vunpack.c.l.b16 %v7733
        %v7863 = vunpack.c.l.b16 %v7734
        %v7864 = vunpack.c.l.b16 %v7735
        %v7865 = vunpack.c.l.b16 %v7736
        %v7866 = vunpack.c.l.b16 %v7737
        %v7867 = vunpack.c.l.b16 %v7738
        %v7868 = vunpack.c.l.b16 %v7739
        %v7869 = vunpack.c.l.b16 %v7740
        %v7870 = vunpack.c.l.b16 %v7741
        %v7871 = vunpack.c.l.b16 %v7742
        %v7872 = vunpack.c.l.b16 %v7743
        %v7873 = vunpack.c.l.b16 %v7744
        %v7874 = vunpack.c.l.b16 %v7745
        %v7875 = vunpack.c.l.b16 %v7746
        %v7876 = vunpack.c.l.b16 %v7747
        %v7877 = vunpack.c.l.b16 %v7748
        %v7878 = vunpack.c.l.b16 %v7749
        %v7879 = vunpack.c.l.b16 %v7750
        %v7880 = vunpack.c.l.b16 %v7751
        %v7881 = vunpack.c.l.b16 %v7752
        %v7882 = vunpack.c.l.b16 %v7753
        %v7883 = vunpack.c.l.b16 %v7754
        %v7884 = vunpack.c.l.b16 %v7755
        %v7885 = vunpack.c.l.b16 %v7756
        %v7886 = vunpack.c.l.b16 %v7757
        %v7887 = vunpack.c.l.b16 %v7758
        %v7888 = vunpack.c.l.b16 %v7759
        %v7889 = vunpack.c.l.b16 %v7760
        %v7890 = vunpack.c.l.b16 %v7761
        %v7891 = vunpack.c.l.b16 %v7762
        %v7892 = vunpack.c.l.b16 %v7763
        %v7893 = vunpack.c.l.b16 %v7764
        %v7894 = vunpack.c.l.b16 %v7765
        %v7895 = vunpack.c.l.b16 %v7766
        %v7896 = vunpack.c.l.b16 %v7767
        %v7897 = vunpack.c.l.b16 %v7768
        %v7898 = vpack.c.b16 %v7835, %v7834
        %v7899 = vpack.c.b16 %v7837, %v7836
        %v7900 = vpack.c.b16 %v7839, %v7838
        %v7901 = vpack.c.b16 %v7841, %v7840
        %v7902 = vpack.c.b16 %v7843, %v7842
        %v7903 = vpack.c.b16 %v7845, %v7844
        %v7904 = vpack.c.b16 %v7847, %v7846
        %v7905 = vpack.c.b16 %v7849, %v7848
        %v7906 = vpack.c.b16 %v7851, %v7850
        %v7907 = vpack.c.b16 %v7853, %v7852
        %v7908 = vpack.c.b16 %v7855, %v7854
        %v7909 = vpack.c.b16 %v7857, %v7856
        %v7910 = vpack.c.b16 %v7859, %v7858
        %v7911 = vpack.c.b16 %v7861, %v7860
        %v7912 = vpack.c.b16 %v7863, %v7862
        %v7913 = vpack.c.b16 %v7865, %v7864
        %v7914 = vpack.c.b16 %v7867, %v7866
        %v7915 = vpack.c.b16 %v7869, %v7868
        %v7916 = vpack.c.b16 %v7871, %v7870
        %v7917 = vpack.c.b16 %v7873, %v7872
        %v7918 = vpack.c.b16 %v7875, %v7874
        %v7919 = vpack.c.b16 %v7877, %v7876
        %v7920 = vpack.c.b16 %v7879, %v7878
        %v7921 = vpack.c.b16 %v7881, %v7880
        %v7922 = vpack.c.b16 %v7883, %v7882
        %v7923 = vpack.c.b16 %v7885, %v7884
        %v7924 = vpack.c.b16 %v7887, %v7886
        %v7925 = vpack.c.b16 %v7889, %v7888
        %v7926 = vpack.c.b16 %v7891, %v7890
        %v7927 = vpack.c.b16 %v7893, %v7892
        %v7928 = vpack.c.b16 %v7895, %v7894
        %v7929 = vpack.c.b16 %v7897, %v7896
        %7962 = vmatprep.subr.bf16.mxu0 0
        %7963 = vmatpush1.bf16.msra.mxu0 %v7898
        %7964 = vmatprep.subr.bf16.mxu0 0
        %7965 = vmatpush1.bf16.msra.mxu0 %v7899
        %7966 = vmatprep.subr.bf16.mxu0 0
        %7967 = vmatpush1.bf16.msra.mxu0 %v7900
        %7968 = vmatprep.subr.bf16.mxu0 0
        %7969 = vmatpush1.bf16.msra.mxu0 %v7901
        %7970 = vmatprep.subr.bf16.mxu0 0
        %7971 = vmatpush1.bf16.msra.mxu0 %v7902
        %7972 = vmatprep.subr.bf16.mxu0 0
        %7973 = vmatpush1.bf16.msra.mxu0 %v7903
        %7974 = vmatprep.subr.bf16.mxu0 0
        %7975 = vmatpush1.bf16.msra.mxu0 %v7904
        %7976 = vmatprep.subr.bf16.mxu0 0
        %7977 = vmatpush1.bf16.msra.mxu0 %v7905
        %7978 = vmatprep.subr.bf16.mxu0 0
        %7979 = vmatpush1.bf16.msra.mxu0 %v7906
        %7980 = vmatprep.subr.bf16.mxu0 0
        %7981 = vmatpush1.bf16.msra.mxu0 %v7907
        %7982 = vmatprep.subr.bf16.mxu0 0
        %7983 = vmatpush1.bf16.msra.mxu0 %v7908
        %7984 = vmatprep.subr.bf16.mxu0 0
        %7985 = vmatpush1.bf16.msra.mxu0 %v7909
        %7986 = vmatprep.subr.bf16.mxu0 0
        %7987 = vmatpush1.bf16.msra.mxu0 %v7910
        %7988 = vmatprep.subr.bf16.mxu0 0
        %7989 = vmatpush1.bf16.msra.mxu0 %v7911
        %7990 = vmatprep.subr.bf16.mxu0 0
        %7991 = vmatpush1.bf16.msra.mxu0 %v7912
        %7992 = vmatprep.subr.bf16.mxu0 0
        %7993 = vmatpush1.bf16.msra.mxu0 %v7913
        %7994 = vmatprep.mubr.bf16.mxu0 %v7702
        %7995 = vmatmul.mubr.bf16.gmra.mrb[0].mxu0 %v7701
        %v7996 = vpop.f32.mrb[0].mxu0
        %v7997 = vadd.f32 %v7769, %v7996
        %v7998 = vpop.f32.mrb[0].mxu0
        %v7999 = vpop.f32.mrb[0].mxu0
        %v8000 = vpop.f32.mrb[0].mxu0
        %8001 = vdwg.mxu0
        %8002 = vmatprep.subr.bf16.mxu0 0
        %8003 = vmatpush1.bf16.msra.mxu0 %v7914
        %8004 = vmatprep.subr.bf16.mxu0 0
        %8005 = vmatpush1.bf16.msra.mxu0 %v7915
        %8006 = vmatprep.subr.bf16.mxu0 0
        %8007 = vmatpush1.bf16.msra.mxu0 %v7916
        %8008 = vmatprep.subr.bf16.mxu0 0
        %8009 = vmatpush1.bf16.msra.mxu0 %v7917
        %8010 = vmatprep.subr.bf16.mxu0 0
        %8011 = vmatpush1.bf16.msra.mxu0 %v7918
        %8012 = vmatprep.subr.bf16.mxu0 0
        %8013 = vmatpush1.bf16.msra.mxu0 %v7919
        %8014 = vmatprep.subr.bf16.mxu0 0
        %8015 = vmatpush1.bf16.msra.mxu0 %v7920
        %8016 = vmatprep.subr.bf16.mxu0 0
        %8017 = vmatpush1.bf16.msra.mxu0 %v7921
        %8018 = vmatprep.subr.bf16.mxu0 0
        %8019 = vmatpush1.bf16.msra.mxu0 %v7922
        %8020 = vmatprep.subr.bf16.mxu0 0
        %8021 = vmatpush1.bf16.msra.mxu0 %v7923
        %8022 = vmatprep.subr.bf16.mxu0 0
        %8023 = vmatpush1.bf16.msra.mxu0 %v7924
        %8024 = vmatprep.subr.bf16.mxu0 0
        %8025 = vmatpush1.bf16.msra.mxu0 %v7925
        %8026 = vmatprep.subr.bf16.mxu0 0
        %8027 = vmatpush1.bf16.msra.mxu0 %v7926
        %8028 = vmatprep.subr.bf16.mxu0 0
        %8029 = vmatpush1.bf16.msra.mxu0 %v7927
        %8030 = vmatprep.subr.bf16.mxu0 0
        %8031 = vmatpush1.bf16.msra.mxu0 %v7928
        %8032 = vmatprep.subr.bf16.mxu0 0
        %8033 = vmatpush1.bf16.msra.mxu0 %v7929
        %8034 = vmatprep.mubr.bf16.mxu0 %v7704
        %8035 = vmatmul.mubr.bf16.gmra.mrb[0].mxu0 %v7703
        %v8036 = vpop.f32.mrb[0].mxu0
        %v8037 = vadd.f32 %v7997, %v8036
        %v8038 = vpop.f32.mrb[0].mxu0
        %v8039 = vpop.f32.mrb[0].mxu0
        %v8040 = vpop.f32.mrb[0].mxu0
        %8041 = vdwg.mxu0
        %8042 = vst [vmem:[%s432] sm:$0x1] %v8037
        %s8043 = sand.u32 %s313, 1
        %s8044 = scalar_lea.sflag [#allocation4], %s8043
        %s8045 = sand.u32 %s313, 1
        %s8046 = scalar_lea.vmem [#allocation3], %s8045
        // Predicated region
        $region73: #{mynet_forward.1} parent=71 // pred_check
          %p8047 = pneg %p323
        $region74: #{mynet_forward.1} parent=71 // pred_check_branch
          %8049 = sbr.rel (%p8047) target = $region76
        $region75: #{mynet_forward.1} parent=71 // pred_region
          %s8051 = ssub.s32 16, 16
          %8052 = vsyncadd %s8044, %s8051
          %s8053 = smul.addr %s27, 16
          %s8054 = scalar_lea.hbm %s13, %s8053
          %s8056 = sshll.u32 %s8046, 4
          %s8057 = int_to_ptr.vmem [resolvable:$true] %s8056
          %8059 = dma.vmem_to_hbm [thread:$0]  %s8057, 16, %s8054, %s8044
        $region76: #{mynet_forward.1} parent=71 // pred_fallthru
          _
      $region72: #{mynet_forward.1} parent=5 // pred_fallthru
        _
      %p8060 = scmp.le.s32.totalorder 2, %s22
      // Predicated region
      $region77: #{mynet_forward.1} parent=5 // pred_check
        %p8061 = pneg %p8060
      $region78: #{mynet_forward.1} parent=5 // pred_check_branch
        %8063 = sbr.rel (%p8061) target = $region80
      $region79: #{mynet_forward.1} parent=5 // pred_region
        %s8064 = ssub.s32 %s22, 2
        // Predicated region
        $region81: #{mynet_forward.1} parent=79 // pred_check
          %p8065 = pneg %p329
        $region82: #{mynet_forward.1} parent=79 // pred_check_branch
          %8067 = sbr.rel (%p8065) target = $region84
        $region83: #{mynet_forward.1} parent=79 // pred_region
          %s8068 = sand.u32 %s314, 1
          %s8069 = scalar_lea.sflag [#allocation4], %s8068
          %s8070 = sand.u32 %s314, 1
          %s8071 = scalar_lea.vmem [#allocation3], %s8070
          %8072 = dma.done %s8069, 16
        $region84: #{mynet_forward.1} parent=79 // pred_fallthru
          _
      $region80: #{mynet_forward.1} parent=5 // pred_fallthru
        _
    $region6: #{mynet_forward.1} parent=1 // loop_footer
      %s26 = sadd.s32 1, %s22
    $region7: #{mynet_forward.1} parent=1 // loop_footer_branch
      %21 = sbr.rel target = $region3
    $region8: #{mynet_forward.1} parent=1 // loop_exit
      _
    %8073 = vsyncpa [#allocation4], 1
    %s8074 = scalar_lea.sflag [#allocation4], 1
    %8075 = vsyncpa %s8074, 1

</llo_original>
